<compile_context>
chip_gen: v7x
topology: tpu7x:2x2x1
jax: 0.10.0
libtpu: 0.0.40
codegen_flags: <defaults>
</compile_context>

<pallas_src>
import functools

import jax
import jax.numpy as jnp
from jax.experimental import pallas as pl
from jax.experimental.pallas import tpu as pltpu


def _round_up(x, m):
    return (x + m - 1) // m * m


_VMEM_LIMIT = 32 * 1024 * 1024  # explicit scoped-VMEM budget, safe on v5e/v6e/v7x


# --------------------------------------------------------------------------
# Fused tiled matmul kernel (conv-as-matmul + BN/ReLU/bias fusion)
# --------------------------------------------------------------------------

def _make_matmul_kernel(has_in_affine, has_out_affine, has_bias, out_act):
    def kernel(*refs):
        idx = 0
        a_ref = refs[idx]; idx += 1
        b_ref = refs[idx]; idx += 1
        if has_in_affine:
            in_sc_ref, in_sh_ref = refs[idx], refs[idx + 1]; idx += 2
        if has_out_affine:
            out_sc_ref, out_sh_ref = refs[idx], refs[idx + 1]; idx += 2
        if has_bias:
            bias_ref = refs[idx]; idx += 1
        o_ref, acc_ref = refs[idx], refs[idx + 1]

        k = pl.program_id(2)

        @pl.when(k == 0)
        def _():
            acc_ref[...] = jnp.zeros_like(acc_ref)

        a = a_ref[...]
        if has_in_affine:
            # folded eval-mode BatchNorm + ReLU on the conv input (f32 math,
            # bf16 feed to the MXU).
            a32 = a.astype(jnp.float32) * in_sc_ref[...] + in_sh_ref[...]
            a = jnp.maximum(a32, 0.0).astype(jnp.bfloat16)
        acc_ref[...] += jnp.dot(a, b_ref[...],
                                preferred_element_type=jnp.float32)

        @pl.when(k == pl.num_programs(2) - 1)
        def _():
            acc = acc_ref[...]
            if has_out_affine:
                acc = acc * out_sc_ref[...] + out_sh_ref[...]
            if has_bias:
                acc = acc + bias_ref[...]
            if out_act == "relu":
                acc = jnp.maximum(acc, 0.0)
            elif out_act == "leaky_relu":
                acc = jnp.where(acc > 0, acc, 0.01 * acc)
            o_ref[...] = acc.astype(o_ref.dtype)

    return kernel


def fused_matmul(a, b, *, in_affine=None, out_affine=None, bias=None,
                 out_act="none", out_dtype=jnp.bfloat16,
                 tm=256, tk=512, tn=512):
    """(M,K) @ (K,N) with fused input-BN/ReLU and output affine/bias/act."""
    M, K = a.shape
    K2, N = b.shape
    assert K == K2
    TM = min(tm, _round_up(M, 16))     # bf16 sublane packing -> multiples of 16
    TK = min(tk, _round_up(K, 128))
    TN = min(tn, _round_up(N, 128))
    Mp, Kp, Np = _round_up(M, TM), _round_up(K, TK), _round_up(N, TN)

    a_p = jnp.pad(a.astype(jnp.bfloat16), ((0, Mp - M), (0, Kp - K)))
    b_p = jnp.pad(b.astype(jnp.bfloat16), ((0, Kp - K), (0, Np - N)))

    inputs = [a_p, b_p]
    in_specs = [
        pl.BlockSpec((TM, TK), lambda i, j, k: (i, k)),
        pl.BlockSpec((TK, TN), lambda i, j, k: (k, j)),
    ]

    def vec_k(v):
        return jnp.pad(v.astype(jnp.float32), (0, Kp - K)).reshape(1, Kp)

    def vec_n(v):
        return jnp.pad(v.astype(jnp.float32), (0, Np - N)).reshape(1, Np)

    if in_affine is not None:
        sc, sh = in_affine
        inputs += [vec_k(sc), vec_k(sh)]
        in_specs += [pl.BlockSpec((1, TK), lambda i, j, k: (0, k)),
                     pl.BlockSpec((1, TK), lambda i, j, k: (0, k))]
    if out_affine is not None:
        sc, sh = out_affine
        inputs += [vec_n(sc), vec_n(sh)]
        in_specs += [pl.BlockSpec((1, TN), lambda i, j, k: (0, j)),
                     pl.BlockSpec((1, TN), lambda i, j, k: (0, j))]
    if bias is not None:
        inputs += [vec_n(bias)]
        in_specs += [pl.BlockSpec((1, TN), lambda i, j, k: (0, j))]

    kernel = _make_matmul_kernel(in_affine is not None, out_affine is not None,
                                 bias is not None, out_act)
    out = pl.pallas_call(
        kernel,
        out_shape=jax.ShapeDtypeStruct((Mp, Np), out_dtype),
        grid=(Mp // TM, Np // TN, Kp // TK),
        in_specs=in_specs,
        out_specs=pl.BlockSpec((TM, TN), lambda i, j, k: (i, j)),
        scratch_shapes=[pltpu.VMEM((TM, TN), jnp.float32)],
        compiler_params=pltpu.CompilerParams(
            dimension_semantics=("parallel", "parallel", "arbitrary"),
            vmem_limit_bytes=_VMEM_LIMIT),
    )(*inputs)
    return out[:M, :N]


# --------------------------------------------------------------------------
# Pooling kernel: reduce window taps, tiled over rows
# --------------------------------------------------------------------------

def _pool_kernel(x_ref, o_ref, *, op):
    x = x_ref[...]                       # (K_taps, TM, Cp)
    if op == "max":
        o_ref[...] = jnp.max(x, axis=0).astype(o_ref.dtype)
    else:
        o_ref[...] = jnp.mean(x.astype(jnp.float32), axis=0).astype(o_ref.dtype)


def _pool_reduce(stacked, op, out_dtype=jnp.bfloat16):
    """Reduce (K, M, C) over axis 0 (max / mean), tiled over M."""
    K, M, C = stacked.shape
    TM = min(512, _round_up(M, 16))
    Mp, Cp = _round_up(M, TM), _round_up(C, 128)
    pad_val = float("-inf") if op == "max" else 0.0
    x_p = jnp.pad(stacked, ((0, 0), (0, Mp - M), (0, Cp - C)),
                  constant_values=pad_val)
    out = pl.pallas_call(
        functools.partial(_pool_kernel, op=op),
        out_shape=jax.ShapeDtypeStruct((Mp, Cp), out_dtype),
        grid=(Mp // TM,),
        in_specs=[pl.BlockSpec((K, TM, Cp), lambda i: (0, i, 0))],
        out_specs=pl.BlockSpec((TM, Cp), lambda i: (i, 0)),
        compiler_params=pltpu.CompilerParams(
            dimension_semantics=("parallel",),
            vmem_limit_bytes=_VMEM_LIMIT),
    )(x_p)
    return out[:M, :C]


# --------------------------------------------------------------------------
# Fused classifier kernel: norm5-affine -> fc1 -> LeakyReLU -> fc2
# --------------------------------------------------------------------------

def _classifier_kernel(x_ref, sc_ref, sh_ref, w1_ref, b1_ref, w2_ref, b2_ref,
                       o_ref):
    x = x_ref[...].astype(jnp.float32) * sc_ref[...] + sh_ref[...]
    h = jnp.dot(x.astype(jnp.bfloat16), w1_ref[...],
                preferred_element_type=jnp.float32) + b1_ref[...]
    h = jnp.where(h > 0, h, 0.01 * h)            # nn.LeakyReLU default slope
    o = jnp.dot(h.astype(jnp.bfloat16), w2_ref[...],
                preferred_element_type=jnp.float32) + b2_ref[...]
    o_ref[...] = o.astype(o_ref.dtype)


def classifier(x, norm5, fc1_w, fc1_b, fc2_w, fc2_b):
    """norm5 affine (commuted past the global avg-pool) + Dropout(eval) +
    Linear -> LeakyReLU -> Linear, all in one Pallas call."""
    B, F = x.shape
    H = fc1_w.shape[1]
    NC = fc2_w.shape[1]
    Bp, Fp = _round_up(B, 16), _round_up(F, 128)
    Hp, Np = _round_up(H, 128), _round_up(NC, 128)

    sc, sh = _fold_bn(norm5)
    x_p = jnp.pad(x.astype(jnp.bfloat16), ((0, Bp - B), (0, Fp - F)))
    sc_p = jnp.pad(sc, (0, Fp - F)).reshape(1, Fp)
    sh_p = jnp.pad(sh, (0, Fp - F)).reshape(1, Fp)
    w1_p = jnp.pad(fc1_w.astype(jnp.bfloat16), ((0, Fp - F), (0, Hp - H)))
    b1_p = jnp.pad(fc1_b.astype(jnp.float32), (0, Hp - H)).reshape(1, Hp)
    w2_p = jnp.pad(fc2_w.astype(jnp.bfloat16), ((0, Hp - H), (0, Np - NC)))
    b2_p = jnp.pad(fc2_b.astype(jnp.float32), (0, Np - NC)).reshape(1, Np)

    out = pl.pallas_call(
        _classifier_kernel,
        out_shape=jax.ShapeDtypeStruct((Bp, Np), jnp.float32),
        grid=(1,),
        in_specs=[
            pl.BlockSpec((Bp, Fp), lambda i: (0, 0)),
            pl.BlockSpec((1, Fp), lambda i: (0, 0)),
            pl.BlockSpec((1, Fp), lambda i: (0, 0)),
            pl.BlockSpec((Fp, Hp), lambda i: (0, 0)),
            pl.BlockSpec((1, Hp), lambda i: (0, 0)),
            pl.BlockSpec((Hp, Np), lambda i: (0, 0)),
            pl.BlockSpec((1, Np), lambda i: (0, 0)),
        ],
        out_specs=pl.BlockSpec((Bp, Np), lambda i: (0, 0)),
        compiler_params=pltpu.CompilerParams(vmem_limit_bytes=_VMEM_LIMIT),
    )(x_p, sc_p, sh_p, w1_p, b1_p, w2_p, b2_p)
    return out[:B, :NC]


# --------------------------------------------------------------------------
# Layer wrappers (JAX glue: padding / reshapes / tap extraction)
# --------------------------------------------------------------------------

def _fold_bn(bn):
    scale = bn["gamma"] / jnp.sqrt(bn["var"] + 1e-5)
    shift = bn["beta"] - bn["mean"] * scale
    return scale, shift


def conv2d(x, w, *, stride=1, pad=0, in_bn=None, out_bn=None, out_relu=False):
    """conv( relu(bn_in(x)) ) with optional bn_out(+relu) on the output,
    fully fused into one tiled Pallas matmul.  x: (N,H,W,Cin) bf16 NHWC,
    w: (kh,kw,Cin,Cout)."""
    N, H, W_, Cin = x.shape
    kh, kw, _, Cout = w.shape
    # Fusing the input BN/ReLU is only valid when there is no spatial zero
    # padding (the reference pads the post-activation tensor); in DenseNet all
    # pre-BN convs are 1x1 with pad=0, so this always holds here.
    assert in_bn is None or pad == 0
    Ho = (H + 2 * pad - kh) // stride + 1
    Wo = (W_ + 2 * pad - kw) // stride + 1

    if kh == 1 and kw == 1 and stride == 1 and pad == 0:
        a = x.reshape(N * H * W_, Cin)            # no im2col copy for 1x1
    else:
        xp = jnp.pad(x, ((0, 0), (pad, pad), (pad, pad), (0, 0)))
        cols = [xp[:, i:i + stride * Ho:stride, j:j + stride * Wo:stride, :]
                for i in range(kh) for j in range(kw)]
        # TODO(synk): im2col still materializes kh*kw shifted copies in HBM; a
        # tap-as-grid-reduction kernel reading the padded NHWC activation in
        # place would remove it (only the 7x7 stem and small 3x3 bottleneck
        # convs take this path).
        a = jnp.concatenate(cols, axis=-1).reshape(N * Ho * Wo, kh * kw * Cin)

    in_affine = None
    if in_bn is not None:
        sc, sh = _fold_bn(in_bn)
        in_affine = (jnp.tile(sc, kh * kw), jnp.tile(sh, kh * kw))
    out_affine = _fold_bn(out_bn) if out_bn is not None else None

    out = fused_matmul(a, w.reshape(kh * kw * Cin, Cout),
                       in_affine=in_affine, out_affine=out_affine,
                       out_act="relu" if out_relu else "none")
    return out.reshape(N, Ho, Wo, Cout)


def maxpool2d(x, k, stride, pad):
    N, H, W_, C = x.shape
    xp = jnp.pad(x, ((0, 0), (pad, pad), (pad, pad), (0, 0)),
                 constant_values=float("-inf"))
    Ho = (H + 2 * pad - k) // stride + 1
    Wo = (W_ + 2 * pad - k) // stride + 1
    taps = [xp[:, i:i + stride * Ho:stride, j:j + stride * Wo:stride, :]
            for i in range(k) for j in range(k)]
    stacked = jnp.stack(taps, 0).reshape(k * k, N * Ho * Wo, C)
    return _pool_reduce(stacked, "max").reshape(N, Ho, Wo, C)


def avgpool2d(x, k, stride):
    # kernel == stride here -> non-overlapping taps, zero HBM inflation.
    N, H, W_, C = x.shape
    Ho = (H - k) // stride + 1
    Wo = (W_ - k) // stride + 1
    taps = [x[:, i:i + stride * Ho:stride, j:j + stride * Wo:stride, :]
            for i in range(k) for j in range(k)]
    stacked = jnp.stack(taps, 0).reshape(k * k, N * Ho * Wo, C)
    return _pool_reduce(stacked, "mean").reshape(N, Ho, Wo, C)


def global_avgpool(x):
    """AdaptiveAvgPool2d((1,1)): mean over H*W per (N, C)."""
    N, H, W_, C = x.shape
    stacked = jnp.transpose(x.reshape(N, H * W_, C), (1, 0, 2))  # (HW, N, C)
    return _pool_reduce(stacked, "mean")                          # (N, C)


# --------------------------------------------------------------------------
# Parameters (deterministic synthetic weights)
# --------------------------------------------------------------------------

def make_params(key, num_classes, growth_rate=8, block_config=(2, 2, 2, 2),
                num_init_features=16, bn_size=4):
    # densenet161 would be growth_rate=48, block_config=(6,12,36,24),
    # num_init_features=96 -> num_features=2208.
    keys = [key]

    def nxt():
        keys[0], sub = jax.random.split(keys[0])
        return sub

    def conv_init(kh, kw, cin, cout):
        fan = kh * kw * cin
        return jax.random.normal(nxt(), (kh, kw, cin, cout), jnp.float32) / jnp.sqrt(fan)

    def bn_init(c):
        return {
            "gamma": 1.0 + 0.1 * jax.random.normal(nxt(), (c,), jnp.float32),
            "beta": 0.1 * jax.random.normal(nxt(), (c,), jnp.float32),
            "mean": 0.1 * jax.random.normal(nxt(), (c,), jnp.float32),
            "var": 1.0 + 0.1 * jnp.abs(jax.random.normal(nxt(), (c,), jnp.float32)),
        }

    def linear_init(cin, cout):
        w = jax.random.normal(nxt(), (cin, cout), jnp.float32) / jnp.sqrt(cin)
        b = 0.01 * jax.random.normal(nxt(), (cout,), jnp.float32)
        return w, b

    params = {}
    params["conv0"] = conv_init(7, 7, 3, num_init_features)
    params["norm0"] = bn_init(num_init_features)
    c = num_init_features
    for bi, nlayers in enumerate(block_config):
        for li in range(nlayers):
            params[f"block{bi}_layer{li}"] = {
                "norm1": bn_init(c),
                "conv1": conv_init(1, 1, c, bn_size * growth_rate),
                "norm2": bn_init(bn_size * growth_rate),
                "conv2": conv_init(3, 3, bn_size * growth_rate, growth_rate),
            }
            c += growth_rate
        if bi != len(block_config) - 1:
            params[f"trans{bi}"] = {"norm": bn_init(c),
                                    "conv": conv_init(1, 1, c, c // 2)}
            c = c // 2
    params["norm5"] = bn_init(c)
    num_features = c
    params["fc1_w"], params["fc1_b"] = linear_init(num_features, 1024)
    params["fc2_w"], params["fc2_b"] = linear_init(1024, num_classes)
    return params, num_features, block_config


# --------------------------------------------------------------------------
# Forward pass (mirrors DenseNet.forward: features -> view -> classifier)
# --------------------------------------------------------------------------

def densenet_forward(params, block_config, x_nchw):
    x = jnp.transpose(x_nchw, (0, 2, 3, 1)).astype(jnp.bfloat16)  # NCHW -> NHWC

    # --- features (torchvision densenet161.features + appended avgpool) ---
    x = conv2d(x, params["conv0"], stride=2, pad=3,
               out_bn=params["norm0"], out_relu=True)   # conv0 + norm0 + relu0
    x = maxpool2d(x, 3, 2, 1)                           # pool0
    for bi, nlayers in enumerate(block_config):
        for li in range(nlayers):
            lp = params[f"block{bi}_layer{li}"]
            # norm1+relu+conv1(1x1)+norm2+relu -> one fused matmul kernel
            y = conv2d(x, lp["conv1"], in_bn=lp["norm1"],
                       out_bn=lp["norm2"], out_relu=True)
            # conv2 (3x3, pad=1) on the already-activated bottleneck tensor
            y = conv2d(y, lp["conv2"], stride=1, pad=1)
            # TODO(synk): dense concat still copies the growing feature map;
            # writing conv2's output into a preallocated channel slab would
            # remove the O(L^2) copy traffic.
            x = jnp.concatenate([x, y], axis=-1)
        if bi != len(block_config) - 1:
            tp = params[f"trans{bi}"]
            x = conv2d(x, tp["conv"], in_bn=tp["norm"])  # norm+relu+1x1 conv
            x = avgpool2d(x, 2, 2)
    # norm5 (BN, no relu) commutes with the global average pool (per-channel
    # affine), so it is applied inside the fused classifier kernel.
    x = global_avgpool(x)                                # (B, num_features)

    # --- x.view(x.size(0), -1) ---
    x = x.reshape(x.shape[0], -1)

    # --- classifier ---
    # TODO(synk): nn.Dropout(p=0.5) is identity in eval mode; training-mode RNG
    # mask not implemented.
    return classifier(x, params["norm5"], params["fc1_w"], params["fc1_b"],
                      params["fc2_w"], params["fc2_b"])


if __name__ == "__main__":
    key = jax.random.PRNGKey(0)
    pkey, xkey = jax.random.split(key)

    num_classes = 10
    params, num_features, block_config = make_params(pkey, num_classes)

    # Small, module-consistent input: 3-channel image, NCHW (PyTorch convention).
    x = jax.random.normal(xkey, (2, 3, 32, 32), jnp.float32)

    fwd = jax.jit(densenet_forward, static_argnums=1)
    out = fwd(params, block_config, x)
    out = jax.block_until_ready(out)

    assert out.shape == (2, num_classes), out.shape
    assert jnp.all(jnp.isfinite(out))
    print("KERNEL_OK")
</pallas_src>

<mosaic_0001>
module attributes {stable_mosaic.version = 11 : i64} {
  func.func @kernel(%arg0: i32, %arg1: i32, %arg2: i32, %arg3: memref<256x256xbf16, #tpu.memory_space<vmem>>, %arg4: memref<256x128xbf16, #tpu.memory_space<vmem>>, %arg5: memref<1x128xf32, #tpu.memory_space<vmem>>, %arg6: memref<1x128xf32, #tpu.memory_space<vmem>>, %arg7: memref<256x128xbf16, #tpu.memory_space<vmem>>, %arg8: memref<256x128xf32, #tpu.memory_space<vmem>>) attributes {dimension_semantics = [#tpu.dimension_semantics<parallel>, #tpu.dimension_semantics<parallel>, #tpu.dimension_semantics<arbitrary>], iteration_bounds = array<i64: 2, 1, 1>, scalar_prefetch = 0 : i64, scratch_operands = 1 : i64, tpu.core_type = #tpu.core_type<tc>, window_params = [{transform_indices = @transform_0, window_bounds = array<i64: 256, 256>}, {transform_indices = @transform_1, window_bounds = array<i64: 256, 128>}, {transform_indices = @transform_2, window_bounds = array<i64: 1, 128>}, {transform_indices = @transform_3, window_bounds = array<i64: 1, 128>}, {transform_indices = @transform_4, window_bounds = array<i64: 256, 128>}]} {
    %c0_i32 = arith.constant 0 : i32
    %0 = arith.cmpi eq, %arg2, %c0_i32 : i32
    %1 = arith.extui %0 : i1 to i32
    %c0_i32_0 = arith.constant 0 : i32
    %2 = arith.cmpi ne, %1, %c0_i32_0 : i32
    scf.if %2 {
      %cst_10 = arith.constant 0.000000e+00 : f32
      %12 = vector.broadcast %cst_10 : f32 to vector<256x128xf32>
      %c0_11 = arith.constant 0 : index
      %c0_12 = arith.constant 0 : index
      %13 = vector.load %arg8[%c0_11, %c0_12] : memref<256x128xf32, #tpu.memory_space<vmem>>, vector<256x128xf32>
      tpu.vector_store %arg8[%c0_11, %c0_12], %12 {strides = array<i32>} : memref<256x128xf32, #tpu.memory_space<vmem>>, vector<256x128xf32>,
    } else {
    }
    %c0 = arith.constant 0 : index
    %c0_1 = arith.constant 0 : index
    %3 = vector.load %arg3[%c0, %c0_1] : memref<256x256xbf16, #tpu.memory_space<vmem>>, vector<256x256xbf16>
    %c0_2 = arith.constant 0 : index
    %c0_3 = arith.constant 0 : index
    %4 = vector.load %arg8[%c0_2, %c0_3] : memref<256x128xf32, #tpu.memory_space<vmem>>, vector<256x128xf32>
    %c0_4 = arith.constant 0 : index
    %c0_5 = arith.constant 0 : index
    %5 = vector.load %arg4[%c0_4, %c0_5] : memref<256x128xbf16, #tpu.memory_space<vmem>>, vector<256x128xbf16>
    %cst = arith.constant dense<0.000000e+00> : vector<256x128xf32>
    %6 = tpu.matmul %3, %5, %cst {dimension_numbers = #tpu.dot_dimension_numbers<[1], [0], [0], [1], [0, 0, 1, 1], [], []>} : vector<256x256xbf16>, vector<256x128xbf16>, vector<256x128xf32> -> vector<256x128xf32>
    %7 = arith.addf %4, %6 : vector<256x128xf32>
    %c0_6 = arith.constant 0 : index
    %c0_7 = arith.constant 0 : index
    %8 = vector.load %arg8[%c0_6, %c0_7] : memref<256x128xf32, #tpu.memory_space<vmem>>, vector<256x128xf32>
    tpu.vector_store %arg8[%c0_6, %c0_7], %7 {strides = array<i32>} : memref<256x128xf32, #tpu.memory_space<vmem>>, vector<256x128xf32>,
    %c0_i32_8 = arith.constant 0 : i32
    %9 = arith.cmpi eq, %arg2, %c0_i32_8 : i32
    %10 = arith.extui %9 : i1 to i32
    %c0_i32_9 = arith.constant 0 : i32
    %11 = arith.cmpi ne, %10, %c0_i32_9 : i32
    scf.if %11 {
      %c0_10 = arith.constant 0 : index
      %c0_11 = arith.constant 0 : index
      %12 = vector.load %arg8[%c0_10, %c0_11] : memref<256x128xf32, #tpu.memory_space<vmem>>, vector<256x128xf32>
      %c0_12 = arith.constant 0 : index
      %c0_13 = arith.constant 0 : index
      %13 = vector.load %arg5[%c0_12, %c0_13] : memref<1x128xf32, #tpu.memory_space<vmem>>, vector<1x128xf32>
      %14 = vector.broadcast %13 : vector<1x128xf32> to vector<256x128xf32>
      %15 = arith.mulf %12, %14 : vector<256x128xf32>
      %c0_14 = arith.constant 0 : index
      %c0_15 = arith.constant 0 : index
      %16 = vector.load %arg6[%c0_14, %c0_15] : memref<1x128xf32, #tpu.memory_space<vmem>>, vector<1x128xf32>
      %17 = vector.broadcast %16 : vector<1x128xf32> to vector<256x128xf32>
      %18 = arith.addf %15, %17 : vector<256x128xf32>
      %cst_16 = arith.constant 0.000000e+00 : f32
      %19 = vector.broadcast %cst_16 : f32 to vector<256x128xf32>
      %20 = arith.maximumf %18, %19 : vector<256x128xf32>
      %21 = arith.truncf %20 : vector<256x128xf32> to vector<256x128xbf16>
      %c0_17 = arith.constant 0 : index
      %c0_18 = arith.constant 0 : index
      %22 = vector.load %arg7[%c0_17, %c0_18] : memref<256x128xbf16, #tpu.memory_space<vmem>>, vector<256x128xbf16>
      tpu.vector_store %arg7[%c0_17, %c0_18], %21 {strides = array<i32>} : memref<256x128xbf16, #tpu.memory_space<vmem>>, vector<256x128xbf16>,
    } else {
    }
    return
  }
  func.func @transform_0(%arg0: i32, %arg1: i32, %arg2: i32) -> (i32, i32) {
    %c0_i32 = arith.constant 0 : i32
    return %arg0, %arg2 : i32, i32
  }
  func.func @transform_1(%arg0: i32, %arg1: i32, %arg2: i32) -> (i32, i32) {
    %c0_i32 = arith.constant 0 : i32
    return %arg2, %arg1 : i32, i32
  }
  func.func @transform_2(%arg0: i32, %arg1: i32, %arg2: i32) -> (i32, i32) {
    %c0_i32 = arith.constant 0 : i32
    %c0_i32_0 = arith.constant 0 : i32
    return %c0_i32, %arg1 : i32, i32
  }
  func.func @transform_3(%arg0: i32, %arg1: i32, %arg2: i32) -> (i32, i32) {
    %c0_i32 = arith.constant 0 : i32
    %c0_i32_0 = arith.constant 0 : i32
    return %c0_i32, %arg1 : i32, i32
  }
  func.func @transform_4(%arg0: i32, %arg1: i32, %arg2: i32) -> (i32, i32) {
    %c0_i32 = arith.constant 0 : i32
    return %arg0, %arg1 : i32, i32
  }
}

module attributes {stable_mosaic.version = 11 : i64} {
  func.func @_pool_kernel(%arg0: i32, %arg1: memref<9x128x128xbf16, #tpu.memory_space<vmem>>, %arg2: memref<128x128xbf16, #tpu.memory_space<vmem>>) attributes {dimension_semantics = [#tpu.dimension_semantics<parallel>], iteration_bounds = array<i64: 1>, scalar_prefetch = 0 : i64, scratch_operands = 0 : i64, tpu.core_type = #tpu.core_type<tc>, window_params = [{transform_indices = @transform_0, window_bounds = array<i64: 9, 128, 128>}, {transform_indices = @transform_1, window_bounds = array<i64: 128, 128>}]} {
    %c0 = arith.constant 0 : index
    %c0_0 = arith.constant 0 : index
    %c0_1 = arith.constant 0 : index
    %0 = vector.load %arg1[%c0, %c0_0, %c0_1] : memref<9x128x128xbf16, #tpu.memory_space<vmem>>, vector<9x128x128xbf16>
    %cst = arith.constant dense<0xFF80> : vector<128x128xbf16>
    %1 = vector.multi_reduction <maximumf>, %0, %cst [0] : vector<9x128x128xbf16> to vector<128x128xbf16>
    %c0_2 = arith.constant 0 : index
    %c0_3 = arith.constant 0 : index
    %2 = vector.load %arg2[%c0_2, %c0_3] : memref<128x128xbf16, #tpu.memory_space<vmem>>, vector<128x128xbf16>
    tpu.vector_store %arg2[%c0_2, %c0_3], %1 {strides = array<i32>} : memref<128x128xbf16, #tpu.memory_space<vmem>>, vector<128x128xbf16>,
    return
  }
  func.func @transform_0(%arg0: i32) -> (i32, i32, i32) {
    %c0_i32 = arith.constant 0 : i32
    %c0_i32_0 = arith.constant 0 : i32
    %c0_i32_1 = arith.constant 0 : i32
    return %c0_i32, %arg0, %c0_i32_0 : i32, i32, i32
  }
  func.func @transform_1(%arg0: i32) -> (i32, i32) {
    %c0_i32 = arith.constant 0 : i32
    %c0_i32_0 = arith.constant 0 : i32
    return %arg0, %c0_i32 : i32, i32
  }
}

module attributes {stable_mosaic.version = 11 : i64} {
  func.func @kernel(%arg0: i32, %arg1: i32, %arg2: i32, %arg3: memref<128x128xbf16, #tpu.memory_space<vmem>>, %arg4: memref<128x128xbf16, #tpu.memory_space<vmem>>, %arg5: memref<1x128xf32, #tpu.memory_space<vmem>>, %arg6: memref<1x128xf32, #tpu.memory_space<vmem>>, %arg7: memref<1x128xf32, #tpu.memory_space<vmem>>, %arg8: memref<1x128xf32, #tpu.memory_space<vmem>>, %arg9: memref<128x128xbf16, #tpu.memory_space<vmem>>, %arg10: memref<128x128xf32, #tpu.memory_space<vmem>>) attributes {dimension_semantics = [#tpu.dimension_semantics<parallel>, #tpu.dimension_semantics<parallel>, #tpu.dimension_semantics<arbitrary>], iteration_bounds = array<i64: 1, 1, 1>, scalar_prefetch = 0 : i64, scratch_operands = 1 : i64, tpu.core_type = #tpu.core_type<tc>, window_params = [{transform_indices = @transform_0, window_bounds = array<i64: 128, 128>}, {transform_indices = @transform_1, window_bounds = array<i64: 128, 128>}, {transform_indices = @transform_2, window_bounds = array<i64: 1, 128>}, {transform_indices = @transform_3, window_bounds = array<i64: 1, 128>}, {transform_indices = @transform_4, window_bounds = array<i64: 1, 128>}, {transform_indices = @transform_5, window_bounds = array<i64: 1, 128>}, {transform_indices = @transform_6, window_bounds = array<i64: 128, 128>}]} {
    %c0_i32 = arith.constant 0 : i32
    %0 = arith.cmpi eq, %arg2, %c0_i32 : i32
    %1 = arith.extui %0 : i1 to i32
    %c0_i32_0 = arith.constant 0 : i32
    %2 = arith.cmpi ne, %1, %c0_i32_0 : i32
    scf.if %2 {
      %cst_15 = arith.constant 0.000000e+00 : f32
      %22 = vector.broadcast %cst_15 : f32 to vector<128x128xf32>
      %c0_16 = arith.constant 0 : index
      %c0_17 = arith.constant 0 : index
      %23 = vector.load %arg10[%c0_16, %c0_17] : memref<128x128xf32, #tpu.memory_space<vmem>>, vector<128x128xf32>
      tpu.vector_store %arg10[%c0_16, %c0_17], %22 {strides = array<i32>} : memref<128x128xf32, #tpu.memory_space<vmem>>, vector<128x128xf32>,
    } else {
    }
    %c0 = arith.constant 0 : index
    %c0_1 = arith.constant 0 : index
    %3 = vector.load %arg3[%c0, %c0_1] : memref<128x128xbf16, #tpu.memory_space<vmem>>, vector<128x128xbf16>
    %4 = arith.extf %3 : vector<128x128xbf16> to vector<128x128xf32>
    %c0_2 = arith.constant 0 : index
    %c0_3 = arith.constant 0 : index
    %5 = vector.load %arg5[%c0_2, %c0_3] : memref<1x128xf32, #tpu.memory_space<vmem>>, vector<1x128xf32>
    %6 = vector.broadcast %5 : vector<1x128xf32> to vector<128x128xf32>
    %7 = arith.mulf %4, %6 : vector<128x128xf32>
    %c0_4 = arith.constant 0 : index
    %c0_5 = arith.constant 0 : index
    %8 = vector.load %arg6[%c0_4, %c0_5] : memref<1x128xf32, #tpu.memory_space<vmem>>, vector<1x128xf32>
    %9 = vector.broadcast %8 : vector<1x128xf32> to vector<128x128xf32>
    %10 = arith.addf %7, %9 : vector<128x128xf32>
    %cst = arith.constant 0.000000e+00 : f32
    %11 = vector.broadcast %cst : f32 to vector<128x128xf32>
    %12 = arith.maximumf %10, %11 : vector<128x128xf32>
    %13 = arith.truncf %12 : vector<128x128xf32> to vector<128x128xbf16>
    %c0_6 = arith.constant 0 : index
    %c0_7 = arith.constant 0 : index
    %14 = vector.load %arg10[%c0_6, %c0_7] : memref<128x128xf32, #tpu.memory_space<vmem>>, vector<128x128xf32>
    %c0_8 = arith.constant 0 : index
    %c0_9 = arith.constant 0 : index
    %15 = vector.load %arg4[%c0_8, %c0_9] : memref<128x128xbf16, #tpu.memory_space<vmem>>, vector<128x128xbf16>
    %cst_10 = arith.constant dense<0.000000e+00> : vector<128x128xf32>
    %16 = tpu.matmul %13, %15, %cst_10 {dimension_numbers = #tpu.dot_dimension_numbers<[1], [0], [0], [1], [0, 0, 1, 1], [], []>} : vector<128x128xbf16>, vector<128x128xbf16>, vector<128x128xf32> -> vector<128x128xf32>
    %17 = arith.addf %14, %16 : vector<128x128xf32>
    %c0_11 = arith.constant 0 : index
    %c0_12 = arith.constant 0 : index
    %18 = vector.load %arg10[%c0_11, %c0_12] : memref<128x128xf32, #tpu.memory_space<vmem>>, vector<128x128xf32>
    tpu.vector_store %arg10[%c0_11, %c0_12], %17 {strides = array<i32>} : memref<128x128xf32, #tpu.memory_space<vmem>>, vector<128x128xf32>,
    %c0_i32_13 = arith.constant 0 : i32
    %19 = arith.cmpi eq, %arg2, %c0_i32_13 : i32
    %20 = arith.extui %19 : i1 to i32
    %c0_i32_14 = arith.constant 0 : i32
    %21 = arith.cmpi ne, %20, %c0_i32_14 : i32
    scf.if %21 {
      %c0_15 = arith.constant 0 : index
      %c0_16 = arith.constant 0 : index
      %22 = vector.load %arg10[%c0_15, %c0_16] : memref<128x128xf32, #tpu.memory_space<vmem>>, vector<128x128xf32>
      %c0_17 = arith.constant 0 : index
      %c0_18 = arith.constant 0 : index
      %23 = vector.load %arg7[%c0_17, %c0_18] : memref<1x128xf32, #tpu.memory_space<vmem>>, vector<1x128xf32>
      %24 = vector.broadcast %23 : vector<1x128xf32> to vector<128x128xf32>
      %25 = arith.mulf %22, %24 : vector<128x128xf32>
      %c0_19 = arith.constant 0 : index
      %c0_20 = arith.constant 0 : index
      %26 = vector.load %arg8[%c0_19, %c0_20] : memref<1x128xf32, #tpu.memory_space<vmem>>, vector<1x128xf32>
      %27 = vector.broadcast %26 : vector<1x128xf32> to vector<128x128xf32>
      %28 = arith.addf %25, %27 : vector<128x128xf32>
      %cst_21 = arith.constant 0.000000e+00 : f32
      %29 = vector.broadcast %cst_21 : f32 to vector<128x128xf32>
      %30 = arith.maximumf %28, %29 : vector<128x128xf32>
      %31 = arith.truncf %30 : vector<128x128xf32> to vector<128x128xbf16>
      %c0_22 = arith.constant 0 : index
      %c0_23 = arith.constant 0 : index
      %32 = vector.load %arg9[%c0_22, %c0_23] : memref<128x128xbf16, #tpu.memory_space<vmem>>, vector<128x128xbf16>
      tpu.vector_store %arg9[%c0_22, %c0_23], %31 {strides = array<i32>} : memref<128x128xbf16, #tpu.memory_space<vmem>>, vector<128x128xbf16>,
    } else {
    }
    return
  }
  func.func @transform_0(%arg0: i32, %arg1: i32, %arg2: i32) -> (i32, i32) {
    %c0_i32 = arith.constant 0 : i32
    return %arg0, %arg2 : i32, i32
  }
  func.func @transform_1(%arg0: i32, %arg1: i32, %arg2: i32) -> (i32, i32) {
    %c0_i32 = arith.constant 0 : i32
    return %arg2, %arg1 : i32, i32
  }
  func.func @transform_2(%arg0: i32, %arg1: i32, %arg2: i32) -> (i32, i32) {
    %c0_i32 = arith.constant 0 : i32
    %c0_i32_0 = arith.constant 0 : i32
    return %c0_i32, %arg2 : i32, i32
  }
  func.func @transform_3(%arg0: i32, %arg1: i32, %arg2: i32) -> (i32, i32) {
    %c0_i32 = arith.constant 0 : i32
    %c0_i32_0 = arith.constant 0 : i32
    return %c0_i32, %arg2 : i32, i32
  }
  func.func @transform_4(%arg0: i32, %arg1: i32, %arg2: i32) -> (i32, i32) {
    %c0_i32 = arith.constant 0 : i32
    %c0_i32_0 = arith.constant 0 : i32
    return %c0_i32, %arg1 : i32, i32
  }
  func.func @transform_5(%arg0: i32, %arg1: i32, %arg2: i32) -> (i32, i32) {
    %c0_i32 = arith.constant 0 : i32
    %c0_i32_0 = arith.constant 0 : i32
    return %c0_i32, %arg1 : i32, i32
  }
  func.func @transform_6(%arg0: i32, %arg1: i32, %arg2: i32) -> (i32, i32) {
    %c0_i32 = arith.constant 0 : i32
    return %arg0, %arg1 : i32, i32
  }
}

module attributes {stable_mosaic.version = 11 : i64} {
  func.func @kernel(%arg0: i32, %arg1: i32, %arg2: i32, %arg3: memref<128x384xbf16, #tpu.memory_space<vmem>>, %arg4: memref<384x128xbf16, #tpu.memory_space<vmem>>, %arg5: memref<128x128xbf16, #tpu.memory_space<vmem>>, %arg6: memref<128x128xf32, #tpu.memory_space<vmem>>) attributes {dimension_semantics = [#tpu.dimension_semantics<parallel>, #tpu.dimension_semantics<parallel>, #tpu.dimension_semantics<arbitrary>], iteration_bounds = array<i64: 1, 1, 1>, scalar_prefetch = 0 : i64, scratch_operands = 1 : i64, tpu.core_type = #tpu.core_type<tc>, window_params = [{transform_indices = @transform_0, window_bounds = array<i64: 128, 384>}, {transform_indices = @transform_1, window_bounds = array<i64: 384, 128>}, {transform_indices = @transform_2, window_bounds = array<i64: 128, 128>}]} {
    %c0_i32 = arith.constant 0 : i32
    %0 = arith.cmpi eq, %arg2, %c0_i32 : i32
    %1 = arith.extui %0 : i1 to i32
    %c0_i32_0 = arith.constant 0 : i32
    %2 = arith.cmpi ne, %1, %c0_i32_0 : i32
    scf.if %2 {
      %cst_10 = arith.constant 0.000000e+00 : f32
      %12 = vector.broadcast %cst_10 : f32 to vector<128x128xf32>
      %c0_11 = arith.constant 0 : index
      %c0_12 = arith.constant 0 : index
      %13 = vector.load %arg6[%c0_11, %c0_12] : memref<128x128xf32, #tpu.memory_space<vmem>>, vector<128x128xf32>
      tpu.vector_store %arg6[%c0_11, %c0_12], %12 {strides = array<i32>} : memref<128x128xf32, #tpu.memory_space<vmem>>, vector<128x128xf32>,
    } else {
    }
    %c0 = arith.constant 0 : index
    %c0_1 = arith.constant 0 : index
    %3 = vector.load %arg3[%c0, %c0_1] : memref<128x384xbf16, #tpu.memory_space<vmem>>, vector<128x384xbf16>
    %c0_2 = arith.constant 0 : index
    %c0_3 = arith.constant 0 : index
    %4 = vector.load %arg6[%c0_2, %c0_3] : memref<128x128xf32, #tpu.memory_space<vmem>>, vector<128x128xf32>
    %c0_4 = arith.constant 0 : index
    %c0_5 = arith.constant 0 : index
    %5 = vector.load %arg4[%c0_4, %c0_5] : memref<384x128xbf16, #tpu.memory_space<vmem>>, vector<384x128xbf16>
    %cst = arith.constant dense<0.000000e+00> : vector<128x128xf32>
    %6 = tpu.matmul %3, %5, %cst {dimension_numbers = #tpu.dot_dimension_numbers<[1], [0], [0], [1], [0, 0, 1, 1], [], []>} : vector<128x384xbf16>, vector<384x128xbf16>, vector<128x128xf32> -> vector<128x128xf32>
    %7 = arith.addf %4, %6 : vector<128x128xf32>
    %c0_6 = arith.constant 0 : index
    %c0_7 = arith.constant 0 : index
    %8 = vector.load %arg6[%c0_6, %c0_7] : memref<128x128xf32, #tpu.memory_space<vmem>>, vector<128x128xf32>
    tpu.vector_store %arg6[%c0_6, %c0_7], %7 {strides = array<i32>} : memref<128x128xf32, #tpu.memory_space<vmem>>, vector<128x128xf32>,
    %c0_i32_8 = arith.constant 0 : i32
    %9 = arith.cmpi eq, %arg2, %c0_i32_8 : i32
    %10 = arith.extui %9 : i1 to i32
    %c0_i32_9 = arith.constant 0 : i32
    %11 = arith.cmpi ne, %10, %c0_i32_9 : i32
    scf.if %11 {
      %c0_10 = arith.constant 0 : index
      %c0_11 = arith.constant 0 : index
      %12 = vector.load %arg6[%c0_10, %c0_11] : memref<128x128xf32, #tpu.memory_space<vmem>>, vector<128x128xf32>
      %13 = arith.truncf %12 : vector<128x128xf32> to vector<128x128xbf16>
      %c0_12 = arith.constant 0 : index
      %c0_13 = arith.constant 0 : index
      %14 = vector.load %arg5[%c0_12, %c0_13] : memref<128x128xbf16, #tpu.memory_space<vmem>>, vector<128x128xbf16>
      tpu.vector_store %arg5[%c0_12, %c0_13], %13 {strides = array<i32>} : memref<128x128xbf16, #tpu.memory_space<vmem>>, vector<128x128xbf16>,
    } else {
    }
    return
  }
  func.func @transform_0(%arg0: i32, %arg1: i32, %arg2: i32) -> (i32, i32) {
    %c0_i32 = arith.constant 0 : i32
    return %arg0, %arg2 : i32, i32
  }
  func.func @transform_1(%arg0: i32, %arg1: i32, %arg2: i32) -> (i32, i32) {
    %c0_i32 = arith.constant 0 : i32
    return %arg2, %arg1 : i32, i32
  }
  func.func @transform_2(%arg0: i32, %arg1: i32, %arg2: i32) -> (i32, i32) {
    %c0_i32 = arith.constant 0 : i32
    return %arg0, %arg1 : i32, i32
  }
}

module attributes {stable_mosaic.version = 11 : i64} {
  func.func @kernel(%arg0: i32, %arg1: i32, %arg2: i32, %arg3: memref<128x128xbf16, #tpu.memory_space<vmem>>, %arg4: memref<128x128xbf16, #tpu.memory_space<vmem>>, %arg5: memref<1x128xf32, #tpu.memory_space<vmem>>, %arg6: memref<1x128xf32, #tpu.memory_space<vmem>>, %arg7: memref<128x128xbf16, #tpu.memory_space<vmem>>, %arg8: memref<128x128xf32, #tpu.memory_space<vmem>>) attributes {dimension_semantics = [#tpu.dimension_semantics<parallel>, #tpu.dimension_semantics<parallel>, #tpu.dimension_semantics<arbitrary>], iteration_bounds = array<i64: 1, 1, 1>, scalar_prefetch = 0 : i64, scratch_operands = 1 : i64, tpu.core_type = #tpu.core_type<tc>, window_params = [{transform_indices = @transform_0, window_bounds = array<i64: 128, 128>}, {transform_indices = @transform_1, window_bounds = array<i64: 128, 128>}, {transform_indices = @transform_2, window_bounds = array<i64: 1, 128>}, {transform_indices = @transform_3, window_bounds = array<i64: 1, 128>}, {transform_indices = @transform_4, window_bounds = array<i64: 128, 128>}]} {
    %c0_i32 = arith.constant 0 : i32
    %0 = arith.cmpi eq, %arg2, %c0_i32 : i32
    %1 = arith.extui %0 : i1 to i32
    %c0_i32_0 = arith.constant 0 : i32
    %2 = arith.cmpi ne, %1, %c0_i32_0 : i32
    scf.if %2 {
      %cst_15 = arith.constant 0.000000e+00 : f32
      %22 = vector.broadcast %cst_15 : f32 to vector<128x128xf32>
      %c0_16 = arith.constant 0 : index
      %c0_17 = arith.constant 0 : index
      %23 = vector.load %arg8[%c0_16, %c0_17] : memref<128x128xf32, #tpu.memory_space<vmem>>, vector<128x128xf32>
      tpu.vector_store %arg8[%c0_16, %c0_17], %22 {strides = array<i32>} : memref<128x128xf32, #tpu.memory_space<vmem>>, vector<128x128xf32>,
    } else {
    }
    %c0 = arith.constant 0 : index
    %c0_1 = arith.constant 0 : index
    %3 = vector.load %arg3[%c0, %c0_1] : memref<128x128xbf16, #tpu.memory_space<vmem>>, vector<128x128xbf16>
    %4 = arith.extf %3 : vector<128x128xbf16> to vector<128x128xf32>
    %c0_2 = arith.constant 0 : index
    %c0_3 = arith.constant 0 : index
    %5 = vector.load %arg5[%c0_2, %c0_3] : memref<1x128xf32, #tpu.memory_space<vmem>>, vector<1x128xf32>
    %6 = vector.broadcast %5 : vector<1x128xf32> to vector<128x128xf32>
    %7 = arith.mulf %4, %6 : vector<128x128xf32>
    %c0_4 = arith.constant 0 : index
    %c0_5 = arith.constant 0 : index
    %8 = vector.load %arg6[%c0_4, %c0_5] : memref<1x128xf32, #tpu.memory_space<vmem>>, vector<1x128xf32>
    %9 = vector.broadcast %8 : vector<1x128xf32> to vector<128x128xf32>
    %10 = arith.addf %7, %9 : vector<128x128xf32>
    %cst = arith.constant 0.000000e+00 : f32
    %11 = vector.broadcast %cst : f32 to vector<128x128xf32>
    %12 = arith.maximumf %10, %11 : vector<128x128xf32>
    %13 = arith.truncf %12 : vector<128x128xf32> to vector<128x128xbf16>
    %c0_6 = arith.constant 0 : index
    %c0_7 = arith.constant 0 : index
    %14 = vector.load %arg8[%c0_6, %c0_7] : memref<128x128xf32, #tpu.memory_space<vmem>>, vector<128x128xf32>
    %c0_8 = arith.constant 0 : index
    %c0_9 = arith.constant 0 : index
    %15 = vector.load %arg4[%c0_8, %c0_9] : memref<128x128xbf16, #tpu.memory_space<vmem>>, vector<128x128xbf16>
    %cst_10 = arith.constant dense<0.000000e+00> : vector<128x128xf32>
    %16 = tpu.matmul %13, %15, %cst_10 {dimension_numbers = #tpu.dot_dimension_numbers<[1], [0], [0], [1], [0, 0, 1, 1], [], []>} : vector<128x128xbf16>, vector<128x128xbf16>, vector<128x128xf32> -> vector<128x128xf32>
    %17 = arith.addf %14, %16 : vector<128x128xf32>
    %c0_11 = arith.constant 0 : index
    %c0_12 = arith.constant 0 : index
    %18 = vector.load %arg8[%c0_11, %c0_12] : memref<128x128xf32, #tpu.memory_space<vmem>>, vector<128x128xf32>
    tpu.vector_store %arg8[%c0_11, %c0_12], %17 {strides = array<i32>} : memref<128x128xf32, #tpu.memory_space<vmem>>, vector<128x128xf32>,
    %c0_i32_13 = arith.constant 0 : i32
    %19 = arith.cmpi eq, %arg2, %c0_i32_13 : i32
    %20 = arith.extui %19 : i1 to i32
    %c0_i32_14 = arith.constant 0 : i32
    %21 = arith.cmpi ne, %20, %c0_i32_14 : i32
    scf.if %21 {
      %c0_15 = arith.constant 0 : index
      %c0_16 = arith.constant 0 : index
      %22 = vector.load %arg8[%c0_15, %c0_16] : memref<128x128xf32, #tpu.memory_space<vmem>>, vector<128x128xf32>
      %23 = arith.truncf %22 : vector<128x128xf32> to vector<128x128xbf16>
      %c0_17 = arith.constant 0 : index
      %c0_18 = arith.constant 0 : index
      %24 = vector.load %arg7[%c0_17, %c0_18] : memref<128x128xbf16, #tpu.memory_space<vmem>>, vector<128x128xbf16>
      tpu.vector_store %arg7[%c0_17, %c0_18], %23 {strides = array<i32>} : memref<128x128xbf16, #tpu.memory_space<vmem>>, vector<128x128xbf16>,
    } else {
    }
    return
  }
  func.func @transform_0(%arg0: i32, %arg1: i32, %arg2: i32) -> (i32, i32) {
    %c0_i32 = arith.constant 0 : i32
    return %arg0, %arg2 : i32, i32
  }
  func.func @transform_1(%arg0: i32, %arg1: i32, %arg2: i32) -> (i32, i32) {
    %c0_i32 = arith.constant 0 : i32
    return %arg2, %arg1 : i32, i32
  }
  func.func @transform_2(%arg0: i32, %arg1: i32, %arg2: i32) -> (i32, i32) {
    %c0_i32 = arith.constant 0 : i32
    %c0_i32_0 = arith.constant 0 : i32
    return %c0_i32, %arg2 : i32, i32
  }
  func.func @transform_3(%arg0: i32, %arg1: i32, %arg2: i32) -> (i32, i32) {
    %c0_i32 = arith.constant 0 : i32
    %c0_i32_0 = arith.constant 0 : i32
    return %c0_i32, %arg2 : i32, i32
  }
  func.func @transform_4(%arg0: i32, %arg1: i32, %arg2: i32) -> (i32, i32) {
    %c0_i32 = arith.constant 0 : i32
    return %arg0, %arg1 : i32, i32
  }
}

module attributes {stable_mosaic.version = 11 : i64} {
  func.func @_pool_kernel(%arg0: i32, %arg1: memref<4x32x128xbf16, #tpu.memory_space<vmem>>, %arg2: memref<32x128xbf16, #tpu.memory_space<vmem>>) attributes {dimension_semantics = [#tpu.dimension_semantics<parallel>], iteration_bounds = array<i64: 1>, scalar_prefetch = 0 : i64, scratch_operands = 0 : i64, tpu.core_type = #tpu.core_type<tc>, window_params = [{transform_indices = @transform_0, window_bounds = array<i64: 4, 32, 128>}, {transform_indices = @transform_1, window_bounds = array<i64: 32, 128>}]} {
    %c0 = arith.constant 0 : index
    %c0_0 = arith.constant 0 : index
    %c0_1 = arith.constant 0 : index
    %0 = vector.load %arg1[%c0, %c0_0, %c0_1] : memref<4x32x128xbf16, #tpu.memory_space<vmem>>, vector<4x32x128xbf16>
    %1 = arith.extf %0 : vector<4x32x128xbf16> to vector<4x32x128xf32>
    %cst = arith.constant dense<0.000000e+00> : vector<32x128xf32>
    %2 = vector.multi_reduction <add>, %1, %cst [0] : vector<4x32x128xf32> to vector<32x128xf32>
    %cst_2 = arith.constant 4.000000e+00 : f32
    %3 = vector.broadcast %cst_2 : f32 to vector<32x128xf32>
    %4 = arith.divf %2, %3 : vector<32x128xf32>
    %5 = arith.truncf %4 : vector<32x128xf32> to vector<32x128xbf16>
    %c0_3 = arith.constant 0 : index
    %c0_4 = arith.constant 0 : index
    %6 = vector.load %arg2[%c0_3, %c0_4] : memref<32x128xbf16, #tpu.memory_space<vmem>>, vector<32x128xbf16>
    tpu.vector_store %arg2[%c0_3, %c0_4], %5 {strides = array<i32>} : memref<32x128xbf16, #tpu.memory_space<vmem>>, vector<32x128xbf16>,
    return
  }
  func.func @transform_0(%arg0: i32) -> (i32, i32, i32) {
    %c0_i32 = arith.constant 0 : i32
    %c0_i32_0 = arith.constant 0 : i32
    %c0_i32_1 = arith.constant 0 : i32
    return %c0_i32, %arg0, %c0_i32_0 : i32, i32, i32
  }
  func.func @transform_1(%arg0: i32) -> (i32, i32) {
    %c0_i32 = arith.constant 0 : i32
    %c0_i32_0 = arith.constant 0 : i32
    return %arg0, %c0_i32 : i32, i32
  }
}

module attributes {stable_mosaic.version = 11 : i64} {
  func.func @kernel(%arg0: i32, %arg1: i32, %arg2: i32, %arg3: memref<32x128xbf16, #tpu.memory_space<vmem>>, %arg4: memref<128x128xbf16, #tpu.memory_space<vmem>>, %arg5: memref<1x128xf32, #tpu.memory_space<vmem>>, %arg6: memref<1x128xf32, #tpu.memory_space<vmem>>, %arg7: memref<1x128xf32, #tpu.memory_space<vmem>>, %arg8: memref<1x128xf32, #tpu.memory_space<vmem>>, %arg9: memref<32x128xbf16, #tpu.memory_space<vmem>>, %arg10: memref<32x128xf32, #tpu.memory_space<vmem>>) attributes {dimension_semantics = [#tpu.dimension_semantics<parallel>, #tpu.dimension_semantics<parallel>, #tpu.dimension_semantics<arbitrary>], iteration_bounds = array<i64: 1, 1, 1>, scalar_prefetch = 0 : i64, scratch_operands = 1 : i64, tpu.core_type = #tpu.core_type<tc>, window_params = [{transform_indices = @transform_0, window_bounds = array<i64: 32, 128>}, {transform_indices = @transform_1, window_bounds = array<i64: 128, 128>}, {transform_indices = @transform_2, window_bounds = array<i64: 1, 128>}, {transform_indices = @transform_3, window_bounds = array<i64: 1, 128>}, {transform_indices = @transform_4, window_bounds = array<i64: 1, 128>}, {transform_indices = @transform_5, window_bounds = array<i64: 1, 128>}, {transform_indices = @transform_6, window_bounds = array<i64: 32, 128>}]} {
    %c0_i32 = arith.constant 0 : i32
    %0 = arith.cmpi eq, %arg2, %c0_i32 : i32
    %1 = arith.extui %0 : i1 to i32
    %c0_i32_0 = arith.constant 0 : i32
    %2 = arith.cmpi ne, %1, %c0_i32_0 : i32
    scf.if %2 {
      %cst_15 = arith.constant 0.000000e+00 : f32
      %22 = vector.broadcast %cst_15 : f32 to vector<32x128xf32>
      %c0_16 = arith.constant 0 : index
      %c0_17 = arith.constant 0 : index
      %23 = vector.load %arg10[%c0_16, %c0_17] : memref<32x128xf32, #tpu.memory_space<vmem>>, vector<32x128xf32>
      tpu.vector_store %arg10[%c0_16, %c0_17], %22 {strides = array<i32>} : memref<32x128xf32, #tpu.memory_space<vmem>>, vector<32x128xf32>,
    } else {
    }
    %c0 = arith.constant 0 : index
    %c0_1 = arith.constant 0 : index
    %3 = vector.load %arg3[%c0, %c0_1] : memref<32x128xbf16, #tpu.memory_space<vmem>>, vector<32x128xbf16>
    %4 = arith.extf %3 : vector<32x128xbf16> to vector<32x128xf32>
    %c0_2 = arith.constant 0 : index
    %c0_3 = arith.constant 0 : index
    %5 = vector.load %arg5[%c0_2, %c0_3] : memref<1x128xf32, #tpu.memory_space<vmem>>, vector<1x128xf32>
    %6 = vector.broadcast %5 : vector<1x128xf32> to vector<32x128xf32>
    %7 = arith.mulf %4, %6 : vector<32x128xf32>
    %c0_4 = arith.constant 0 : index
    %c0_5 = arith.constant 0 : index
    %8 = vector.load %arg6[%c0_4, %c0_5] : memref<1x128xf32, #tpu.memory_space<vmem>>, vector<1x128xf32>
    %9 = vector.broadcast %8 : vector<1x128xf32> to vector<32x128xf32>
    %10 = arith.addf %7, %9 : vector<32x128xf32>
    %cst = arith.constant 0.000000e+00 : f32
    %11 = vector.broadcast %cst : f32 to vector<32x128xf32>
    %12 = arith.maximumf %10, %11 : vector<32x128xf32>
    %13 = arith.truncf %12 : vector<32x128xf32> to vector<32x128xbf16>
    %c0_6 = arith.constant 0 : index
    %c0_7 = arith.constant 0 : index
    %14 = vector.load %arg10[%c0_6, %c0_7] : memref<32x128xf32, #tpu.memory_space<vmem>>, vector<32x128xf32>
    %c0_8 = arith.constant 0 : index
    %c0_9 = arith.constant 0 : index
    %15 = vector.load %arg4[%c0_8, %c0_9] : memref<128x128xbf16, #tpu.memory_space<vmem>>, vector<128x128xbf16>
    %cst_10 = arith.constant dense<0.000000e+00> : vector<32x128xf32>
    %16 = tpu.matmul %13, %15, %cst_10 {dimension_numbers = #tpu.dot_dimension_numbers<[1], [0], [0], [1], [0, 0, 1, 1], [], []>} : vector<32x128xbf16>, vector<128x128xbf16>, vector<32x128xf32> -> vector<32x128xf32>
    %17 = arith.addf %14, %16 : vector<32x128xf32>
    %c0_11 = arith.constant 0 : index
    %c0_12 = arith.constant 0 : index
    %18 = vector.load %arg10[%c0_11, %c0_12] : memref<32x128xf32, #tpu.memory_space<vmem>>, vector<32x128xf32>
    tpu.vector_store %arg10[%c0_11, %c0_12], %17 {strides = array<i32>} : memref<32x128xf32, #tpu.memory_space<vmem>>, vector<32x128xf32>,
    %c0_i32_13 = arith.constant 0 : i32
    %19 = arith.cmpi eq, %arg2, %c0_i32_13 : i32
    %20 = arith.extui %19 : i1 to i32
    %c0_i32_14 = arith.constant 0 : i32
    %21 = arith.cmpi ne, %20, %c0_i32_14 : i32
    scf.if %21 {
      %c0_15 = arith.constant 0 : index
      %c0_16 = arith.constant 0 : index
      %22 = vector.load %arg10[%c0_15, %c0_16] : memref<32x128xf32, #tpu.memory_space<vmem>>, vector<32x128xf32>
      %c0_17 = arith.constant 0 : index
      %c0_18 = arith.constant 0 : index
      %23 = vector.load %arg7[%c0_17, %c0_18] : memref<1x128xf32, #tpu.memory_space<vmem>>, vector<1x128xf32>
      %24 = vector.broadcast %23 : vector<1x128xf32> to vector<32x128xf32>
      %25 = arith.mulf %22, %24 : vector<32x128xf32>
      %c0_19 = arith.constant 0 : index
      %c0_20 = arith.constant 0 : index
      %26 = vector.load %arg8[%c0_19, %c0_20] : memref<1x128xf32, #tpu.memory_space<vmem>>, vector<1x128xf32>
      %27 = vector.broadcast %26 : vector<1x128xf32> to vector<32x128xf32>
      %28 = arith.addf %25, %27 : vector<32x128xf32>
      %cst_21 = arith.constant 0.000000e+00 : f32
      %29 = vector.broadcast %cst_21 : f32 to vector<32x128xf32>
      %30 = arith.maximumf %28, %29 : vector<32x128xf32>
      %31 = arith.truncf %30 : vector<32x128xf32> to vector<32x128xbf16>
      %c0_22 = arith.constant 0 : index
      %c0_23 = arith.constant 0 : index
      %32 = vector.load %arg9[%c0_22, %c0_23] : memref<32x128xbf16, #tpu.memory_space<vmem>>, vector<32x128xbf16>
      tpu.vector_store %arg9[%c0_22, %c0_23], %31 {strides = array<i32>} : memref<32x128xbf16, #tpu.memory_space<vmem>>, vector<32x128xbf16>,
    } else {
    }
    return
  }
  func.func @transform_0(%arg0: i32, %arg1: i32, %arg2: i32) -> (i32, i32) {
    %c0_i32 = arith.constant 0 : i32
    return %arg0, %arg2 : i32, i32
  }
  func.func @transform_1(%arg0: i32, %arg1: i32, %arg2: i32) -> (i32, i32) {
    %c0_i32 = arith.constant 0 : i32
    return %arg2, %arg1 : i32, i32
  }
  func.func @transform_2(%arg0: i32, %arg1: i32, %arg2: i32) -> (i32, i32) {
    %c0_i32 = arith.constant 0 : i32
    %c0_i32_0 = arith.constant 0 : i32
    return %c0_i32, %arg2 : i32, i32
  }
  func.func @transform_3(%arg0: i32, %arg1: i32, %arg2: i32) -> (i32, i32) {
    %c0_i32 = arith.constant 0 : i32
    %c0_i32_0 = arith.constant 0 : i32
    return %c0_i32, %arg2 : i32, i32
  }
  func.func @transform_4(%arg0: i32, %arg1: i32, %arg2: i32) -> (i32, i32) {
    %c0_i32 = arith.constant 0 : i32
    %c0_i32_0 = arith.constant 0 : i32
    return %c0_i32, %arg1 : i32, i32
  }
  func.func @transform_5(%arg0: i32, %arg1: i32, %arg2: i32) -> (i32, i32) {
    %c0_i32 = arith.constant 0 : i32
    %c0_i32_0 = arith.constant 0 : i32
    return %c0_i32, %arg1 : i32, i32
  }
  func.func @transform_6(%arg0: i32, %arg1: i32, %arg2: i32) -> (i32, i32) {
    %c0_i32 = arith.constant 0 : i32
    return %arg0, %arg1 : i32, i32
  }
}

module attributes {stable_mosaic.version = 11 : i64} {
  func.func @kernel(%arg0: i32, %arg1: i32, %arg2: i32, %arg3: memref<32x384xbf16, #tpu.memory_space<vmem>>, %arg4: memref<384x128xbf16, #tpu.memory_space<vmem>>, %arg5: memref<32x128xbf16, #tpu.memory_space<vmem>>, %arg6: memref<32x128xf32, #tpu.memory_space<vmem>>) attributes {dimension_semantics = [#tpu.dimension_semantics<parallel>, #tpu.dimension_semantics<parallel>, #tpu.dimension_semantics<arbitrary>], iteration_bounds = array<i64: 1, 1, 1>, scalar_prefetch = 0 : i64, scratch_operands = 1 : i64, tpu.core_type = #tpu.core_type<tc>, window_params = [{transform_indices = @transform_0, window_bounds = array<i64: 32, 384>}, {transform_indices = @transform_1, window_bounds = array<i64: 384, 128>}, {transform_indices = @transform_2, window_bounds = array<i64: 32, 128>}]} {
    %c0_i32 = arith.constant 0 : i32
    %0 = arith.cmpi eq, %arg2, %c0_i32 : i32
    %1 = arith.extui %0 : i1 to i32
    %c0_i32_0 = arith.constant 0 : i32
    %2 = arith.cmpi ne, %1, %c0_i32_0 : i32
    scf.if %2 {
      %cst_10 = arith.constant 0.000000e+00 : f32
      %12 = vector.broadcast %cst_10 : f32 to vector<32x128xf32>
      %c0_11 = arith.constant 0 : index
      %c0_12 = arith.constant 0 : index
      %13 = vector.load %arg6[%c0_11, %c0_12] : memref<32x128xf32, #tpu.memory_space<vmem>>, vector<32x128xf32>
      tpu.vector_store %arg6[%c0_11, %c0_12], %12 {strides = array<i32>} : memref<32x128xf32, #tpu.memory_space<vmem>>, vector<32x128xf32>,
    } else {
    }
    %c0 = arith.constant 0 : index
    %c0_1 = arith.constant 0 : index
    %3 = vector.load %arg3[%c0, %c0_1] : memref<32x384xbf16, #tpu.memory_space<vmem>>, vector<32x384xbf16>
    %c0_2 = arith.constant 0 : index
    %c0_3 = arith.constant 0 : index
    %4 = vector.load %arg6[%c0_2, %c0_3] : memref<32x128xf32, #tpu.memory_space<vmem>>, vector<32x128xf32>
    %c0_4 = arith.constant 0 : index
    %c0_5 = arith.constant 0 : index
    %5 = vector.load %arg4[%c0_4, %c0_5] : memref<384x128xbf16, #tpu.memory_space<vmem>>, vector<384x128xbf16>
    %cst = arith.constant dense<0.000000e+00> : vector<32x128xf32>
    %6 = tpu.matmul %3, %5, %cst {dimension_numbers = #tpu.dot_dimension_numbers<[1], [0], [0], [1], [0, 0, 1, 1], [], []>} : vector<32x384xbf16>, vector<384x128xbf16>, vector<32x128xf32> -> vector<32x128xf32>
    %7 = arith.addf %4, %6 : vector<32x128xf32>
    %c0_6 = arith.constant 0 : index
    %c0_7 = arith.constant 0 : index
    %8 = vector.load %arg6[%c0_6, %c0_7] : memref<32x128xf32, #tpu.memory_space<vmem>>, vector<32x128xf32>
    tpu.vector_store %arg6[%c0_6, %c0_7], %7 {strides = array<i32>} : memref<32x128xf32, #tpu.memory_space<vmem>>, vector<32x128xf32>,
    %c0_i32_8 = arith.constant 0 : i32
    %9 = arith.cmpi eq, %arg2, %c0_i32_8 : i32
    %10 = arith.extui %9 : i1 to i32
    %c0_i32_9 = arith.constant 0 : i32
    %11 = arith.cmpi ne, %10, %c0_i32_9 : i32
    scf.if %11 {
      %c0_10 = arith.constant 0 : index
      %c0_11 = arith.constant 0 : index
      %12 = vector.load %arg6[%c0_10, %c0_11] : memref<32x128xf32, #tpu.memory_space<vmem>>, vector<32x128xf32>
      %13 = arith.truncf %12 : vector<32x128xf32> to vector<32x128xbf16>
      %c0_12 = arith.constant 0 : index
      %c0_13 = arith.constant 0 : index
      %14 = vector.load %arg5[%c0_12, %c0_13] : memref<32x128xbf16, #tpu.memory_space<vmem>>, vector<32x128xbf16>
      tpu.vector_store %arg5[%c0_12, %c0_13], %13 {strides = array<i32>} : memref<32x128xbf16, #tpu.memory_space<vmem>>, vector<32x128xbf16>,
    } else {
    }
    return
  }
  func.func @transform_0(%arg0: i32, %arg1: i32, %arg2: i32) -> (i32, i32) {
    %c0_i32 = arith.constant 0 : i32
    return %arg0, %arg2 : i32, i32
  }
  func.func @transform_1(%arg0: i32, %arg1: i32, %arg2: i32) -> (i32, i32) {
    %c0_i32 = arith.constant 0 : i32
    return %arg2, %arg1 : i32, i32
  }
  func.func @transform_2(%arg0: i32, %arg1: i32, %arg2: i32) -> (i32, i32) {
    %c0_i32 = arith.constant 0 : i32
    return %arg0, %arg1 : i32, i32
  }
}

module attributes {stable_mosaic.version = 11 : i64} {
  func.func @kernel(%arg0: i32, %arg1: i32, %arg2: i32, %arg3: memref<32x128xbf16, #tpu.memory_space<vmem>>, %arg4: memref<128x128xbf16, #tpu.memory_space<vmem>>, %arg5: memref<1x128xf32, #tpu.memory_space<vmem>>, %arg6: memref<1x128xf32, #tpu.memory_space<vmem>>, %arg7: memref<32x128xbf16, #tpu.memory_space<vmem>>, %arg8: memref<32x128xf32, #tpu.memory_space<vmem>>) attributes {dimension_semantics = [#tpu.dimension_semantics<parallel>, #tpu.dimension_semantics<parallel>, #tpu.dimension_semantics<arbitrary>], iteration_bounds = array<i64: 1, 1, 1>, scalar_prefetch = 0 : i64, scratch_operands = 1 : i64, tpu.core_type = #tpu.core_type<tc>, window_params = [{transform_indices = @transform_0, window_bounds = array<i64: 32, 128>}, {transform_indices = @transform_1, window_bounds = array<i64: 128, 128>}, {transform_indices = @transform_2, window_bounds = array<i64: 1, 128>}, {transform_indices = @transform_3, window_bounds = array<i64: 1, 128>}, {transform_indices = @transform_4, window_bounds = array<i64: 32, 128>}]} {
    %c0_i32 = arith.constant 0 : i32
    %0 = arith.cmpi eq, %arg2, %c0_i32 : i32
    %1 = arith.extui %0 : i1 to i32
    %c0_i32_0 = arith.constant 0 : i32
    %2 = arith.cmpi ne, %1, %c0_i32_0 : i32
    scf.if %2 {
      %cst_15 = arith.constant 0.000000e+00 : f32
      %22 = vector.broadcast %cst_15 : f32 to vector<32x128xf32>
      %c0_16 = arith.constant 0 : index
      %c0_17 = arith.constant 0 : index
      %23 = vector.load %arg8[%c0_16, %c0_17] : memref<32x128xf32, #tpu.memory_space<vmem>>, vector<32x128xf32>
      tpu.vector_store %arg8[%c0_16, %c0_17], %22 {strides = array<i32>} : memref<32x128xf32, #tpu.memory_space<vmem>>, vector<32x128xf32>,
    } else {
    }
    %c0 = arith.constant 0 : index
    %c0_1 = arith.constant 0 : index
    %3 = vector.load %arg3[%c0, %c0_1] : memref<32x128xbf16, #tpu.memory_space<vmem>>, vector<32x128xbf16>
    %4 = arith.extf %3 : vector<32x128xbf16> to vector<32x128xf32>
    %c0_2 = arith.constant 0 : index
    %c0_3 = arith.constant 0 : index
    %5 = vector.load %arg5[%c0_2, %c0_3] : memref<1x128xf32, #tpu.memory_space<vmem>>, vector<1x128xf32>
    %6 = vector.broadcast %5 : vector<1x128xf32> to vector<32x128xf32>
    %7 = arith.mulf %4, %6 : vector<32x128xf32>
    %c0_4 = arith.constant 0 : index
    %c0_5 = arith.constant 0 : index
    %8 = vector.load %arg6[%c0_4, %c0_5] : memref<1x128xf32, #tpu.memory_space<vmem>>, vector<1x128xf32>
    %9 = vector.broadcast %8 : vector<1x128xf32> to vector<32x128xf32>
    %10 = arith.addf %7, %9 : vector<32x128xf32>
    %cst = arith.constant 0.000000e+00 : f32
    %11 = vector.broadcast %cst : f32 to vector<32x128xf32>
    %12 = arith.maximumf %10, %11 : vector<32x128xf32>
    %13 = arith.truncf %12 : vector<32x128xf32> to vector<32x128xbf16>
    %c0_6 = arith.constant 0 : index
    %c0_7 = arith.constant 0 : index
    %14 = vector.load %arg8[%c0_6, %c0_7] : memref<32x128xf32, #tpu.memory_space<vmem>>, vector<32x128xf32>
    %c0_8 = arith.constant 0 : index
    %c0_9 = arith.constant 0 : index
    %15 = vector.load %arg4[%c0_8, %c0_9] : memref<128x128xbf16, #tpu.memory_space<vmem>>, vector<128x128xbf16>
    %cst_10 = arith.constant dense<0.000000e+00> : vector<32x128xf32>
    %16 = tpu.matmul %13, %15, %cst_10 {dimension_numbers = #tpu.dot_dimension_numbers<[1], [0], [0], [1], [0, 0, 1, 1], [], []>} : vector<32x128xbf16>, vector<128x128xbf16>, vector<32x128xf32> -> vector<32x128xf32>
    %17 = arith.addf %14, %16 : vector<32x128xf32>
    %c0_11 = arith.constant 0 : index
    %c0_12 = arith.constant 0 : index
    %18 = vector.load %arg8[%c0_11, %c0_12] : memref<32x128xf32, #tpu.memory_space<vmem>>, vector<32x128xf32>
    tpu.vector_store %arg8[%c0_11, %c0_12], %17 {strides = array<i32>} : memref<32x128xf32, #tpu.memory_space<vmem>>, vector<32x128xf32>,
    %c0_i32_13 = arith.constant 0 : i32
    %19 = arith.cmpi eq, %arg2, %c0_i32_13 : i32
    %20 = arith.extui %19 : i1 to i32
    %c0_i32_14 = arith.constant 0 : i32
    %21 = arith.cmpi ne, %20, %c0_i32_14 : i32
    scf.if %21 {
      %c0_15 = arith.constant 0 : index
      %c0_16 = arith.constant 0 : index
      %22 = vector.load %arg8[%c0_15, %c0_16] : memref<32x128xf32, #tpu.memory_space<vmem>>, vector<32x128xf32>
      %23 = arith.truncf %22 : vector<32x128xf32> to vector<32x128xbf16>
      %c0_17 = arith.constant 0 : index
      %c0_18 = arith.constant 0 : index
      %24 = vector.load %arg7[%c0_17, %c0_18] : memref<32x128xbf16, #tpu.memory_space<vmem>>, vector<32x128xbf16>
      tpu.vector_store %arg7[%c0_17, %c0_18], %23 {strides = array<i32>} : memref<32x128xbf16, #tpu.memory_space<vmem>>, vector<32x128xbf16>,
    } else {
    }
    return
  }
  func.func @transform_0(%arg0: i32, %arg1: i32, %arg2: i32) -> (i32, i32) {
    %c0_i32 = arith.constant 0 : i32
    return %arg0, %arg2 : i32, i32
  }
  func.func @transform_1(%arg0: i32, %arg1: i32, %arg2: i32) -> (i32, i32) {
    %c0_i32 = arith.constant 0 : i32
    return %arg2, %arg1 : i32, i32
  }
  func.func @transform_2(%arg0: i32, %arg1: i32, %arg2: i32) -> (i32, i32) {
    %c0_i32 = arith.constant 0 : i32
    %c0_i32_0 = arith.constant 0 : i32
    return %c0_i32, %arg2 : i32, i32
  }
  func.func @transform_3(%arg0: i32, %arg1: i32, %arg2: i32) -> (i32, i32) {
    %c0_i32 = arith.constant 0 : i32
    %c0_i32_0 = arith.constant 0 : i32
    return %c0_i32, %arg2 : i32, i32
  }
  func.func @transform_4(%arg0: i32, %arg1: i32, %arg2: i32) -> (i32, i32) {
    %c0_i32 = arith.constant 0 : i32
    return %arg0, %arg1 : i32, i32
  }
}

module attributes {stable_mosaic.version = 11 : i64} {
  func.func @_pool_kernel(%arg0: i32, %arg1: memref<4x16x128xbf16, #tpu.memory_space<vmem>>, %arg2: memref<16x128xbf16, #tpu.memory_space<vmem>>) attributes {dimension_semantics = [#tpu.dimension_semantics<parallel>], iteration_bounds = array<i64: 1>, scalar_prefetch = 0 : i64, scratch_operands = 0 : i64, tpu.core_type = #tpu.core_type<tc>, window_params = [{transform_indices = @transform_0, window_bounds = array<i64: 4, 16, 128>}, {transform_indices = @transform_1, window_bounds = array<i64: 16, 128>}]} {
    %c0 = arith.constant 0 : index
    %c0_0 = arith.constant 0 : index
    %c0_1 = arith.constant 0 : index
    %0 = vector.load %arg1[%c0, %c0_0, %c0_1] : memref<4x16x128xbf16, #tpu.memory_space<vmem>>, vector<4x16x128xbf16>
    %1 = arith.extf %0 : vector<4x16x128xbf16> to vector<4x16x128xf32>
    %cst = arith.constant dense<0.000000e+00> : vector<16x128xf32>
    %2 = vector.multi_reduction <add>, %1, %cst [0] : vector<4x16x128xf32> to vector<16x128xf32>
    %cst_2 = arith.constant 4.000000e+00 : f32
    %3 = vector.broadcast %cst_2 : f32 to vector<16x128xf32>
    %4 = arith.divf %2, %3 : vector<16x128xf32>
    %5 = arith.truncf %4 : vector<16x128xf32> to vector<16x128xbf16>
    %c0_3 = arith.constant 0 : index
    %c0_4 = arith.constant 0 : index
    %6 = vector.load %arg2[%c0_3, %c0_4] : memref<16x128xbf16, #tpu.memory_space<vmem>>, vector<16x128xbf16>
    tpu.vector_store %arg2[%c0_3, %c0_4], %5 {strides = array<i32>} : memref<16x128xbf16, #tpu.memory_space<vmem>>, vector<16x128xbf16>,
    return
  }
  func.func @transform_0(%arg0: i32) -> (i32, i32, i32) {
    %c0_i32 = arith.constant 0 : i32
    %c0_i32_0 = arith.constant 0 : i32
    %c0_i32_1 = arith.constant 0 : i32
    return %c0_i32, %arg0, %c0_i32_0 : i32, i32, i32
  }
  func.func @transform_1(%arg0: i32) -> (i32, i32) {
    %c0_i32 = arith.constant 0 : i32
    %c0_i32_0 = arith.constant 0 : i32
    return %arg0, %c0_i32 : i32, i32
  }
}

module attributes {stable_mosaic.version = 11 : i64} {
  func.func @kernel(%arg0: i32, %arg1: i32, %arg2: i32, %arg3: memref<16x128xbf16, #tpu.memory_space<vmem>>, %arg4: memref<128x128xbf16, #tpu.memory_space<vmem>>, %arg5: memref<1x128xf32, #tpu.memory_space<vmem>>, %arg6: memref<1x128xf32, #tpu.memory_space<vmem>>, %arg7: memref<1x128xf32, #tpu.memory_space<vmem>>, %arg8: memref<1x128xf32, #tpu.memory_space<vmem>>, %arg9: memref<16x128xbf16, #tpu.memory_space<vmem>>, %arg10: memref<16x128xf32, #tpu.memory_space<vmem>>) attributes {dimension_semantics = [#tpu.dimension_semantics<parallel>, #tpu.dimension_semantics<parallel>, #tpu.dimension_semantics<arbitrary>], iteration_bounds = array<i64: 1, 1, 1>, scalar_prefetch = 0 : i64, scratch_operands = 1 : i64, tpu.core_type = #tpu.core_type<tc>, window_params = [{transform_indices = @transform_0, window_bounds = array<i64: 16, 128>}, {transform_indices = @transform_1, window_bounds = array<i64: 128, 128>}, {transform_indices = @transform_2, window_bounds = array<i64: 1, 128>}, {transform_indices = @transform_3, window_bounds = array<i64: 1, 128>}, {transform_indices = @transform_4, window_bounds = array<i64: 1, 128>}, {transform_indices = @transform_5, window_bounds = array<i64: 1, 128>}, {transform_indices = @transform_6, window_bounds = array<i64: 16, 128>}]} {
    %c0_i32 = arith.constant 0 : i32
    %0 = arith.cmpi eq, %arg2, %c0_i32 : i32
    %1 = arith.extui %0 : i1 to i32
    %c0_i32_0 = arith.constant 0 : i32
    %2 = arith.cmpi ne, %1, %c0_i32_0 : i32
    scf.if %2 {
      %cst_15 = arith.constant 0.000000e+00 : f32
      %22 = vector.broadcast %cst_15 : f32 to vector<16x128xf32>
      %c0_16 = arith.constant 0 : index
      %c0_17 = arith.constant 0 : index
      %23 = vector.load %arg10[%c0_16, %c0_17] : memref<16x128xf32, #tpu.memory_space<vmem>>, vector<16x128xf32>
      tpu.vector_store %arg10[%c0_16, %c0_17], %22 {strides = array<i32>} : memref<16x128xf32, #tpu.memory_space<vmem>>, vector<16x128xf32>,
    } else {
    }
    %c0 = arith.constant 0 : index
    %c0_1 = arith.constant 0 : index
    %3 = vector.load %arg3[%c0, %c0_1] : memref<16x128xbf16, #tpu.memory_space<vmem>>, vector<16x128xbf16>
    %4 = arith.extf %3 : vector<16x128xbf16> to vector<16x128xf32>
    %c0_2 = arith.constant 0 : index
    %c0_3 = arith.constant 0 : index
    %5 = vector.load %arg5[%c0_2, %c0_3] : memref<1x128xf32, #tpu.memory_space<vmem>>, vector<1x128xf32>
    %6 = vector.broadcast %5 : vector<1x128xf32> to vector<16x128xf32>
    %7 = arith.mulf %4, %6 : vector<16x128xf32>
    %c0_4 = arith.constant 0 : index
    %c0_5 = arith.constant 0 : index
    %8 = vector.load %arg6[%c0_4, %c0_5] : memref<1x128xf32, #tpu.memory_space<vmem>>, vector<1x128xf32>
    %9 = vector.broadcast %8 : vector<1x128xf32> to vector<16x128xf32>
    %10 = arith.addf %7, %9 : vector<16x128xf32>
    %cst = arith.constant 0.000000e+00 : f32
    %11 = vector.broadcast %cst : f32 to vector<16x128xf32>
    %12 = arith.maximumf %10, %11 : vector<16x128xf32>
    %13 = arith.truncf %12 : vector<16x128xf32> to vector<16x128xbf16>
    %c0_6 = arith.constant 0 : index
    %c0_7 = arith.constant 0 : index
    %14 = vector.load %arg10[%c0_6, %c0_7] : memref<16x128xf32, #tpu.memory_space<vmem>>, vector<16x128xf32>
    %c0_8 = arith.constant 0 : index
    %c0_9 = arith.constant 0 : index
    %15 = vector.load %arg4[%c0_8, %c0_9] : memref<128x128xbf16, #tpu.memory_space<vmem>>, vector<128x128xbf16>
    %cst_10 = arith.constant dense<0.000000e+00> : vector<16x128xf32>
    %16 = tpu.matmul %13, %15, %cst_10 {dimension_numbers = #tpu.dot_dimension_numbers<[1], [0], [0], [1], [0, 0, 1, 1], [], []>} : vector<16x128xbf16>, vector<128x128xbf16>, vector<16x128xf32> -> vector<16x128xf32>
    %17 = arith.addf %14, %16 : vector<16x128xf32>
    %c0_11 = arith.constant 0 : index
    %c0_12 = arith.constant 0 : index
    %18 = vector.load %arg10[%c0_11, %c0_12] : memref<16x128xf32, #tpu.memory_space<vmem>>, vector<16x128xf32>
    tpu.vector_store %arg10[%c0_11, %c0_12], %17 {strides = array<i32>} : memref<16x128xf32, #tpu.memory_space<vmem>>, vector<16x128xf32>,
    %c0_i32_13 = arith.constant 0 : i32
    %19 = arith.cmpi eq, %arg2, %c0_i32_13 : i32
    %20 = arith.extui %19 : i1 to i32
    %c0_i32_14 = arith.constant 0 : i32
    %21 = arith.cmpi ne, %20, %c0_i32_14 : i32
    scf.if %21 {
      %c0_15 = arith.constant 0 : index
      %c0_16 = arith.constant 0 : index
      %22 = vector.load %arg10[%c0_15, %c0_16] : memref<16x128xf32, #tpu.memory_space<vmem>>, vector<16x128xf32>
      %c0_17 = arith.constant 0 : index
      %c0_18 = arith.constant 0 : index
      %23 = vector.load %arg7[%c0_17, %c0_18] : memref<1x128xf32, #tpu.memory_space<vmem>>, vector<1x128xf32>
      %24 = vector.broadcast %23 : vector<1x128xf32> to vector<16x128xf32>
      %25 = arith.mulf %22, %24 : vector<16x128xf32>
      %c0_19 = arith.constant 0 : index
      %c0_20 = arith.constant 0 : index
      %26 = vector.load %arg8[%c0_19, %c0_20] : memref<1x128xf32, #tpu.memory_space<vmem>>, vector<1x128xf32>
      %27 = vector.broadcast %26 : vector<1x128xf32> to vector<16x128xf32>
      %28 = arith.addf %25, %27 : vector<16x128xf32>
      %cst_21 = arith.constant 0.000000e+00 : f32
      %29 = vector.broadcast %cst_21 : f32 to vector<16x128xf32>
      %30 = arith.maximumf %28, %29 : vector<16x128xf32>
      %31 = arith.truncf %30 : vector<16x128xf32> to vector<16x128xbf16>
      %c0_22 = arith.constant 0 : index
      %c0_23 = arith.constant 0 : index
      %32 = vector.load %arg9[%c0_22, %c0_23] : memref<16x128xbf16, #tpu.memory_space<vmem>>, vector<16x128xbf16>
      tpu.vector_store %arg9[%c0_22, %c0_23], %31 {strides = array<i32>} : memref<16x128xbf16, #tpu.memory_space<vmem>>, vector<16x128xbf16>,
    } else {
    }
    return
  }
  func.func @transform_0(%arg0: i32, %arg1: i32, %arg2: i32) -> (i32, i32) {
    %c0_i32 = arith.constant 0 : i32
    return %arg0, %arg2 : i32, i32
  }
  func.func @transform_1(%arg0: i32, %arg1: i32, %arg2: i32) -> (i32, i32) {
    %c0_i32 = arith.constant 0 : i32
    return %arg2, %arg1 : i32, i32
  }
  func.func @transform_2(%arg0: i32, %arg1: i32, %arg2: i32) -> (i32, i32) {
    %c0_i32 = arith.constant 0 : i32
    %c0_i32_0 = arith.constant 0 : i32
    return %c0_i32, %arg2 : i32, i32
  }
  func.func @transform_3(%arg0: i32, %arg1: i32, %arg2: i32) -> (i32, i32) {
    %c0_i32 = arith.constant 0 : i32
    %c0_i32_0 = arith.constant 0 : i32
    return %c0_i32, %arg2 : i32, i32
  }
  func.func @transform_4(%arg0: i32, %arg1: i32, %arg2: i32) -> (i32, i32) {
    %c0_i32 = arith.constant 0 : i32
    %c0_i32_0 = arith.constant 0 : i32
    return %c0_i32, %arg1 : i32, i32
  }
  func.func @transform_5(%arg0: i32, %arg1: i32, %arg2: i32) -> (i32, i32) {
    %c0_i32 = arith.constant 0 : i32
    %c0_i32_0 = arith.constant 0 : i32
    return %c0_i32, %arg1 : i32, i32
  }
  func.func @transform_6(%arg0: i32, %arg1: i32, %arg2: i32) -> (i32, i32) {
    %c0_i32 = arith.constant 0 : i32
    return %arg0, %arg1 : i32, i32
  }
}

module attributes {stable_mosaic.version = 11 : i64} {
  func.func @kernel(%arg0: i32, %arg1: i32, %arg2: i32, %arg3: memref<16x384xbf16, #tpu.memory_space<vmem>>, %arg4: memref<384x128xbf16, #tpu.memory_space<vmem>>, %arg5: memref<16x128xbf16, #tpu.memory_space<vmem>>, %arg6: memref<16x128xf32, #tpu.memory_space<vmem>>) attributes {dimension_semantics = [#tpu.dimension_semantics<parallel>, #tpu.dimension_semantics<parallel>, #tpu.dimension_semantics<arbitrary>], iteration_bounds = array<i64: 1, 1, 1>, scalar_prefetch = 0 : i64, scratch_operands = 1 : i64, tpu.core_type = #tpu.core_type<tc>, window_params = [{transform_indices = @transform_0, window_bounds = array<i64: 16, 384>}, {transform_indices = @transform_1, window_bounds = array<i64: 384, 128>}, {transform_indices = @transform_2, window_bounds = array<i64: 16, 128>}]} {
    %c0_i32 = arith.constant 0 : i32
    %0 = arith.cmpi eq, %arg2, %c0_i32 : i32
    %1 = arith.extui %0 : i1 to i32
    %c0_i32_0 = arith.constant 0 : i32
    %2 = arith.cmpi ne, %1, %c0_i32_0 : i32
    scf.if %2 {
      %cst_10 = arith.constant 0.000000e+00 : f32
      %12 = vector.broadcast %cst_10 : f32 to vector<16x128xf32>
      %c0_11 = arith.constant 0 : index
      %c0_12 = arith.constant 0 : index
      %13 = vector.load %arg6[%c0_11, %c0_12] : memref<16x128xf32, #tpu.memory_space<vmem>>, vector<16x128xf32>
      tpu.vector_store %arg6[%c0_11, %c0_12], %12 {strides = array<i32>} : memref<16x128xf32, #tpu.memory_space<vmem>>, vector<16x128xf32>,
    } else {
    }
    %c0 = arith.constant 0 : index
    %c0_1 = arith.constant 0 : index
    %3 = vector.load %arg3[%c0, %c0_1] : memref<16x384xbf16, #tpu.memory_space<vmem>>, vector<16x384xbf16>
    %c0_2 = arith.constant 0 : index
    %c0_3 = arith.constant 0 : index
    %4 = vector.load %arg6[%c0_2, %c0_3] : memref<16x128xf32, #tpu.memory_space<vmem>>, vector<16x128xf32>
    %c0_4 = arith.constant 0 : index
    %c0_5 = arith.constant 0 : index
    %5 = vector.load %arg4[%c0_4, %c0_5] : memref<384x128xbf16, #tpu.memory_space<vmem>>, vector<384x128xbf16>
    %cst = arith.constant dense<0.000000e+00> : vector<16x128xf32>
    %6 = tpu.matmul %3, %5, %cst {dimension_numbers = #tpu.dot_dimension_numbers<[1], [0], [0], [1], [0, 0, 1, 1], [], []>} : vector<16x384xbf16>, vector<384x128xbf16>, vector<16x128xf32> -> vector<16x128xf32>
    %7 = arith.addf %4, %6 : vector<16x128xf32>
    %c0_6 = arith.constant 0 : index
    %c0_7 = arith.constant 0 : index
    %8 = vector.load %arg6[%c0_6, %c0_7] : memref<16x128xf32, #tpu.memory_space<vmem>>, vector<16x128xf32>
    tpu.vector_store %arg6[%c0_6, %c0_7], %7 {strides = array<i32>} : memref<16x128xf32, #tpu.memory_space<vmem>>, vector<16x128xf32>,
    %c0_i32_8 = arith.constant 0 : i32
    %9 = arith.cmpi eq, %arg2, %c0_i32_8 : i32
    %10 = arith.extui %9 : i1 to i32
    %c0_i32_9 = arith.constant 0 : i32
    %11 = arith.cmpi ne, %10, %c0_i32_9 : i32
    scf.if %11 {
      %c0_10 = arith.constant 0 : index
      %c0_11 = arith.constant 0 : index
      %12 = vector.load %arg6[%c0_10, %c0_11] : memref<16x128xf32, #tpu.memory_space<vmem>>, vector<16x128xf32>
      %13 = arith.truncf %12 : vector<16x128xf32> to vector<16x128xbf16>
      %c0_12 = arith.constant 0 : index
      %c0_13 = arith.constant 0 : index
      %14 = vector.load %arg5[%c0_12, %c0_13] : memref<16x128xbf16, #tpu.memory_space<vmem>>, vector<16x128xbf16>
      tpu.vector_store %arg5[%c0_12, %c0_13], %13 {strides = array<i32>} : memref<16x128xbf16, #tpu.memory_space<vmem>>, vector<16x128xbf16>,
    } else {
    }
    return
  }
  func.func @transform_0(%arg0: i32, %arg1: i32, %arg2: i32) -> (i32, i32) {
    %c0_i32 = arith.constant 0 : i32
    return %arg0, %arg2 : i32, i32
  }
  func.func @transform_1(%arg0: i32, %arg1: i32, %arg2: i32) -> (i32, i32) {
    %c0_i32 = arith.constant 0 : i32
    return %arg2, %arg1 : i32, i32
  }
  func.func @transform_2(%arg0: i32, %arg1: i32, %arg2: i32) -> (i32, i32) {
    %c0_i32 = arith.constant 0 : i32
    return %arg0, %arg1 : i32, i32
  }
}

module attributes {stable_mosaic.version = 11 : i64} {
  func.func @kernel(%arg0: i32, %arg1: i32, %arg2: i32, %arg3: memref<16x128xbf16, #tpu.memory_space<vmem>>, %arg4: memref<128x128xbf16, #tpu.memory_space<vmem>>, %arg5: memref<1x128xf32, #tpu.memory_space<vmem>>, %arg6: memref<1x128xf32, #tpu.memory_space<vmem>>, %arg7: memref<16x128xbf16, #tpu.memory_space<vmem>>, %arg8: memref<16x128xf32, #tpu.memory_space<vmem>>) attributes {dimension_semantics = [#tpu.dimension_semantics<parallel>, #tpu.dimension_semantics<parallel>, #tpu.dimension_semantics<arbitrary>], iteration_bounds = array<i64: 1, 1, 1>, scalar_prefetch = 0 : i64, scratch_operands = 1 : i64, tpu.core_type = #tpu.core_type<tc>, window_params = [{transform_indices = @transform_0, window_bounds = array<i64: 16, 128>}, {transform_indices = @transform_1, window_bounds = array<i64: 128, 128>}, {transform_indices = @transform_2, window_bounds = array<i64: 1, 128>}, {transform_indices = @transform_3, window_bounds = array<i64: 1, 128>}, {transform_indices = @transform_4, window_bounds = array<i64: 16, 128>}]} {
    %c0_i32 = arith.constant 0 : i32
    %0 = arith.cmpi eq, %arg2, %c0_i32 : i32
    %1 = arith.extui %0 : i1 to i32
    %c0_i32_0 = arith.constant 0 : i32
    %2 = arith.cmpi ne, %1, %c0_i32_0 : i32
    scf.if %2 {
      %cst_15 = arith.constant 0.000000e+00 : f32
      %22 = vector.broadcast %cst_15 : f32 to vector<16x128xf32>
      %c0_16 = arith.constant 0 : index
      %c0_17 = arith.constant 0 : index
      %23 = vector.load %arg8[%c0_16, %c0_17] : memref<16x128xf32, #tpu.memory_space<vmem>>, vector<16x128xf32>
      tpu.vector_store %arg8[%c0_16, %c0_17], %22 {strides = array<i32>} : memref<16x128xf32, #tpu.memory_space<vmem>>, vector<16x128xf32>,
    } else {
    }
    %c0 = arith.constant 0 : index
    %c0_1 = arith.constant 0 : index
    %3 = vector.load %arg3[%c0, %c0_1] : memref<16x128xbf16, #tpu.memory_space<vmem>>, vector<16x128xbf16>
    %4 = arith.extf %3 : vector<16x128xbf16> to vector<16x128xf32>
    %c0_2 = arith.constant 0 : index
    %c0_3 = arith.constant 0 : index
    %5 = vector.load %arg5[%c0_2, %c0_3] : memref<1x128xf32, #tpu.memory_space<vmem>>, vector<1x128xf32>
    %6 = vector.broadcast %5 : vector<1x128xf32> to vector<16x128xf32>
    %7 = arith.mulf %4, %6 : vector<16x128xf32>
    %c0_4 = arith.constant 0 : index
    %c0_5 = arith.constant 0 : index
    %8 = vector.load %arg6[%c0_4, %c0_5] : memref<1x128xf32, #tpu.memory_space<vmem>>, vector<1x128xf32>
    %9 = vector.broadcast %8 : vector<1x128xf32> to vector<16x128xf32>
    %10 = arith.addf %7, %9 : vector<16x128xf32>
    %cst = arith.constant 0.000000e+00 : f32
    %11 = vector.broadcast %cst : f32 to vector<16x128xf32>
    %12 = arith.maximumf %10, %11 : vector<16x128xf32>
    %13 = arith.truncf %12 : vector<16x128xf32> to vector<16x128xbf16>
    %c0_6 = arith.constant 0 : index
    %c0_7 = arith.constant 0 : index
    %14 = vector.load %arg8[%c0_6, %c0_7] : memref<16x128xf32, #tpu.memory_space<vmem>>, vector<16x128xf32>
    %c0_8 = arith.constant 0 : index
    %c0_9 = arith.constant 0 : index
    %15 = vector.load %arg4[%c0_8, %c0_9] : memref<128x128xbf16, #tpu.memory_space<vmem>>, vector<128x128xbf16>
    %cst_10 = arith.constant dense<0.000000e+00> : vector<16x128xf32>
    %16 = tpu.matmul %13, %15, %cst_10 {dimension_numbers = #tpu.dot_dimension_numbers<[1], [0], [0], [1], [0, 0, 1, 1], [], []>} : vector<16x128xbf16>, vector<128x128xbf16>, vector<16x128xf32> -> vector<16x128xf32>
    %17 = arith.addf %14, %16 : vector<16x128xf32>
    %c0_11 = arith.constant 0 : index
    %c0_12 = arith.constant 0 : index
    %18 = vector.load %arg8[%c0_11, %c0_12] : memref<16x128xf32, #tpu.memory_space<vmem>>, vector<16x128xf32>
    tpu.vector_store %arg8[%c0_11, %c0_12], %17 {strides = array<i32>} : memref<16x128xf32, #tpu.memory_space<vmem>>, vector<16x128xf32>,
    %c0_i32_13 = arith.constant 0 : i32
    %19 = arith.cmpi eq, %arg2, %c0_i32_13 : i32
    %20 = arith.extui %19 : i1 to i32
    %c0_i32_14 = arith.constant 0 : i32
    %21 = arith.cmpi ne, %20, %c0_i32_14 : i32
    scf.if %21 {
      %c0_15 = arith.constant 0 : index
      %c0_16 = arith.constant 0 : index
      %22 = vector.load %arg8[%c0_15, %c0_16] : memref<16x128xf32, #tpu.memory_space<vmem>>, vector<16x128xf32>
      %23 = arith.truncf %22 : vector<16x128xf32> to vector<16x128xbf16>
      %c0_17 = arith.constant 0 : index
      %c0_18 = arith.constant 0 : index
      %24 = vector.load %arg7[%c0_17, %c0_18] : memref<16x128xbf16, #tpu.memory_space<vmem>>, vector<16x128xbf16>
      tpu.vector_store %arg7[%c0_17, %c0_18], %23 {strides = array<i32>} : memref<16x128xbf16, #tpu.memory_space<vmem>>, vector<16x128xbf16>,
    } else {
    }
    return
  }
  func.func @transform_0(%arg0: i32, %arg1: i32, %arg2: i32) -> (i32, i32) {
    %c0_i32 = arith.constant 0 : i32
    return %arg0, %arg2 : i32, i32
  }
  func.func @transform_1(%arg0: i32, %arg1: i32, %arg2: i32) -> (i32, i32) {
    %c0_i32 = arith.constant 0 : i32
    return %arg2, %arg1 : i32, i32
  }
  func.func @transform_2(%arg0: i32, %arg1: i32, %arg2: i32) -> (i32, i32) {
    %c0_i32 = arith.constant 0 : i32
    %c0_i32_0 = arith.constant 0 : i32
    return %c0_i32, %arg2 : i32, i32
  }
  func.func @transform_3(%arg0: i32, %arg1: i32, %arg2: i32) -> (i32, i32) {
    %c0_i32 = arith.constant 0 : i32
    %c0_i32_0 = arith.constant 0 : i32
    return %c0_i32, %arg2 : i32, i32
  }
  func.func @transform_4(%arg0: i32, %arg1: i32, %arg2: i32) -> (i32, i32) {
    %c0_i32 = arith.constant 0 : i32
    return %arg0, %arg1 : i32, i32
  }
}

module attributes {stable_mosaic.version = 11 : i64} {
  func.func @_pool_kernel(%arg0: i32, %arg1: memref<1x16x128xbf16, #tpu.memory_space<vmem>>, %arg2: memref<16x128xbf16, #tpu.memory_space<vmem>>) attributes {dimension_semantics = [#tpu.dimension_semantics<parallel>], iteration_bounds = array<i64: 1>, scalar_prefetch = 0 : i64, scratch_operands = 0 : i64, tpu.core_type = #tpu.core_type<tc>, window_params = [{transform_indices = @transform_0, window_bounds = array<i64: 1, 16, 128>}, {transform_indices = @transform_1, window_bounds = array<i64: 16, 128>}]} {
    %c0 = arith.constant 0 : index
    %c0_0 = arith.constant 0 : index
    %c0_1 = arith.constant 0 : index
    %0 = vector.load %arg1[%c0, %c0_0, %c0_1] : memref<1x16x128xbf16, #tpu.memory_space<vmem>>, vector<1x16x128xbf16>
    %1 = arith.extf %0 : vector<1x16x128xbf16> to vector<1x16x128xf32>
    %cst = arith.constant dense<0.000000e+00> : vector<16x128xf32>
    %2 = vector.multi_reduction <add>, %1, %cst [0] : vector<1x16x128xf32> to vector<16x128xf32>
    %cst_2 = arith.constant 1.000000e+00 : f32
    %3 = vector.broadcast %cst_2 : f32 to vector<16x128xf32>
    %4 = arith.divf %2, %3 : vector<16x128xf32>
    %5 = arith.truncf %4 : vector<16x128xf32> to vector<16x128xbf16>
    %c0_3 = arith.constant 0 : index
    %c0_4 = arith.constant 0 : index
    %6 = vector.load %arg2[%c0_3, %c0_4] : memref<16x128xbf16, #tpu.memory_space<vmem>>, vector<16x128xbf16>
    tpu.vector_store %arg2[%c0_3, %c0_4], %5 {strides = array<i32>} : memref<16x128xbf16, #tpu.memory_space<vmem>>, vector<16x128xbf16>,
    return
  }
  func.func @transform_0(%arg0: i32) -> (i32, i32, i32) {
    %c0_i32 = arith.constant 0 : i32
    %c0_i32_0 = arith.constant 0 : i32
    %c0_i32_1 = arith.constant 0 : i32
    return %c0_i32, %arg0, %c0_i32_0 : i32, i32, i32
  }
  func.func @transform_1(%arg0: i32) -> (i32, i32) {
    %c0_i32 = arith.constant 0 : i32
    %c0_i32_0 = arith.constant 0 : i32
    return %arg0, %c0_i32 : i32, i32
  }
}

module attributes {stable_mosaic.version = 11 : i64} {
  func.func @_classifier_kernel(%arg0: i32, %arg1: memref<16x128xbf16, #tpu.memory_space<vmem>>, %arg2: memref<1x128xf32, #tpu.memory_space<vmem>>, %arg3: memref<1x128xf32, #tpu.memory_space<vmem>>, %arg4: memref<128x1024xbf16, #tpu.memory_space<vmem>>, %arg5: memref<1x1024xf32, #tpu.memory_space<vmem>>, %arg6: memref<1024x128xbf16, #tpu.memory_space<vmem>>, %arg7: memref<1x128xf32, #tpu.memory_space<vmem>>, %arg8: memref<16x128xf32, #tpu.memory_space<vmem>>) attributes {dimension_semantics = [#tpu.dimension_semantics<arbitrary>], iteration_bounds = array<i64: 1>, scalar_prefetch = 0 : i64, scratch_operands = 0 : i64, tpu.core_type = #tpu.core_type<tc>, window_params = [{pipeline_mode = #tpu.pipeline_mode<synchronous>, transform_indices = @transform_0, window_bounds = array<i64: 16, 128>}, {pipeline_mode = #tpu.pipeline_mode<synchronous>, transform_indices = @transform_1, window_bounds = array<i64: 1, 128>}, {pipeline_mode = #tpu.pipeline_mode<synchronous>, transform_indices = @transform_2, window_bounds = array<i64: 1, 128>}, {pipeline_mode = #tpu.pipeline_mode<synchronous>, transform_indices = @transform_3, window_bounds = array<i64: 128, 1024>}, {pipeline_mode = #tpu.pipeline_mode<synchronous>, transform_indices = @transform_4, window_bounds = array<i64: 1, 1024>}, {pipeline_mode = #tpu.pipeline_mode<synchronous>, transform_indices = @transform_5, window_bounds = array<i64: 1024, 128>}, {pipeline_mode = #tpu.pipeline_mode<synchronous>, transform_indices = @transform_6, window_bounds = array<i64: 1, 128>}, {pipeline_mode = #tpu.pipeline_mode<synchronous>, transform_indices = @transform_7, window_bounds = array<i64: 16, 128>}]} {
    %c0 = arith.constant 0 : index
    %c0_0 = arith.constant 0 : index
    %0 = vector.load %arg1[%c0, %c0_0] : memref<16x128xbf16, #tpu.memory_space<vmem>>, vector<16x128xbf16>
    %1 = arith.extf %0 : vector<16x128xbf16> to vector<16x128xf32>
    %c0_1 = arith.constant 0 : index
    %c0_2 = arith.constant 0 : index
    %2 = vector.load %arg2[%c0_1, %c0_2] : memref<1x128xf32, #tpu.memory_space<vmem>>, vector<1x128xf32>
    %3 = vector.broadcast %2 : vector<1x128xf32> to vector<16x128xf32>
    %4 = arith.mulf %1, %3 : vector<16x128xf32>
    %c0_3 = arith.constant 0 : index
    %c0_4 = arith.constant 0 : index
    %5 = vector.load %arg3[%c0_3, %c0_4] : memref<1x128xf32, #tpu.memory_space<vmem>>, vector<1x128xf32>
    %6 = vector.broadcast %5 : vector<1x128xf32> to vector<16x128xf32>
    %7 = arith.addf %4, %6 : vector<16x128xf32>
    %8 = arith.truncf %7 : vector<16x128xf32> to vector<16x128xbf16>
    %c0_5 = arith.constant 0 : index
    %c0_6 = arith.constant 0 : index
    %9 = vector.load %arg4[%c0_5, %c0_6] : memref<128x1024xbf16, #tpu.memory_space<vmem>>, vector<128x1024xbf16>
    %cst = arith.constant dense<0.000000e+00> : vector<16x1024xf32>
    %10 = tpu.matmul %8, %9, %cst {dimension_numbers = #tpu.dot_dimension_numbers<[1], [0], [0], [1], [0, 0, 1, 1], [], []>} : vector<16x128xbf16>, vector<128x1024xbf16>, vector<16x1024xf32> -> vector<16x1024xf32>
    %c0_7 = arith.constant 0 : index
    %c0_8 = arith.constant 0 : index
    %11 = vector.load %arg5[%c0_7, %c0_8] : memref<1x1024xf32, #tpu.memory_space<vmem>>, vector<1x1024xf32>
    %12 = vector.broadcast %11 : vector<1x1024xf32> to vector<16x1024xf32>
    %13 = arith.addf %10, %12 : vector<16x1024xf32>
    %cst_9 = arith.constant 0.000000e+00 : f32
    %14 = vector.broadcast %cst_9 : f32 to vector<16x1024xf32>
    %15 = arith.cmpf ogt, %13, %14 : vector<16x1024xf32>
    %cst_10 = arith.constant 0.00999999977 : f32
    %16 = vector.broadcast %cst_10 : f32 to vector<16x1024xf32>
    %17 = arith.mulf %16, %13 : vector<16x1024xf32>
    %18 = arith.select %15, %13, %17 : vector<16x1024xi1>, vector<16x1024xf32>
    %19 = arith.truncf %18 : vector<16x1024xf32> to vector<16x1024xbf16>
    %c0_11 = arith.constant 0 : index
    %c0_12 = arith.constant 0 : index
    %20 = vector.load %arg6[%c0_11, %c0_12] : memref<1024x128xbf16, #tpu.memory_space<vmem>>, vector<1024x128xbf16>
    %cst_13 = arith.constant dense<0.000000e+00> : vector<16x128xf32>
    %21 = tpu.matmul %19, %20, %cst_13 {dimension_numbers = #tpu.dot_dimension_numbers<[1], [0], [0], [1], [0, 0, 1, 1], [], []>} : vector<16x1024xbf16>, vector<1024x128xbf16>, vector<16x128xf32> -> vector<16x128xf32>
    %c0_14 = arith.constant 0 : index
    %c0_15 = arith.constant 0 : index
    %22 = vector.load %arg7[%c0_14, %c0_15] : memref<1x128xf32, #tpu.memory_space<vmem>>, vector<1x128xf32>
    %23 = vector.broadcast %22 : vector<1x128xf32> to vector<16x128xf32>
    %24 = arith.addf %21, %23 : vector<16x128xf32>
    %c0_16 = arith.constant 0 : index
    %c0_17 = arith.constant 0 : index
    %25 = vector.load %arg8[%c0_16, %c0_17] : memref<16x128xf32, #tpu.memory_space<vmem>>, vector<16x128xf32>
    tpu.vector_store %arg8[%c0_16, %c0_17], %24 {strides = array<i32>} : memref<16x128xf32, #tpu.memory_space<vmem>>, vector<16x128xf32>,
    return
  }
  func.func @transform_0(%arg0: i32) -> (i32, i32) {
    %c0_i32 = arith.constant 0 : i32
    %c0_i32_0 = arith.constant 0 : i32
    %c0_i32_1 = arith.constant 0 : i32
    return %c0_i32, %c0_i32_0 : i32, i32
  }
  func.func @transform_1(%arg0: i32) -> (i32, i32) {
    %c0_i32 = arith.constant 0 : i32
    %c0_i32_0 = arith.constant 0 : i32
    %c0_i32_1 = arith.constant 0 : i32
    return %c0_i32, %c0_i32_0 : i32, i32
  }
  func.func @transform_2(%arg0: i32) -> (i32, i32) {
    %c0_i32 = arith.constant 0 : i32
    %c0_i32_0 = arith.constant 0 : i32
    %c0_i32_1 = arith.constant 0 : i32
    return %c0_i32, %c0_i32_0 : i32, i32
  }
  func.func @transform_3(%arg0: i32) -> (i32, i32) {
    %c0_i32 = arith.constant 0 : i32
    %c0_i32_0 = arith.constant 0 : i32
    %c0_i32_1 = arith.constant 0 : i32
    return %c0_i32, %c0_i32_0 : i32, i32
  }
  func.func @transform_4(%arg0: i32) -> (i32, i32) {
    %c0_i32 = arith.constant 0 : i32
    %c0_i32_0 = arith.constant 0 : i32
    %c0_i32_1 = arith.constant 0 : i32
    return %c0_i32, %c0_i32_0 : i32, i32
  }
  func.func @transform_5(%arg0: i32) -> (i32, i32) {
    %c0_i32 = arith.constant 0 : i32
    %c0_i32_0 = arith.constant 0 : i32
    %c0_i32_1 = arith.constant 0 : i32
    return %c0_i32, %c0_i32_0 : i32, i32
  }
  func.func @transform_6(%arg0: i32) -> (i32, i32) {
    %c0_i32 = arith.constant 0 : i32
    %c0_i32_0 = arith.constant 0 : i32
    %c0_i32_1 = arith.constant 0 : i32
    return %c0_i32, %c0_i32_0 : i32, i32
  }
  func.func @transform_7(%arg0: i32) -> (i32, i32) {
    %c0_i32 = arith.constant 0 : i32
    %c0_i32_0 = arith.constant 0 : i32
    %c0_i32_1 = arith.constant 0 : i32
    return %c0_i32, %c0_i32_0 : i32, i32
  }
}

</mosaic_0001>

<llo_original>
// kernel: densenet_forward.26
$region0: #{densenet_forward.26}
  #allocation0 [shape = 'u32[]', space=smem, size = 0x4, offset = 0x4, fixed_abs, tag = 'smem constant byte address 0x4 - core index']
  #allocation1 [shape = 'u32[144,128]{1,0:T(1,128)}', space=vmem, size = 0x12000, scoped, tag = 'internal scratch']
  #allocation2 [shape = 'f32[256,128]{1,0:T(8,128)}', space=vmem, size = 0x20000, scoped, tag = 'scratch operand']
  %s0 = inlined_call_operand.vmem [shape: bf16[512,256], index: 0, kind: input, shape index: {}]
  %s1 = inlined_call_operand.vmem [shape: bf16[256,128], index: 1, kind: input, shape index: {}]
  %s2 = inlined_call_operand.vmem [shape: f32[1,128], index: 2, kind: input, shape index: {}]
  %s3 = inlined_call_operand.vmem [shape: f32[1,128], index: 3, kind: input, shape index: {}]
  %s4 = inlined_call_operand.vmem [shape: bf16[512,128], index: 4, kind: output, shape index: {}]
  %s5 = sld [smem:[#allocation0]]
  $region57: #{densenet_forward.26} parent=0
    _
  %s7 = ssub.s32 1, %s5
  %s8 = scalar_select 0, %s7, %s5
  loop: start=0, step=1, limit=4
  $region2: #{densenet_forward.26} parent=0 // loop_pre_header
    _
  $region3: #{densenet_forward.26} parent=0 // loop_header
    %s10 = sphi 0, %s14
    %p11 = scmp.ge.s32.totalorder %s10, 4
    %s17 = sphi 0, %s36
    %s18 = sphi 0, %s32
    %s19 = sphi 0, %s28
    %s20 = sphi 0, %s17
    %s21 = sphi 0, %s18
    %s22 = sphi 0, %s19
    %s23 = sphi 0, %s20
    %s24 = sphi 0, %s21
    %s25 = sphi 0, %s22
    %s41 = sphi 0, %s43
    %s44 = sphi 0, %s41
    %s45 = sphi 0, %s44
    %s61 = sphi 0, %s45
    %s69 = sphi 0, %s71
    %s72 = sphi 0, %s69
    %s73 = sphi 0, %s72
    %s89 = sphi 0, %s73
    %s95 = sphi 0, %s97
    %s98 = sphi 0, %s95
    %s99 = sphi 0, %s98
    %s115 = sphi 0, %s99
    %s121 = sphi 0, %s123
    %s124 = sphi 0, %s121
    %s125 = sphi 0, %s124
    %s141 = sphi 0, %s125
    %s149 = sphi 0, %s151
    %s152 = sphi 0, %s149
    %s153 = sphi 0, %s152
    %s169 = sphi 0, %s153
  $region4: #{densenet_forward.26} parent=0 // loop_header_branch
    %13 = sbr.rel (%p11) target = $region8
  $region5: #{densenet_forward.26} parent=0 // loop_body
    %s15 = ssub.s32 %s10, 1
    %s16 = ssub.s32 %s10, 2
    %s26 = sadd.s32 1, %s19
    %p27 = scmp.ge.s32.totalorder %s26, 1
    %s28 = scalar_select %p27, 0, %s26
    %s29 = sadd.s32 1, %s18
    %s30 = scalar_select %p27, %s29, %s18
    %p31 = scmp.ge.s32.totalorder %s30, 1
    %s32 = scalar_select %p31, 0, %s30
    %s33 = sadd.s32 1, %s17
    %s34 = scalar_select %p31, %s33, %s17
    %p35 = scmp.ge.s32.totalorder %s34, 2
    %s36 = scalar_select %p35, 0, %s34
    %s37 = ssub.s32 %s17, %s36
    %s38 = ssub.s32 %s19, %s28
    %s39 = sor.u32 %s37, %s38
    %p40 = scmp.eq.s32.totalorder %s39, 0
    %s42 = sadd.s32 %s41, 1
    %s43 = scalar_select %p40, %s41, %s42
    %p46 = pneg %p40
    %p47 = scmp.eq.s32.totalorder %s10, 1
    %p48 = por %p46, %p47
    %p49 = scmp.ne.s32.totalorder %s41, %s44
    %p50 = scmp.eq.s32.totalorder %s10, 0
    %p51 = por %p49, %p50
    %p52 = scmp.ne.s32.totalorder %s41, %s44
    %p53 = scmp.eq.s32.totalorder %s15, 1
    %p54 = por %p52, %p53
    %p55 = scmp.ne.s32.totalorder %s44, %s45
    %p56 = scmp.eq.s32.totalorder %s15, 0
    %p57 = por %p55, %p56
    %p58 = scmp.ne.s32.totalorder %s44, %s45
    %p59 = scmp.eq.s32.totalorder %s16, 1
    %p60 = por %p58, %p59
    %p62 = scmp.ne.s32.totalorder %s45, %s61
    %p63 = scmp.eq.s32.totalorder %s16, 0
    %p64 = por %p62, %p63
    %s65 = ssub.s32 %s19, %s28
    %s66 = ssub.s32 %s18, %s32
    %s67 = sor.u32 %s65, %s66
    %p68 = scmp.eq.s32.totalorder %s67, 0
    %s70 = sadd.s32 %s69, 1
    %s71 = scalar_select %p68, %s69, %s70
    %p74 = pneg %p68
    %p75 = scmp.eq.s32.totalorder %s10, 1
    %p76 = por %p74, %p75
    %p77 = scmp.ne.s32.totalorder %s69, %s72
    %p78 = scmp.eq.s32.totalorder %s10, 0
    %p79 = por %p77, %p78
    %p80 = scmp.ne.s32.totalorder %s69, %s72
    %p81 = scmp.eq.s32.totalorder %s15, 1
    %p82 = por %p80, %p81
    %p83 = scmp.ne.s32.totalorder %s72, %s73
    %p84 = scmp.eq.s32.totalorder %s15, 0
    %p85 = por %p83, %p84
    %p86 = scmp.ne.s32.totalorder %s72, %s73
    %p87 = scmp.eq.s32.totalorder %s16, 1
    %p88 = por %p86, %p87
    %p90 = scmp.ne.s32.totalorder %s73, %s89
    %p91 = scmp.eq.s32.totalorder %s16, 0
    %p92 = por %p90, %p91
    %s93 = ssub.s32 %s18, %s32
    %p94 = scmp.eq.s32.totalorder %s93, 0
    %s96 = sadd.s32 %s95, 1
    %s97 = scalar_select %p94, %s95, %s96
    %p100 = pneg %p94
    %p101 = scmp.eq.s32.totalorder %s10, 1
    %p102 = por %p100, %p101
    %p103 = scmp.ne.s32.totalorder %s95, %s98
    %p104 = scmp.eq.s32.totalorder %s10, 0
    %p105 = por %p103, %p104
    %p106 = scmp.ne.s32.totalorder %s95, %s98
    %p107 = scmp.eq.s32.totalorder %s15, 1
    %p108 = por %p106, %p107
    %p109 = scmp.ne.s32.totalorder %s98, %s99
    %p110 = scmp.eq.s32.totalorder %s15, 0
    %p111 = por %p109, %p110
    %p112 = scmp.ne.s32.totalorder %s98, %s99
    %p113 = scmp.eq.s32.totalorder %s16, 1
    %p114 = por %p112, %p113
    %p116 = scmp.ne.s32.totalorder %s99, %s115
    %p117 = scmp.eq.s32.totalorder %s16, 0
    %p118 = por %p116, %p117
    %s119 = ssub.s32 %s18, %s32
    %p120 = scmp.eq.s32.totalorder %s119, 0
    %s122 = sadd.s32 %s121, 1
    %s123 = scalar_select %p120, %s121, %s122
    %p126 = pneg %p120
    %p127 = scmp.eq.s32.totalorder %s10, 1
    %p128 = por %p126, %p127
    %p129 = scmp.ne.s32.totalorder %s121, %s124
    %p130 = scmp.eq.s32.totalorder %s10, 0
    %p131 = por %p129, %p130
    %p132 = scmp.ne.s32.totalorder %s121, %s124
    %p133 = scmp.eq.s32.totalorder %s15, 1
    %p134 = por %p132, %p133
    %p135 = scmp.ne.s32.totalorder %s124, %s125
    %p136 = scmp.eq.s32.totalorder %s15, 0
    %p137 = por %p135, %p136
    %p138 = scmp.ne.s32.totalorder %s124, %s125
    %p139 = scmp.eq.s32.totalorder %s16, 1
    %p140 = por %p138, %p139
    %p142 = scmp.ne.s32.totalorder %s125, %s141
    %p143 = scmp.eq.s32.totalorder %s16, 0
    %p144 = por %p142, %p143
    %s145 = ssub.s32 %s17, %s36
    %s146 = ssub.s32 %s18, %s32
    %s147 = sor.u32 %s145, %s146
    %p148 = scmp.eq.s32.totalorder %s147, 0
    %s150 = sadd.s32 %s149, 1
    %s151 = scalar_select %p148, %s149, %s150
    %p154 = pneg %p148
    %p155 = scmp.eq.s32.totalorder %s10, 1
    %p156 = por %p154, %p155
    %p157 = scmp.ne.s32.totalorder %s149, %s152
    %p158 = scmp.eq.s32.totalorder %s10, 0
    %p159 = por %p157, %p158
    %p160 = scmp.ne.s32.totalorder %s149, %s152
    %p161 = scmp.eq.s32.totalorder %s15, 1
    %p162 = por %p160, %p161
    %p163 = scmp.ne.s32.totalorder %s152, %s153
    %p164 = scmp.eq.s32.totalorder %s15, 0
    %p165 = por %p163, %p164
    %p166 = scmp.ne.s32.totalorder %s152, %s153
    %p167 = scmp.eq.s32.totalorder %s16, 1
    %p168 = por %p166, %p167
    %p170 = scmp.ne.s32.totalorder %s153, %s169
    %p171 = scmp.eq.s32.totalorder %s16, 0
    %p172 = por %p170, %p171
    %p173 = scmp.le.s32.totalorder 1, %s10
    %p174 = scmp.lt.s32.totalorder %s10, 3
    %p175 = pnand %p173, %p174
    %p176 = pneg %p175
    // Predicated region
    $region9: #{densenet_forward.26} parent=5 // pred_check
      _
    $region10: #{densenet_forward.26} parent=5 // pred_check_branch
      %178 = sbr.rel (%p175) target = $region12
    $region11: #{densenet_forward.26} parent=5 // pred_region
      %s179 = ssub.s32 %s10, 1
      // Predicated region
      $region13: #{densenet_forward.26} parent=11 // pred_check
        %p180 = pneg %p85
      $region14: #{densenet_forward.26} parent=11 // pred_check_branch
        %182 = sbr.rel (%p180) target = $region16
      $region15: #{densenet_forward.26} parent=11 // pred_region
        %s183 = smul.u32 32, %s22
        %p184 = scmp.lt.s32.totalorder %s183, 31
        %s185 = scalar_select %p184, %s183, 31
        %p186 = scmp.lt.s32.totalorder %s21, 0
        %s187 = scalar_select %p186, %s21, 0
        %s188 = sadd.s32 %s187, %s185
        %s189 = smul.addr %s188, 4
        %s190 = scalar_lea.vmem %s1, %s189
        %s191 = smul.u32 32, %s22
      $region16: #{densenet_forward.26} parent=11 // pred_fallthru
        _
      // Predicated region
      $region17: #{densenet_forward.26} parent=11 // pred_check
        %p192 = pneg %p111
      $region18: #{densenet_forward.26} parent=11 // pred_check_branch
        %194 = sbr.rel (%p192) target = $region20
      $region19: #{densenet_forward.26} parent=11 // pred_region
        %p195 = scmp.lt.s32.totalorder %s21, 0
        %s196 = scalar_select %p195, %s21, 0
        %s197 = scalar_lea.vmem %s2, %s196
      $region20: #{densenet_forward.26} parent=11 // pred_fallthru
        _
      // Predicated region
      $region21: #{densenet_forward.26} parent=11 // pred_check
        %p198 = pneg %p137
      $region22: #{densenet_forward.26} parent=11 // pred_check_branch
        %200 = sbr.rel (%p198) target = $region24
      $region23: #{densenet_forward.26} parent=11 // pred_region
        %p201 = scmp.lt.s32.totalorder %s21, 0
        %s202 = scalar_select %p201, %s21, 0
        %s203 = scalar_lea.vmem %s3, %s202
      $region24: #{densenet_forward.26} parent=11 // pred_fallthru
        _
    $region12: #{densenet_forward.26} parent=5 // pred_fallthru
      _
    %p204 = scmp.lt.s32.totalorder %s10, 2
    // Predicated region
    $region25: #{densenet_forward.26} parent=5 // pred_check
      %p205 = pneg %p204
    $region26: #{densenet_forward.26} parent=5 // pred_check_branch
      %207 = sbr.rel (%p205) target = $region28
    $region27: #{densenet_forward.26} parent=5 // pred_region
      // Predicated region
      $region29: #{densenet_forward.26} parent=27 // pred_check
        %p208 = pneg %p51
      $region30: #{densenet_forward.26} parent=27 // pred_check_branch
        %210 = sbr.rel (%p208) target = $region32
      $region31: #{densenet_forward.26} parent=27 // pred_region
        %s211 = smul.u32 32, %s17
        %s212 = smul.u32 2, %s19
        %p213 = scmp.lt.s32.totalorder %s211, 63
        %s214 = scalar_select %p213, %s211, 63
        %p215 = scmp.lt.s32.totalorder %s212, 1
        %s216 = scalar_select %p215, %s212, 1
        %s217 = smul.addr %s214, 2
        %s218 = sadd.s32 %s216, %s217
        %s219 = smul.addr %s218, 4
        %s220 = scalar_lea.vmem %s0, %s219
        %s221 = smul.u32 32, %s17
        %s222 = smul.u32 2, %s19
      $region32: #{densenet_forward.26} parent=27 // pred_fallthru
        _
    $region28: #{densenet_forward.26} parent=5 // pred_fallthru
      _
    %p223 = scmp.le.s32.totalorder 1, %s10
    %p224 = scmp.lt.s32.totalorder %s10, 3
    %p225 = pnand %p223, %p224
    %p226 = pneg %p225
    // Predicated region
    $region33: #{densenet_forward.26} parent=5 // pred_check
      _
    $region34: #{densenet_forward.26} parent=5 // pred_check_branch
      %228 = sbr.rel (%p225) target = $region36
    $region35: #{densenet_forward.26} parent=5 // pred_region
      %s229 = ssub.s32 %s10, 1
      %s230 = smul.u32 32, %s20
      %s231 = smul.u32 2, %s22
      %p232 = scmp.lt.s32.totalorder %s230, 63
      %s233 = scalar_select %p232, %s230, 63
      %p234 = scmp.lt.s32.totalorder %s231, 1
      %s235 = scalar_select %p234, %s231, 1
      %s236 = smul.addr %s233, 2
      %s237 = sadd.s32 %s235, %s236
      %s238 = smul.addr %s237, 4
      %s239 = scalar_lea.vmem %s0, %s238
      %p240 = pneg %p57
      %p241 = pneg %p54
      %s242 = smul.u32 32, %s22
      %p243 = scmp.lt.s32.totalorder %s242, 31
      %s244 = scalar_select %p243, %s242, 31
      %p245 = scmp.lt.s32.totalorder %s21, 0
      %s246 = scalar_select %p245, %s21, 0
      %s247 = sadd.s32 %s246, %s244
      %s248 = smul.addr %s247, 4
      %s249 = scalar_lea.vmem %s1, %s248
      %p250 = pneg %p85
      %p251 = pneg %p82
      %p252 = scmp.lt.s32.totalorder %s21, 0
      %s253 = scalar_select %p252, %s21, 0
      %s254 = scalar_lea.vmem %s2, %s253
      %p255 = pneg %p111
      %p256 = pneg %p108
      %p257 = scmp.lt.s32.totalorder %s21, 0
      %s258 = scalar_select %p257, %s21, 0
      %s259 = scalar_lea.vmem %s3, %s258
      %p260 = pneg %p137
      %p261 = pneg %p134
      %p262 = pneg %p165
      %p263 = pneg %p162
      %s264 = smul.u32 32, %s20
      %p265 = scmp.lt.s32.totalorder %s264, 63
      %s266 = scalar_select %p265, %s264, 63
      %p267 = scmp.lt.s32.totalorder %s21, 0
      %s268 = scalar_select %p267, %s21, 0
      %s269 = sadd.s32 %s268, %s266
      %s270 = smul.addr %s269, 4
      %s271 = scalar_lea.vmem %s4, %s270
      %s272 = smul.u32 32, %s20
      %s273 = smul.u32 2, %s22
      %p274 = scmp.lt.s32.totalorder %s272, 63
      %s275 = scalar_select %p274, %s272, 63
      %p276 = scmp.lt.s32.totalorder %s273, 1
      %s277 = scalar_select %p276, %s273, 1
      %s278 = smul.addr %s275, 2
      %s279 = sadd.s32 %s277, %s278
      %s280 = smul.addr %s279, 4
      %s281 = scalar_lea.vmem %s0, %s280
      %s282 = smul.u32 32, %s20
      %s283 = smul.u32 2, %s22
      %s284 = smul.u32 32, %s22
      %p285 = scmp.lt.s32.totalorder %s284, 31
      %s286 = scalar_select %p285, %s284, 31
      %p287 = scmp.lt.s32.totalorder %s21, 0
      %s288 = scalar_select %p287, %s21, 0
      %s289 = sadd.s32 %s288, %s286
      %s290 = smul.addr %s289, 4
      %s291 = scalar_lea.vmem %s1, %s290
      %s292 = smul.u32 32, %s22
      %p293 = scmp.lt.s32.totalorder %s21, 0
      %s294 = scalar_select %p293, %s21, 0
      %s295 = scalar_lea.vmem %s2, %s294
      %p296 = scmp.lt.s32.totalorder %s21, 0
      %s297 = scalar_select %p296, %s21, 0
      %s298 = scalar_lea.vmem %s3, %s297
      %s299 = smul.u32 32, %s20
      %p300 = scmp.lt.s32.totalorder %s299, 63
      %s301 = scalar_select %p300, %s299, 63
      %p302 = scmp.lt.s32.totalorder %s21, 0
      %s303 = scalar_select %p302, %s21, 0
      %s304 = sadd.s32 %s303, %s301
      %s305 = smul.addr %s304, 4
      %s306 = scalar_lea.vmem %s4, %s305
      %s307 = smul.u32 32, %s20
      %p309 = scmp.eq.s32.totalorder %s22, 0
      // Predicated region
      $region37: #{densenet_forward.26} parent=35 // pred_check
        %p310 = pneg %p309
      $region38: #{densenet_forward.26} parent=35 // pred_check_branch
        %312 = sbr.rel (%p310) target = $region40
      $region39: #{densenet_forward.26} parent=35 // pred_region
        %313 = vst [vmem:[#allocation2] sm:$0xff] 0.0
        %314 = vst [vmem:[#allocation2 + $0x8] sm:$0xff] 0.0
        %315 = vst [vmem:[#allocation2 + $0x10] sm:$0xff] 0.0
        %316 = vst [vmem:[#allocation2 + $0x18] sm:$0xff] 0.0
        %317 = vst [vmem:[#allocation2 + $0x20] sm:$0xff] 0.0
        %318 = vst [vmem:[#allocation2 + $0x28] sm:$0xff] 0.0
        %319 = vst [vmem:[#allocation2 + $0x30] sm:$0xff] 0.0
        %320 = vst [vmem:[#allocation2 + $0x38] sm:$0xff] 0.0
        %321 = vst [vmem:[#allocation2 + $0x40] sm:$0xff] 0.0
        %322 = vst [vmem:[#allocation2 + $0x48] sm:$0xff] 0.0
        %323 = vst [vmem:[#allocation2 + $0x50] sm:$0xff] 0.0
        %324 = vst [vmem:[#allocation2 + $0x58] sm:$0xff] 0.0
        %325 = vst [vmem:[#allocation2 + $0x60] sm:$0xff] 0.0
        %326 = vst [vmem:[#allocation2 + $0x68] sm:$0xff] 0.0
        %327 = vst [vmem:[#allocation2 + $0x70] sm:$0xff] 0.0
        %328 = vst [vmem:[#allocation2 + $0x78] sm:$0xff] 0.0
        %329 = vst [vmem:[#allocation2 + $0x80] sm:$0xff] 0.0
        %330 = vst [vmem:[#allocation2 + $0x88] sm:$0xff] 0.0
        %331 = vst [vmem:[#allocation2 + $0x90] sm:$0xff] 0.0
        %332 = vst [vmem:[#allocation2 + $0x98] sm:$0xff] 0.0
        %333 = vst [vmem:[#allocation2 + $0xa0] sm:$0xff] 0.0
        %334 = vst [vmem:[#allocation2 + $0xa8] sm:$0xff] 0.0
        %335 = vst [vmem:[#allocation2 + $0xb0] sm:$0xff] 0.0
        %336 = vst [vmem:[#allocation2 + $0xb8] sm:$0xff] 0.0
        %337 = vst [vmem:[#allocation2 + $0xc0] sm:$0xff] 0.0
        %338 = vst [vmem:[#allocation2 + $0xc8] sm:$0xff] 0.0
        %339 = vst [vmem:[#allocation2 + $0xd0] sm:$0xff] 0.0
        %340 = vst [vmem:[#allocation2 + $0xd8] sm:$0xff] 0.0
        %341 = vst [vmem:[#allocation2 + $0xe0] sm:$0xff] 0.0
        %342 = vst [vmem:[#allocation2 + $0xe8] sm:$0xff] 0.0
        %343 = vst [vmem:[#allocation2 + $0xf0] sm:$0xff] 0.0
        %344 = vst [vmem:[#allocation2 + $0xf8] sm:$0xff] 0.0
      $region40: #{densenet_forward.26} parent=35 // pred_fallthru
        _
      %v345 = vld [vmem:[%s281] sm:$0xff]
      %v346 = vld [vmem:[%s281 + $0x8] sm:$0xff]
      %v347 = vld [vmem:[%s281 + $0x10] sm:$0xff]
      %v348 = vld [vmem:[%s281 + $0x18] sm:$0xff]
      %v349 = vld [vmem:[%s281 + $0x20] sm:$0xff]
      %v350 = vld [vmem:[%s281 + $0x28] sm:$0xff]
      %v351 = vld [vmem:[%s281 + $0x30] sm:$0xff]
      %v352 = vld [vmem:[%s281 + $0x38] sm:$0xff]
      %v353 = vld [vmem:[%s281 + $0x40] sm:$0xff]
      %v354 = vld [vmem:[%s281 + $0x48] sm:$0xff]
      %v355 = vld [vmem:[%s281 + $0x50] sm:$0xff]
      %v356 = vld [vmem:[%s281 + $0x58] sm:$0xff]
      %v357 = vld [vmem:[%s281 + $0x60] sm:$0xff]
      %v358 = vld [vmem:[%s281 + $0x68] sm:$0xff]
      %v359 = vld [vmem:[%s281 + $0x70] sm:$0xff]
      %v360 = vld [vmem:[%s281 + $0x78] sm:$0xff]
      %v361 = vld [vmem:[%s281 + $0x80] sm:$0xff]
      %v362 = vld [vmem:[%s281 + $0x88] sm:$0xff]
      %v363 = vld [vmem:[%s281 + $0x90] sm:$0xff]
      %v364 = vld [vmem:[%s281 + $0x98] sm:$0xff]
      %v365 = vld [vmem:[%s281 + $0xa0] sm:$0xff]
      %v366 = vld [vmem:[%s281 + $0xa8] sm:$0xff]
      %v367 = vld [vmem:[%s281 + $0xb0] sm:$0xff]
      %v368 = vld [vmem:[%s281 + $0xb8] sm:$0xff]
      %v369 = vld [vmem:[%s281 + $0xc0] sm:$0xff]
      %v370 = vld [vmem:[%s281 + $0xc8] sm:$0xff]
      %v371 = vld [vmem:[%s281 + $0xd0] sm:$0xff]
      %v372 = vld [vmem:[%s281 + $0xd8] sm:$0xff]
      %v373 = vld [vmem:[%s281 + $0xe0] sm:$0xff]
      %v374 = vld [vmem:[%s281 + $0xe8] sm:$0xff]
      %v375 = vld [vmem:[%s281 + $0xf0] sm:$0xff]
      %v376 = vld [vmem:[%s281 + $0xf8] sm:$0xff]
      %v377 = vld [vmem:[#allocation2] sm:$0xff]
      %v378 = vld [vmem:[#allocation2 + $0x8] sm:$0xff]
      %v379 = vld [vmem:[#allocation2 + $0x10] sm:$0xff]
      %v380 = vld [vmem:[#allocation2 + $0x18] sm:$0xff]
      %v381 = vld [vmem:[#allocation2 + $0x20] sm:$0xff]
      %v382 = vld [vmem:[#allocation2 + $0x28] sm:$0xff]
      %v383 = vld [vmem:[#allocation2 + $0x30] sm:$0xff]
      %v384 = vld [vmem:[#allocation2 + $0x38] sm:$0xff]
      %v385 = vld [vmem:[#allocation2 + $0x40] sm:$0xff]
      %v386 = vld [vmem:[#allocation2 + $0x48] sm:$0xff]
      %v387 = vld [vmem:[#allocation2 + $0x50] sm:$0xff]
      %v388 = vld [vmem:[#allocation2 + $0x58] sm:$0xff]
      %v389 = vld [vmem:[#allocation2 + $0x60] sm:$0xff]
      %v390 = vld [vmem:[#allocation2 + $0x68] sm:$0xff]
      %v391 = vld [vmem:[#allocation2 + $0x70] sm:$0xff]
      %v392 = vld [vmem:[#allocation2 + $0x78] sm:$0xff]
      %v393 = vld [vmem:[#allocation2 + $0x80] sm:$0xff]
      %v394 = vld [vmem:[#allocation2 + $0x88] sm:$0xff]
      %v395 = vld [vmem:[#allocation2 + $0x90] sm:$0xff]
      %v396 = vld [vmem:[#allocation2 + $0x98] sm:$0xff]
      %v397 = vld [vmem:[#allocation2 + $0xa0] sm:$0xff]
      %v398 = vld [vmem:[#allocation2 + $0xa8] sm:$0xff]
      %v399 = vld [vmem:[#allocation2 + $0xb0] sm:$0xff]
      %v400 = vld [vmem:[#allocation2 + $0xb8] sm:$0xff]
      %v401 = vld [vmem:[#allocation2 + $0xc0] sm:$0xff]
      %v402 = vld [vmem:[#allocation2 + $0xc8] sm:$0xff]
      %v403 = vld [vmem:[#allocation2 + $0xd0] sm:$0xff]
      %v404 = vld [vmem:[#allocation2 + $0xd8] sm:$0xff]
      %v405 = vld [vmem:[#allocation2 + $0xe0] sm:$0xff]
      %v406 = vld [vmem:[#allocation2 + $0xe8] sm:$0xff]
      %v407 = vld [vmem:[#allocation2 + $0xf0] sm:$0xff]
      %v408 = vld [vmem:[#allocation2 + $0xf8] sm:$0xff]
      %v409 = vld [vmem:[%s291] sm:$0xf]
      %v410 = vld [vmem:[%s291 + $0x4] sm:$0xf]
      %v411 = vld [vmem:[%s291 + $0x8] sm:$0xf]
      %v412 = vld [vmem:[%s291 + $0xc] sm:$0xf]
      %v413 = vld [vmem:[%s291 + $0x10] sm:$0xf]
      %v414 = vld [vmem:[%s291 + $0x14] sm:$0xf]
      %v415 = vld [vmem:[%s291 + $0x18] sm:$0xf]
      %v416 = vld [vmem:[%s291 + $0x1c] sm:$0xf]
      %v417 = vld [vmem:[%s291 + $0x20] sm:$0xf]
      %v418 = vld [vmem:[%s291 + $0x24] sm:$0xf]
      %v419 = vld [vmem:[%s291 + $0x28] sm:$0xf]
      %v420 = vld [vmem:[%s291 + $0x2c] sm:$0xf]
      %v421 = vld [vmem:[%s291 + $0x30] sm:$0xf]
      %v422 = vld [vmem:[%s291 + $0x34] sm:$0xf]
      %v423 = vld [vmem:[%s291 + $0x38] sm:$0xf]
      %v424 = vld [vmem:[%s291 + $0x3c] sm:$0xf]
      %v425 = vld [vmem:[%s291 + $0x40] sm:$0xf]
      %v426 = vld [vmem:[%s291 + $0x44] sm:$0xf]
      %v427 = vld [vmem:[%s291 + $0x48] sm:$0xf]
      %v428 = vld [vmem:[%s291 + $0x4c] sm:$0xf]
      %v429 = vld [vmem:[%s291 + $0x50] sm:$0xf]
      %v430 = vld [vmem:[%s291 + $0x54] sm:$0xf]
      %v431 = vld [vmem:[%s291 + $0x58] sm:$0xf]
      %v432 = vld [vmem:[%s291 + $0x5c] sm:$0xf]
      %v433 = vld [vmem:[%s291 + $0x60] sm:$0xf]
      %v434 = vld [vmem:[%s291 + $0x64] sm:$0xf]
      %v435 = vld [vmem:[%s291 + $0x68] sm:$0xf]
      %v436 = vld [vmem:[%s291 + $0x6c] sm:$0xf]
      %v437 = vld [vmem:[%s291 + $0x70] sm:$0xf]
      %v438 = vld [vmem:[%s291 + $0x74] sm:$0xf]
      %v439 = vld [vmem:[%s291 + $0x78] sm:$0xf]
      %v440 = vld [vmem:[%s291 + $0x7c] sm:$0xf]
      %v473 = vunpack.c.l.b16 %v345
      %v474 = vunpack.c.h.b16 %v345
      %v475 = vunpack.c.l.b16 %v346
      %v476 = vunpack.c.h.b16 %v346
      %v477 = vunpack.c.l.b16 %v347
      %v478 = vunpack.c.h.b16 %v347
      %v479 = vunpack.c.l.b16 %v348
      %v480 = vunpack.c.h.b16 %v348
      %v481 = vunpack.c.l.b16 %v349
      %v482 = vunpack.c.h.b16 %v349
      %v483 = vunpack.c.l.b16 %v350
      %v484 = vunpack.c.h.b16 %v350
      %v485 = vunpack.c.l.b16 %v351
      %v486 = vunpack.c.h.b16 %v351
      %v487 = vunpack.c.l.b16 %v352
      %v488 = vunpack.c.h.b16 %v352
      %v489 = vunpack.c.l.b16 %v353
      %v490 = vunpack.c.h.b16 %v353
      %v491 = vunpack.c.l.b16 %v354
      %v492 = vunpack.c.h.b16 %v354
      %v493 = vunpack.c.l.b16 %v355
      %v494 = vunpack.c.h.b16 %v355
      %v495 = vunpack.c.l.b16 %v356
      %v496 = vunpack.c.h.b16 %v356
      %v497 = vunpack.c.l.b16 %v357
      %v498 = vunpack.c.h.b16 %v357
      %v499 = vunpack.c.l.b16 %v358
      %v500 = vunpack.c.h.b16 %v358
      %v501 = vunpack.c.l.b16 %v359
      %v502 = vunpack.c.h.b16 %v359
      %v503 = vunpack.c.l.b16 %v360
      %v504 = vunpack.c.h.b16 %v360
      %v505 = vunpack.c.l.b16 %v361
      %v506 = vunpack.c.h.b16 %v361
      %v507 = vunpack.c.l.b16 %v362
      %v508 = vunpack.c.h.b16 %v362
      %v509 = vunpack.c.l.b16 %v363
      %v510 = vunpack.c.h.b16 %v363
      %v511 = vunpack.c.l.b16 %v364
      %v512 = vunpack.c.h.b16 %v364
      %v513 = vunpack.c.l.b16 %v365
      %v514 = vunpack.c.h.b16 %v365
      %v515 = vunpack.c.l.b16 %v366
      %v516 = vunpack.c.h.b16 %v366
      %v517 = vunpack.c.l.b16 %v367
      %v518 = vunpack.c.h.b16 %v367
      %v519 = vunpack.c.l.b16 %v368
      %v520 = vunpack.c.h.b16 %v368
      %v521 = vunpack.c.l.b16 %v369
      %v522 = vunpack.c.h.b16 %v369
      %v523 = vunpack.c.l.b16 %v370
      %v524 = vunpack.c.h.b16 %v370
      %v525 = vunpack.c.l.b16 %v371
      %v526 = vunpack.c.h.b16 %v371
      %v527 = vunpack.c.l.b16 %v372
      %v528 = vunpack.c.h.b16 %v372
      %v529 = vunpack.c.l.b16 %v373
      %v530 = vunpack.c.h.b16 %v373
      %v531 = vunpack.c.l.b16 %v374
      %v532 = vunpack.c.h.b16 %v374
      %v533 = vunpack.c.l.b16 %v375
      %v534 = vunpack.c.h.b16 %v375
      %v535 = vunpack.c.l.b16 %v376
      %v536 = vunpack.c.h.b16 %v376
      %v537 = vpack.c.b16 %v475, %v473
      %v538 = vpack.c.b16 %v476, %v474
      %v539 = vpack.c.b16 %v479, %v477
      %v540 = vpack.c.b16 %v480, %v478
      %v541 = vpack.c.b16 %v483, %v481
      %v542 = vpack.c.b16 %v484, %v482
      %v543 = vpack.c.b16 %v487, %v485
      %v544 = vpack.c.b16 %v488, %v486
      %v545 = vpack.c.b16 %v491, %v489
      %v546 = vpack.c.b16 %v492, %v490
      %v547 = vpack.c.b16 %v495, %v493
      %v548 = vpack.c.b16 %v496, %v494
      %v549 = vpack.c.b16 %v499, %v497
      %v550 = vpack.c.b16 %v500, %v498
      %v551 = vpack.c.b16 %v503, %v501
      %v552 = vpack.c.b16 %v504, %v502
      %v553 = vpack.c.b16 %v507, %v505
      %v554 = vpack.c.b16 %v508, %v506
      %v555 = vpack.c.b16 %v511, %v509
      %v556 = vpack.c.b16 %v512, %v510
      %v557 = vpack.c.b16 %v515, %v513
      %v558 = vpack.c.b16 %v516, %v514
      %v559 = vpack.c.b16 %v519, %v517
      %v560 = vpack.c.b16 %v520, %v518
      %v561 = vpack.c.b16 %v523, %v521
      %v562 = vpack.c.b16 %v524, %v522
      %v563 = vpack.c.b16 %v527, %v525
      %v564 = vpack.c.b16 %v528, %v526
      %v565 = vpack.c.b16 %v531, %v529
      %v566 = vpack.c.b16 %v532, %v530
      %v567 = vpack.c.b16 %v535, %v533
      %v568 = vpack.c.b16 %v536, %v534
      %v633 = vunpack.c.l.b16 %v409
      %v634 = vunpack.c.l.b16 %v410
      %v635 = vunpack.c.l.b16 %v411
      %v636 = vunpack.c.l.b16 %v412
      %v637 = vunpack.c.l.b16 %v413
      %v638 = vunpack.c.l.b16 %v414
      %v639 = vunpack.c.l.b16 %v415
      %v640 = vunpack.c.l.b16 %v416
      %v641 = vunpack.c.l.b16 %v417
      %v642 = vunpack.c.l.b16 %v418
      %v643 = vunpack.c.l.b16 %v419
      %v644 = vunpack.c.l.b16 %v420
      %v645 = vunpack.c.l.b16 %v421
      %v646 = vunpack.c.l.b16 %v422
      %v647 = vunpack.c.l.b16 %v423
      %v648 = vunpack.c.l.b16 %v424
      %v649 = vunpack.c.l.b16 %v425
      %v650 = vunpack.c.l.b16 %v426
      %v651 = vunpack.c.l.b16 %v427
      %v652 = vunpack.c.l.b16 %v428
      %v653 = vunpack.c.l.b16 %v429
      %v654 = vunpack.c.l.b16 %v430
      %v655 = vunpack.c.l.b16 %v431
      %v656 = vunpack.c.l.b16 %v432
      %v657 = vunpack.c.l.b16 %v433
      %v658 = vunpack.c.l.b16 %v434
      %v659 = vunpack.c.l.b16 %v435
      %v660 = vunpack.c.l.b16 %v436
      %v661 = vunpack.c.l.b16 %v437
      %v662 = vunpack.c.l.b16 %v438
      %v663 = vunpack.c.l.b16 %v439
      %v664 = vunpack.c.l.b16 %v440
      %v665 = vpack.c.b16 %v634, %v633
      %v666 = vpack.c.b16 %v636, %v635
      %v667 = vpack.c.b16 %v638, %v637
      %v668 = vpack.c.b16 %v640, %v639
      %v669 = vpack.c.b16 %v642, %v641
      %v670 = vpack.c.b16 %v644, %v643
      %v671 = vpack.c.b16 %v646, %v645
      %v672 = vpack.c.b16 %v648, %v647
      %v673 = vpack.c.b16 %v650, %v649
      %v674 = vpack.c.b16 %v652, %v651
      %v675 = vpack.c.b16 %v654, %v653
      %v676 = vpack.c.b16 %v656, %v655
      %v677 = vpack.c.b16 %v658, %v657
      %v678 = vpack.c.b16 %v660, %v659
      %v679 = vpack.c.b16 %v662, %v661
      %v680 = vpack.c.b16 %v664, %v663
      %697 = vmatprep.subr.bf16.mxu0 0
      %698 = vmatpush1.bf16.msra.mxu0 %v665
      %699 = vmatprep.subr.bf16.mxu0 0
      %700 = vmatpush1.bf16.msra.mxu0 %v666
      %701 = vmatprep.subr.bf16.mxu0 0
      %702 = vmatpush1.bf16.msra.mxu0 %v667
      %703 = vmatprep.subr.bf16.mxu0 0
      %704 = vmatpush1.bf16.msra.mxu0 %v668
      %705 = vmatprep.subr.bf16.mxu0 0
      %706 = vmatpush1.bf16.msra.mxu0 %v669
      %707 = vmatprep.subr.bf16.mxu0 0
      %708 = vmatpush1.bf16.msra.mxu0 %v670
      %709 = vmatprep.subr.bf16.mxu0 0
      %710 = vmatpush1.bf16.msra.mxu0 %v671
      %711 = vmatprep.subr.bf16.mxu0 0
      %712 = vmatpush1.bf16.msra.mxu0 %v672
      %713 = vmatprep.subr.bf16.mxu0 0
      %714 = vmatpush1.bf16.msra.mxu0 %v673
      %715 = vmatprep.subr.bf16.mxu0 0
      %716 = vmatpush1.bf16.msra.mxu0 %v674
      %717 = vmatprep.subr.bf16.mxu0 0
      %718 = vmatpush1.bf16.msra.mxu0 %v675
      %719 = vmatprep.subr.bf16.mxu0 0
      %720 = vmatpush1.bf16.msra.mxu0 %v676
      %721 = vmatprep.subr.bf16.mxu0 0
      %722 = vmatpush1.bf16.msra.mxu0 %v677
      %723 = vmatprep.subr.bf16.mxu0 0
      %724 = vmatpush1.bf16.msra.mxu0 %v678
      %725 = vmatprep.subr.bf16.mxu0 0
      %726 = vmatpush1.bf16.msra.mxu0 %v679
      %727 = vmatprep.subr.bf16.mxu0 0
      %728 = vmatpush1.bf16.msra.mxu0 %v680
      %729 = vmatprep.mubr.bf16.mxu0 %v538
      %730 = vmatmul.mubr.bf16.gmra.mrb[0].mxu0 %v537
      %v731 = vpop.f32.mrb[0].mxu0
      %v732 = vadd.f32 0.0, %v731
      %v733 = vpop.f32.mrb[0].mxu0
      %v734 = vpop.f32.mrb[0].mxu0
      %v735 = vadd.f32 0.0, %v734
      %v736 = vpop.f32.mrb[0].mxu0
      %737 = vmatprep.mubr.bf16.mxu0 %v540
      %738 = vmatmul.mubr.bf16.gmra.mrb[0].mxu0 %v539
      %v739 = vpop.f32.mrb[0].mxu0
      %v740 = vadd.f32 0.0, %v739
      %v741 = vpop.f32.mrb[0].mxu0
      %v742 = vpop.f32.mrb[0].mxu0
      %v743 = vadd.f32 0.0, %v742
      %v744 = vpop.f32.mrb[0].mxu0
      %745 = vmatprep.mubr.bf16.mxu0 %v542
      %746 = vmatmul.mubr.bf16.gmra.mrb[0].mxu0 %v541
      %v747 = vpop.f32.mrb[0].mxu0
      %v748 = vadd.f32 0.0, %v747
      %v749 = vpop.f32.mrb[0].mxu0
      %v750 = vpop.f32.mrb[0].mxu0
      %v751 = vadd.f32 0.0, %v750
      %v752 = vpop.f32.mrb[0].mxu0
      %753 = vmatprep.mubr.bf16.mxu0 %v544
      %754 = vmatmul.mubr.bf16.gmra.mrb[0].mxu0 %v543
      %v755 = vpop.f32.mrb[0].mxu0
      %v756 = vadd.f32 0.0, %v755
      %v757 = vpop.f32.mrb[0].mxu0
      %v758 = vpop.f32.mrb[0].mxu0
      %v759 = vadd.f32 0.0, %v758
      %v760 = vpop.f32.mrb[0].mxu0
      %761 = vmatprep.mubr.bf16.mxu0 %v546
      %762 = vmatmul.mubr.bf16.gmra.mrb[0].mxu0 %v545
      %v763 = vpop.f32.mrb[0].mxu0
      %v764 = vadd.f32 0.0, %v763
      %v765 = vpop.f32.mrb[0].mxu0
      %v766 = vpop.f32.mrb[0].mxu0
      %v767 = vadd.f32 0.0, %v766
      %v768 = vpop.f32.mrb[0].mxu0
      %769 = vmatprep.mubr.bf16.mxu0 %v548
      %770 = vmatmul.mubr.bf16.gmra.mrb[0].mxu0 %v547
      %v771 = vpop.f32.mrb[0].mxu0
      %v772 = vadd.f32 0.0, %v771
      %v773 = vpop.f32.mrb[0].mxu0
      %v774 = vpop.f32.mrb[0].mxu0
      %v775 = vadd.f32 0.0, %v774
      %v776 = vpop.f32.mrb[0].mxu0
      %777 = vmatprep.mubr.bf16.mxu0 %v550
      %778 = vmatmul.mubr.bf16.gmra.mrb[0].mxu0 %v549
      %v779 = vpop.f32.mrb[0].mxu0
      %v780 = vadd.f32 0.0, %v779
      %v781 = vpop.f32.mrb[0].mxu0
      %v782 = vpop.f32.mrb[0].mxu0
      %v783 = vadd.f32 0.0, %v782
      %v784 = vpop.f32.mrb[0].mxu0
      %785 = vmatprep.mubr.bf16.mxu0 %v552
      %786 = vmatmul.mubr.bf16.gmra.mrb[0].mxu0 %v551
      %v787 = vpop.f32.mrb[0].mxu0
      %v788 = vadd.f32 0.0, %v787
      %v789 = vpop.f32.mrb[0].mxu0
      %v790 = vpop.f32.mrb[0].mxu0
      %v791 = vadd.f32 0.0, %v790
      %v792 = vpop.f32.mrb[0].mxu0
      %793 = vmatprep.mubr.bf16.mxu0 %v554
      %794 = vmatmul.mubr.bf16.gmra.mrb[0].mxu0 %v553
      %v795 = vpop.f32.mrb[0].mxu0
      %v796 = vadd.f32 0.0, %v795
      %v797 = vpop.f32.mrb[0].mxu0
      %v798 = vpop.f32.mrb[0].mxu0
      %v799 = vadd.f32 0.0, %v798
      %v800 = vpop.f32.mrb[0].mxu0
      %801 = vmatprep.mubr.bf16.mxu0 %v556
      %802 = vmatmul.mubr.bf16.gmra.mrb[0].mxu0 %v555
      %v803 = vpop.f32.mrb[0].mxu0
      %v804 = vadd.f32 0.0, %v803
      %v805 = vpop.f32.mrb[0].mxu0
      %v806 = vpop.f32.mrb[0].mxu0
      %v807 = vadd.f32 0.0, %v806
      %v808 = vpop.f32.mrb[0].mxu0
      %809 = vmatprep.mubr.bf16.mxu0 %v558
      %810 = vmatmul.mubr.bf16.gmra.mrb[0].mxu0 %v557
      %v811 = vpop.f32.mrb[0].mxu0
      %v812 = vadd.f32 0.0, %v811
      %v813 = vpop.f32.mrb[0].mxu0
      %v814 = vpop.f32.mrb[0].mxu0
      %v815 = vadd.f32 0.0, %v814
      %v816 = vpop.f32.mrb[0].mxu0
      %817 = vmatprep.mubr.bf16.mxu0 %v560
      %818 = vmatmul.mubr.bf16.gmra.mrb[0].mxu0 %v559
      %v819 = vpop.f32.mrb[0].mxu0
      %v820 = vadd.f32 0.0, %v819
      %v821 = vpop.f32.mrb[0].mxu0
      %v822 = vpop.f32.mrb[0].mxu0
      %v823 = vadd.f32 0.0, %v822
      %v824 = vpop.f32.mrb[0].mxu0
      %825 = vmatprep.mubr.bf16.mxu0 %v562
      %826 = vmatmul.mubr.bf16.gmra.mrb[0].mxu0 %v561
      %v827 = vpop.f32.mrb[0].mxu0
      %v828 = vadd.f32 0.0, %v827
      %v829 = vpop.f32.mrb[0].mxu0
      %v830 = vpop.f32.mrb[0].mxu0
      %v831 = vadd.f32 0.0, %v830
      %v832 = vpop.f32.mrb[0].mxu0
      %833 = vmatprep.mubr.bf16.mxu0 %v564
      %834 = vmatmul.mubr.bf16.gmra.mrb[0].mxu0 %v563
      %v835 = vpop.f32.mrb[0].mxu0
      %v836 = vadd.f32 0.0, %v835
      %v837 = vpop.f32.mrb[0].mxu0
      %v838 = vpop.f32.mrb[0].mxu0
      %v839 = vadd.f32 0.0, %v838
      %v840 = vpop.f32.mrb[0].mxu0
      %841 = vmatprep.mubr.bf16.mxu0 %v566
      %842 = vmatmul.mubr.bf16.gmra.mrb[0].mxu0 %v565
      %v843 = vpop.f32.mrb[0].mxu0
      %v844 = vadd.f32 0.0, %v843
      %v845 = vpop.f32.mrb[0].mxu0
      %v846 = vpop.f32.mrb[0].mxu0
      %v847 = vadd.f32 0.0, %v846
      %v848 = vpop.f32.mrb[0].mxu0
      %849 = vmatprep.mubr.bf16.mxu0 %v568
      %850 = vmatmul.mubr.bf16.gmra.mrb[0].mxu0 %v567
      %v851 = vpop.f32.mrb[0].mxu0
      %v852 = vadd.f32 0.0, %v851
      %v853 = vpop.f32.mrb[0].mxu0
      %v854 = vpop.f32.mrb[0].mxu0
      %v855 = vadd.f32 0.0, %v854
      %v856 = vpop.f32.mrb[0].mxu0
      %857 = vdwg.mxu0
      %v858 = vadd.f32 %v377, %v732
      %v859 = vadd.f32 %v378, %v735
      %v860 = vadd.f32 %v379, %v740
      %v861 = vadd.f32 %v380, %v743
      %v862 = vadd.f32 %v381, %v748
      %v863 = vadd.f32 %v382, %v751
      %v864 = vadd.f32 %v383, %v756
      %v865 = vadd.f32 %v384, %v759
      %v866 = vadd.f32 %v385, %v764
      %v867 = vadd.f32 %v386, %v767
      %v868 = vadd.f32 %v387, %v772
      %v869 = vadd.f32 %v388, %v775
      %v870 = vadd.f32 %v389, %v780
      %v871 = vadd.f32 %v390, %v783
      %v872 = vadd.f32 %v391, %v788
      %v873 = vadd.f32 %v392, %v791
      %v874 = vadd.f32 %v393, %v796
      %v875 = vadd.f32 %v394, %v799
      %v876 = vadd.f32 %v395, %v804
      %v877 = vadd.f32 %v396, %v807
      %v878 = vadd.f32 %v397, %v812
      %v879 = vadd.f32 %v398, %v815
      %v880 = vadd.f32 %v399, %v820
      %v881 = vadd.f32 %v400, %v823
      %v882 = vadd.f32 %v401, %v828
      %v883 = vadd.f32 %v402, %v831
      %v884 = vadd.f32 %v403, %v836
      %v885 = vadd.f32 %v404, %v839
      %v886 = vadd.f32 %v405, %v844
      %v887 = vadd.f32 %v406, %v847
      %v888 = vadd.f32 %v407, %v852
      %v889 = vadd.f32 %v408, %v855
      %890 = vst [vmem:[#allocation2] sm:$0xff] %v858
      %891 = vst [vmem:[#allocation2 + $0x8] sm:$0xff] %v859
      %892 = vst [vmem:[#allocation2 + $0x10] sm:$0xff] %v860
      %893 = vst [vmem:[#allocation2 + $0x18] sm:$0xff] %v861
      %894 = vst [vmem:[#allocation2 + $0x20] sm:$0xff] %v862
      %895 = vst [vmem:[#allocation2 + $0x28] sm:$0xff] %v863
      %896 = vst [vmem:[#allocation2 + $0x30] sm:$0xff] %v864
      %897 = vst [vmem:[#allocation2 + $0x38] sm:$0xff] %v865
      %898 = vst [vmem:[#allocation2 + $0x40] sm:$0xff] %v866
      %899 = vst [vmem:[#allocation2 + $0x48] sm:$0xff] %v867
      %900 = vst [vmem:[#allocation2 + $0x50] sm:$0xff] %v868
      %901 = vst [vmem:[#allocation2 + $0x58] sm:$0xff] %v869
      %902 = vst [vmem:[#allocation2 + $0x60] sm:$0xff] %v870
      %903 = vst [vmem:[#allocation2 + $0x68] sm:$0xff] %v871
      %904 = vst [vmem:[#allocation2 + $0x70] sm:$0xff] %v872
      %905 = vst [vmem:[#allocation2 + $0x78] sm:$0xff] %v873
      %906 = vst [vmem:[#allocation2 + $0x80] sm:$0xff] %v874
      %907 = vst [vmem:[#allocation2 + $0x88] sm:$0xff] %v875
      %908 = vst [vmem:[#allocation2 + $0x90] sm:$0xff] %v876
      %909 = vst [vmem:[#allocation2 + $0x98] sm:$0xff] %v877
      %910 = vst [vmem:[#allocation2 + $0xa0] sm:$0xff] %v878
      %911 = vst [vmem:[#allocation2 + $0xa8] sm:$0xff] %v879
      %912 = vst [vmem:[#allocation2 + $0xb0] sm:$0xff] %v880
      %913 = vst [vmem:[#allocation2 + $0xb8] sm:$0xff] %v881
      %914 = vst [vmem:[#allocation2 + $0xc0] sm:$0xff] %v882
      %915 = vst [vmem:[#allocation2 + $0xc8] sm:$0xff] %v883
      %916 = vst [vmem:[#allocation2 + $0xd0] sm:$0xff] %v884
      %917 = vst [vmem:[#allocation2 + $0xd8] sm:$0xff] %v885
      %918 = vst [vmem:[#allocation2 + $0xe0] sm:$0xff] %v886
      %919 = vst [vmem:[#allocation2 + $0xe8] sm:$0xff] %v887
      %920 = vst [vmem:[#allocation2 + $0xf0] sm:$0xff] %v888
      %921 = vst [vmem:[#allocation2 + $0xf8] sm:$0xff] %v889
      // Predicated region
      $region41: #{densenet_forward.26} parent=35 // pred_check
        %p922 = pneg %p309
      $region42: #{densenet_forward.26} parent=35 // pred_check_branch
        %924 = sbr.rel (%p922) target = $region44
      $region43: #{densenet_forward.26} parent=35 // pred_region
        %v925 = vld [vmem:[#allocation2] sm:$0xff]
        %v926 = vld [vmem:[#allocation2 + $0x8] sm:$0xff]
        %v927 = vld [vmem:[#allocation2 + $0x10] sm:$0xff]
        %v928 = vld [vmem:[#allocation2 + $0x18] sm:$0xff]
        %v929 = vld [vmem:[#allocation2 + $0x20] sm:$0xff]
        %v930 = vld [vmem:[#allocation2 + $0x28] sm:$0xff]
        %v931 = vld [vmem:[#allocation2 + $0x30] sm:$0xff]
        %v932 = vld [vmem:[#allocation2 + $0x38] sm:$0xff]
        %v933 = vld [vmem:[#allocation2 + $0x40] sm:$0xff]
        %v934 = vld [vmem:[#allocation2 + $0x48] sm:$0xff]
        %v935 = vld [vmem:[#allocation2 + $0x50] sm:$0xff]
        %v936 = vld [vmem:[#allocation2 + $0x58] sm:$0xff]
        %v937 = vld [vmem:[#allocation2 + $0x60] sm:$0xff]
        %v938 = vld [vmem:[#allocation2 + $0x68] sm:$0xff]
        %v939 = vld [vmem:[#allocation2 + $0x70] sm:$0xff]
        %v940 = vld [vmem:[#allocation2 + $0x78] sm:$0xff]
        %v941 = vld [vmem:[#allocation2 + $0x80] sm:$0xff]
        %v942 = vld [vmem:[#allocation2 + $0x88] sm:$0xff]
        %v943 = vld [vmem:[#allocation2 + $0x90] sm:$0xff]
        %v944 = vld [vmem:[#allocation2 + $0x98] sm:$0xff]
        %v945 = vld [vmem:[#allocation2 + $0xa0] sm:$0xff]
        %v946 = vld [vmem:[#allocation2 + $0xa8] sm:$0xff]
        %v947 = vld [vmem:[#allocation2 + $0xb0] sm:$0xff]
        %v948 = vld [vmem:[#allocation2 + $0xb8] sm:$0xff]
        %v949 = vld [vmem:[#allocation2 + $0xc0] sm:$0xff]
        %v950 = vld [vmem:[#allocation2 + $0xc8] sm:$0xff]
        %v951 = vld [vmem:[#allocation2 + $0xd0] sm:$0xff]
        %v952 = vld [vmem:[#allocation2 + $0xd8] sm:$0xff]
        %v953 = vld [vmem:[#allocation2 + $0xe0] sm:$0xff]
        %v954 = vld [vmem:[#allocation2 + $0xe8] sm:$0xff]
        %v955 = vld [vmem:[#allocation2 + $0xf0] sm:$0xff]
        %v956 = vld [vmem:[#allocation2 + $0xf8] sm:$0xff]
        %v957 = vld [vmem:[%s295] sm:$0x1]
        %v959 = vlaneseq
        %v960 = vshrl.u32 %v959, 7
        %v961 = vsub.s32 0, %v960
        %v962 = vrot.slane %v957, %v961
        %v964 = vmul.f32 %v925, %v962
        %v965 = vmul.f32 %v926, %v962
        %v966 = vmul.f32 %v927, %v962
        %v967 = vmul.f32 %v928, %v962
        %v968 = vmul.f32 %v929, %v962
        %v969 = vmul.f32 %v930, %v962
        %v970 = vmul.f32 %v931, %v962
        %v971 = vmul.f32 %v932, %v962
        %v972 = vmul.f32 %v933, %v962
        %v973 = vmul.f32 %v934, %v962
        %v974 = vmul.f32 %v935, %v962
        %v975 = vmul.f32 %v936, %v962
        %v976 = vmul.f32 %v937, %v962
        %v977 = vmul.f32 %v938, %v962
        %v978 = vmul.f32 %v939, %v962
        %v979 = vmul.f32 %v940, %v962
        %v980 = vmul.f32 %v941, %v962
        %v981 = vmul.f32 %v942, %v962
        %v982 = vmul.f32 %v943, %v962
        %v983 = vmul.f32 %v944, %v962
        %v984 = vmul.f32 %v945, %v962
        %v985 = vmul.f32 %v946, %v962
        %v986 = vmul.f32 %v947, %v962
        %v987 = vmul.f32 %v948, %v962
        %v988 = vmul.f32 %v949, %v962
        %v989 = vmul.f32 %v950, %v962
        %v990 = vmul.f32 %v951, %v962
        %v991 = vmul.f32 %v952, %v962
        %v992 = vmul.f32 %v953, %v962
        %v993 = vmul.f32 %v954, %v962
        %v994 = vmul.f32 %v955, %v962
        %v995 = vmul.f32 %v956, %v962
        %v996 = vld [vmem:[%s298] sm:$0x1]
        %v998 = vlaneseq
        %v999 = vshrl.u32 %v998, 7
        %v1000 = vsub.s32 0, %v999
        %v1001 = vrot.slane %v996, %v1000
        %v1003 = vadd.f32 %v964, %v1001
        %v1004 = vadd.f32 %v965, %v1001
        %v1005 = vadd.f32 %v966, %v1001
        %v1006 = vadd.f32 %v967, %v1001
        %v1007 = vadd.f32 %v968, %v1001
        %v1008 = vadd.f32 %v969, %v1001
        %v1009 = vadd.f32 %v970, %v1001
        %v1010 = vadd.f32 %v971, %v1001
        %v1011 = vadd.f32 %v972, %v1001
        %v1012 = vadd.f32 %v973, %v1001
        %v1013 = vadd.f32 %v974, %v1001
        %v1014 = vadd.f32 %v975, %v1001
        %v1015 = vadd.f32 %v976, %v1001
        %v1016 = vadd.f32 %v977, %v1001
        %v1017 = vadd.f32 %v978, %v1001
        %v1018 = vadd.f32 %v979, %v1001
        %v1019 = vadd.f32 %v980, %v1001
        %v1020 = vadd.f32 %v981, %v1001
        %v1021 = vadd.f32 %v982, %v1001
        %v1022 = vadd.f32 %v983, %v1001
        %v1023 = vadd.f32 %v984, %v1001
        %v1024 = vadd.f32 %v985, %v1001
        %v1025 = vadd.f32 %v986, %v1001
        %v1026 = vadd.f32 %v987, %v1001
        %v1027 = vadd.f32 %v988, %v1001
        %v1028 = vadd.f32 %v989, %v1001
        %v1029 = vadd.f32 %v990, %v1001
        %v1030 = vadd.f32 %v991, %v1001
        %v1031 = vadd.f32 %v992, %v1001
        %v1032 = vadd.f32 %v993, %v1001
        %v1033 = vadd.f32 %v994, %v1001
        %v1034 = vadd.f32 %v995, %v1001
        %v1035 = vmax.f32 %v1003, 0.0
        %v1036 = vmax.f32 %v1004, 0.0
        %v1037 = vmax.f32 %v1005, 0.0
        %v1038 = vmax.f32 %v1006, 0.0
        %v1039 = vmax.f32 %v1007, 0.0
        %v1040 = vmax.f32 %v1008, 0.0
        %v1041 = vmax.f32 %v1009, 0.0
        %v1042 = vmax.f32 %v1010, 0.0
        %v1043 = vmax.f32 %v1011, 0.0
        %v1044 = vmax.f32 %v1012, 0.0
        %v1045 = vmax.f32 %v1013, 0.0
        %v1046 = vmax.f32 %v1014, 0.0
        %v1047 = vmax.f32 %v1015, 0.0
        %v1048 = vmax.f32 %v1016, 0.0
        %v1049 = vmax.f32 %v1017, 0.0
        %v1050 = vmax.f32 %v1018, 0.0
        %v1051 = vmax.f32 %v1019, 0.0
        %v1052 = vmax.f32 %v1020, 0.0
        %v1053 = vmax.f32 %v1021, 0.0
        %v1054 = vmax.f32 %v1022, 0.0
        %v1055 = vmax.f32 %v1023, 0.0
        %v1056 = vmax.f32 %v1024, 0.0
        %v1057 = vmax.f32 %v1025, 0.0
        %v1058 = vmax.f32 %v1026, 0.0
        %v1059 = vmax.f32 %v1027, 0.0
        %v1060 = vmax.f32 %v1028, 0.0
        %v1061 = vmax.f32 %v1029, 0.0
        %v1062 = vmax.f32 %v1030, 0.0
        %v1063 = vmax.f32 %v1031, 0.0
        %v1064 = vmax.f32 %v1032, 0.0
        %v1065 = vmax.f32 %v1033, 0.0
        %v1066 = vmax.f32 %v1034, 0.0
        %v1067 = vpack.c.bf16 %v1036, %v1035
        %v1068 = vpack.c.bf16 %v1038, %v1037
        %v1069 = vpack.c.bf16 %v1040, %v1039
        %v1070 = vpack.c.bf16 %v1042, %v1041
        %v1071 = vpack.c.bf16 %v1044, %v1043
        %v1072 = vpack.c.bf16 %v1046, %v1045
        %v1073 = vpack.c.bf16 %v1048, %v1047
        %v1074 = vpack.c.bf16 %v1050, %v1049
        %v1075 = vpack.c.bf16 %v1052, %v1051
        %v1076 = vpack.c.bf16 %v1054, %v1053
        %v1077 = vpack.c.bf16 %v1056, %v1055
        %v1078 = vpack.c.bf16 %v1058, %v1057
        %v1079 = vpack.c.bf16 %v1060, %v1059
        %v1080 = vpack.c.bf16 %v1062, %v1061
        %v1081 = vpack.c.bf16 %v1064, %v1063
        %v1082 = vpack.c.bf16 %v1066, %v1065
        %v1099 = vunpack.c.l.b16 %v1067
        %v1100 = vunpack.c.h.b16 %v1067
        %v1101 = vunpack.c.l.b16 %v1068
        %v1102 = vunpack.c.h.b16 %v1068
        %v1103 = vunpack.c.l.b16 %v1069
        %v1104 = vunpack.c.h.b16 %v1069
        %v1105 = vunpack.c.l.b16 %v1070
        %v1106 = vunpack.c.h.b16 %v1070
        %v1107 = vunpack.c.l.b16 %v1071
        %v1108 = vunpack.c.h.b16 %v1071
        %v1109 = vunpack.c.l.b16 %v1072
        %v1110 = vunpack.c.h.b16 %v1072
        %v1111 = vunpack.c.l.b16 %v1073
        %v1112 = vunpack.c.h.b16 %v1073
        %v1113 = vunpack.c.l.b16 %v1074
        %v1114 = vunpack.c.h.b16 %v1074
        %v1115 = vunpack.c.l.b16 %v1075
        %v1116 = vunpack.c.h.b16 %v1075
        %v1117 = vunpack.c.l.b16 %v1076
        %v1118 = vunpack.c.h.b16 %v1076
        %v1119 = vunpack.c.l.b16 %v1077
        %v1120 = vunpack.c.h.b16 %v1077
        %v1121 = vunpack.c.l.b16 %v1078
        %v1122 = vunpack.c.h.b16 %v1078
        %v1123 = vunpack.c.l.b16 %v1079
        %v1124 = vunpack.c.h.b16 %v1079
        %v1125 = vunpack.c.l.b16 %v1080
        %v1126 = vunpack.c.h.b16 %v1080
        %v1127 = vunpack.c.l.b16 %v1081
        %v1128 = vunpack.c.h.b16 %v1081
        %v1129 = vunpack.c.l.b16 %v1082
        %v1130 = vunpack.c.h.b16 %v1082
        %v1131 = vpack.c.b16 %v1099, %v1099
        %v1132 = vpack.c.b16 %v1100, %v1100
        %v1133 = vpack.c.b16 %v1101, %v1101
        %v1134 = vpack.c.b16 %v1102, %v1102
        %v1135 = vpack.c.b16 %v1103, %v1103
        %v1136 = vpack.c.b16 %v1104, %v1104
        %v1137 = vpack.c.b16 %v1105, %v1105
        %v1138 = vpack.c.b16 %v1106, %v1106
        %v1139 = vpack.c.b16 %v1107, %v1107
        %v1140 = vpack.c.b16 %v1108, %v1108
        %v1141 = vpack.c.b16 %v1109, %v1109
        %v1142 = vpack.c.b16 %v1110, %v1110
        %v1143 = vpack.c.b16 %v1111, %v1111
        %v1144 = vpack.c.b16 %v1112, %v1112
        %v1145 = vpack.c.b16 %v1113, %v1113
        %v1146 = vpack.c.b16 %v1114, %v1114
        %v1147 = vpack.c.b16 %v1115, %v1115
        %v1148 = vpack.c.b16 %v1116, %v1116
        %v1149 = vpack.c.b16 %v1117, %v1117
        %v1150 = vpack.c.b16 %v1118, %v1118
        %v1151 = vpack.c.b16 %v1119, %v1119
        %v1152 = vpack.c.b16 %v1120, %v1120
        %v1153 = vpack.c.b16 %v1121, %v1121
        %v1154 = vpack.c.b16 %v1122, %v1122
        %v1155 = vpack.c.b16 %v1123, %v1123
        %v1156 = vpack.c.b16 %v1124, %v1124
        %v1157 = vpack.c.b16 %v1125, %v1125
        %v1158 = vpack.c.b16 %v1126, %v1126
        %v1159 = vpack.c.b16 %v1127, %v1127
        %v1160 = vpack.c.b16 %v1128, %v1128
        %v1161 = vpack.c.b16 %v1129, %v1129
        %v1162 = vpack.c.b16 %v1130, %v1130
        %1195 = vst [vmem:[%s306] sm:$0xf] %v1131
        %1196 = vst [vmem:[%s306 + $0x4] sm:$0xf] %v1132
        %1197 = vst [vmem:[%s306 + $0x8] sm:$0xf] %v1133
        %1198 = vst [vmem:[%s306 + $0xc] sm:$0xf] %v1134
        %1199 = vst [vmem:[%s306 + $0x10] sm:$0xf] %v1135
        %1200 = vst [vmem:[%s306 + $0x14] sm:$0xf] %v1136
        %1201 = vst [vmem:[%s306 + $0x18] sm:$0xf] %v1137
        %1202 = vst [vmem:[%s306 + $0x1c] sm:$0xf] %v1138
        %1203 = vst [vmem:[%s306 + $0x20] sm:$0xf] %v1139
        %1204 = vst [vmem:[%s306 + $0x24] sm:$0xf] %v1140
        %1205 = vst [vmem:[%s306 + $0x28] sm:$0xf] %v1141
        %1206 = vst [vmem:[%s306 + $0x2c] sm:$0xf] %v1142
        %1207 = vst [vmem:[%s306 + $0x30] sm:$0xf] %v1143
        %1208 = vst [vmem:[%s306 + $0x34] sm:$0xf] %v1144
        %1209 = vst [vmem:[%s306 + $0x38] sm:$0xf] %v1145
        %1210 = vst [vmem:[%s306 + $0x3c] sm:$0xf] %v1146
        %1211 = vst [vmem:[%s306 + $0x40] sm:$0xf] %v1147
        %1212 = vst [vmem:[%s306 + $0x44] sm:$0xf] %v1148
        %1213 = vst [vmem:[%s306 + $0x48] sm:$0xf] %v1149
        %1214 = vst [vmem:[%s306 + $0x4c] sm:$0xf] %v1150
        %1215 = vst [vmem:[%s306 + $0x50] sm:$0xf] %v1151
        %1216 = vst [vmem:[%s306 + $0x54] sm:$0xf] %v1152
        %1217 = vst [vmem:[%s306 + $0x58] sm:$0xf] %v1153
        %1218 = vst [vmem:[%s306 + $0x5c] sm:$0xf] %v1154
        %1219 = vst [vmem:[%s306 + $0x60] sm:$0xf] %v1155
        %1220 = vst [vmem:[%s306 + $0x64] sm:$0xf] %v1156
        %1221 = vst [vmem:[%s306 + $0x68] sm:$0xf] %v1157
        %1222 = vst [vmem:[%s306 + $0x6c] sm:$0xf] %v1158
        %1223 = vst [vmem:[%s306 + $0x70] sm:$0xf] %v1159
        %1224 = vst [vmem:[%s306 + $0x74] sm:$0xf] %v1160
        %1225 = vst [vmem:[%s306 + $0x78] sm:$0xf] %v1161
        %1226 = vst [vmem:[%s306 + $0x7c] sm:$0xf] %v1162
      $region44: #{densenet_forward.26} parent=35 // pred_fallthru
        _
      %s1227 = smul.u32 32, %s20
      %p1228 = scmp.lt.s32.totalorder %s1227, 63
      %s1229 = scalar_select %p1228, %s1227, 63
      %p1230 = scmp.lt.s32.totalorder %s21, 0
      %s1231 = scalar_select %p1230, %s21, 0
      %s1232 = sadd.s32 %s1231, %s1229
      %s1233 = smul.addr %s1232, 4
      %s1234 = scalar_lea.vmem %s4, %s1233
      // Predicated region
      $region45: #{densenet_forward.26} parent=35 // pred_check
        %p1235 = pneg %p162
      $region46: #{densenet_forward.26} parent=35 // pred_check_branch
        %1237 = sbr.rel (%p1235) target = $region48
      $region47: #{densenet_forward.26} parent=35 // pred_region
        %s1238 = smul.u32 32, %s20
      $region48: #{densenet_forward.26} parent=35 // pred_fallthru
        _
    $region36: #{densenet_forward.26} parent=5 // pred_fallthru
      _
    %p1239 = scmp.le.s32.totalorder 2, %s10
    // Predicated region
    $region49: #{densenet_forward.26} parent=5 // pred_check
      %p1240 = pneg %p1239
    $region50: #{densenet_forward.26} parent=5 // pred_check_branch
      %1242 = sbr.rel (%p1240) target = $region52
    $region51: #{densenet_forward.26} parent=5 // pred_region
      %s1243 = ssub.s32 %s10, 2
      // Predicated region
      $region53: #{densenet_forward.26} parent=51 // pred_check
        %p1244 = pneg %p168
      $region54: #{densenet_forward.26} parent=51 // pred_check_branch
        %1246 = sbr.rel (%p1244) target = $region56
      $region55: #{densenet_forward.26} parent=51 // pred_region
        %s1247 = smul.u32 32, %s23
        %p1248 = scmp.lt.s32.totalorder %s1247, 63
        %s1249 = scalar_select %p1248, %s1247, 63
        %p1250 = scmp.lt.s32.totalorder %s24, 0
        %s1251 = scalar_select %p1250, %s24, 0
        %s1252 = sadd.s32 %s1251, %s1249
        %s1253 = smul.addr %s1252, 4
        %s1254 = scalar_lea.vmem %s4, %s1253
      $region56: #{densenet_forward.26} parent=51 // pred_fallthru
        _
    $region52: #{densenet_forward.26} parent=5 // pred_fallthru
      _
  $region6: #{densenet_forward.26} parent=0 // loop_footer
    %s14 = sadd.s32 1, %s10
  $region7: #{densenet_forward.26} parent=0 // loop_footer_branch
    %9 = sbr.rel target = $region3
  $region8: #{densenet_forward.26} parent=0 // loop_exit
    _

// kernel: densenet_forward.27
$region0: #{densenet_forward.27}
  #allocation0 [shape = 'u32[]', space=smem, size = 0x4, offset = 0x4, fixed_abs, tag = 'smem constant byte address 0x4 - core index']
  #allocation1 [shape = 'u32[144,128]{1,0:T(1,128)}', space=vmem, size = 0x12000, scoped, tag = 'internal scratch']
  %s0 = inlined_call_operand.vmem [shape: bf16[9,128,128], index: 0, kind: input, shape index: {}]
  %s1 = inlined_call_operand.vmem [shape: bf16[128,128], index: 1, kind: output, shape index: {}]
  %s2 = sld [smem:[#allocation0]]
  $region14: #{densenet_forward.27} parent=0
    _
  %s4 = ssub.s32 1, %s2
  %s5 = scalar_select 0, %s4, %s2
  // Predicated region
  $region2: #{densenet_forward.27} parent=0 // pred_check
    _
  $region3: #{densenet_forward.27} parent=0 // pred_check_branch
    %7 = sbr.rel (0) target = $region5
  $region4: #{densenet_forward.27} parent=0 // pred_region
    _
  $region5: #{densenet_forward.27} parent=0 // pred_fallthru
    _
  %v9 = vld [vmem:[%s0] sm:$0xf]
  %v10 = vld [vmem:[%s0 + $0x4] sm:$0xf]
  %v11 = vld [vmem:[%s0 + $0x8] sm:$0xf]
  %v12 = vld [vmem:[%s0 + $0xc] sm:$0xf]
  %v13 = vld [vmem:[%s0 + $0x10] sm:$0xf]
  %v14 = vld [vmem:[%s0 + $0x14] sm:$0xf]
  %v15 = vld [vmem:[%s0 + $0x18] sm:$0xf]
  %v16 = vld [vmem:[%s0 + $0x1c] sm:$0xf]
  %v17 = vld [vmem:[%s0 + $0x20] sm:$0xf]
  %v18 = vld [vmem:[%s0 + $0x24] sm:$0xf]
  %v19 = vld [vmem:[%s0 + $0x28] sm:$0xf]
  %v20 = vld [vmem:[%s0 + $0x2c] sm:$0xf]
  %v21 = vld [vmem:[%s0 + $0x30] sm:$0xf]
  %v22 = vld [vmem:[%s0 + $0x34] sm:$0xf]
  %v23 = vld [vmem:[%s0 + $0x38] sm:$0xf]
  %v24 = vld [vmem:[%s0 + $0x3c] sm:$0xf]
  %v25 = vld [vmem:[%s0 + $0x40] sm:$0xf]
  %v26 = vld [vmem:[%s0 + $0x44] sm:$0xf]
  %v27 = vld [vmem:[%s0 + $0x48] sm:$0xf]
  %v28 = vld [vmem:[%s0 + $0x4c] sm:$0xf]
  %v29 = vld [vmem:[%s0 + $0x50] sm:$0xf]
  %v30 = vld [vmem:[%s0 + $0x54] sm:$0xf]
  %v31 = vld [vmem:[%s0 + $0x58] sm:$0xf]
  %v32 = vld [vmem:[%s0 + $0x5c] sm:$0xf]
  %v33 = vld [vmem:[%s0 + $0x60] sm:$0xf]
  %v34 = vld [vmem:[%s0 + $0x64] sm:$0xf]
  %v35 = vld [vmem:[%s0 + $0x68] sm:$0xf]
  %v36 = vld [vmem:[%s0 + $0x6c] sm:$0xf]
  %v37 = vld [vmem:[%s0 + $0x70] sm:$0xf]
  %v38 = vld [vmem:[%s0 + $0x74] sm:$0xf]
  %v39 = vld [vmem:[%s0 + $0x78] sm:$0xf]
  %v40 = vld [vmem:[%s0 + $0x7c] sm:$0xf]
  %v41 = vld [vmem:[%s0 + $0x80] sm:$0xf]
  %v42 = vld [vmem:[%s0 + $0x84] sm:$0xf]
  %v43 = vld [vmem:[%s0 + $0x88] sm:$0xf]
  %v44 = vld [vmem:[%s0 + $0x8c] sm:$0xf]
  %v45 = vld [vmem:[%s0 + $0x90] sm:$0xf]
  %v46 = vld [vmem:[%s0 + $0x94] sm:$0xf]
  %v47 = vld [vmem:[%s0 + $0x98] sm:$0xf]
  %v48 = vld [vmem:[%s0 + $0x9c] sm:$0xf]
  %v49 = vld [vmem:[%s0 + $0xa0] sm:$0xf]
  %v50 = vld [vmem:[%s0 + $0xa4] sm:$0xf]
  %v51 = vld [vmem:[%s0 + $0xa8] sm:$0xf]
  %v52 = vld [vmem:[%s0 + $0xac] sm:$0xf]
  %v53 = vld [vmem:[%s0 + $0xb0] sm:$0xf]
  %v54 = vld [vmem:[%s0 + $0xb4] sm:$0xf]
  %v55 = vld [vmem:[%s0 + $0xb8] sm:$0xf]
  %v56 = vld [vmem:[%s0 + $0xbc] sm:$0xf]
  %v57 = vld [vmem:[%s0 + $0xc0] sm:$0xf]
  %v58 = vld [vmem:[%s0 + $0xc4] sm:$0xf]
  %v59 = vld [vmem:[%s0 + $0xc8] sm:$0xf]
  %v60 = vld [vmem:[%s0 + $0xcc] sm:$0xf]
  %v61 = vld [vmem:[%s0 + $0xd0] sm:$0xf]
  %v62 = vld [vmem:[%s0 + $0xd4] sm:$0xf]
  %v63 = vld [vmem:[%s0 + $0xd8] sm:$0xf]
  %v64 = vld [vmem:[%s0 + $0xdc] sm:$0xf]
  %v65 = vld [vmem:[%s0 + $0xe0] sm:$0xf]
  %v66 = vld [vmem:[%s0 + $0xe4] sm:$0xf]
  %v67 = vld [vmem:[%s0 + $0xe8] sm:$0xf]
  %v68 = vld [vmem:[%s0 + $0xec] sm:$0xf]
  %v69 = vld [vmem:[%s0 + $0xf0] sm:$0xf]
  %v70 = vld [vmem:[%s0 + $0xf4] sm:$0xf]
  %v71 = vld [vmem:[%s0 + $0xf8] sm:$0xf]
  %v72 = vld [vmem:[%s0 + $0xfc] sm:$0xf]
  %v73 = vld [vmem:[%s0 + $0x100] sm:$0xf]
  %v74 = vld [vmem:[%s0 + $0x104] sm:$0xf]
  %v75 = vld [vmem:[%s0 + $0x108] sm:$0xf]
  %v76 = vld [vmem:[%s0 + $0x10c] sm:$0xf]
  %v77 = vld [vmem:[%s0 + $0x110] sm:$0xf]
  %v78 = vld [vmem:[%s0 + $0x114] sm:$0xf]
  %v79 = vld [vmem:[%s0 + $0x118] sm:$0xf]
  %v80 = vld [vmem:[%s0 + $0x11c] sm:$0xf]
  %v81 = vld [vmem:[%s0 + $0x120] sm:$0xf]
  %v82 = vld [vmem:[%s0 + $0x124] sm:$0xf]
  %v83 = vld [vmem:[%s0 + $0x128] sm:$0xf]
  %v84 = vld [vmem:[%s0 + $0x12c] sm:$0xf]
  %v85 = vld [vmem:[%s0 + $0x130] sm:$0xf]
  %v86 = vld [vmem:[%s0 + $0x134] sm:$0xf]
  %v87 = vld [vmem:[%s0 + $0x138] sm:$0xf]
  %v88 = vld [vmem:[%s0 + $0x13c] sm:$0xf]
  %v89 = vld [vmem:[%s0 + $0x140] sm:$0xf]
  %v90 = vld [vmem:[%s0 + $0x144] sm:$0xf]
  %v91 = vld [vmem:[%s0 + $0x148] sm:$0xf]
  %v92 = vld [vmem:[%s0 + $0x14c] sm:$0xf]
  %v93 = vld [vmem:[%s0 + $0x150] sm:$0xf]
  %v94 = vld [vmem:[%s0 + $0x154] sm:$0xf]
  %v95 = vld [vmem:[%s0 + $0x158] sm:$0xf]
  %v96 = vld [vmem:[%s0 + $0x15c] sm:$0xf]
  %v97 = vld [vmem:[%s0 + $0x160] sm:$0xf]
  %v98 = vld [vmem:[%s0 + $0x164] sm:$0xf]
  %v99 = vld [vmem:[%s0 + $0x168] sm:$0xf]
  %v100 = vld [vmem:[%s0 + $0x16c] sm:$0xf]
  %v101 = vld [vmem:[%s0 + $0x170] sm:$0xf]
  %v102 = vld [vmem:[%s0 + $0x174] sm:$0xf]
  %v103 = vld [vmem:[%s0 + $0x178] sm:$0xf]
  %v104 = vld [vmem:[%s0 + $0x17c] sm:$0xf]
  %v105 = vld [vmem:[%s0 + $0x180] sm:$0xf]
  %v106 = vld [vmem:[%s0 + $0x184] sm:$0xf]
  %v107 = vld [vmem:[%s0 + $0x188] sm:$0xf]
  %v108 = vld [vmem:[%s0 + $0x18c] sm:$0xf]
  %v109 = vld [vmem:[%s0 + $0x190] sm:$0xf]
  %v110 = vld [vmem:[%s0 + $0x194] sm:$0xf]
  %v111 = vld [vmem:[%s0 + $0x198] sm:$0xf]
  %v112 = vld [vmem:[%s0 + $0x19c] sm:$0xf]
  %v113 = vld [vmem:[%s0 + $0x1a0] sm:$0xf]
  %v114 = vld [vmem:[%s0 + $0x1a4] sm:$0xf]
  %v115 = vld [vmem:[%s0 + $0x1a8] sm:$0xf]
  %v116 = vld [vmem:[%s0 + $0x1ac] sm:$0xf]
  %v117 = vld [vmem:[%s0 + $0x1b0] sm:$0xf]
  %v118 = vld [vmem:[%s0 + $0x1b4] sm:$0xf]
  %v119 = vld [vmem:[%s0 + $0x1b8] sm:$0xf]
  %v120 = vld [vmem:[%s0 + $0x1bc] sm:$0xf]
  %v121 = vld [vmem:[%s0 + $0x1c0] sm:$0xf]
  %v122 = vld [vmem:[%s0 + $0x1c4] sm:$0xf]
  %v123 = vld [vmem:[%s0 + $0x1c8] sm:$0xf]
  %v124 = vld [vmem:[%s0 + $0x1cc] sm:$0xf]
  %v125 = vld [vmem:[%s0 + $0x1d0] sm:$0xf]
  %v126 = vld [vmem:[%s0 + $0x1d4] sm:$0xf]
  %v127 = vld [vmem:[%s0 + $0x1d8] sm:$0xf]
  %v128 = vld [vmem:[%s0 + $0x1dc] sm:$0xf]
  %v129 = vld [vmem:[%s0 + $0x1e0] sm:$0xf]
  %v130 = vld [vmem:[%s0 + $0x1e4] sm:$0xf]
  %v131 = vld [vmem:[%s0 + $0x1e8] sm:$0xf]
  %v132 = vld [vmem:[%s0 + $0x1ec] sm:$0xf]
  %v133 = vld [vmem:[%s0 + $0x1f0] sm:$0xf]
  %v134 = vld [vmem:[%s0 + $0x1f4] sm:$0xf]
  %v135 = vld [vmem:[%s0 + $0x1f8] sm:$0xf]
  %v136 = vld [vmem:[%s0 + $0x1fc] sm:$0xf]
  %v137 = vld [vmem:[%s0 + $0x200] sm:$0xf]
  %v138 = vld [vmem:[%s0 + $0x204] sm:$0xf]
  %v139 = vld [vmem:[%s0 + $0x208] sm:$0xf]
  %v140 = vld [vmem:[%s0 + $0x20c] sm:$0xf]
  %v141 = vld [vmem:[%s0 + $0x210] sm:$0xf]
  %v142 = vld [vmem:[%s0 + $0x214] sm:$0xf]
  %v143 = vld [vmem:[%s0 + $0x218] sm:$0xf]
  %v144 = vld [vmem:[%s0 + $0x21c] sm:$0xf]
  %v145 = vld [vmem:[%s0 + $0x220] sm:$0xf]
  %v146 = vld [vmem:[%s0 + $0x224] sm:$0xf]
  %v147 = vld [vmem:[%s0 + $0x228] sm:$0xf]
  %v148 = vld [vmem:[%s0 + $0x22c] sm:$0xf]
  %v149 = vld [vmem:[%s0 + $0x230] sm:$0xf]
  %v150 = vld [vmem:[%s0 + $0x234] sm:$0xf]
  %v151 = vld [vmem:[%s0 + $0x238] sm:$0xf]
  %v152 = vld [vmem:[%s0 + $0x23c] sm:$0xf]
  %vm153 = vcmask 1043456
  %v156 = vsel %vm153, %v9, 4286644096
  %v159 = vsel %vm153, %v25, 4286644096
  %v161 = vmax.bf16 %v156, %v159
  %v163 = vsel %vm153, %v41, 4286644096
  %v165 = vmax.bf16 %v161, %v163
  %v167 = vsel %vm153, %v57, 4286644096
  %v169 = vmax.bf16 %v165, %v167
  %v171 = vsel %vm153, %v73, 4286644096
  %v173 = vmax.bf16 %v169, %v171
  %v175 = vsel %vm153, %v89, 4286644096
  %v177 = vmax.bf16 %v173, %v175
  %v179 = vsel %vm153, %v105, 4286644096
  %v181 = vmax.bf16 %v177, %v179
  %v183 = vsel %vm153, %v121, 4286644096
  %v185 = vmax.bf16 %v181, %v183
  %v187 = vsel %vm153, %v137, 4286644096
  %v189 = vmax.bf16 %v185, %v187
  %v191 = vsel %vm153, %v10, 4286644096
  %v194 = vsel %vm153, %v26, 4286644096
  %v196 = vmax.bf16 %v191, %v194
  %v198 = vsel %vm153, %v42, 4286644096
  %v200 = vmax.bf16 %v196, %v198
  %v202 = vsel %vm153, %v58, 4286644096
  %v204 = vmax.bf16 %v200, %v202
  %v206 = vsel %vm153, %v74, 4286644096
  %v208 = vmax.bf16 %v204, %v206
  %v210 = vsel %vm153, %v90, 4286644096
  %v212 = vmax.bf16 %v208, %v210
  %v214 = vsel %vm153, %v106, 4286644096
  %v216 = vmax.bf16 %v212, %v214
  %v218 = vsel %vm153, %v122, 4286644096
  %v220 = vmax.bf16 %v216, %v218
  %v222 = vsel %vm153, %v138, 4286644096
  %v224 = vmax.bf16 %v220, %v222
  %v226 = vsel %vm153, %v11, 4286644096
  %v229 = vsel %vm153, %v27, 4286644096
  %v231 = vmax.bf16 %v226, %v229
  %v233 = vsel %vm153, %v43, 4286644096
  %v235 = vmax.bf16 %v231, %v233
  %v237 = vsel %vm153, %v59, 4286644096
  %v239 = vmax.bf16 %v235, %v237
  %v241 = vsel %vm153, %v75, 4286644096
  %v243 = vmax.bf16 %v239, %v241
  %v245 = vsel %vm153, %v91, 4286644096
  %v247 = vmax.bf16 %v243, %v245
  %v249 = vsel %vm153, %v107, 4286644096
  %v251 = vmax.bf16 %v247, %v249
  %v253 = vsel %vm153, %v123, 4286644096
  %v255 = vmax.bf16 %v251, %v253
  %v257 = vsel %vm153, %v139, 4286644096
  %v259 = vmax.bf16 %v255, %v257
  %v261 = vsel %vm153, %v12, 4286644096
  %v264 = vsel %vm153, %v28, 4286644096
  %v266 = vmax.bf16 %v261, %v264
  %v268 = vsel %vm153, %v44, 4286644096
  %v270 = vmax.bf16 %v266, %v268
  %v272 = vsel %vm153, %v60, 4286644096
  %v274 = vmax.bf16 %v270, %v272
  %v276 = vsel %vm153, %v76, 4286644096
  %v278 = vmax.bf16 %v274, %v276
  %v280 = vsel %vm153, %v92, 4286644096
  %v282 = vmax.bf16 %v278, %v280
  %v284 = vsel %vm153, %v108, 4286644096
  %v286 = vmax.bf16 %v282, %v284
  %v288 = vsel %vm153, %v124, 4286644096
  %v290 = vmax.bf16 %v286, %v288
  %v292 = vsel %vm153, %v140, 4286644096
  %v294 = vmax.bf16 %v290, %v292
  %v296 = vsel %vm153, %v13, 4286644096
  %v299 = vsel %vm153, %v29, 4286644096
  %v301 = vmax.bf16 %v296, %v299
  %v303 = vsel %vm153, %v45, 4286644096
  %v305 = vmax.bf16 %v301, %v303
  %v307 = vsel %vm153, %v61, 4286644096
  %v309 = vmax.bf16 %v305, %v307
  %v311 = vsel %vm153, %v77, 4286644096
  %v313 = vmax.bf16 %v309, %v311
  %v315 = vsel %vm153, %v93, 4286644096
  %v317 = vmax.bf16 %v313, %v315
  %v319 = vsel %vm153, %v109, 4286644096
  %v321 = vmax.bf16 %v317, %v319
  %v323 = vsel %vm153, %v125, 4286644096
  %v325 = vmax.bf16 %v321, %v323
  %v327 = vsel %vm153, %v141, 4286644096
  %v329 = vmax.bf16 %v325, %v327
  %v331 = vsel %vm153, %v14, 4286644096
  %v334 = vsel %vm153, %v30, 4286644096
  %v336 = vmax.bf16 %v331, %v334
  %v338 = vsel %vm153, %v46, 4286644096
  %v340 = vmax.bf16 %v336, %v338
  %v342 = vsel %vm153, %v62, 4286644096
  %v344 = vmax.bf16 %v340, %v342
  %v346 = vsel %vm153, %v78, 4286644096
  %v348 = vmax.bf16 %v344, %v346
  %v350 = vsel %vm153, %v94, 4286644096
  %v352 = vmax.bf16 %v348, %v350
  %v354 = vsel %vm153, %v110, 4286644096
  %v356 = vmax.bf16 %v352, %v354
  %v358 = vsel %vm153, %v126, 4286644096
  %v360 = vmax.bf16 %v356, %v358
  %v362 = vsel %vm153, %v142, 4286644096
  %v364 = vmax.bf16 %v360, %v362
  %v366 = vsel %vm153, %v15, 4286644096
  %v369 = vsel %vm153, %v31, 4286644096
  %v371 = vmax.bf16 %v366, %v369
  %v373 = vsel %vm153, %v47, 4286644096
  %v375 = vmax.bf16 %v371, %v373
  %v377 = vsel %vm153, %v63, 4286644096
  %v379 = vmax.bf16 %v375, %v377
  %v381 = vsel %vm153, %v79, 4286644096
  %v383 = vmax.bf16 %v379, %v381
  %v385 = vsel %vm153, %v95, 4286644096
  %v387 = vmax.bf16 %v383, %v385
  %v389 = vsel %vm153, %v111, 4286644096
  %v391 = vmax.bf16 %v387, %v389
  %v393 = vsel %vm153, %v127, 4286644096
  %v395 = vmax.bf16 %v391, %v393
  %v397 = vsel %vm153, %v143, 4286644096
  %v399 = vmax.bf16 %v395, %v397
  %v401 = vsel %vm153, %v16, 4286644096
  %v404 = vsel %vm153, %v32, 4286644096
  %v406 = vmax.bf16 %v401, %v404
  %v408 = vsel %vm153, %v48, 4286644096
  %v410 = vmax.bf16 %v406, %v408
  %v412 = vsel %vm153, %v64, 4286644096
  %v414 = vmax.bf16 %v410, %v412
  %v416 = vsel %vm153, %v80, 4286644096
  %v418 = vmax.bf16 %v414, %v416
  %v420 = vsel %vm153, %v96, 4286644096
  %v422 = vmax.bf16 %v418, %v420
  %v424 = vsel %vm153, %v112, 4286644096
  %v426 = vmax.bf16 %v422, %v424
  %v428 = vsel %vm153, %v128, 4286644096
  %v430 = vmax.bf16 %v426, %v428
  %v432 = vsel %vm153, %v144, 4286644096
  %v434 = vmax.bf16 %v430, %v432
  %v436 = vsel %vm153, %v17, 4286644096
  %v439 = vsel %vm153, %v33, 4286644096
  %v441 = vmax.bf16 %v436, %v439
  %v443 = vsel %vm153, %v49, 4286644096
  %v445 = vmax.bf16 %v441, %v443
  %v447 = vsel %vm153, %v65, 4286644096
  %v449 = vmax.bf16 %v445, %v447
  %v451 = vsel %vm153, %v81, 4286644096
  %v453 = vmax.bf16 %v449, %v451
  %v455 = vsel %vm153, %v97, 4286644096
  %v457 = vmax.bf16 %v453, %v455
  %v459 = vsel %vm153, %v113, 4286644096
  %v461 = vmax.bf16 %v457, %v459
  %v463 = vsel %vm153, %v129, 4286644096
  %v465 = vmax.bf16 %v461, %v463
  %v467 = vsel %vm153, %v145, 4286644096
  %v469 = vmax.bf16 %v465, %v467
  %v471 = vsel %vm153, %v18, 4286644096
  %v474 = vsel %vm153, %v34, 4286644096
  %v476 = vmax.bf16 %v471, %v474
  %v478 = vsel %vm153, %v50, 4286644096
  %v480 = vmax.bf16 %v476, %v478
  %v482 = vsel %vm153, %v66, 4286644096
  %v484 = vmax.bf16 %v480, %v482
  %v486 = vsel %vm153, %v82, 4286644096
  %v488 = vmax.bf16 %v484, %v486
  %v490 = vsel %vm153, %v98, 4286644096
  %v492 = vmax.bf16 %v488, %v490
  %v494 = vsel %vm153, %v114, 4286644096
  %v496 = vmax.bf16 %v492, %v494
  %v498 = vsel %vm153, %v130, 4286644096
  %v500 = vmax.bf16 %v496, %v498
  %v502 = vsel %vm153, %v146, 4286644096
  %v504 = vmax.bf16 %v500, %v502
  %v506 = vsel %vm153, %v19, 4286644096
  %v509 = vsel %vm153, %v35, 4286644096
  %v511 = vmax.bf16 %v506, %v509
  %v513 = vsel %vm153, %v51, 4286644096
  %v515 = vmax.bf16 %v511, %v513
  %v517 = vsel %vm153, %v67, 4286644096
  %v519 = vmax.bf16 %v515, %v517
  %v521 = vsel %vm153, %v83, 4286644096
  %v523 = vmax.bf16 %v519, %v521
  %v525 = vsel %vm153, %v99, 4286644096
  %v527 = vmax.bf16 %v523, %v525
  %v529 = vsel %vm153, %v115, 4286644096
  %v531 = vmax.bf16 %v527, %v529
  %v533 = vsel %vm153, %v131, 4286644096
  %v535 = vmax.bf16 %v531, %v533
  %v537 = vsel %vm153, %v147, 4286644096
  %v539 = vmax.bf16 %v535, %v537
  %v541 = vsel %vm153, %v20, 4286644096
  %v544 = vsel %vm153, %v36, 4286644096
  %v546 = vmax.bf16 %v541, %v544
  %v548 = vsel %vm153, %v52, 4286644096
  %v550 = vmax.bf16 %v546, %v548
  %v552 = vsel %vm153, %v68, 4286644096
  %v554 = vmax.bf16 %v550, %v552
  %v556 = vsel %vm153, %v84, 4286644096
  %v558 = vmax.bf16 %v554, %v556
  %v560 = vsel %vm153, %v100, 4286644096
  %v562 = vmax.bf16 %v558, %v560
  %v564 = vsel %vm153, %v116, 4286644096
  %v566 = vmax.bf16 %v562, %v564
  %v568 = vsel %vm153, %v132, 4286644096
  %v570 = vmax.bf16 %v566, %v568
  %v572 = vsel %vm153, %v148, 4286644096
  %v574 = vmax.bf16 %v570, %v572
  %v576 = vsel %vm153, %v21, 4286644096
  %v579 = vsel %vm153, %v37, 4286644096
  %v581 = vmax.bf16 %v576, %v579
  %v583 = vsel %vm153, %v53, 4286644096
  %v585 = vmax.bf16 %v581, %v583
  %v587 = vsel %vm153, %v69, 4286644096
  %v589 = vmax.bf16 %v585, %v587
  %v591 = vsel %vm153, %v85, 4286644096
  %v593 = vmax.bf16 %v589, %v591
  %v595 = vsel %vm153, %v101, 4286644096
  %v597 = vmax.bf16 %v593, %v595
  %v599 = vsel %vm153, %v117, 4286644096
  %v601 = vmax.bf16 %v597, %v599
  %v603 = vsel %vm153, %v133, 4286644096
  %v605 = vmax.bf16 %v601, %v603
  %v607 = vsel %vm153, %v149, 4286644096
  %v609 = vmax.bf16 %v605, %v607
  %v611 = vsel %vm153, %v22, 4286644096
  %v614 = vsel %vm153, %v38, 4286644096
  %v616 = vmax.bf16 %v611, %v614
  %v618 = vsel %vm153, %v54, 4286644096
  %v620 = vmax.bf16 %v616, %v618
  %v622 = vsel %vm153, %v70, 4286644096
  %v624 = vmax.bf16 %v620, %v622
  %v626 = vsel %vm153, %v86, 4286644096
  %v628 = vmax.bf16 %v624, %v626
  %v630 = vsel %vm153, %v102, 4286644096
  %v632 = vmax.bf16 %v628, %v630
  %v634 = vsel %vm153, %v118, 4286644096
  %v636 = vmax.bf16 %v632, %v634
  %v638 = vsel %vm153, %v134, 4286644096
  %v640 = vmax.bf16 %v636, %v638
  %v642 = vsel %vm153, %v150, 4286644096
  %v644 = vmax.bf16 %v640, %v642
  %v646 = vsel %vm153, %v23, 4286644096
  %v649 = vsel %vm153, %v39, 4286644096
  %v651 = vmax.bf16 %v646, %v649
  %v653 = vsel %vm153, %v55, 4286644096
  %v655 = vmax.bf16 %v651, %v653
  %v657 = vsel %vm153, %v71, 4286644096
  %v659 = vmax.bf16 %v655, %v657
  %v661 = vsel %vm153, %v87, 4286644096
  %v663 = vmax.bf16 %v659, %v661
  %v665 = vsel %vm153, %v103, 4286644096
  %v667 = vmax.bf16 %v663, %v665
  %v669 = vsel %vm153, %v119, 4286644096
  %v671 = vmax.bf16 %v667, %v669
  %v673 = vsel %vm153, %v135, 4286644096
  %v675 = vmax.bf16 %v671, %v673
  %v677 = vsel %vm153, %v151, 4286644096
  %v679 = vmax.bf16 %v675, %v677
  %v681 = vsel %vm153, %v24, 4286644096
  %v684 = vsel %vm153, %v40, 4286644096
  %v686 = vmax.bf16 %v681, %v684
  %v688 = vsel %vm153, %v56, 4286644096
  %v690 = vmax.bf16 %v686, %v688
  %v692 = vsel %vm153, %v72, 4286644096
  %v694 = vmax.bf16 %v690, %v692
  %v696 = vsel %vm153, %v88, 4286644096
  %v698 = vmax.bf16 %v694, %v696
  %v700 = vsel %vm153, %v104, 4286644096
  %v702 = vmax.bf16 %v698, %v700
  %v704 = vsel %vm153, %v120, 4286644096
  %v706 = vmax.bf16 %v702, %v704
  %v708 = vsel %vm153, %v136, 4286644096
  %v710 = vmax.bf16 %v706, %v708
  %v712 = vsel %vm153, %v152, 4286644096
  %v714 = vmax.bf16 %v710, %v712
  %715 = vst [vmem:[%s1] sm:$0xf] %v189
  %716 = vst [vmem:[%s1 + $0x4] sm:$0xf] %v224
  %717 = vst [vmem:[%s1 + $0x8] sm:$0xf] %v259
  %718 = vst [vmem:[%s1 + $0xc] sm:$0xf] %v294
  %719 = vst [vmem:[%s1 + $0x10] sm:$0xf] %v329
  %720 = vst [vmem:[%s1 + $0x14] sm:$0xf] %v364
  %721 = vst [vmem:[%s1 + $0x18] sm:$0xf] %v399
  %722 = vst [vmem:[%s1 + $0x1c] sm:$0xf] %v434
  %723 = vst [vmem:[%s1 + $0x20] sm:$0xf] %v469
  %724 = vst [vmem:[%s1 + $0x24] sm:$0xf] %v504
  %725 = vst [vmem:[%s1 + $0x28] sm:$0xf] %v539
  %726 = vst [vmem:[%s1 + $0x2c] sm:$0xf] %v574
  %727 = vst [vmem:[%s1 + $0x30] sm:$0xf] %v609
  %728 = vst [vmem:[%s1 + $0x34] sm:$0xf] %v644
  %729 = vst [vmem:[%s1 + $0x38] sm:$0xf] %v679
  %730 = vst [vmem:[%s1 + $0x3c] sm:$0xf] %v714
  // Predicated region
  $region6: #{densenet_forward.27} parent=0 // pred_check
    _
  $region7: #{densenet_forward.27} parent=0 // pred_check_branch
    %732 = sbr.rel (0) target = $region9
  $region8: #{densenet_forward.27} parent=0 // pred_region
    _
  $region9: #{densenet_forward.27} parent=0 // pred_fallthru
    _
  // Predicated region
  $region10: #{densenet_forward.27} parent=0 // pred_check
    _
  $region11: #{densenet_forward.27} parent=0 // pred_check_branch
    %734 = sbr.rel (0) target = $region13
  $region12: #{densenet_forward.27} parent=0 // pred_region
    _
  $region13: #{densenet_forward.27} parent=0 // pred_fallthru
    _

// kernel: densenet_forward.28
$region0: #{densenet_forward.28}
  #allocation0 [shape = 'u32[]', space=smem, size = 0x4, offset = 0x4, fixed_abs, tag = 'smem constant byte address 0x4 - core index']
  #allocation1 [shape = 'u32[144,128]{1,0:T(1,128)}', space=vmem, size = 0x12000, scoped, tag = 'internal scratch']
  #allocation2 [shape = 'f32[128,128]{1,0:T(8,128)}', space=vmem, size = 0x10000, scoped, tag = 'scratch operand']
  %s0 = inlined_call_operand.vmem [shape: bf16[128,128], index: 0, kind: input, shape index: {}]
  %s1 = inlined_call_operand.vmem [shape: bf16[128,128], index: 1, kind: input, shape index: {}]
  %s2 = inlined_call_operand.vmem [shape: f32[1,128], index: 2, kind: input, shape index: {}]
  %s3 = inlined_call_operand.vmem [shape: f32[1,128], index: 3, kind: input, shape index: {}]
  %s4 = inlined_call_operand.vmem [shape: f32[1,128], index: 4, kind: input, shape index: {}]
  %s5 = inlined_call_operand.vmem [shape: f32[1,128], index: 5, kind: input, shape index: {}]
  %s6 = inlined_call_operand.vmem [shape: bf16[128,128], index: 6, kind: output, shape index: {}]
  %s7 = sld [smem:[#allocation0]]
  $region42: #{densenet_forward.28} parent=0
    _
  %s9 = ssub.s32 1, %s7
  %s10 = scalar_select 0, %s9, %s7
  // Predicated region
  $region2: #{densenet_forward.28} parent=0 // pred_check
    _
  $region3: #{densenet_forward.28} parent=0 // pred_check_branch
    %12 = sbr.rel (0) target = $region5
  $region4: #{densenet_forward.28} parent=0 // pred_region
    _
  $region5: #{densenet_forward.28} parent=0 // pred_fallthru
    _
  // Predicated region
  $region6: #{densenet_forward.28} parent=0 // pred_check
    _
  $region7: #{densenet_forward.28} parent=0 // pred_check_branch
    %14 = sbr.rel (0) target = $region9
  $region8: #{densenet_forward.28} parent=0 // pred_region
    _
  $region9: #{densenet_forward.28} parent=0 // pred_fallthru
    _
  // Predicated region
  $region10: #{densenet_forward.28} parent=0 // pred_check
    _
  $region11: #{densenet_forward.28} parent=0 // pred_check_branch
    %16 = sbr.rel (0) target = $region13
  $region12: #{densenet_forward.28} parent=0 // pred_region
    _
  $region13: #{densenet_forward.28} parent=0 // pred_fallthru
    _
  // Predicated region
  $region14: #{densenet_forward.28} parent=0 // pred_check
    _
  $region15: #{densenet_forward.28} parent=0 // pred_check_branch
    %18 = sbr.rel (0) target = $region17
  $region16: #{densenet_forward.28} parent=0 // pred_region
    _
  $region17: #{densenet_forward.28} parent=0 // pred_fallthru
    _
  // Predicated region
  $region18: #{densenet_forward.28} parent=0 // pred_check
    _
  $region19: #{densenet_forward.28} parent=0 // pred_check_branch
    %20 = sbr.rel (0) target = $region21
  $region20: #{densenet_forward.28} parent=0 // pred_region
    _
  $region21: #{densenet_forward.28} parent=0 // pred_fallthru
    _
  // Predicated region
  $region22: #{densenet_forward.28} parent=0 // pred_check
    _
  $region23: #{densenet_forward.28} parent=0 // pred_check_branch
    %22 = sbr.rel (0) target = $region25
  $region24: #{densenet_forward.28} parent=0 // pred_region
    _
  $region25: #{densenet_forward.28} parent=0 // pred_fallthru
    _
  %p24 = scmp.eq.s32.totalorder 0, 0
  // Predicated region
  $region26: #{densenet_forward.28} parent=0 // pred_check
    %p25 = pneg %p24
  $region27: #{densenet_forward.28} parent=0 // pred_check_branch
    %27 = sbr.rel (%p25) target = $region29
  $region28: #{densenet_forward.28} parent=0 // pred_region
    %28 = vst [vmem:[#allocation2] sm:$0xff] 0.0
    %29 = vst [vmem:[#allocation2 + $0x8] sm:$0xff] 0.0
    %30 = vst [vmem:[#allocation2 + $0x10] sm:$0xff] 0.0
    %31 = vst [vmem:[#allocation2 + $0x18] sm:$0xff] 0.0
    %32 = vst [vmem:[#allocation2 + $0x20] sm:$0xff] 0.0
    %33 = vst [vmem:[#allocation2 + $0x28] sm:$0xff] 0.0
    %34 = vst [vmem:[#allocation2 + $0x30] sm:$0xff] 0.0
    %35 = vst [vmem:[#allocation2 + $0x38] sm:$0xff] 0.0
    %36 = vst [vmem:[#allocation2 + $0x40] sm:$0xff] 0.0
    %37 = vst [vmem:[#allocation2 + $0x48] sm:$0xff] 0.0
    %38 = vst [vmem:[#allocation2 + $0x50] sm:$0xff] 0.0
    %39 = vst [vmem:[#allocation2 + $0x58] sm:$0xff] 0.0
    %40 = vst [vmem:[#allocation2 + $0x60] sm:$0xff] 0.0
    %41 = vst [vmem:[#allocation2 + $0x68] sm:$0xff] 0.0
    %42 = vst [vmem:[#allocation2 + $0x70] sm:$0xff] 0.0
    %43 = vst [vmem:[#allocation2 + $0x78] sm:$0xff] 0.0
  $region29: #{densenet_forward.28} parent=0 // pred_fallthru
    _
  %v44 = vld [vmem:[%s0] sm:$0xf]
  %v45 = vld [vmem:[%s0 + $0x4] sm:$0xf]
  %v46 = vld [vmem:[%s0 + $0x8] sm:$0xf]
  %v47 = vld [vmem:[%s0 + $0xc] sm:$0xf]
  %v48 = vld [vmem:[%s0 + $0x10] sm:$0xf]
  %v49 = vld [vmem:[%s0 + $0x14] sm:$0xf]
  %v50 = vld [vmem:[%s0 + $0x18] sm:$0xf]
  %v51 = vld [vmem:[%s0 + $0x1c] sm:$0xf]
  %v52 = vld [vmem:[%s0 + $0x20] sm:$0xf]
  %v53 = vld [vmem:[%s0 + $0x24] sm:$0xf]
  %v54 = vld [vmem:[%s0 + $0x28] sm:$0xf]
  %v55 = vld [vmem:[%s0 + $0x2c] sm:$0xf]
  %v56 = vld [vmem:[%s0 + $0x30] sm:$0xf]
  %v57 = vld [vmem:[%s0 + $0x34] sm:$0xf]
  %v58 = vld [vmem:[%s0 + $0x38] sm:$0xf]
  %v59 = vld [vmem:[%s0 + $0x3c] sm:$0xf]
  %v60 = vunpack.c.l.bf16 %v44
  %v61 = vunpack.c.l.bf16 %v45
  %v62 = vunpack.c.l.bf16 %v46
  %v63 = vunpack.c.l.bf16 %v47
  %v64 = vunpack.c.l.bf16 %v48
  %v65 = vunpack.c.l.bf16 %v49
  %v66 = vunpack.c.l.bf16 %v50
  %v67 = vunpack.c.l.bf16 %v51
  %v68 = vunpack.c.l.bf16 %v52
  %v69 = vunpack.c.l.bf16 %v53
  %v70 = vunpack.c.l.bf16 %v54
  %v71 = vunpack.c.l.bf16 %v55
  %v72 = vunpack.c.l.bf16 %v56
  %v73 = vunpack.c.l.bf16 %v57
  %v74 = vunpack.c.l.bf16 %v58
  %v75 = vunpack.c.l.bf16 %v59
  %v76 = vld [vmem:[%s2] sm:$0x1]
  %v78 = vlaneseq
  %v79 = vshrl.u32 %v78, 7
  %v80 = vsub.s32 0, %v79
  %v81 = vrot.slane %v76, %v80
  %v83 = vmul.f32 %v60, %v81
  %v84 = vmul.f32 %v61, %v81
  %v85 = vmul.f32 %v62, %v81
  %v86 = vmul.f32 %v63, %v81
  %v87 = vmul.f32 %v64, %v81
  %v88 = vmul.f32 %v65, %v81
  %v89 = vmul.f32 %v66, %v81
  %v90 = vmul.f32 %v67, %v81
  %v91 = vmul.f32 %v68, %v81
  %v92 = vmul.f32 %v69, %v81
  %v93 = vmul.f32 %v70, %v81
  %v94 = vmul.f32 %v71, %v81
  %v95 = vmul.f32 %v72, %v81
  %v96 = vmul.f32 %v73, %v81
  %v97 = vmul.f32 %v74, %v81
  %v98 = vmul.f32 %v75, %v81
  %v99 = vld [vmem:[%s3] sm:$0x1]
  %v101 = vlaneseq
  %v102 = vshrl.u32 %v101, 7
  %v103 = vsub.s32 0, %v102
  %v104 = vrot.slane %v99, %v103
  %v106 = vadd.f32 %v83, %v104
  %v107 = vadd.f32 %v84, %v104
  %v108 = vadd.f32 %v85, %v104
  %v109 = vadd.f32 %v86, %v104
  %v110 = vadd.f32 %v87, %v104
  %v111 = vadd.f32 %v88, %v104
  %v112 = vadd.f32 %v89, %v104
  %v113 = vadd.f32 %v90, %v104
  %v114 = vadd.f32 %v91, %v104
  %v115 = vadd.f32 %v92, %v104
  %v116 = vadd.f32 %v93, %v104
  %v117 = vadd.f32 %v94, %v104
  %v118 = vadd.f32 %v95, %v104
  %v119 = vadd.f32 %v96, %v104
  %v120 = vadd.f32 %v97, %v104
  %v121 = vadd.f32 %v98, %v104
  %v122 = vmax.f32 %v106, 0.0
  %v123 = vmax.f32 %v107, 0.0
  %v124 = vmax.f32 %v108, 0.0
  %v125 = vmax.f32 %v109, 0.0
  %v126 = vmax.f32 %v110, 0.0
  %v127 = vmax.f32 %v111, 0.0
  %v128 = vmax.f32 %v112, 0.0
  %v129 = vmax.f32 %v113, 0.0
  %v130 = vmax.f32 %v114, 0.0
  %v131 = vmax.f32 %v115, 0.0
  %v132 = vmax.f32 %v116, 0.0
  %v133 = vmax.f32 %v117, 0.0
  %v134 = vmax.f32 %v118, 0.0
  %v135 = vmax.f32 %v119, 0.0
  %v136 = vmax.f32 %v120, 0.0
  %v137 = vmax.f32 %v121, 0.0
  %v138 = vpack.c.bf16 %v123, %v122
  %v139 = vpack.c.bf16 %v125, %v124
  %v140 = vpack.c.bf16 %v127, %v126
  %v141 = vpack.c.bf16 %v129, %v128
  %v142 = vpack.c.bf16 %v131, %v130
  %v143 = vpack.c.bf16 %v133, %v132
  %v144 = vpack.c.bf16 %v135, %v134
  %v145 = vpack.c.bf16 %v137, %v136
  %v146 = vld [vmem:[#allocation2] sm:$0xff]
  %v147 = vld [vmem:[#allocation2 + $0x8] sm:$0xff]
  %v148 = vld [vmem:[#allocation2 + $0x10] sm:$0xff]
  %v149 = vld [vmem:[#allocation2 + $0x18] sm:$0xff]
  %v150 = vld [vmem:[#allocation2 + $0x20] sm:$0xff]
  %v151 = vld [vmem:[#allocation2 + $0x28] sm:$0xff]
  %v152 = vld [vmem:[#allocation2 + $0x30] sm:$0xff]
  %v153 = vld [vmem:[#allocation2 + $0x38] sm:$0xff]
  %v154 = vld [vmem:[#allocation2 + $0x40] sm:$0xff]
  %v155 = vld [vmem:[#allocation2 + $0x48] sm:$0xff]
  %v156 = vld [vmem:[#allocation2 + $0x50] sm:$0xff]
  %v157 = vld [vmem:[#allocation2 + $0x58] sm:$0xff]
  %v158 = vld [vmem:[#allocation2 + $0x60] sm:$0xff]
  %v159 = vld [vmem:[#allocation2 + $0x68] sm:$0xff]
  %v160 = vld [vmem:[#allocation2 + $0x70] sm:$0xff]
  %v161 = vld [vmem:[#allocation2 + $0x78] sm:$0xff]
  %v162 = vld [vmem:[%s1] sm:$0xf]
  %v163 = vld [vmem:[%s1 + $0x4] sm:$0xf]
  %v164 = vld [vmem:[%s1 + $0x8] sm:$0xf]
  %v165 = vld [vmem:[%s1 + $0xc] sm:$0xf]
  %v166 = vld [vmem:[%s1 + $0x10] sm:$0xf]
  %v167 = vld [vmem:[%s1 + $0x14] sm:$0xf]
  %v168 = vld [vmem:[%s1 + $0x18] sm:$0xf]
  %v169 = vld [vmem:[%s1 + $0x1c] sm:$0xf]
  %v170 = vld [vmem:[%s1 + $0x20] sm:$0xf]
  %v171 = vld [vmem:[%s1 + $0x24] sm:$0xf]
  %v172 = vld [vmem:[%s1 + $0x28] sm:$0xf]
  %v173 = vld [vmem:[%s1 + $0x2c] sm:$0xf]
  %v174 = vld [vmem:[%s1 + $0x30] sm:$0xf]
  %v175 = vld [vmem:[%s1 + $0x34] sm:$0xf]
  %v176 = vld [vmem:[%s1 + $0x38] sm:$0xf]
  %v177 = vld [vmem:[%s1 + $0x3c] sm:$0xf]
  %v194 = vunpack.c.l.b16 %v162
  %v195 = vunpack.c.l.b16 %v163
  %v196 = vunpack.c.l.b16 %v164
  %v197 = vunpack.c.l.b16 %v165
  %v198 = vunpack.c.l.b16 %v166
  %v199 = vunpack.c.l.b16 %v167
  %v200 = vunpack.c.l.b16 %v168
  %v201 = vunpack.c.l.b16 %v169
  %v202 = vunpack.c.l.b16 %v170
  %v203 = vunpack.c.l.b16 %v171
  %v204 = vunpack.c.l.b16 %v172
  %v205 = vunpack.c.l.b16 %v173
  %v206 = vunpack.c.l.b16 %v174
  %v207 = vunpack.c.l.b16 %v175
  %v208 = vunpack.c.l.b16 %v176
  %v209 = vunpack.c.l.b16 %v177
  %v210 = vpack.c.b16 %v195, %v194
  %v211 = vpack.c.b16 %v197, %v196
  %v212 = vpack.c.b16 %v199, %v198
  %v213 = vpack.c.b16 %v201, %v200
  %v214 = vpack.c.b16 %v203, %v202
  %v215 = vpack.c.b16 %v205, %v204
  %v216 = vpack.c.b16 %v207, %v206
  %v217 = vpack.c.b16 %v209, %v208
  %226 = vmatprep.subr.bf16.mxu0 0
  %227 = vmatpush1.bf16.msra.mxu0 %v210
  %228 = vmatprep.subr.bf16.mxu0 0
  %229 = vmatpush1.bf16.msra.mxu0 %v211
  %230 = vmatprep.subr.bf16.mxu0 0
  %231 = vmatpush1.bf16.msra.mxu0 %v212
  %232 = vmatprep.subr.bf16.mxu0 0
  %233 = vmatpush1.bf16.msra.mxu0 %v213
  %234 = vmatprep.subr.bf16.mxu0 0
  %235 = vmatpush1.bf16.msra.mxu0 %v214
  %236 = vmatprep.subr.bf16.mxu0 0
  %237 = vmatpush1.bf16.msra.mxu0 %v215
  %238 = vmatprep.subr.bf16.mxu0 0
  %239 = vmatpush1.bf16.msra.mxu0 %v216
  %240 = vmatprep.subr.bf16.mxu0 0
  %241 = vmatpush1.bf16.msra.mxu0 %v217
  %242 = vmatprep.subr.bf16.mxu0 0
  %243 = vmatpush1.bf16.msra.mxu0 0
  %244 = vmatprep.subr.bf16.mxu0 0
  %245 = vmatpush1.bf16.msra.mxu0 0
  %246 = vmatprep.subr.bf16.mxu0 0
  %247 = vmatpush1.bf16.msra.mxu0 0
  %248 = vmatprep.subr.bf16.mxu0 0
  %249 = vmatpush1.bf16.msra.mxu0 0
  %250 = vmatprep.subr.bf16.mxu0 0
  %251 = vmatpush1.bf16.msra.mxu0 0
  %252 = vmatprep.subr.bf16.mxu0 0
  %253 = vmatpush1.bf16.msra.mxu0 0
  %254 = vmatprep.subr.bf16.mxu0 0
  %255 = vmatpush1.bf16.msra.mxu0 0
  %256 = vmatprep.subr.bf16.mxu0 0
  %257 = vmatpush1.bf16.msra.mxu0 0
  %258 = vmatprep.mubr.bf16.mxu0 0
  %259 = vmatmul.mubr.bf16.gmra.mrb[0].mxu0 %v138
  %v260 = vpop.f32.mrb[0].mxu0
  %v261 = vadd.f32 0.0, %v260
  %v262 = vpop.f32.mrb[0].mxu0
  %v263 = vpop.f32.mrb[0].mxu0
  %v264 = vadd.f32 0.0, %v263
  %v265 = vpop.f32.mrb[0].mxu0
  %266 = vmatprep.mubr.bf16.mxu0 0
  %267 = vmatmul.mubr.bf16.gmra.mrb[0].mxu0 %v139
  %v268 = vpop.f32.mrb[0].mxu0
  %v269 = vadd.f32 0.0, %v268
  %v270 = vpop.f32.mrb[0].mxu0
  %v271 = vpop.f32.mrb[0].mxu0
  %v272 = vadd.f32 0.0, %v271
  %v273 = vpop.f32.mrb[0].mxu0
  %274 = vmatprep.mubr.bf16.mxu0 0
  %275 = vmatmul.mubr.bf16.gmra.mrb[0].mxu0 %v140
  %v276 = vpop.f32.mrb[0].mxu0
  %v277 = vadd.f32 0.0, %v276
  %v278 = vpop.f32.mrb[0].mxu0
  %v279 = vpop.f32.mrb[0].mxu0
  %v280 = vadd.f32 0.0, %v279
  %v281 = vpop.f32.mrb[0].mxu0
  %282 = vmatprep.mubr.bf16.mxu0 0
  %283 = vmatmul.mubr.bf16.gmra.mrb[0].mxu0 %v141
  %v284 = vpop.f32.mrb[0].mxu0
  %v285 = vadd.f32 0.0, %v284
  %v286 = vpop.f32.mrb[0].mxu0
  %v287 = vpop.f32.mrb[0].mxu0
  %v288 = vadd.f32 0.0, %v287
  %v289 = vpop.f32.mrb[0].mxu0
  %290 = vmatprep.mubr.bf16.mxu0 0
  %291 = vmatmul.mubr.bf16.gmra.mrb[0].mxu0 %v142
  %v292 = vpop.f32.mrb[0].mxu0
  %v293 = vadd.f32 0.0, %v292
  %v294 = vpop.f32.mrb[0].mxu0
  %v295 = vpop.f32.mrb[0].mxu0
  %v296 = vadd.f32 0.0, %v295
  %v297 = vpop.f32.mrb[0].mxu0
  %298 = vmatprep.mubr.bf16.mxu0 0
  %299 = vmatmul.mubr.bf16.gmra.mrb[0].mxu0 %v143
  %v300 = vpop.f32.mrb[0].mxu0
  %v301 = vadd.f32 0.0, %v300
  %v302 = vpop.f32.mrb[0].mxu0
  %v303 = vpop.f32.mrb[0].mxu0
  %v304 = vadd.f32 0.0, %v303
  %v305 = vpop.f32.mrb[0].mxu0
  %306 = vmatprep.mubr.bf16.mxu0 0
  %307 = vmatmul.mubr.bf16.gmra.mrb[0].mxu0 %v144
  %v308 = vpop.f32.mrb[0].mxu0
  %v309 = vadd.f32 0.0, %v308
  %v310 = vpop.f32.mrb[0].mxu0
  %v311 = vpop.f32.mrb[0].mxu0
  %v312 = vadd.f32 0.0, %v311
  %v313 = vpop.f32.mrb[0].mxu0
  %314 = vmatprep.mubr.bf16.mxu0 0
  %315 = vmatmul.mubr.bf16.gmra.mrb[0].mxu0 %v145
  %v316 = vpop.f32.mrb[0].mxu0
  %v317 = vadd.f32 0.0, %v316
  %v318 = vpop.f32.mrb[0].mxu0
  %v319 = vpop.f32.mrb[0].mxu0
  %v320 = vadd.f32 0.0, %v319
  %v321 = vpop.f32.mrb[0].mxu0
  %322 = vdwg.mxu0
  %v323 = vadd.f32 %v146, %v261
  %v324 = vadd.f32 %v147, %v264
  %v325 = vadd.f32 %v148, %v269
  %v326 = vadd.f32 %v149, %v272
  %v327 = vadd.f32 %v150, %v277
  %v328 = vadd.f32 %v151, %v280
  %v329 = vadd.f32 %v152, %v285
  %v330 = vadd.f32 %v153, %v288
  %v331 = vadd.f32 %v154, %v293
  %v332 = vadd.f32 %v155, %v296
  %v333 = vadd.f32 %v156, %v301
  %v334 = vadd.f32 %v157, %v304
  %v335 = vadd.f32 %v158, %v309
  %v336 = vadd.f32 %v159, %v312
  %v337 = vadd.f32 %v160, %v317
  %v338 = vadd.f32 %v161, %v320
  %339 = vst [vmem:[#allocation2] sm:$0xff] %v323
  %340 = vst [vmem:[#allocation2 + $0x8] sm:$0xff] %v324
  %341 = vst [vmem:[#allocation2 + $0x10] sm:$0xff] %v325
  %342 = vst [vmem:[#allocation2 + $0x18] sm:$0xff] %v326
  %343 = vst [vmem:[#allocation2 + $0x20] sm:$0xff] %v327
  %344 = vst [vmem:[#allocation2 + $0x28] sm:$0xff] %v328
  %345 = vst [vmem:[#allocation2 + $0x30] sm:$0xff] %v329
  %346 = vst [vmem:[#allocation2 + $0x38] sm:$0xff] %v330
  %347 = vst [vmem:[#allocation2 + $0x40] sm:$0xff] %v331
  %348 = vst [vmem:[#allocation2 + $0x48] sm:$0xff] %v332
  %349 = vst [vmem:[#allocation2 + $0x50] sm:$0xff] %v333
  %350 = vst [vmem:[#allocation2 + $0x58] sm:$0xff] %v334
  %351 = vst [vmem:[#allocation2 + $0x60] sm:$0xff] %v335
  %352 = vst [vmem:[#allocation2 + $0x68] sm:$0xff] %v336
  %353 = vst [vmem:[#allocation2 + $0x70] sm:$0xff] %v337
  %354 = vst [vmem:[#allocation2 + $0x78] sm:$0xff] %v338
  // Predicated region
  $region30: #{densenet_forward.28} parent=0 // pred_check
    %p355 = pneg %p24
  $region31: #{densenet_forward.28} parent=0 // pred_check_branch
    %357 = sbr.rel (%p355) target = $region33
  $region32: #{densenet_forward.28} parent=0 // pred_region
    %v358 = vld [vmem:[#allocation2] sm:$0xff]
    %v359 = vld [vmem:[#allocation2 + $0x8] sm:$0xff]
    %v360 = vld [vmem:[#allocation2 + $0x10] sm:$0xff]
    %v361 = vld [vmem:[#allocation2 + $0x18] sm:$0xff]
    %v362 = vld [vmem:[#allocation2 + $0x20] sm:$0xff]
    %v363 = vld [vmem:[#allocation2 + $0x28] sm:$0xff]
    %v364 = vld [vmem:[#allocation2 + $0x30] sm:$0xff]
    %v365 = vld [vmem:[#allocation2 + $0x38] sm:$0xff]
    %v366 = vld [vmem:[#allocation2 + $0x40] sm:$0xff]
    %v367 = vld [vmem:[#allocation2 + $0x48] sm:$0xff]
    %v368 = vld [vmem:[#allocation2 + $0x50] sm:$0xff]
    %v369 = vld [vmem:[#allocation2 + $0x58] sm:$0xff]
    %v370 = vld [vmem:[#allocation2 + $0x60] sm:$0xff]
    %v371 = vld [vmem:[#allocation2 + $0x68] sm:$0xff]
    %v372 = vld [vmem:[#allocation2 + $0x70] sm:$0xff]
    %v373 = vld [vmem:[#allocation2 + $0x78] sm:$0xff]
    %v374 = vld [vmem:[%s4] sm:$0x1]
    %v376 = vlaneseq
    %v377 = vshrl.u32 %v376, 7
    %v378 = vsub.s32 0, %v377
    %v379 = vrot.slane %v374, %v378
    %v381 = vmul.f32 %v358, %v379
    %v382 = vmul.f32 %v359, %v379
    %v383 = vmul.f32 %v360, %v379
    %v384 = vmul.f32 %v361, %v379
    %v385 = vmul.f32 %v362, %v379
    %v386 = vmul.f32 %v363, %v379
    %v387 = vmul.f32 %v364, %v379
    %v388 = vmul.f32 %v365, %v379
    %v389 = vmul.f32 %v366, %v379
    %v390 = vmul.f32 %v367, %v379
    %v391 = vmul.f32 %v368, %v379
    %v392 = vmul.f32 %v369, %v379
    %v393 = vmul.f32 %v370, %v379
    %v394 = vmul.f32 %v371, %v379
    %v395 = vmul.f32 %v372, %v379
    %v396 = vmul.f32 %v373, %v379
    %v397 = vld [vmem:[%s5] sm:$0x1]
    %v399 = vlaneseq
    %v400 = vshrl.u32 %v399, 7
    %v401 = vsub.s32 0, %v400
    %v402 = vrot.slane %v397, %v401
    %v404 = vadd.f32 %v381, %v402
    %v405 = vadd.f32 %v382, %v402
    %v406 = vadd.f32 %v383, %v402
    %v407 = vadd.f32 %v384, %v402
    %v408 = vadd.f32 %v385, %v402
    %v409 = vadd.f32 %v386, %v402
    %v410 = vadd.f32 %v387, %v402
    %v411 = vadd.f32 %v388, %v402
    %v412 = vadd.f32 %v389, %v402
    %v413 = vadd.f32 %v390, %v402
    %v414 = vadd.f32 %v391, %v402
    %v415 = vadd.f32 %v392, %v402
    %v416 = vadd.f32 %v393, %v402
    %v417 = vadd.f32 %v394, %v402
    %v418 = vadd.f32 %v395, %v402
    %v419 = vadd.f32 %v396, %v402
    %v420 = vmax.f32 %v404, 0.0
    %v421 = vmax.f32 %v405, 0.0
    %v422 = vmax.f32 %v406, 0.0
    %v423 = vmax.f32 %v407, 0.0
    %v424 = vmax.f32 %v408, 0.0
    %v425 = vmax.f32 %v409, 0.0
    %v426 = vmax.f32 %v410, 0.0
    %v427 = vmax.f32 %v411, 0.0
    %v428 = vmax.f32 %v412, 0.0
    %v429 = vmax.f32 %v413, 0.0
    %v430 = vmax.f32 %v414, 0.0
    %v431 = vmax.f32 %v415, 0.0
    %v432 = vmax.f32 %v416, 0.0
    %v433 = vmax.f32 %v417, 0.0
    %v434 = vmax.f32 %v418, 0.0
    %v435 = vmax.f32 %v419, 0.0
    %v436 = vpack.c.bf16 %v421, %v420
    %v437 = vpack.c.bf16 %v423, %v422
    %v438 = vpack.c.bf16 %v425, %v424
    %v439 = vpack.c.bf16 %v427, %v426
    %v440 = vpack.c.bf16 %v429, %v428
    %v441 = vpack.c.bf16 %v431, %v430
    %v442 = vpack.c.bf16 %v433, %v432
    %v443 = vpack.c.bf16 %v435, %v434
    %v452 = vunpack.c.l.b16 %v436
    %v453 = vunpack.c.h.b16 %v436
    %v454 = vunpack.c.l.b16 %v437
    %v455 = vunpack.c.h.b16 %v437
    %v456 = vunpack.c.l.b16 %v438
    %v457 = vunpack.c.h.b16 %v438
    %v458 = vunpack.c.l.b16 %v439
    %v459 = vunpack.c.h.b16 %v439
    %v460 = vunpack.c.l.b16 %v440
    %v461 = vunpack.c.h.b16 %v440
    %v462 = vunpack.c.l.b16 %v441
    %v463 = vunpack.c.h.b16 %v441
    %v464 = vunpack.c.l.b16 %v442
    %v465 = vunpack.c.h.b16 %v442
    %v466 = vunpack.c.l.b16 %v443
    %v467 = vunpack.c.h.b16 %v443
    %v468 = vpack.c.b16 %v452, %v452
    %v469 = vpack.c.b16 %v453, %v453
    %v470 = vpack.c.b16 %v454, %v454
    %v471 = vpack.c.b16 %v455, %v455
    %v472 = vpack.c.b16 %v456, %v456
    %v473 = vpack.c.b16 %v457, %v457
    %v474 = vpack.c.b16 %v458, %v458
    %v475 = vpack.c.b16 %v459, %v459
    %v476 = vpack.c.b16 %v460, %v460
    %v477 = vpack.c.b16 %v461, %v461
    %v478 = vpack.c.b16 %v462, %v462
    %v479 = vpack.c.b16 %v463, %v463
    %v480 = vpack.c.b16 %v464, %v464
    %v481 = vpack.c.b16 %v465, %v465
    %v482 = vpack.c.b16 %v466, %v466
    %v483 = vpack.c.b16 %v467, %v467
    %500 = vst [vmem:[%s6] sm:$0xf] %v468
    %501 = vst [vmem:[%s6 + $0x4] sm:$0xf] %v469
    %502 = vst [vmem:[%s6 + $0x8] sm:$0xf] %v470
    %503 = vst [vmem:[%s6 + $0xc] sm:$0xf] %v471
    %504 = vst [vmem:[%s6 + $0x10] sm:$0xf] %v472
    %505 = vst [vmem:[%s6 + $0x14] sm:$0xf] %v473
    %506 = vst [vmem:[%s6 + $0x18] sm:$0xf] %v474
    %507 = vst [vmem:[%s6 + $0x1c] sm:$0xf] %v475
    %508 = vst [vmem:[%s6 + $0x20] sm:$0xf] %v476
    %509 = vst [vmem:[%s6 + $0x24] sm:$0xf] %v477
    %510 = vst [vmem:[%s6 + $0x28] sm:$0xf] %v478
    %511 = vst [vmem:[%s6 + $0x2c] sm:$0xf] %v479
    %512 = vst [vmem:[%s6 + $0x30] sm:$0xf] %v480
    %513 = vst [vmem:[%s6 + $0x34] sm:$0xf] %v481
    %514 = vst [vmem:[%s6 + $0x38] sm:$0xf] %v482
    %515 = vst [vmem:[%s6 + $0x3c] sm:$0xf] %v483
  $region33: #{densenet_forward.28} parent=0 // pred_fallthru
    _
  // Predicated region
  $region34: #{densenet_forward.28} parent=0 // pred_check
    _
  $region35: #{densenet_forward.28} parent=0 // pred_check_branch
    %517 = sbr.rel (0) target = $region37
  $region36: #{densenet_forward.28} parent=0 // pred_region
    _
  $region37: #{densenet_forward.28} parent=0 // pred_fallthru
    _
  // Predicated region
  $region38: #{densenet_forward.28} parent=0 // pred_check
    _
  $region39: #{densenet_forward.28} parent=0 // pred_check_branch
    %519 = sbr.rel (0) target = $region41
  $region40: #{densenet_forward.28} parent=0 // pred_region
    _
  $region41: #{densenet_forward.28} parent=0 // pred_fallthru
    _

// kernel: densenet_forward.29
$region0: #{densenet_forward.29}
  #allocation0 [shape = 'u32[]', space=smem, size = 0x4, offset = 0x4, fixed_abs, tag = 'smem constant byte address 0x4 - core index']
  #allocation1 [shape = 'u32[144,128]{1,0:T(1,128)}', space=vmem, size = 0x12000, scoped, tag = 'internal scratch']
  #allocation2 [shape = 'f32[128,128]{1,0:T(8,128)}', space=vmem, size = 0x10000, scoped, tag = 'scratch operand']
  %s0 = inlined_call_operand.vmem [shape: bf16[128,384], index: 0, kind: input, shape index: {}]
  %s1 = inlined_call_operand.vmem [shape: bf16[384,128], index: 1, kind: input, shape index: {}]
  %s2 = inlined_call_operand.vmem [shape: bf16[128,128], index: 2, kind: output, shape index: {}]
  %s3 = sld [smem:[#allocation0]]
  $region26: #{densenet_forward.29} parent=0
    _
  %s5 = ssub.s32 1, %s3
  %s6 = scalar_select 0, %s5, %s3
  // Predicated region
  $region2: #{densenet_forward.29} parent=0 // pred_check
    _
  $region3: #{densenet_forward.29} parent=0 // pred_check_branch
    %8 = sbr.rel (0) target = $region5
  $region4: #{densenet_forward.29} parent=0 // pred_region
    _
  $region5: #{densenet_forward.29} parent=0 // pred_fallthru
    _
  // Predicated region
  $region6: #{densenet_forward.29} parent=0 // pred_check
    _
  $region7: #{densenet_forward.29} parent=0 // pred_check_branch
    %10 = sbr.rel (0) target = $region9
  $region8: #{densenet_forward.29} parent=0 // pred_region
    _
  $region9: #{densenet_forward.29} parent=0 // pred_fallthru
    _
  %p12 = scmp.eq.s32.totalorder 0, 0
  // Predicated region
  $region10: #{densenet_forward.29} parent=0 // pred_check
    %p13 = pneg %p12
  $region11: #{densenet_forward.29} parent=0 // pred_check_branch
    %15 = sbr.rel (%p13) target = $region13
  $region12: #{densenet_forward.29} parent=0 // pred_region
    %16 = vst [vmem:[#allocation2] sm:$0xff] 0.0
    %17 = vst [vmem:[#allocation2 + $0x8] sm:$0xff] 0.0
    %18 = vst [vmem:[#allocation2 + $0x10] sm:$0xff] 0.0
    %19 = vst [vmem:[#allocation2 + $0x18] sm:$0xff] 0.0
    %20 = vst [vmem:[#allocation2 + $0x20] sm:$0xff] 0.0
    %21 = vst [vmem:[#allocation2 + $0x28] sm:$0xff] 0.0
    %22 = vst [vmem:[#allocation2 + $0x30] sm:$0xff] 0.0
    %23 = vst [vmem:[#allocation2 + $0x38] sm:$0xff] 0.0
    %24 = vst [vmem:[#allocation2 + $0x40] sm:$0xff] 0.0
    %25 = vst [vmem:[#allocation2 + $0x48] sm:$0xff] 0.0
    %26 = vst [vmem:[#allocation2 + $0x50] sm:$0xff] 0.0
    %27 = vst [vmem:[#allocation2 + $0x58] sm:$0xff] 0.0
    %28 = vst [vmem:[#allocation2 + $0x60] sm:$0xff] 0.0
    %29 = vst [vmem:[#allocation2 + $0x68] sm:$0xff] 0.0
    %30 = vst [vmem:[#allocation2 + $0x70] sm:$0xff] 0.0
    %31 = vst [vmem:[#allocation2 + $0x78] sm:$0xff] 0.0
  $region13: #{densenet_forward.29} parent=0 // pred_fallthru
    _
  %v32 = vld [vmem:[%s0] sm:$0xff]
  %v33 = vld [vmem:[%s0 + $0x8] sm:$0xf]
  %v34 = vld [vmem:[%s0 + $0xc] sm:$0xff]
  %v35 = vld [vmem:[%s0 + $0x14] sm:$0xf]
  %v36 = vld [vmem:[%s0 + $0x18] sm:$0xff]
  %v37 = vld [vmem:[%s0 + $0x20] sm:$0xf]
  %v38 = vld [vmem:[%s0 + $0x24] sm:$0xff]
  %v39 = vld [vmem:[%s0 + $0x2c] sm:$0xf]
  %v40 = vld [vmem:[%s0 + $0x30] sm:$0xff]
  %v41 = vld [vmem:[%s0 + $0x38] sm:$0xf]
  %v42 = vld [vmem:[%s0 + $0x3c] sm:$0xff]
  %v43 = vld [vmem:[%s0 + $0x44] sm:$0xf]
  %v44 = vld [vmem:[%s0 + $0x48] sm:$0xff]
  %v45 = vld [vmem:[%s0 + $0x50] sm:$0xf]
  %v46 = vld [vmem:[%s0 + $0x54] sm:$0xff]
  %v47 = vld [vmem:[%s0 + $0x5c] sm:$0xf]
  %v48 = vld [vmem:[%s0 + $0x60] sm:$0xff]
  %v49 = vld [vmem:[%s0 + $0x68] sm:$0xf]
  %v50 = vld [vmem:[%s0 + $0x6c] sm:$0xff]
  %v51 = vld [vmem:[%s0 + $0x74] sm:$0xf]
  %v52 = vld [vmem:[%s0 + $0x78] sm:$0xff]
  %v53 = vld [vmem:[%s0 + $0x80] sm:$0xf]
  %v54 = vld [vmem:[%s0 + $0x84] sm:$0xff]
  %v55 = vld [vmem:[%s0 + $0x8c] sm:$0xf]
  %v56 = vld [vmem:[%s0 + $0x90] sm:$0xff]
  %v57 = vld [vmem:[%s0 + $0x98] sm:$0xf]
  %v58 = vld [vmem:[%s0 + $0x9c] sm:$0xff]
  %v59 = vld [vmem:[%s0 + $0xa4] sm:$0xf]
  %v60 = vld [vmem:[%s0 + $0xa8] sm:$0xff]
  %v61 = vld [vmem:[%s0 + $0xb0] sm:$0xf]
  %v62 = vld [vmem:[%s0 + $0xb4] sm:$0xff]
  %v63 = vld [vmem:[%s0 + $0xbc] sm:$0xf]
  %v64 = vld [vmem:[#allocation2] sm:$0xff]
  %v65 = vld [vmem:[#allocation2 + $0x8] sm:$0xff]
  %v66 = vld [vmem:[#allocation2 + $0x10] sm:$0xff]
  %v67 = vld [vmem:[#allocation2 + $0x18] sm:$0xff]
  %v68 = vld [vmem:[#allocation2 + $0x20] sm:$0xff]
  %v69 = vld [vmem:[#allocation2 + $0x28] sm:$0xff]
  %v70 = vld [vmem:[#allocation2 + $0x30] sm:$0xff]
  %v71 = vld [vmem:[#allocation2 + $0x38] sm:$0xff]
  %v72 = vld [vmem:[#allocation2 + $0x40] sm:$0xff]
  %v73 = vld [vmem:[#allocation2 + $0x48] sm:$0xff]
  %v74 = vld [vmem:[#allocation2 + $0x50] sm:$0xff]
  %v75 = vld [vmem:[#allocation2 + $0x58] sm:$0xff]
  %v76 = vld [vmem:[#allocation2 + $0x60] sm:$0xff]
  %v77 = vld [vmem:[#allocation2 + $0x68] sm:$0xff]
  %v78 = vld [vmem:[#allocation2 + $0x70] sm:$0xff]
  %v79 = vld [vmem:[#allocation2 + $0x78] sm:$0xff]
  %v80 = vld [vmem:[%s1] sm:$0xf]
  %v81 = vld [vmem:[%s1 + $0x4] sm:$0xf]
  %v82 = vld [vmem:[%s1 + $0x8] sm:$0xf]
  %v83 = vld [vmem:[%s1 + $0xc] sm:$0xf]
  %v84 = vld [vmem:[%s1 + $0x10] sm:$0xf]
  %v85 = vld [vmem:[%s1 + $0x14] sm:$0xf]
  %v86 = vld [vmem:[%s1 + $0x18] sm:$0xf]
  %v87 = vld [vmem:[%s1 + $0x1c] sm:$0xf]
  %v88 = vld [vmem:[%s1 + $0x20] sm:$0xf]
  %v89 = vld [vmem:[%s1 + $0x24] sm:$0xf]
  %v90 = vld [vmem:[%s1 + $0x28] sm:$0xf]
  %v91 = vld [vmem:[%s1 + $0x2c] sm:$0xf]
  %v92 = vld [vmem:[%s1 + $0x30] sm:$0xf]
  %v93 = vld [vmem:[%s1 + $0x34] sm:$0xf]
  %v94 = vld [vmem:[%s1 + $0x38] sm:$0xf]
  %v95 = vld [vmem:[%s1 + $0x3c] sm:$0xf]
  %v96 = vld [vmem:[%s1 + $0x40] sm:$0xf]
  %v97 = vld [vmem:[%s1 + $0x44] sm:$0xf]
  %v98 = vld [vmem:[%s1 + $0x48] sm:$0xf]
  %v99 = vld [vmem:[%s1 + $0x4c] sm:$0xf]
  %v100 = vld [vmem:[%s1 + $0x50] sm:$0xf]
  %v101 = vld [vmem:[%s1 + $0x54] sm:$0xf]
  %v102 = vld [vmem:[%s1 + $0x58] sm:$0xf]
  %v103 = vld [vmem:[%s1 + $0x5c] sm:$0xf]
  %v104 = vld [vmem:[%s1 + $0x60] sm:$0xf]
  %v105 = vld [vmem:[%s1 + $0x64] sm:$0xf]
  %v106 = vld [vmem:[%s1 + $0x68] sm:$0xf]
  %v107 = vld [vmem:[%s1 + $0x6c] sm:$0xf]
  %v108 = vld [vmem:[%s1 + $0x70] sm:$0xf]
  %v109 = vld [vmem:[%s1 + $0x74] sm:$0xf]
  %v110 = vld [vmem:[%s1 + $0x78] sm:$0xf]
  %v111 = vld [vmem:[%s1 + $0x7c] sm:$0xf]
  %v112 = vld [vmem:[%s1 + $0x80] sm:$0xf]
  %v113 = vld [vmem:[%s1 + $0x84] sm:$0xf]
  %v114 = vld [vmem:[%s1 + $0x88] sm:$0xf]
  %v115 = vld [vmem:[%s1 + $0x8c] sm:$0xf]
  %v116 = vld [vmem:[%s1 + $0x90] sm:$0xf]
  %v117 = vld [vmem:[%s1 + $0x94] sm:$0xf]
  %v118 = vld [vmem:[%s1 + $0x98] sm:$0xf]
  %v119 = vld [vmem:[%s1 + $0x9c] sm:$0xf]
  %v120 = vld [vmem:[%s1 + $0xa0] sm:$0xf]
  %v121 = vld [vmem:[%s1 + $0xa4] sm:$0xf]
  %v122 = vld [vmem:[%s1 + $0xa8] sm:$0xf]
  %v123 = vld [vmem:[%s1 + $0xac] sm:$0xf]
  %v124 = vld [vmem:[%s1 + $0xb0] sm:$0xf]
  %v125 = vld [vmem:[%s1 + $0xb4] sm:$0xf]
  %v126 = vld [vmem:[%s1 + $0xb8] sm:$0xf]
  %v127 = vld [vmem:[%s1 + $0xbc] sm:$0xf]
  %v160 = vunpack.c.l.b16 %v32
  %v161 = vunpack.c.h.b16 %v32
  %v162 = vunpack.c.l.b16 %v33
  %v163 = vunpack.c.l.b16 %v34
  %v164 = vunpack.c.h.b16 %v34
  %v165 = vunpack.c.l.b16 %v35
  %v166 = vunpack.c.l.b16 %v36
  %v167 = vunpack.c.h.b16 %v36
  %v168 = vunpack.c.l.b16 %v37
  %v169 = vunpack.c.l.b16 %v38
  %v170 = vunpack.c.h.b16 %v38
  %v171 = vunpack.c.l.b16 %v39
  %v172 = vunpack.c.l.b16 %v40
  %v173 = vunpack.c.h.b16 %v40
  %v174 = vunpack.c.l.b16 %v41
  %v175 = vunpack.c.l.b16 %v42
  %v176 = vunpack.c.h.b16 %v42
  %v177 = vunpack.c.l.b16 %v43
  %v178 = vunpack.c.l.b16 %v44
  %v179 = vunpack.c.h.b16 %v44
  %v180 = vunpack.c.l.b16 %v45
  %v181 = vunpack.c.l.b16 %v46
  %v182 = vunpack.c.h.b16 %v46
  %v183 = vunpack.c.l.b16 %v47
  %v184 = vunpack.c.l.b16 %v48
  %v185 = vunpack.c.h.b16 %v48
  %v186 = vunpack.c.l.b16 %v49
  %v187 = vunpack.c.l.b16 %v50
  %v188 = vunpack.c.h.b16 %v50
  %v189 = vunpack.c.l.b16 %v51
  %v190 = vunpack.c.l.b16 %v52
  %v191 = vunpack.c.h.b16 %v52
  %v192 = vunpack.c.l.b16 %v53
  %v193 = vunpack.c.l.b16 %v54
  %v194 = vunpack.c.h.b16 %v54
  %v195 = vunpack.c.l.b16 %v55
  %v196 = vunpack.c.l.b16 %v56
  %v197 = vunpack.c.h.b16 %v56
  %v198 = vunpack.c.l.b16 %v57
  %v199 = vunpack.c.l.b16 %v58
  %v200 = vunpack.c.h.b16 %v58
  %v201 = vunpack.c.l.b16 %v59
  %v202 = vunpack.c.l.b16 %v60
  %v203 = vunpack.c.h.b16 %v60
  %v204 = vunpack.c.l.b16 %v61
  %v205 = vunpack.c.l.b16 %v62
  %v206 = vunpack.c.h.b16 %v62
  %v207 = vunpack.c.l.b16 %v63
  %v208 = vpack.c.b16 %v163, %v160
  %v209 = vpack.c.b16 %v164, %v161
  %v210 = vpack.c.b16 %v165, %v162
  %v211 = vpack.c.b16 %v169, %v166
  %v212 = vpack.c.b16 %v170, %v167
  %v213 = vpack.c.b16 %v171, %v168
  %v214 = vpack.c.b16 %v175, %v172
  %v215 = vpack.c.b16 %v176, %v173
  %v216 = vpack.c.b16 %v177, %v174
  %v217 = vpack.c.b16 %v181, %v178
  %v218 = vpack.c.b16 %v182, %v179
  %v219 = vpack.c.b16 %v183, %v180
  %v220 = vpack.c.b16 %v187, %v184
  %v221 = vpack.c.b16 %v188, %v185
  %v222 = vpack.c.b16 %v189, %v186
  %v223 = vpack.c.b16 %v193, %v190
  %v224 = vpack.c.b16 %v194, %v191
  %v225 = vpack.c.b16 %v195, %v192
  %v226 = vpack.c.b16 %v199, %v196
  %v227 = vpack.c.b16 %v200, %v197
  %v228 = vpack.c.b16 %v201, %v198
  %v229 = vpack.c.b16 %v205, %v202
  %v230 = vpack.c.b16 %v206, %v203
  %v231 = vpack.c.b16 %v207, %v204
  %v304 = vunpack.c.l.b16 %v80
  %v305 = vunpack.c.l.b16 %v81
  %v306 = vunpack.c.l.b16 %v82
  %v307 = vunpack.c.l.b16 %v83
  %v308 = vunpack.c.l.b16 %v84
  %v309 = vunpack.c.l.b16 %v85
  %v310 = vunpack.c.l.b16 %v86
  %v311 = vunpack.c.l.b16 %v87
  %v312 = vunpack.c.l.b16 %v88
  %v313 = vunpack.c.l.b16 %v89
  %v314 = vunpack.c.l.b16 %v90
  %v315 = vunpack.c.l.b16 %v91
  %v316 = vunpack.c.l.b16 %v92
  %v317 = vunpack.c.l.b16 %v93
  %v318 = vunpack.c.l.b16 %v94
  %v319 = vunpack.c.l.b16 %v95
  %v320 = vunpack.c.l.b16 %v96
  %v321 = vunpack.c.l.b16 %v97
  %v322 = vunpack.c.l.b16 %v98
  %v323 = vunpack.c.l.b16 %v99
  %v324 = vunpack.c.l.b16 %v100
  %v325 = vunpack.c.l.b16 %v101
  %v326 = vunpack.c.l.b16 %v102
  %v327 = vunpack.c.l.b16 %v103
  %v328 = vunpack.c.l.b16 %v104
  %v329 = vunpack.c.l.b16 %v105
  %v330 = vunpack.c.l.b16 %v106
  %v331 = vunpack.c.l.b16 %v107
  %v332 = vunpack.c.l.b16 %v108
  %v333 = vunpack.c.l.b16 %v109
  %v334 = vunpack.c.l.b16 %v110
  %v335 = vunpack.c.l.b16 %v111
  %v336 = vunpack.c.l.b16 %v112
  %v337 = vunpack.c.l.b16 %v113
  %v338 = vunpack.c.l.b16 %v114
  %v339 = vunpack.c.l.b16 %v115
  %v340 = vunpack.c.l.b16 %v116
  %v341 = vunpack.c.l.b16 %v117
  %v342 = vunpack.c.l.b16 %v118
  %v343 = vunpack.c.l.b16 %v119
  %v344 = vunpack.c.l.b16 %v120
  %v345 = vunpack.c.l.b16 %v121
  %v346 = vunpack.c.l.b16 %v122
  %v347 = vunpack.c.l.b16 %v123
  %v348 = vunpack.c.l.b16 %v124
  %v349 = vunpack.c.l.b16 %v125
  %v350 = vunpack.c.l.b16 %v126
  %v351 = vunpack.c.l.b16 %v127
  %v352 = vpack.c.b16 %v305, %v304
  %v353 = vpack.c.b16 %v307, %v306
  %v354 = vpack.c.b16 %v309, %v308
  %v355 = vpack.c.b16 %v311, %v310
  %v356 = vpack.c.b16 %v313, %v312
  %v357 = vpack.c.b16 %v315, %v314
  %v358 = vpack.c.b16 %v317, %v316
  %v359 = vpack.c.b16 %v319, %v318
  %v360 = vpack.c.b16 %v321, %v320
  %v361 = vpack.c.b16 %v323, %v322
  %v362 = vpack.c.b16 %v325, %v324
  %v363 = vpack.c.b16 %v327, %v326
  %v364 = vpack.c.b16 %v329, %v328
  %v365 = vpack.c.b16 %v331, %v330
  %v366 = vpack.c.b16 %v333, %v332
  %v367 = vpack.c.b16 %v335, %v334
  %v368 = vpack.c.b16 %v337, %v336
  %v369 = vpack.c.b16 %v339, %v338
  %v370 = vpack.c.b16 %v341, %v340
  %v371 = vpack.c.b16 %v343, %v342
  %v372 = vpack.c.b16 %v345, %v344
  %v373 = vpack.c.b16 %v347, %v346
  %v374 = vpack.c.b16 %v349, %v348
  %v375 = vpack.c.b16 %v351, %v350
  %400 = vmatprep.subr.bf16.mxu0 0
  %401 = vmatpush1.bf16.msra.mxu0 %v352
  %402 = vmatprep.subr.bf16.mxu0 0
  %403 = vmatpush1.bf16.msra.mxu0 %v353
  %404 = vmatprep.subr.bf16.mxu0 0
  %405 = vmatpush1.bf16.msra.mxu0 %v354
  %406 = vmatprep.subr.bf16.mxu0 0
  %407 = vmatpush1.bf16.msra.mxu0 %v355
  %408 = vmatprep.subr.bf16.mxu0 0
  %409 = vmatpush1.bf16.msra.mxu0 %v356
  %410 = vmatprep.subr.bf16.mxu0 0
  %411 = vmatpush1.bf16.msra.mxu0 %v357
  %412 = vmatprep.subr.bf16.mxu0 0
  %413 = vmatpush1.bf16.msra.mxu0 %v358
  %414 = vmatprep.subr.bf16.mxu0 0
  %415 = vmatpush1.bf16.msra.mxu0 %v359
  %416 = vmatprep.subr.bf16.mxu0 0
  %417 = vmatpush1.bf16.msra.mxu0 %v360
  %418 = vmatprep.subr.bf16.mxu0 0
  %419 = vmatpush1.bf16.msra.mxu0 %v361
  %420 = vmatprep.subr.bf16.mxu0 0
  %421 = vmatpush1.bf16.msra.mxu0 %v362
  %422 = vmatprep.subr.bf16.mxu0 0
  %423 = vmatpush1.bf16.msra.mxu0 %v363
  %424 = vmatprep.subr.bf16.mxu0 0
  %425 = vmatpush1.bf16.msra.mxu0 %v364
  %426 = vmatprep.subr.bf16.mxu0 0
  %427 = vmatpush1.bf16.msra.mxu0 %v365
  %428 = vmatprep.subr.bf16.mxu0 0
  %429 = vmatpush1.bf16.msra.mxu0 %v366
  %430 = vmatprep.subr.bf16.mxu0 0
  %431 = vmatpush1.bf16.msra.mxu0 %v367
  %432 = vmatprep.mubr.bf16.mxu0 %v209
  %433 = vmatmul.mubr.bf16.gmra.mrb[0].mxu0 %v208
  %v434 = vpop.f32.mrb[0].mxu0
  %v435 = vadd.f32 0.0, %v434
  %v436 = vpop.f32.mrb[0].mxu0
  %v437 = vpop.f32.mrb[0].mxu0
  %v438 = vadd.f32 0.0, %v437
  %v439 = vpop.f32.mrb[0].mxu0
  %440 = vmatprep.mubr.bf16.mxu0 %v212
  %441 = vmatmul.mubr.bf16.gmra.mrb[0].mxu0 %v211
  %v442 = vpop.f32.mrb[0].mxu0
  %v443 = vadd.f32 0.0, %v442
  %v444 = vpop.f32.mrb[0].mxu0
  %v445 = vpop.f32.mrb[0].mxu0
  %v446 = vadd.f32 0.0, %v445
  %v447 = vpop.f32.mrb[0].mxu0
  %448 = vmatprep.mubr.bf16.mxu0 %v215
  %449 = vmatmul.mubr.bf16.gmra.mrb[0].mxu0 %v214
  %v450 = vpop.f32.mrb[0].mxu0
  %v451 = vadd.f32 0.0, %v450
  %v452 = vpop.f32.mrb[0].mxu0
  %v453 = vpop.f32.mrb[0].mxu0
  %v454 = vadd.f32 0.0, %v453
  %v455 = vpop.f32.mrb[0].mxu0
  %456 = vmatprep.mubr.bf16.mxu0 %v218
  %457 = vmatmul.mubr.bf16.gmra.mrb[0].mxu0 %v217
  %v458 = vpop.f32.mrb[0].mxu0
  %v459 = vadd.f32 0.0, %v458
  %v460 = vpop.f32.mrb[0].mxu0
  %v461 = vpop.f32.mrb[0].mxu0
  %v462 = vadd.f32 0.0, %v461
  %v463 = vpop.f32.mrb[0].mxu0
  %464 = vmatprep.mubr.bf16.mxu0 %v221
  %465 = vmatmul.mubr.bf16.gmra.mrb[0].mxu0 %v220
  %v466 = vpop.f32.mrb[0].mxu0
  %v467 = vadd.f32 0.0, %v466
  %v468 = vpop.f32.mrb[0].mxu0
  %v469 = vpop.f32.mrb[0].mxu0
  %v470 = vadd.f32 0.0, %v469
  %v471 = vpop.f32.mrb[0].mxu0
  %472 = vmatprep.mubr.bf16.mxu0 %v224
  %473 = vmatmul.mubr.bf16.gmra.mrb[0].mxu0 %v223
  %v474 = vpop.f32.mrb[0].mxu0
  %v475 = vadd.f32 0.0, %v474
  %v476 = vpop.f32.mrb[0].mxu0
  %v477 = vpop.f32.mrb[0].mxu0
  %v478 = vadd.f32 0.0, %v477
  %v479 = vpop.f32.mrb[0].mxu0
  %480 = vmatprep.mubr.bf16.mxu0 %v227
  %481 = vmatmul.mubr.bf16.gmra.mrb[0].mxu0 %v226
  %v482 = vpop.f32.mrb[0].mxu0
  %v483 = vadd.f32 0.0, %v482
  %v484 = vpop.f32.mrb[0].mxu0
  %v485 = vpop.f32.mrb[0].mxu0
  %v486 = vadd.f32 0.0, %v485
  %v487 = vpop.f32.mrb[0].mxu0
  %488 = vmatprep.mubr.bf16.mxu0 %v230
  %489 = vmatmul.mubr.bf16.gmra.mrb[0].mxu0 %v229
  %v490 = vpop.f32.mrb[0].mxu0
  %v491 = vadd.f32 0.0, %v490
  %v492 = vpop.f32.mrb[0].mxu0
  %v493 = vpop.f32.mrb[0].mxu0
  %v494 = vadd.f32 0.0, %v493
  %v495 = vpop.f32.mrb[0].mxu0
  %496 = vdwg.mxu0
  %497 = vmatprep.subr.bf16.mxu0 0
  %498 = vmatpush1.bf16.msra.mxu0 %v368
  %499 = vmatprep.subr.bf16.mxu0 0
  %500 = vmatpush1.bf16.msra.mxu0 %v369
  %501 = vmatprep.subr.bf16.mxu0 0
  %502 = vmatpush1.bf16.msra.mxu0 %v370
  %503 = vmatprep.subr.bf16.mxu0 0
  %504 = vmatpush1.bf16.msra.mxu0 %v371
  %505 = vmatprep.subr.bf16.mxu0 0
  %506 = vmatpush1.bf16.msra.mxu0 %v372
  %507 = vmatprep.subr.bf16.mxu0 0
  %508 = vmatpush1.bf16.msra.mxu0 %v373
  %509 = vmatprep.subr.bf16.mxu0 0
  %510 = vmatpush1.bf16.msra.mxu0 %v374
  %511 = vmatprep.subr.bf16.mxu0 0
  %512 = vmatpush1.bf16.msra.mxu0 %v375
  %513 = vmatprep.subr.bf16.mxu0 0
  %514 = vmatpush1.bf16.msra.mxu0 0
  %515 = vmatprep.subr.bf16.mxu0 0
  %516 = vmatpush1.bf16.msra.mxu0 0
  %517 = vmatprep.subr.bf16.mxu0 0
  %518 = vmatpush1.bf16.msra.mxu0 0
  %519 = vmatprep.subr.bf16.mxu0 0
  %520 = vmatpush1.bf16.msra.mxu0 0
  %521 = vmatprep.subr.bf16.mxu0 0
  %522 = vmatpush1.bf16.msra.mxu0 0
  %523 = vmatprep.subr.bf16.mxu0 0
  %524 = vmatpush1.bf16.msra.mxu0 0
  %525 = vmatprep.subr.bf16.mxu0 0
  %526 = vmatpush1.bf16.msra.mxu0 0
  %527 = vmatprep.subr.bf16.mxu0 0
  %528 = vmatpush1.bf16.msra.mxu0 0
  %529 = vmatprep.mubr.bf16.mxu0 0
  %530 = vmatmul.mubr.bf16.gmra.mrb[0].mxu0 %v210
  %v531 = vpop.f32.mrb[0].mxu0
  %v532 = vadd.f32 %v435, %v531
  %v533 = vpop.f32.mrb[0].mxu0
  %v534 = vpop.f32.mrb[0].mxu0
  %v535 = vadd.f32 %v438, %v534
  %v536 = vpop.f32.mrb[0].mxu0
  %537 = vmatprep.mubr.bf16.mxu0 0
  %538 = vmatmul.mubr.bf16.gmra.mrb[0].mxu0 %v213
  %v539 = vpop.f32.mrb[0].mxu0
  %v540 = vadd.f32 %v443, %v539
  %v541 = vpop.f32.mrb[0].mxu0
  %v542 = vpop.f32.mrb[0].mxu0
  %v543 = vadd.f32 %v446, %v542
  %v544 = vpop.f32.mrb[0].mxu0
  %545 = vmatprep.mubr.bf16.mxu0 0
  %546 = vmatmul.mubr.bf16.gmra.mrb[0].mxu0 %v216
  %v547 = vpop.f32.mrb[0].mxu0
  %v548 = vadd.f32 %v451, %v547
  %v549 = vpop.f32.mrb[0].mxu0
  %v550 = vpop.f32.mrb[0].mxu0
  %v551 = vadd.f32 %v454, %v550
  %v552 = vpop.f32.mrb[0].mxu0
  %553 = vmatprep.mubr.bf16.mxu0 0
  %554 = vmatmul.mubr.bf16.gmra.mrb[0].mxu0 %v219
  %v555 = vpop.f32.mrb[0].mxu0
  %v556 = vadd.f32 %v459, %v555
  %v557 = vpop.f32.mrb[0].mxu0
  %v558 = vpop.f32.mrb[0].mxu0
  %v559 = vadd.f32 %v462, %v558
  %v560 = vpop.f32.mrb[0].mxu0
  %561 = vmatprep.mubr.bf16.mxu0 0
  %562 = vmatmul.mubr.bf16.gmra.mrb[0].mxu0 %v222
  %v563 = vpop.f32.mrb[0].mxu0
  %v564 = vadd.f32 %v467, %v563
  %v565 = vpop.f32.mrb[0].mxu0
  %v566 = vpop.f32.mrb[0].mxu0
  %v567 = vadd.f32 %v470, %v566
  %v568 = vpop.f32.mrb[0].mxu0
  %569 = vmatprep.mubr.bf16.mxu0 0
  %570 = vmatmul.mubr.bf16.gmra.mrb[0].mxu0 %v225
  %v571 = vpop.f32.mrb[0].mxu0
  %v572 = vadd.f32 %v475, %v571
  %v573 = vpop.f32.mrb[0].mxu0
  %v574 = vpop.f32.mrb[0].mxu0
  %v575 = vadd.f32 %v478, %v574
  %v576 = vpop.f32.mrb[0].mxu0
  %577 = vmatprep.mubr.bf16.mxu0 0
  %578 = vmatmul.mubr.bf16.gmra.mrb[0].mxu0 %v228
  %v579 = vpop.f32.mrb[0].mxu0
  %v580 = vadd.f32 %v483, %v579
  %v581 = vpop.f32.mrb[0].mxu0
  %v582 = vpop.f32.mrb[0].mxu0
  %v583 = vadd.f32 %v486, %v582
  %v584 = vpop.f32.mrb[0].mxu0
  %585 = vmatprep.mubr.bf16.mxu0 0
  %586 = vmatmul.mubr.bf16.gmra.mrb[0].mxu0 %v231
  %v587 = vpop.f32.mrb[0].mxu0
  %v588 = vadd.f32 %v491, %v587
  %v589 = vpop.f32.mrb[0].mxu0
  %v590 = vpop.f32.mrb[0].mxu0
  %v591 = vadd.f32 %v494, %v590
  %v592 = vpop.f32.mrb[0].mxu0
  %593 = vdwg.mxu0
  %v594 = vadd.f32 %v64, %v532
  %v595 = vadd.f32 %v65, %v535
  %v596 = vadd.f32 %v66, %v540
  %v597 = vadd.f32 %v67, %v543
  %v598 = vadd.f32 %v68, %v548
  %v599 = vadd.f32 %v69, %v551
  %v600 = vadd.f32 %v70, %v556
  %v601 = vadd.f32 %v71, %v559
  %v602 = vadd.f32 %v72, %v564
  %v603 = vadd.f32 %v73, %v567
  %v604 = vadd.f32 %v74, %v572
  %v605 = vadd.f32 %v75, %v575
  %v606 = vadd.f32 %v76, %v580
  %v607 = vadd.f32 %v77, %v583
  %v608 = vadd.f32 %v78, %v588
  %v609 = vadd.f32 %v79, %v591
  %610 = vst [vmem:[#allocation2] sm:$0xff] %v594
  %611 = vst [vmem:[#allocation2 + $0x8] sm:$0xff] %v595
  %612 = vst [vmem:[#allocation2 + $0x10] sm:$0xff] %v596
  %613 = vst [vmem:[#allocation2 + $0x18] sm:$0xff] %v597
  %614 = vst [vmem:[#allocation2 + $0x20] sm:$0xff] %v598
  %615 = vst [vmem:[#allocation2 + $0x28] sm:$0xff] %v599
  %616 = vst [vmem:[#allocation2 + $0x30] sm:$0xff] %v600
  %617 = vst [vmem:[#allocation2 + $0x38] sm:$0xff] %v601
  %618 = vst [vmem:[#allocation2 + $0x40] sm:$0xff] %v602
  %619 = vst [vmem:[#allocation2 + $0x48] sm:$0xff] %v603
  %620 = vst [vmem:[#allocation2 + $0x50] sm:$0xff] %v604
  %621 = vst [vmem:[#allocation2 + $0x58] sm:$0xff] %v605
  %622 = vst [vmem:[#allocation2 + $0x60] sm:$0xff] %v606
  %623 = vst [vmem:[#allocation2 + $0x68] sm:$0xff] %v607
  %624 = vst [vmem:[#allocation2 + $0x70] sm:$0xff] %v608
  %625 = vst [vmem:[#allocation2 + $0x78] sm:$0xff] %v609
  // Predicated region
  $region14: #{densenet_forward.29} parent=0 // pred_check
    %p626 = pneg %p12
  $region15: #{densenet_forward.29} parent=0 // pred_check_branch
    %628 = sbr.rel (%p626) target = $region17
  $region16: #{densenet_forward.29} parent=0 // pred_region
    %v629 = vld [vmem:[#allocation2] sm:$0xff]
    %v630 = vld [vmem:[#allocation2 + $0x8] sm:$0xff]
    %v631 = vld [vmem:[#allocation2 + $0x10] sm:$0xff]
    %v632 = vld [vmem:[#allocation2 + $0x18] sm:$0xff]
    %v633 = vld [vmem:[#allocation2 + $0x20] sm:$0xff]
    %v634 = vld [vmem:[#allocation2 + $0x28] sm:$0xff]
    %v635 = vld [vmem:[#allocation2 + $0x30] sm:$0xff]
    %v636 = vld [vmem:[#allocation2 + $0x38] sm:$0xff]
    %v637 = vld [vmem:[#allocation2 + $0x40] sm:$0xff]
    %v638 = vld [vmem:[#allocation2 + $0x48] sm:$0xff]
    %v639 = vld [vmem:[#allocation2 + $0x50] sm:$0xff]
    %v640 = vld [vmem:[#allocation2 + $0x58] sm:$0xff]
    %v641 = vld [vmem:[#allocation2 + $0x60] sm:$0xff]
    %v642 = vld [vmem:[#allocation2 + $0x68] sm:$0xff]
    %v643 = vld [vmem:[#allocation2 + $0x70] sm:$0xff]
    %v644 = vld [vmem:[#allocation2 + $0x78] sm:$0xff]
    %v645 = vpack.c.bf16 %v630, %v629
    %v646 = vpack.c.bf16 %v632, %v631
    %v647 = vpack.c.bf16 %v634, %v633
    %v648 = vpack.c.bf16 %v636, %v635
    %v649 = vpack.c.bf16 %v638, %v637
    %v650 = vpack.c.bf16 %v640, %v639
    %v651 = vpack.c.bf16 %v642, %v641
    %v652 = vpack.c.bf16 %v644, %v643
    %v661 = vunpack.c.l.b16 %v645
    %v662 = vunpack.c.h.b16 %v645
    %v663 = vunpack.c.l.b16 %v646
    %v664 = vunpack.c.h.b16 %v646
    %v665 = vunpack.c.l.b16 %v647
    %v666 = vunpack.c.h.b16 %v647
    %v667 = vunpack.c.l.b16 %v648
    %v668 = vunpack.c.h.b16 %v648
    %v669 = vunpack.c.l.b16 %v649
    %v670 = vunpack.c.h.b16 %v649
    %v671 = vunpack.c.l.b16 %v650
    %v672 = vunpack.c.h.b16 %v650
    %v673 = vunpack.c.l.b16 %v651
    %v674 = vunpack.c.h.b16 %v651
    %v675 = vunpack.c.l.b16 %v652
    %v676 = vunpack.c.h.b16 %v652
    %v677 = vpack.c.b16 %v661, %v661
    %v678 = vpack.c.b16 %v662, %v662
    %v679 = vpack.c.b16 %v663, %v663
    %v680 = vpack.c.b16 %v664, %v664
    %v681 = vpack.c.b16 %v665, %v665
    %v682 = vpack.c.b16 %v666, %v666
    %v683 = vpack.c.b16 %v667, %v667
    %v684 = vpack.c.b16 %v668, %v668
    %v685 = vpack.c.b16 %v669, %v669
    %v686 = vpack.c.b16 %v670, %v670
    %v687 = vpack.c.b16 %v671, %v671
    %v688 = vpack.c.b16 %v672, %v672
    %v689 = vpack.c.b16 %v673, %v673
    %v690 = vpack.c.b16 %v674, %v674
    %v691 = vpack.c.b16 %v675, %v675
    %v692 = vpack.c.b16 %v676, %v676
    %709 = vst [vmem:[%s2] sm:$0xf] %v677
    %710 = vst [vmem:[%s2 + $0x4] sm:$0xf] %v678
    %711 = vst [vmem:[%s2 + $0x8] sm:$0xf] %v679
    %712 = vst [vmem:[%s2 + $0xc] sm:$0xf] %v680
    %713 = vst [vmem:[%s2 + $0x10] sm:$0xf] %v681
    %714 = vst [vmem:[%s2 + $0x14] sm:$0xf] %v682
    %715 = vst [vmem:[%s2 + $0x18] sm:$0xf] %v683
    %716 = vst [vmem:[%s2 + $0x1c] sm:$0xf] %v684
    %717 = vst [vmem:[%s2 + $0x20] sm:$0xf] %v685
    %718 = vst [vmem:[%s2 + $0x24] sm:$0xf] %v686
    %719 = vst [vmem:[%s2 + $0x28] sm:$0xf] %v687
    %720 = vst [vmem:[%s2 + $0x2c] sm:$0xf] %v688
    %721 = vst [vmem:[%s2 + $0x30] sm:$0xf] %v689
    %722 = vst [vmem:[%s2 + $0x34] sm:$0xf] %v690
    %723 = vst [vmem:[%s2 + $0x38] sm:$0xf] %v691
    %724 = vst [vmem:[%s2 + $0x3c] sm:$0xf] %v692
  $region17: #{densenet_forward.29} parent=0 // pred_fallthru
    _
  // Predicated region
  $region18: #{densenet_forward.29} parent=0 // pred_check
    _
  $region19: #{densenet_forward.29} parent=0 // pred_check_branch
    %726 = sbr.rel (0) target = $region21
  $region20: #{densenet_forward.29} parent=0 // pred_region
    _
  $region21: #{densenet_forward.29} parent=0 // pred_fallthru
    _
  // Predicated region
  $region22: #{densenet_forward.29} parent=0 // pred_check
    _
  $region23: #{densenet_forward.29} parent=0 // pred_check_branch
    %728 = sbr.rel (0) target = $region25
  $region24: #{densenet_forward.29} parent=0 // pred_region
    _
  $region25: #{densenet_forward.29} parent=0 // pred_fallthru
    _

// kernel: densenet_forward.32
$region0: #{densenet_forward.32}
  #allocation0 [shape = 'u32[]', space=smem, size = 0x4, offset = 0x4, fixed_abs, tag = 'smem constant byte address 0x4 - core index']
  #allocation1 [shape = 'u32[144,128]{1,0:T(1,128)}', space=vmem, size = 0x12000, scoped, tag = 'internal scratch']
  #allocation2 [shape = 'f32[128,128]{1,0:T(8,128)}', space=vmem, size = 0x10000, scoped, tag = 'scratch operand']
  %s0 = inlined_call_operand.vmem [shape: bf16[128,128], index: 0, kind: input, shape index: {}]
  %s1 = inlined_call_operand.vmem [shape: bf16[128,128], index: 1, kind: input, shape index: {}]
  %s2 = inlined_call_operand.vmem [shape: f32[1,128], index: 2, kind: input, shape index: {}]
  %s3 = inlined_call_operand.vmem [shape: f32[1,128], index: 3, kind: input, shape index: {}]
  %s4 = inlined_call_operand.vmem [shape: bf16[128,128], index: 4, kind: output, shape index: {}]
  %s5 = sld [smem:[#allocation0]]
  $region34: #{densenet_forward.32} parent=0
    _
  %s7 = ssub.s32 1, %s5
  %s8 = scalar_select 0, %s7, %s5
  // Predicated region
  $region2: #{densenet_forward.32} parent=0 // pred_check
    _
  $region3: #{densenet_forward.32} parent=0 // pred_check_branch
    %10 = sbr.rel (0) target = $region5
  $region4: #{densenet_forward.32} parent=0 // pred_region
    _
  $region5: #{densenet_forward.32} parent=0 // pred_fallthru
    _
  // Predicated region
  $region6: #{densenet_forward.32} parent=0 // pred_check
    _
  $region7: #{densenet_forward.32} parent=0 // pred_check_branch
    %12 = sbr.rel (0) target = $region9
  $region8: #{densenet_forward.32} parent=0 // pred_region
    _
  $region9: #{densenet_forward.32} parent=0 // pred_fallthru
    _
  // Predicated region
  $region10: #{densenet_forward.32} parent=0 // pred_check
    _
  $region11: #{densenet_forward.32} parent=0 // pred_check_branch
    %14 = sbr.rel (0) target = $region13
  $region12: #{densenet_forward.32} parent=0 // pred_region
    _
  $region13: #{densenet_forward.32} parent=0 // pred_fallthru
    _
  // Predicated region
  $region14: #{densenet_forward.32} parent=0 // pred_check
    _
  $region15: #{densenet_forward.32} parent=0 // pred_check_branch
    %16 = sbr.rel (0) target = $region17
  $region16: #{densenet_forward.32} parent=0 // pred_region
    _
  $region17: #{densenet_forward.32} parent=0 // pred_fallthru
    _
  %p18 = scmp.eq.s32.totalorder 0, 0
  // Predicated region
  $region18: #{densenet_forward.32} parent=0 // pred_check
    %p19 = pneg %p18
  $region19: #{densenet_forward.32} parent=0 // pred_check_branch
    %21 = sbr.rel (%p19) target = $region21
  $region20: #{densenet_forward.32} parent=0 // pred_region
    %22 = vst [vmem:[#allocation2] sm:$0xff] 0.0
    %23 = vst [vmem:[#allocation2 + $0x8] sm:$0xff] 0.0
    %24 = vst [vmem:[#allocation2 + $0x10] sm:$0xff] 0.0
    %25 = vst [vmem:[#allocation2 + $0x18] sm:$0xff] 0.0
    %26 = vst [vmem:[#allocation2 + $0x20] sm:$0xff] 0.0
    %27 = vst [vmem:[#allocation2 + $0x28] sm:$0xff] 0.0
    %28 = vst [vmem:[#allocation2 + $0x30] sm:$0xff] 0.0
    %29 = vst [vmem:[#allocation2 + $0x38] sm:$0xff] 0.0
    %30 = vst [vmem:[#allocation2 + $0x40] sm:$0xff] 0.0
    %31 = vst [vmem:[#allocation2 + $0x48] sm:$0xff] 0.0
    %32 = vst [vmem:[#allocation2 + $0x50] sm:$0xff] 0.0
    %33 = vst [vmem:[#allocation2 + $0x58] sm:$0xff] 0.0
    %34 = vst [vmem:[#allocation2 + $0x60] sm:$0xff] 0.0
    %35 = vst [vmem:[#allocation2 + $0x68] sm:$0xff] 0.0
    %36 = vst [vmem:[#allocation2 + $0x70] sm:$0xff] 0.0
    %37 = vst [vmem:[#allocation2 + $0x78] sm:$0xff] 0.0
  $region21: #{densenet_forward.32} parent=0 // pred_fallthru
    _
  %v38 = vld [vmem:[%s0] sm:$0xf]
  %v39 = vld [vmem:[%s0 + $0x4] sm:$0xf]
  %v40 = vld [vmem:[%s0 + $0x8] sm:$0xf]
  %v41 = vld [vmem:[%s0 + $0xc] sm:$0xf]
  %v42 = vld [vmem:[%s0 + $0x10] sm:$0xf]
  %v43 = vld [vmem:[%s0 + $0x14] sm:$0xf]
  %v44 = vld [vmem:[%s0 + $0x18] sm:$0xf]
  %v45 = vld [vmem:[%s0 + $0x1c] sm:$0xf]
  %v46 = vld [vmem:[%s0 + $0x20] sm:$0xf]
  %v47 = vld [vmem:[%s0 + $0x24] sm:$0xf]
  %v48 = vld [vmem:[%s0 + $0x28] sm:$0xf]
  %v49 = vld [vmem:[%s0 + $0x2c] sm:$0xf]
  %v50 = vld [vmem:[%s0 + $0x30] sm:$0xf]
  %v51 = vld [vmem:[%s0 + $0x34] sm:$0xf]
  %v52 = vld [vmem:[%s0 + $0x38] sm:$0xf]
  %v53 = vld [vmem:[%s0 + $0x3c] sm:$0xf]
  %v54 = vunpack.c.l.bf16 %v38
  %v55 = vunpack.c.l.bf16 %v39
  %v56 = vunpack.c.l.bf16 %v40
  %v57 = vunpack.c.l.bf16 %v41
  %v58 = vunpack.c.l.bf16 %v42
  %v59 = vunpack.c.l.bf16 %v43
  %v60 = vunpack.c.l.bf16 %v44
  %v61 = vunpack.c.l.bf16 %v45
  %v62 = vunpack.c.l.bf16 %v46
  %v63 = vunpack.c.l.bf16 %v47
  %v64 = vunpack.c.l.bf16 %v48
  %v65 = vunpack.c.l.bf16 %v49
  %v66 = vunpack.c.l.bf16 %v50
  %v67 = vunpack.c.l.bf16 %v51
  %v68 = vunpack.c.l.bf16 %v52
  %v69 = vunpack.c.l.bf16 %v53
  %v70 = vld [vmem:[%s2] sm:$0x1]
  %v72 = vlaneseq
  %v73 = vshrl.u32 %v72, 7
  %v74 = vsub.s32 0, %v73
  %v75 = vrot.slane %v70, %v74
  %v77 = vmul.f32 %v54, %v75
  %v78 = vmul.f32 %v55, %v75
  %v79 = vmul.f32 %v56, %v75
  %v80 = vmul.f32 %v57, %v75
  %v81 = vmul.f32 %v58, %v75
  %v82 = vmul.f32 %v59, %v75
  %v83 = vmul.f32 %v60, %v75
  %v84 = vmul.f32 %v61, %v75
  %v85 = vmul.f32 %v62, %v75
  %v86 = vmul.f32 %v63, %v75
  %v87 = vmul.f32 %v64, %v75
  %v88 = vmul.f32 %v65, %v75
  %v89 = vmul.f32 %v66, %v75
  %v90 = vmul.f32 %v67, %v75
  %v91 = vmul.f32 %v68, %v75
  %v92 = vmul.f32 %v69, %v75
  %v93 = vld [vmem:[%s3] sm:$0x1]
  %v95 = vlaneseq
  %v96 = vshrl.u32 %v95, 7
  %v97 = vsub.s32 0, %v96
  %v98 = vrot.slane %v93, %v97
  %v100 = vadd.f32 %v77, %v98
  %v101 = vadd.f32 %v78, %v98
  %v102 = vadd.f32 %v79, %v98
  %v103 = vadd.f32 %v80, %v98
  %v104 = vadd.f32 %v81, %v98
  %v105 = vadd.f32 %v82, %v98
  %v106 = vadd.f32 %v83, %v98
  %v107 = vadd.f32 %v84, %v98
  %v108 = vadd.f32 %v85, %v98
  %v109 = vadd.f32 %v86, %v98
  %v110 = vadd.f32 %v87, %v98
  %v111 = vadd.f32 %v88, %v98
  %v112 = vadd.f32 %v89, %v98
  %v113 = vadd.f32 %v90, %v98
  %v114 = vadd.f32 %v91, %v98
  %v115 = vadd.f32 %v92, %v98
  %v116 = vmax.f32 %v100, 0.0
  %v117 = vmax.f32 %v101, 0.0
  %v118 = vmax.f32 %v102, 0.0
  %v119 = vmax.f32 %v103, 0.0
  %v120 = vmax.f32 %v104, 0.0
  %v121 = vmax.f32 %v105, 0.0
  %v122 = vmax.f32 %v106, 0.0
  %v123 = vmax.f32 %v107, 0.0
  %v124 = vmax.f32 %v108, 0.0
  %v125 = vmax.f32 %v109, 0.0
  %v126 = vmax.f32 %v110, 0.0
  %v127 = vmax.f32 %v111, 0.0
  %v128 = vmax.f32 %v112, 0.0
  %v129 = vmax.f32 %v113, 0.0
  %v130 = vmax.f32 %v114, 0.0
  %v131 = vmax.f32 %v115, 0.0
  %v132 = vpack.c.bf16 %v117, %v116
  %v133 = vpack.c.bf16 %v119, %v118
  %v134 = vpack.c.bf16 %v121, %v120
  %v135 = vpack.c.bf16 %v123, %v122
  %v136 = vpack.c.bf16 %v125, %v124
  %v137 = vpack.c.bf16 %v127, %v126
  %v138 = vpack.c.bf16 %v129, %v128
  %v139 = vpack.c.bf16 %v131, %v130
  %v140 = vld [vmem:[#allocation2] sm:$0xff]
  %v141 = vld [vmem:[#allocation2 + $0x8] sm:$0xff]
  %v142 = vld [vmem:[#allocation2 + $0x10] sm:$0xff]
  %v143 = vld [vmem:[#allocation2 + $0x18] sm:$0xff]
  %v144 = vld [vmem:[#allocation2 + $0x20] sm:$0xff]
  %v145 = vld [vmem:[#allocation2 + $0x28] sm:$0xff]
  %v146 = vld [vmem:[#allocation2 + $0x30] sm:$0xff]
  %v147 = vld [vmem:[#allocation2 + $0x38] sm:$0xff]
  %v148 = vld [vmem:[#allocation2 + $0x40] sm:$0xff]
  %v149 = vld [vmem:[#allocation2 + $0x48] sm:$0xff]
  %v150 = vld [vmem:[#allocation2 + $0x50] sm:$0xff]
  %v151 = vld [vmem:[#allocation2 + $0x58] sm:$0xff]
  %v152 = vld [vmem:[#allocation2 + $0x60] sm:$0xff]
  %v153 = vld [vmem:[#allocation2 + $0x68] sm:$0xff]
  %v154 = vld [vmem:[#allocation2 + $0x70] sm:$0xff]
  %v155 = vld [vmem:[#allocation2 + $0x78] sm:$0xff]
  %v156 = vld [vmem:[%s1] sm:$0xf]
  %v157 = vld [vmem:[%s1 + $0x4] sm:$0xf]
  %v158 = vld [vmem:[%s1 + $0x8] sm:$0xf]
  %v159 = vld [vmem:[%s1 + $0xc] sm:$0xf]
  %v160 = vld [vmem:[%s1 + $0x10] sm:$0xf]
  %v161 = vld [vmem:[%s1 + $0x14] sm:$0xf]
  %v162 = vld [vmem:[%s1 + $0x18] sm:$0xf]
  %v163 = vld [vmem:[%s1 + $0x1c] sm:$0xf]
  %v164 = vld [vmem:[%s1 + $0x20] sm:$0xf]
  %v165 = vld [vmem:[%s1 + $0x24] sm:$0xf]
  %v166 = vld [vmem:[%s1 + $0x28] sm:$0xf]
  %v167 = vld [vmem:[%s1 + $0x2c] sm:$0xf]
  %v168 = vld [vmem:[%s1 + $0x30] sm:$0xf]
  %v169 = vld [vmem:[%s1 + $0x34] sm:$0xf]
  %v170 = vld [vmem:[%s1 + $0x38] sm:$0xf]
  %v171 = vld [vmem:[%s1 + $0x3c] sm:$0xf]
  %v188 = vunpack.c.l.b16 %v156
  %v189 = vunpack.c.l.b16 %v157
  %v190 = vunpack.c.l.b16 %v158
  %v191 = vunpack.c.l.b16 %v159
  %v192 = vunpack.c.l.b16 %v160
  %v193 = vunpack.c.l.b16 %v161
  %v194 = vunpack.c.l.b16 %v162
  %v195 = vunpack.c.l.b16 %v163
  %v196 = vunpack.c.l.b16 %v164
  %v197 = vunpack.c.l.b16 %v165
  %v198 = vunpack.c.l.b16 %v166
  %v199 = vunpack.c.l.b16 %v167
  %v200 = vunpack.c.l.b16 %v168
  %v201 = vunpack.c.l.b16 %v169
  %v202 = vunpack.c.l.b16 %v170
  %v203 = vunpack.c.l.b16 %v171
  %v204 = vpack.c.b16 %v189, %v188
  %v205 = vpack.c.b16 %v191, %v190
  %v206 = vpack.c.b16 %v193, %v192
  %v207 = vpack.c.b16 %v195, %v194
  %v208 = vpack.c.b16 %v197, %v196
  %v209 = vpack.c.b16 %v199, %v198
  %v210 = vpack.c.b16 %v201, %v200
  %v211 = vpack.c.b16 %v203, %v202
  %220 = vmatprep.subr.bf16.mxu0 0
  %221 = vmatpush1.bf16.msra.mxu0 %v204
  %222 = vmatprep.subr.bf16.mxu0 0
  %223 = vmatpush1.bf16.msra.mxu0 %v205
  %224 = vmatprep.subr.bf16.mxu0 0
  %225 = vmatpush1.bf16.msra.mxu0 %v206
  %226 = vmatprep.subr.bf16.mxu0 0
  %227 = vmatpush1.bf16.msra.mxu0 %v207
  %228 = vmatprep.subr.bf16.mxu0 0
  %229 = vmatpush1.bf16.msra.mxu0 %v208
  %230 = vmatprep.subr.bf16.mxu0 0
  %231 = vmatpush1.bf16.msra.mxu0 %v209
  %232 = vmatprep.subr.bf16.mxu0 0
  %233 = vmatpush1.bf16.msra.mxu0 %v210
  %234 = vmatprep.subr.bf16.mxu0 0
  %235 = vmatpush1.bf16.msra.mxu0 %v211
  %236 = vmatprep.subr.bf16.mxu0 0
  %237 = vmatpush1.bf16.msra.mxu0 0
  %238 = vmatprep.subr.bf16.mxu0 0
  %239 = vmatpush1.bf16.msra.mxu0 0
  %240 = vmatprep.subr.bf16.mxu0 0
  %241 = vmatpush1.bf16.msra.mxu0 0
  %242 = vmatprep.subr.bf16.mxu0 0
  %243 = vmatpush1.bf16.msra.mxu0 0
  %244 = vmatprep.subr.bf16.mxu0 0
  %245 = vmatpush1.bf16.msra.mxu0 0
  %246 = vmatprep.subr.bf16.mxu0 0
  %247 = vmatpush1.bf16.msra.mxu0 0
  %248 = vmatprep.subr.bf16.mxu0 0
  %249 = vmatpush1.bf16.msra.mxu0 0
  %250 = vmatprep.subr.bf16.mxu0 0
  %251 = vmatpush1.bf16.msra.mxu0 0
  %252 = vmatprep.mubr.bf16.mxu0 0
  %253 = vmatmul.mubr.bf16.gmra.mrb[0].mxu0 %v132
  %v254 = vpop.f32.mrb[0].mxu0
  %v255 = vadd.f32 0.0, %v254
  %v256 = vpop.f32.mrb[0].mxu0
  %v257 = vpop.f32.mrb[0].mxu0
  %v258 = vadd.f32 0.0, %v257
  %v259 = vpop.f32.mrb[0].mxu0
  %260 = vmatprep.mubr.bf16.mxu0 0
  %261 = vmatmul.mubr.bf16.gmra.mrb[0].mxu0 %v133
  %v262 = vpop.f32.mrb[0].mxu0
  %v263 = vadd.f32 0.0, %v262
  %v264 = vpop.f32.mrb[0].mxu0
  %v265 = vpop.f32.mrb[0].mxu0
  %v266 = vadd.f32 0.0, %v265
  %v267 = vpop.f32.mrb[0].mxu0
  %268 = vmatprep.mubr.bf16.mxu0 0
  %269 = vmatmul.mubr.bf16.gmra.mrb[0].mxu0 %v134
  %v270 = vpop.f32.mrb[0].mxu0
  %v271 = vadd.f32 0.0, %v270
  %v272 = vpop.f32.mrb[0].mxu0
  %v273 = vpop.f32.mrb[0].mxu0
  %v274 = vadd.f32 0.0, %v273
  %v275 = vpop.f32.mrb[0].mxu0
  %276 = vmatprep.mubr.bf16.mxu0 0
  %277 = vmatmul.mubr.bf16.gmra.mrb[0].mxu0 %v135
  %v278 = vpop.f32.mrb[0].mxu0
  %v279 = vadd.f32 0.0, %v278
  %v280 = vpop.f32.mrb[0].mxu0
  %v281 = vpop.f32.mrb[0].mxu0
  %v282 = vadd.f32 0.0, %v281
  %v283 = vpop.f32.mrb[0].mxu0
  %284 = vmatprep.mubr.bf16.mxu0 0
  %285 = vmatmul.mubr.bf16.gmra.mrb[0].mxu0 %v136
  %v286 = vpop.f32.mrb[0].mxu0
  %v287 = vadd.f32 0.0, %v286
  %v288 = vpop.f32.mrb[0].mxu0
  %v289 = vpop.f32.mrb[0].mxu0
  %v290 = vadd.f32 0.0, %v289
  %v291 = vpop.f32.mrb[0].mxu0
  %292 = vmatprep.mubr.bf16.mxu0 0
  %293 = vmatmul.mubr.bf16.gmra.mrb[0].mxu0 %v137
  %v294 = vpop.f32.mrb[0].mxu0
  %v295 = vadd.f32 0.0, %v294
  %v296 = vpop.f32.mrb[0].mxu0
  %v297 = vpop.f32.mrb[0].mxu0
  %v298 = vadd.f32 0.0, %v297
  %v299 = vpop.f32.mrb[0].mxu0
  %300 = vmatprep.mubr.bf16.mxu0 0
  %301 = vmatmul.mubr.bf16.gmra.mrb[0].mxu0 %v138
  %v302 = vpop.f32.mrb[0].mxu0
  %v303 = vadd.f32 0.0, %v302
  %v304 = vpop.f32.mrb[0].mxu0
  %v305 = vpop.f32.mrb[0].mxu0
  %v306 = vadd.f32 0.0, %v305
  %v307 = vpop.f32.mrb[0].mxu0
  %308 = vmatprep.mubr.bf16.mxu0 0
  %309 = vmatmul.mubr.bf16.gmra.mrb[0].mxu0 %v139
  %v310 = vpop.f32.mrb[0].mxu0
  %v311 = vadd.f32 0.0, %v310
  %v312 = vpop.f32.mrb[0].mxu0
  %v313 = vpop.f32.mrb[0].mxu0
  %v314 = vadd.f32 0.0, %v313
  %v315 = vpop.f32.mrb[0].mxu0
  %316 = vdwg.mxu0
  %v317 = vadd.f32 %v140, %v255
  %v318 = vadd.f32 %v141, %v258
  %v319 = vadd.f32 %v142, %v263
  %v320 = vadd.f32 %v143, %v266
  %v321 = vadd.f32 %v144, %v271
  %v322 = vadd.f32 %v145, %v274
  %v323 = vadd.f32 %v146, %v279
  %v324 = vadd.f32 %v147, %v282
  %v325 = vadd.f32 %v148, %v287
  %v326 = vadd.f32 %v149, %v290
  %v327 = vadd.f32 %v150, %v295
  %v328 = vadd.f32 %v151, %v298
  %v329 = vadd.f32 %v152, %v303
  %v330 = vadd.f32 %v153, %v306
  %v331 = vadd.f32 %v154, %v311
  %v332 = vadd.f32 %v155, %v314
  %333 = vst [vmem:[#allocation2] sm:$0xff] %v317
  %334 = vst [vmem:[#allocation2 + $0x8] sm:$0xff] %v318
  %335 = vst [vmem:[#allocation2 + $0x10] sm:$0xff] %v319
  %336 = vst [vmem:[#allocation2 + $0x18] sm:$0xff] %v320
  %337 = vst [vmem:[#allocation2 + $0x20] sm:$0xff] %v321
  %338 = vst [vmem:[#allocation2 + $0x28] sm:$0xff] %v322
  %339 = vst [vmem:[#allocation2 + $0x30] sm:$0xff] %v323
  %340 = vst [vmem:[#allocation2 + $0x38] sm:$0xff] %v324
  %341 = vst [vmem:[#allocation2 + $0x40] sm:$0xff] %v325
  %342 = vst [vmem:[#allocation2 + $0x48] sm:$0xff] %v326
  %343 = vst [vmem:[#allocation2 + $0x50] sm:$0xff] %v327
  %344 = vst [vmem:[#allocation2 + $0x58] sm:$0xff] %v328
  %345 = vst [vmem:[#allocation2 + $0x60] sm:$0xff] %v329
  %346 = vst [vmem:[#allocation2 + $0x68] sm:$0xff] %v330
  %347 = vst [vmem:[#allocation2 + $0x70] sm:$0xff] %v331
  %348 = vst [vmem:[#allocation2 + $0x78] sm:$0xff] %v332
  // Predicated region
  $region22: #{densenet_forward.32} parent=0 // pred_check
    %p349 = pneg %p18
  $region23: #{densenet_forward.32} parent=0 // pred_check_branch
    %351 = sbr.rel (%p349) target = $region25
  $region24: #{densenet_forward.32} parent=0 // pred_region
    %v352 = vld [vmem:[#allocation2] sm:$0xff]
    %v353 = vld [vmem:[#allocation2 + $0x8] sm:$0xff]
    %v354 = vld [vmem:[#allocation2 + $0x10] sm:$0xff]
    %v355 = vld [vmem:[#allocation2 + $0x18] sm:$0xff]
    %v356 = vld [vmem:[#allocation2 + $0x20] sm:$0xff]
    %v357 = vld [vmem:[#allocation2 + $0x28] sm:$0xff]
    %v358 = vld [vmem:[#allocation2 + $0x30] sm:$0xff]
    %v359 = vld [vmem:[#allocation2 + $0x38] sm:$0xff]
    %v360 = vld [vmem:[#allocation2 + $0x40] sm:$0xff]
    %v361 = vld [vmem:[#allocation2 + $0x48] sm:$0xff]
    %v362 = vld [vmem:[#allocation2 + $0x50] sm:$0xff]
    %v363 = vld [vmem:[#allocation2 + $0x58] sm:$0xff]
    %v364 = vld [vmem:[#allocation2 + $0x60] sm:$0xff]
    %v365 = vld [vmem:[#allocation2 + $0x68] sm:$0xff]
    %v366 = vld [vmem:[#allocation2 + $0x70] sm:$0xff]
    %v367 = vld [vmem:[#allocation2 + $0x78] sm:$0xff]
    %v368 = vpack.c.bf16 %v353, %v352
    %v369 = vpack.c.bf16 %v355, %v354
    %v370 = vpack.c.bf16 %v357, %v356
    %v371 = vpack.c.bf16 %v359, %v358
    %v372 = vpack.c.bf16 %v361, %v360
    %v373 = vpack.c.bf16 %v363, %v362
    %v374 = vpack.c.bf16 %v365, %v364
    %v375 = vpack.c.bf16 %v367, %v366
    %v384 = vunpack.c.l.b16 %v368
    %v385 = vunpack.c.h.b16 %v368
    %v386 = vunpack.c.l.b16 %v369
    %v387 = vunpack.c.h.b16 %v369
    %v388 = vunpack.c.l.b16 %v370
    %v389 = vunpack.c.h.b16 %v370
    %v390 = vunpack.c.l.b16 %v371
    %v391 = vunpack.c.h.b16 %v371
    %v392 = vunpack.c.l.b16 %v372
    %v393 = vunpack.c.h.b16 %v372
    %v394 = vunpack.c.l.b16 %v373
    %v395 = vunpack.c.h.b16 %v373
    %v396 = vunpack.c.l.b16 %v374
    %v397 = vunpack.c.h.b16 %v374
    %v398 = vunpack.c.l.b16 %v375
    %v399 = vunpack.c.h.b16 %v375
    %v400 = vpack.c.b16 %v384, %v384
    %v401 = vpack.c.b16 %v385, %v385
    %v402 = vpack.c.b16 %v386, %v386
    %v403 = vpack.c.b16 %v387, %v387
    %v404 = vpack.c.b16 %v388, %v388
    %v405 = vpack.c.b16 %v389, %v389
    %v406 = vpack.c.b16 %v390, %v390
    %v407 = vpack.c.b16 %v391, %v391
    %v408 = vpack.c.b16 %v392, %v392
    %v409 = vpack.c.b16 %v393, %v393
    %v410 = vpack.c.b16 %v394, %v394
    %v411 = vpack.c.b16 %v395, %v395
    %v412 = vpack.c.b16 %v396, %v396
    %v413 = vpack.c.b16 %v397, %v397
    %v414 = vpack.c.b16 %v398, %v398
    %v415 = vpack.c.b16 %v399, %v399
    %432 = vst [vmem:[%s4] sm:$0xf] %v400
    %433 = vst [vmem:[%s4 + $0x4] sm:$0xf] %v401
    %434 = vst [vmem:[%s4 + $0x8] sm:$0xf] %v402
    %435 = vst [vmem:[%s4 + $0xc] sm:$0xf] %v403
    %436 = vst [vmem:[%s4 + $0x10] sm:$0xf] %v404
    %437 = vst [vmem:[%s4 + $0x14] sm:$0xf] %v405
    %438 = vst [vmem:[%s4 + $0x18] sm:$0xf] %v406
    %439 = vst [vmem:[%s4 + $0x1c] sm:$0xf] %v407
    %440 = vst [vmem:[%s4 + $0x20] sm:$0xf] %v408
    %441 = vst [vmem:[%s4 + $0x24] sm:$0xf] %v409
    %442 = vst [vmem:[%s4 + $0x28] sm:$0xf] %v410
    %443 = vst [vmem:[%s4 + $0x2c] sm:$0xf] %v411
    %444 = vst [vmem:[%s4 + $0x30] sm:$0xf] %v412
    %445 = vst [vmem:[%s4 + $0x34] sm:$0xf] %v413
    %446 = vst [vmem:[%s4 + $0x38] sm:$0xf] %v414
    %447 = vst [vmem:[%s4 + $0x3c] sm:$0xf] %v415
  $region25: #{densenet_forward.32} parent=0 // pred_fallthru
    _
  // Predicated region
  $region26: #{densenet_forward.32} parent=0 // pred_check
    _
  $region27: #{densenet_forward.32} parent=0 // pred_check_branch
    %449 = sbr.rel (0) target = $region29
  $region28: #{densenet_forward.32} parent=0 // pred_region
    _
  $region29: #{densenet_forward.32} parent=0 // pred_fallthru
    _
  // Predicated region
  $region30: #{densenet_forward.32} parent=0 // pred_check
    _
  $region31: #{densenet_forward.32} parent=0 // pred_check_branch
    %451 = sbr.rel (0) target = $region33
  $region32: #{densenet_forward.32} parent=0 // pred_region
    _
  $region33: #{densenet_forward.32} parent=0 // pred_fallthru
    _

// kernel: densenet_forward.33
$region0: #{densenet_forward.33}
  #allocation0 [shape = 'u32[]', space=smem, size = 0x4, offset = 0x4, fixed_abs, tag = 'smem constant byte address 0x4 - core index']
  #allocation1 [shape = 'u32[144,128]{1,0:T(1,128)}', space=vmem, size = 0x12000, scoped, tag = 'internal scratch']
  %s0 = inlined_call_operand.vmem [shape: bf16[4,32,128], index: 0, kind: input, shape index: {}]
  %s1 = inlined_call_operand.vmem [shape: bf16[32,128], index: 1, kind: output, shape index: {}]
  %s2 = sld [smem:[#allocation0]]
  $region14: #{densenet_forward.33} parent=0
    _
  %s4 = ssub.s32 1, %s2
  %s5 = scalar_select 0, %s4, %s2
  // Predicated region
  $region2: #{densenet_forward.33} parent=0 // pred_check
    _
  $region3: #{densenet_forward.33} parent=0 // pred_check_branch
    %7 = sbr.rel (0) target = $region5
  $region4: #{densenet_forward.33} parent=0 // pred_region
    _
  $region5: #{densenet_forward.33} parent=0 // pred_fallthru
    _
  %v8 = vld [vmem:[%s0] sm:$0xf]
  %v9 = vld [vmem:[%s0 + $0x4] sm:$0xf]
  %v10 = vld [vmem:[%s0 + $0x8] sm:$0xf]
  %v11 = vld [vmem:[%s0 + $0xc] sm:$0xf]
  %v12 = vld [vmem:[%s0 + $0x10] sm:$0xf]
  %v13 = vld [vmem:[%s0 + $0x14] sm:$0xf]
  %v14 = vld [vmem:[%s0 + $0x18] sm:$0xf]
  %v15 = vld [vmem:[%s0 + $0x1c] sm:$0xf]
  %v16 = vld [vmem:[%s0 + $0x20] sm:$0xf]
  %v17 = vld [vmem:[%s0 + $0x24] sm:$0xf]
  %v18 = vld [vmem:[%s0 + $0x28] sm:$0xf]
  %v19 = vld [vmem:[%s0 + $0x2c] sm:$0xf]
  %v20 = vld [vmem:[%s0 + $0x30] sm:$0xf]
  %v21 = vld [vmem:[%s0 + $0x34] sm:$0xf]
  %v22 = vld [vmem:[%s0 + $0x38] sm:$0xf]
  %v23 = vld [vmem:[%s0 + $0x3c] sm:$0xf]
  %v24 = vunpack.c.l.bf16 %v8
  %v25 = vunpack.c.l.bf16 %v9
  %v26 = vunpack.c.l.bf16 %v10
  %v27 = vunpack.c.l.bf16 %v11
  %v28 = vunpack.c.l.bf16 %v12
  %v29 = vunpack.c.l.bf16 %v13
  %v30 = vunpack.c.l.bf16 %v14
  %v31 = vunpack.c.l.bf16 %v15
  %v32 = vunpack.c.l.bf16 %v16
  %v33 = vunpack.c.l.bf16 %v17
  %v34 = vunpack.c.l.bf16 %v18
  %v35 = vunpack.c.l.bf16 %v19
  %v36 = vunpack.c.l.bf16 %v20
  %v37 = vunpack.c.l.bf16 %v21
  %v38 = vunpack.c.l.bf16 %v22
  %v39 = vunpack.c.l.bf16 %v23
  %v40 = vadd.f32 %v24, %v28
  %v41 = vadd.f32 %v40, %v32
  %v42 = vadd.f32 %v41, %v36
  %v43 = vadd.f32 %v25, %v29
  %v44 = vadd.f32 %v43, %v33
  %v45 = vadd.f32 %v44, %v37
  %v46 = vadd.f32 %v26, %v30
  %v47 = vadd.f32 %v46, %v34
  %v48 = vadd.f32 %v47, %v38
  %v49 = vadd.f32 %v27, %v31
  %v50 = vadd.f32 %v49, %v35
  %v51 = vadd.f32 %v50, %v39
  %v52 = vrcp.pop 4.0
  %v53 = vmul.f32 %v42, %v52
  %v54 = vmul.f32 %v45, %v52
  %v55 = vmul.f32 %v48, %v52
  %v56 = vmul.f32 %v51, %v52
  %v57 = vpack.c.bf16 %v54, %v53
  %v58 = vpack.c.bf16 %v56, %v55
  %v61 = vunpack.c.l.b16 %v57
  %v62 = vunpack.c.h.b16 %v57
  %v63 = vunpack.c.l.b16 %v58
  %v64 = vunpack.c.h.b16 %v58
  %v65 = vpack.c.b16 %v61, %v61
  %v66 = vpack.c.b16 %v62, %v62
  %v67 = vpack.c.b16 %v63, %v63
  %v68 = vpack.c.b16 %v64, %v64
  %73 = vst [vmem:[%s1] sm:$0xf] %v65
  %74 = vst [vmem:[%s1 + $0x4] sm:$0xf] %v66
  %75 = vst [vmem:[%s1 + $0x8] sm:$0xf] %v67
  %76 = vst [vmem:[%s1 + $0xc] sm:$0xf] %v68
  // Predicated region
  $region6: #{densenet_forward.33} parent=0 // pred_check
    _
  $region7: #{densenet_forward.33} parent=0 // pred_check_branch
    %78 = sbr.rel (0) target = $region9
  $region8: #{densenet_forward.33} parent=0 // pred_region
    _
  $region9: #{densenet_forward.33} parent=0 // pred_fallthru
    _
  // Predicated region
  $region10: #{densenet_forward.33} parent=0 // pred_check
    _
  $region11: #{densenet_forward.33} parent=0 // pred_check_branch
    %80 = sbr.rel (0) target = $region13
  $region12: #{densenet_forward.33} parent=0 // pred_region
    _
  $region13: #{densenet_forward.33} parent=0 // pred_fallthru
    _

// kernel: densenet_forward.34
$region0: #{densenet_forward.34}
  #allocation0 [shape = 'u32[]', space=smem, size = 0x4, offset = 0x4, fixed_abs, tag = 'smem constant byte address 0x4 - core index']
  #allocation1 [shape = 'u32[144,128]{1,0:T(1,128)}', space=vmem, size = 0x12000, scoped, tag = 'internal scratch']
  #allocation2 [shape = 'f32[32,128]{1,0:T(8,128)}', space=vmem, size = 0x4000, scoped, tag = 'scratch operand']
  %s0 = inlined_call_operand.vmem [shape: bf16[32,128], index: 0, kind: input, shape index: {}]
  %s1 = inlined_call_operand.vmem [shape: bf16[128,128], index: 1, kind: input, shape index: {}]
  %s2 = inlined_call_operand.vmem [shape: f32[1,128], index: 2, kind: input, shape index: {}]
  %s3 = inlined_call_operand.vmem [shape: f32[1,128], index: 3, kind: input, shape index: {}]
  %s4 = inlined_call_operand.vmem [shape: f32[1,128], index: 4, kind: input, shape index: {}]
  %s5 = inlined_call_operand.vmem [shape: f32[1,128], index: 5, kind: input, shape index: {}]
  %s6 = inlined_call_operand.vmem [shape: bf16[32,128], index: 6, kind: output, shape index: {}]
  %s7 = sld [smem:[#allocation0]]
  $region42: #{densenet_forward.34} parent=0
    _
  %s9 = ssub.s32 1, %s7
  %s10 = scalar_select 0, %s9, %s7
  // Predicated region
  $region2: #{densenet_forward.34} parent=0 // pred_check
    _
  $region3: #{densenet_forward.34} parent=0 // pred_check_branch
    %12 = sbr.rel (0) target = $region5
  $region4: #{densenet_forward.34} parent=0 // pred_region
    _
  $region5: #{densenet_forward.34} parent=0 // pred_fallthru
    _
  // Predicated region
  $region6: #{densenet_forward.34} parent=0 // pred_check
    _
  $region7: #{densenet_forward.34} parent=0 // pred_check_branch
    %14 = sbr.rel (0) target = $region9
  $region8: #{densenet_forward.34} parent=0 // pred_region
    _
  $region9: #{densenet_forward.34} parent=0 // pred_fallthru
    _
  // Predicated region
  $region10: #{densenet_forward.34} parent=0 // pred_check
    _
  $region11: #{densenet_forward.34} parent=0 // pred_check_branch
    %16 = sbr.rel (0) target = $region13
  $region12: #{densenet_forward.34} parent=0 // pred_region
    _
  $region13: #{densenet_forward.34} parent=0 // pred_fallthru
    _
  // Predicated region
  $region14: #{densenet_forward.34} parent=0 // pred_check
    _
  $region15: #{densenet_forward.34} parent=0 // pred_check_branch
    %18 = sbr.rel (0) target = $region17
  $region16: #{densenet_forward.34} parent=0 // pred_region
    _
  $region17: #{densenet_forward.34} parent=0 // pred_fallthru
    _
  // Predicated region
  $region18: #{densenet_forward.34} parent=0 // pred_check
    _
  $region19: #{densenet_forward.34} parent=0 // pred_check_branch
    %20 = sbr.rel (0) target = $region21
  $region20: #{densenet_forward.34} parent=0 // pred_region
    _
  $region21: #{densenet_forward.34} parent=0 // pred_fallthru
    _
  // Predicated region
  $region22: #{densenet_forward.34} parent=0 // pred_check
    _
  $region23: #{densenet_forward.34} parent=0 // pred_check_branch
    %22 = sbr.rel (0) target = $region25
  $region24: #{densenet_forward.34} parent=0 // pred_region
    _
  $region25: #{densenet_forward.34} parent=0 // pred_fallthru
    _
  %p24 = scmp.eq.s32.totalorder 0, 0
  // Predicated region
  $region26: #{densenet_forward.34} parent=0 // pred_check
    %p25 = pneg %p24
  $region27: #{densenet_forward.34} parent=0 // pred_check_branch
    %27 = sbr.rel (%p25) target = $region29
  $region28: #{densenet_forward.34} parent=0 // pred_region
    %28 = vst [vmem:[#allocation2] sm:$0xff] 0.0
    %29 = vst [vmem:[#allocation2 + $0x8] sm:$0xff] 0.0
    %30 = vst [vmem:[#allocation2 + $0x10] sm:$0xff] 0.0
    %31 = vst [vmem:[#allocation2 + $0x18] sm:$0xff] 0.0
  $region29: #{densenet_forward.34} parent=0 // pred_fallthru
    _
  %v32 = vld [vmem:[%s0] sm:$0xf]
  %v33 = vld [vmem:[%s0 + $0x4] sm:$0xf]
  %v34 = vld [vmem:[%s0 + $0x8] sm:$0xf]
  %v35 = vld [vmem:[%s0 + $0xc] sm:$0xf]
  %v36 = vunpack.c.l.bf16 %v32
  %v37 = vunpack.c.l.bf16 %v33
  %v38 = vunpack.c.l.bf16 %v34
  %v39 = vunpack.c.l.bf16 %v35
  %v40 = vld [vmem:[%s2] sm:$0x1]
  %v42 = vlaneseq
  %v43 = vshrl.u32 %v42, 7
  %v44 = vsub.s32 0, %v43
  %v45 = vrot.slane %v40, %v44
  %v47 = vmul.f32 %v36, %v45
  %v48 = vmul.f32 %v37, %v45
  %v49 = vmul.f32 %v38, %v45
  %v50 = vmul.f32 %v39, %v45
  %v51 = vld [vmem:[%s3] sm:$0x1]
  %v53 = vlaneseq
  %v54 = vshrl.u32 %v53, 7
  %v55 = vsub.s32 0, %v54
  %v56 = vrot.slane %v51, %v55
  %v58 = vadd.f32 %v47, %v56
  %v59 = vadd.f32 %v48, %v56
  %v60 = vadd.f32 %v49, %v56
  %v61 = vadd.f32 %v50, %v56
  %v62 = vmax.f32 %v58, 0.0
  %v63 = vmax.f32 %v59, 0.0
  %v64 = vmax.f32 %v60, 0.0
  %v65 = vmax.f32 %v61, 0.0
  %v66 = vpack.c.bf16 %v63, %v62
  %v67 = vpack.c.bf16 %v65, %v64
  %v68 = vld [vmem:[#allocation2] sm:$0xff]
  %v69 = vld [vmem:[#allocation2 + $0x8] sm:$0xff]
  %v70 = vld [vmem:[#allocation2 + $0x10] sm:$0xff]
  %v71 = vld [vmem:[#allocation2 + $0x18] sm:$0xff]
  %v72 = vld [vmem:[%s1] sm:$0xf]
  %v73 = vld [vmem:[%s1 + $0x4] sm:$0xf]
  %v74 = vld [vmem:[%s1 + $0x8] sm:$0xf]
  %v75 = vld [vmem:[%s1 + $0xc] sm:$0xf]
  %v76 = vld [vmem:[%s1 + $0x10] sm:$0xf]
  %v77 = vld [vmem:[%s1 + $0x14] sm:$0xf]
  %v78 = vld [vmem:[%s1 + $0x18] sm:$0xf]
  %v79 = vld [vmem:[%s1 + $0x1c] sm:$0xf]
  %v80 = vld [vmem:[%s1 + $0x20] sm:$0xf]
  %v81 = vld [vmem:[%s1 + $0x24] sm:$0xf]
  %v82 = vld [vmem:[%s1 + $0x28] sm:$0xf]
  %v83 = vld [vmem:[%s1 + $0x2c] sm:$0xf]
  %v84 = vld [vmem:[%s1 + $0x30] sm:$0xf]
  %v85 = vld [vmem:[%s1 + $0x34] sm:$0xf]
  %v86 = vld [vmem:[%s1 + $0x38] sm:$0xf]
  %v87 = vld [vmem:[%s1 + $0x3c] sm:$0xf]
  %v104 = vunpack.c.l.b16 %v72
  %v105 = vunpack.c.l.b16 %v73
  %v106 = vunpack.c.l.b16 %v74
  %v107 = vunpack.c.l.b16 %v75
  %v108 = vunpack.c.l.b16 %v76
  %v109 = vunpack.c.l.b16 %v77
  %v110 = vunpack.c.l.b16 %v78
  %v111 = vunpack.c.l.b16 %v79
  %v112 = vunpack.c.l.b16 %v80
  %v113 = vunpack.c.l.b16 %v81
  %v114 = vunpack.c.l.b16 %v82
  %v115 = vunpack.c.l.b16 %v83
  %v116 = vunpack.c.l.b16 %v84
  %v117 = vunpack.c.l.b16 %v85
  %v118 = vunpack.c.l.b16 %v86
  %v119 = vunpack.c.l.b16 %v87
  %v120 = vpack.c.b16 %v105, %v104
  %v121 = vpack.c.b16 %v107, %v106
  %v122 = vpack.c.b16 %v109, %v108
  %v123 = vpack.c.b16 %v111, %v110
  %v124 = vpack.c.b16 %v113, %v112
  %v125 = vpack.c.b16 %v115, %v114
  %v126 = vpack.c.b16 %v117, %v116
  %v127 = vpack.c.b16 %v119, %v118
  %136 = vmatprep.subr.bf16.mxu0 0
  %137 = vmatpush1.bf16.msra.mxu0 %v120
  %138 = vmatprep.subr.bf16.mxu0 0
  %139 = vmatpush1.bf16.msra.mxu0 %v121
  %140 = vmatprep.subr.bf16.mxu0 0
  %141 = vmatpush1.bf16.msra.mxu0 %v122
  %142 = vmatprep.subr.bf16.mxu0 0
  %143 = vmatpush1.bf16.msra.mxu0 %v123
  %144 = vmatprep.subr.bf16.mxu0 0
  %145 = vmatpush1.bf16.msra.mxu0 %v124
  %146 = vmatprep.subr.bf16.mxu0 0
  %147 = vmatpush1.bf16.msra.mxu0 %v125
  %148 = vmatprep.subr.bf16.mxu0 0
  %149 = vmatpush1.bf16.msra.mxu0 %v126
  %150 = vmatprep.subr.bf16.mxu0 0
  %151 = vmatpush1.bf16.msra.mxu0 %v127
  %152 = vmatprep.subr.bf16.mxu0 0
  %153 = vmatpush1.bf16.msra.mxu0 0
  %154 = vmatprep.subr.bf16.mxu0 0
  %155 = vmatpush1.bf16.msra.mxu0 0
  %156 = vmatprep.subr.bf16.mxu0 0
  %157 = vmatpush1.bf16.msra.mxu0 0
  %158 = vmatprep.subr.bf16.mxu0 0
  %159 = vmatpush1.bf16.msra.mxu0 0
  %160 = vmatprep.subr.bf16.mxu0 0
  %161 = vmatpush1.bf16.msra.mxu0 0
  %162 = vmatprep.subr.bf16.mxu0 0
  %163 = vmatpush1.bf16.msra.mxu0 0
  %164 = vmatprep.subr.bf16.mxu0 0
  %165 = vmatpush1.bf16.msra.mxu0 0
  %166 = vmatprep.subr.bf16.mxu0 0
  %167 = vmatpush1.bf16.msra.mxu0 0
  %168 = vmatprep.mubr.bf16.mxu0 0
  %169 = vmatmul.mubr.bf16.gmra.mrb[0].mxu0 %v66
  %v170 = vpop.f32.mrb[0].mxu0
  %v171 = vadd.f32 0.0, %v170
  %v172 = vpop.f32.mrb[0].mxu0
  %v173 = vpop.f32.mrb[0].mxu0
  %v174 = vadd.f32 0.0, %v173
  %v175 = vpop.f32.mrb[0].mxu0
  %176 = vmatprep.mubr.bf16.mxu0 0
  %177 = vmatmul.mubr.bf16.gmra.mrb[0].mxu0 %v67
  %v178 = vpop.f32.mrb[0].mxu0
  %v179 = vadd.f32 0.0, %v178
  %v180 = vpop.f32.mrb[0].mxu0
  %v181 = vpop.f32.mrb[0].mxu0
  %v182 = vadd.f32 0.0, %v181
  %v183 = vpop.f32.mrb[0].mxu0
  %184 = vdwg.mxu0
  %v185 = vadd.f32 %v68, %v171
  %v186 = vadd.f32 %v69, %v174
  %v187 = vadd.f32 %v70, %v179
  %v188 = vadd.f32 %v71, %v182
  %189 = vst [vmem:[#allocation2] sm:$0xff] %v185
  %190 = vst [vmem:[#allocation2 + $0x8] sm:$0xff] %v186
  %191 = vst [vmem:[#allocation2 + $0x10] sm:$0xff] %v187
  %192 = vst [vmem:[#allocation2 + $0x18] sm:$0xff] %v188
  // Predicated region
  $region30: #{densenet_forward.34} parent=0 // pred_check
    %p193 = pneg %p24
  $region31: #{densenet_forward.34} parent=0 // pred_check_branch
    %195 = sbr.rel (%p193) target = $region33
  $region32: #{densenet_forward.34} parent=0 // pred_region
    %v196 = vld [vmem:[#allocation2] sm:$0xff]
    %v197 = vld [vmem:[#allocation2 + $0x8] sm:$0xff]
    %v198 = vld [vmem:[#allocation2 + $0x10] sm:$0xff]
    %v199 = vld [vmem:[#allocation2 + $0x18] sm:$0xff]
    %v200 = vld [vmem:[%s4] sm:$0x1]
    %v202 = vlaneseq
    %v203 = vshrl.u32 %v202, 7
    %v204 = vsub.s32 0, %v203
    %v205 = vrot.slane %v200, %v204
    %v207 = vmul.f32 %v196, %v205
    %v208 = vmul.f32 %v197, %v205
    %v209 = vmul.f32 %v198, %v205
    %v210 = vmul.f32 %v199, %v205
    %v211 = vld [vmem:[%s5] sm:$0x1]
    %v213 = vlaneseq
    %v214 = vshrl.u32 %v213, 7
    %v215 = vsub.s32 0, %v214
    %v216 = vrot.slane %v211, %v215
    %v218 = vadd.f32 %v207, %v216
    %v219 = vadd.f32 %v208, %v216
    %v220 = vadd.f32 %v209, %v216
    %v221 = vadd.f32 %v210, %v216
    %v222 = vmax.f32 %v218, 0.0
    %v223 = vmax.f32 %v219, 0.0
    %v224 = vmax.f32 %v220, 0.0
    %v225 = vmax.f32 %v221, 0.0
    %v226 = vpack.c.bf16 %v223, %v222
    %v227 = vpack.c.bf16 %v225, %v224
    %v230 = vunpack.c.l.b16 %v226
    %v231 = vunpack.c.h.b16 %v226
    %v232 = vunpack.c.l.b16 %v227
    %v233 = vunpack.c.h.b16 %v227
    %v234 = vpack.c.b16 %v230, %v230
    %v235 = vpack.c.b16 %v231, %v231
    %v236 = vpack.c.b16 %v232, %v232
    %v237 = vpack.c.b16 %v233, %v233
    %242 = vst [vmem:[%s6] sm:$0xf] %v234
    %243 = vst [vmem:[%s6 + $0x4] sm:$0xf] %v235
    %244 = vst [vmem:[%s6 + $0x8] sm:$0xf] %v236
    %245 = vst [vmem:[%s6 + $0xc] sm:$0xf] %v237
  $region33: #{densenet_forward.34} parent=0 // pred_fallthru
    _
  // Predicated region
  $region34: #{densenet_forward.34} parent=0 // pred_check
    _
  $region35: #{densenet_forward.34} parent=0 // pred_check_branch
    %247 = sbr.rel (0) target = $region37
  $region36: #{densenet_forward.34} parent=0 // pred_region
    _
  $region37: #{densenet_forward.34} parent=0 // pred_fallthru
    _
  // Predicated region
  $region38: #{densenet_forward.34} parent=0 // pred_check
    _
  $region39: #{densenet_forward.34} parent=0 // pred_check_branch
    %249 = sbr.rel (0) target = $region41
  $region40: #{densenet_forward.34} parent=0 // pred_region
    _
  $region41: #{densenet_forward.34} parent=0 // pred_fallthru
    _

// kernel: densenet_forward.38
$region0: #{densenet_forward.38}
  #allocation0 [shape = 'u32[]', space=smem, size = 0x4, offset = 0x4, fixed_abs, tag = 'smem constant byte address 0x4 - core index']
  #allocation1 [shape = 'u32[144,128]{1,0:T(1,128)}', space=vmem, size = 0x12000, scoped, tag = 'internal scratch']
  #allocation2 [shape = 'f32[32,128]{1,0:T(8,128)}', space=vmem, size = 0x4000, scoped, tag = 'scratch operand']
  %s0 = inlined_call_operand.vmem [shape: bf16[32,128], index: 0, kind: input, shape index: {}]
  %s1 = inlined_call_operand.vmem [shape: bf16[128,128], index: 1, kind: input, shape index: {}]
  %s2 = inlined_call_operand.vmem [shape: f32[1,128], index: 2, kind: input, shape index: {}]
  %s3 = inlined_call_operand.vmem [shape: f32[1,128], index: 3, kind: input, shape index: {}]
  %s4 = inlined_call_operand.vmem [shape: bf16[32,128], index: 4, kind: output, shape index: {}]
  %s5 = sld [smem:[#allocation0]]
  $region34: #{densenet_forward.38} parent=0
    _
  %s7 = ssub.s32 1, %s5
  %s8 = scalar_select 0, %s7, %s5
  // Predicated region
  $region2: #{densenet_forward.38} parent=0 // pred_check
    _
  $region3: #{densenet_forward.38} parent=0 // pred_check_branch
    %10 = sbr.rel (0) target = $region5
  $region4: #{densenet_forward.38} parent=0 // pred_region
    _
  $region5: #{densenet_forward.38} parent=0 // pred_fallthru
    _
  // Predicated region
  $region6: #{densenet_forward.38} parent=0 // pred_check
    _
  $region7: #{densenet_forward.38} parent=0 // pred_check_branch
    %12 = sbr.rel (0) target = $region9
  $region8: #{densenet_forward.38} parent=0 // pred_region
    _
  $region9: #{densenet_forward.38} parent=0 // pred_fallthru
    _
  // Predicated region
  $region10: #{densenet_forward.38} parent=0 // pred_check
    _
  $region11: #{densenet_forward.38} parent=0 // pred_check_branch
    %14 = sbr.rel (0) target = $region13
  $region12: #{densenet_forward.38} parent=0 // pred_region
    _
  $region13: #{densenet_forward.38} parent=0 // pred_fallthru
    _
  // Predicated region
  $region14: #{densenet_forward.38} parent=0 // pred_check
    _
  $region15: #{densenet_forward.38} parent=0 // pred_check_branch
    %16 = sbr.rel (0) target = $region17
  $region16: #{densenet_forward.38} parent=0 // pred_region
    _
  $region17: #{densenet_forward.38} parent=0 // pred_fallthru
    _
  %p18 = scmp.eq.s32.totalorder 0, 0
  // Predicated region
  $region18: #{densenet_forward.38} parent=0 // pred_check
    %p19 = pneg %p18
  $region19: #{densenet_forward.38} parent=0 // pred_check_branch
    %21 = sbr.rel (%p19) target = $region21
  $region20: #{densenet_forward.38} parent=0 // pred_region
    %22 = vst [vmem:[#allocation2] sm:$0xff] 0.0
    %23 = vst [vmem:[#allocation2 + $0x8] sm:$0xff] 0.0
    %24 = vst [vmem:[#allocation2 + $0x10] sm:$0xff] 0.0
    %25 = vst [vmem:[#allocation2 + $0x18] sm:$0xff] 0.0
  $region21: #{densenet_forward.38} parent=0 // pred_fallthru
    _
  %v26 = vld [vmem:[%s0] sm:$0xf]
  %v27 = vld [vmem:[%s0 + $0x4] sm:$0xf]
  %v28 = vld [vmem:[%s0 + $0x8] sm:$0xf]
  %v29 = vld [vmem:[%s0 + $0xc] sm:$0xf]
  %v30 = vunpack.c.l.bf16 %v26
  %v31 = vunpack.c.l.bf16 %v27
  %v32 = vunpack.c.l.bf16 %v28
  %v33 = vunpack.c.l.bf16 %v29
  %v34 = vld [vmem:[%s2] sm:$0x1]
  %v36 = vlaneseq
  %v37 = vshrl.u32 %v36, 7
  %v38 = vsub.s32 0, %v37
  %v39 = vrot.slane %v34, %v38
  %v41 = vmul.f32 %v30, %v39
  %v42 = vmul.f32 %v31, %v39
  %v43 = vmul.f32 %v32, %v39
  %v44 = vmul.f32 %v33, %v39
  %v45 = vld [vmem:[%s3] sm:$0x1]
  %v47 = vlaneseq
  %v48 = vshrl.u32 %v47, 7
  %v49 = vsub.s32 0, %v48
  %v50 = vrot.slane %v45, %v49
  %v52 = vadd.f32 %v41, %v50
  %v53 = vadd.f32 %v42, %v50
  %v54 = vadd.f32 %v43, %v50
  %v55 = vadd.f32 %v44, %v50
  %v56 = vmax.f32 %v52, 0.0
  %v57 = vmax.f32 %v53, 0.0
  %v58 = vmax.f32 %v54, 0.0
  %v59 = vmax.f32 %v55, 0.0
  %v60 = vpack.c.bf16 %v57, %v56
  %v61 = vpack.c.bf16 %v59, %v58
  %v62 = vld [vmem:[#allocation2] sm:$0xff]
  %v63 = vld [vmem:[#allocation2 + $0x8] sm:$0xff]
  %v64 = vld [vmem:[#allocation2 + $0x10] sm:$0xff]
  %v65 = vld [vmem:[#allocation2 + $0x18] sm:$0xff]
  %v66 = vld [vmem:[%s1] sm:$0xf]
  %v67 = vld [vmem:[%s1 + $0x4] sm:$0xf]
  %v68 = vld [vmem:[%s1 + $0x8] sm:$0xf]
  %v69 = vld [vmem:[%s1 + $0xc] sm:$0xf]
  %v70 = vld [vmem:[%s1 + $0x10] sm:$0xf]
  %v71 = vld [vmem:[%s1 + $0x14] sm:$0xf]
  %v72 = vld [vmem:[%s1 + $0x18] sm:$0xf]
  %v73 = vld [vmem:[%s1 + $0x1c] sm:$0xf]
  %v74 = vld [vmem:[%s1 + $0x20] sm:$0xf]
  %v75 = vld [vmem:[%s1 + $0x24] sm:$0xf]
  %v76 = vld [vmem:[%s1 + $0x28] sm:$0xf]
  %v77 = vld [vmem:[%s1 + $0x2c] sm:$0xf]
  %v78 = vld [vmem:[%s1 + $0x30] sm:$0xf]
  %v79 = vld [vmem:[%s1 + $0x34] sm:$0xf]
  %v80 = vld [vmem:[%s1 + $0x38] sm:$0xf]
  %v81 = vld [vmem:[%s1 + $0x3c] sm:$0xf]
  %v98 = vunpack.c.l.b16 %v66
  %v99 = vunpack.c.l.b16 %v67
  %v100 = vunpack.c.l.b16 %v68
  %v101 = vunpack.c.l.b16 %v69
  %v102 = vunpack.c.l.b16 %v70
  %v103 = vunpack.c.l.b16 %v71
  %v104 = vunpack.c.l.b16 %v72
  %v105 = vunpack.c.l.b16 %v73
  %v106 = vunpack.c.l.b16 %v74
  %v107 = vunpack.c.l.b16 %v75
  %v108 = vunpack.c.l.b16 %v76
  %v109 = vunpack.c.l.b16 %v77
  %v110 = vunpack.c.l.b16 %v78
  %v111 = vunpack.c.l.b16 %v79
  %v112 = vunpack.c.l.b16 %v80
  %v113 = vunpack.c.l.b16 %v81
  %v114 = vpack.c.b16 %v99, %v98
  %v115 = vpack.c.b16 %v101, %v100
  %v116 = vpack.c.b16 %v103, %v102
  %v117 = vpack.c.b16 %v105, %v104
  %v118 = vpack.c.b16 %v107, %v106
  %v119 = vpack.c.b16 %v109, %v108
  %v120 = vpack.c.b16 %v111, %v110
  %v121 = vpack.c.b16 %v113, %v112
  %130 = vmatprep.subr.bf16.mxu0 0
  %131 = vmatpush1.bf16.msra.mxu0 %v114
  %132 = vmatprep.subr.bf16.mxu0 0
  %133 = vmatpush1.bf16.msra.mxu0 %v115
  %134 = vmatprep.subr.bf16.mxu0 0
  %135 = vmatpush1.bf16.msra.mxu0 %v116
  %136 = vmatprep.subr.bf16.mxu0 0
  %137 = vmatpush1.bf16.msra.mxu0 %v117
  %138 = vmatprep.subr.bf16.mxu0 0
  %139 = vmatpush1.bf16.msra.mxu0 %v118
  %140 = vmatprep.subr.bf16.mxu0 0
  %141 = vmatpush1.bf16.msra.mxu0 %v119
  %142 = vmatprep.subr.bf16.mxu0 0
  %143 = vmatpush1.bf16.msra.mxu0 %v120
  %144 = vmatprep.subr.bf16.mxu0 0
  %145 = vmatpush1.bf16.msra.mxu0 %v121
  %146 = vmatprep.subr.bf16.mxu0 0
  %147 = vmatpush1.bf16.msra.mxu0 0
  %148 = vmatprep.subr.bf16.mxu0 0
  %149 = vmatpush1.bf16.msra.mxu0 0
  %150 = vmatprep.subr.bf16.mxu0 0
  %151 = vmatpush1.bf16.msra.mxu0 0
  %152 = vmatprep.subr.bf16.mxu0 0
  %153 = vmatpush1.bf16.msra.mxu0 0
  %154 = vmatprep.subr.bf16.mxu0 0
  %155 = vmatpush1.bf16.msra.mxu0 0
  %156 = vmatprep.subr.bf16.mxu0 0
  %157 = vmatpush1.bf16.msra.mxu0 0
  %158 = vmatprep.subr.bf16.mxu0 0
  %159 = vmatpush1.bf16.msra.mxu0 0
  %160 = vmatprep.subr.bf16.mxu0 0
  %161 = vmatpush1.bf16.msra.mxu0 0
  %162 = vmatprep.mubr.bf16.mxu0 0
  %163 = vmatmul.mubr.bf16.gmra.mrb[0].mxu0 %v60
  %v164 = vpop.f32.mrb[0].mxu0
  %v165 = vadd.f32 0.0, %v164
  %v166 = vpop.f32.mrb[0].mxu0
  %v167 = vpop.f32.mrb[0].mxu0
  %v168 = vadd.f32 0.0, %v167
  %v169 = vpop.f32.mrb[0].mxu0
  %170 = vmatprep.mubr.bf16.mxu0 0
  %171 = vmatmul.mubr.bf16.gmra.mrb[0].mxu0 %v61
  %v172 = vpop.f32.mrb[0].mxu0
  %v173 = vadd.f32 0.0, %v172
  %v174 = vpop.f32.mrb[0].mxu0
  %v175 = vpop.f32.mrb[0].mxu0
  %v176 = vadd.f32 0.0, %v175
  %v177 = vpop.f32.mrb[0].mxu0
  %178 = vdwg.mxu0
  %v179 = vadd.f32 %v62, %v165
  %v180 = vadd.f32 %v63, %v168
  %v181 = vadd.f32 %v64, %v173
  %v182 = vadd.f32 %v65, %v176
  %183 = vst [vmem:[#allocation2] sm:$0xff] %v179
  %184 = vst [vmem:[#allocation2 + $0x8] sm:$0xff] %v180
  %185 = vst [vmem:[#allocation2 + $0x10] sm:$0xff] %v181
  %186 = vst [vmem:[#allocation2 + $0x18] sm:$0xff] %v182
  // Predicated region
  $region22: #{densenet_forward.38} parent=0 // pred_check
    %p187 = pneg %p18
  $region23: #{densenet_forward.38} parent=0 // pred_check_branch
    %189 = sbr.rel (%p187) target = $region25
  $region24: #{densenet_forward.38} parent=0 // pred_region
    %v190 = vld [vmem:[#allocation2] sm:$0xff]
    %v191 = vld [vmem:[#allocation2 + $0x8] sm:$0xff]
    %v192 = vld [vmem:[#allocation2 + $0x10] sm:$0xff]
    %v193 = vld [vmem:[#allocation2 + $0x18] sm:$0xff]
    %v194 = vpack.c.bf16 %v191, %v190
    %v195 = vpack.c.bf16 %v193, %v192
    %v198 = vunpack.c.l.b16 %v194
    %v199 = vunpack.c.h.b16 %v194
    %v200 = vunpack.c.l.b16 %v195
    %v201 = vunpack.c.h.b16 %v195
    %v202 = vpack.c.b16 %v198, %v198
    %v203 = vpack.c.b16 %v199, %v199
    %v204 = vpack.c.b16 %v200, %v200
    %v205 = vpack.c.b16 %v201, %v201
    %210 = vst [vmem:[%s4] sm:$0xf] %v202
    %211 = vst [vmem:[%s4 + $0x4] sm:$0xf] %v203
    %212 = vst [vmem:[%s4 + $0x8] sm:$0xf] %v204
    %213 = vst [vmem:[%s4 + $0xc] sm:$0xf] %v205
  $region25: #{densenet_forward.38} parent=0 // pred_fallthru
    _
  // Predicated region
  $region26: #{densenet_forward.38} parent=0 // pred_check
    _
  $region27: #{densenet_forward.38} parent=0 // pred_check_branch
    %215 = sbr.rel (0) target = $region29
  $region28: #{densenet_forward.38} parent=0 // pred_region
    _
  $region29: #{densenet_forward.38} parent=0 // pred_fallthru
    _
  // Predicated region
  $region30: #{densenet_forward.38} parent=0 // pred_check
    _
  $region31: #{densenet_forward.38} parent=0 // pred_check_branch
    %217 = sbr.rel (0) target = $region33
  $region32: #{densenet_forward.38} parent=0 // pred_region
    _
  $region33: #{densenet_forward.38} parent=0 // pred_fallthru
    _

// kernel: densenet_forward.35
$region0: #{densenet_forward.35}
  #allocation0 [shape = 'u32[]', space=smem, size = 0x4, offset = 0x4, fixed_abs, tag = 'smem constant byte address 0x4 - core index']
  #allocation1 [shape = 'u32[144,128]{1,0:T(1,128)}', space=vmem, size = 0x12000, scoped, tag = 'internal scratch']
  #allocation2 [shape = 'f32[32,128]{1,0:T(8,128)}', space=vmem, size = 0x4000, scoped, tag = 'scratch operand']
  %s0 = inlined_call_operand.vmem [shape: bf16[32,384], index: 0, kind: input, shape index: {}]
  %s1 = inlined_call_operand.vmem [shape: bf16[384,128], index: 1, kind: input, shape index: {}]
  %s2 = inlined_call_operand.vmem [shape: bf16[32,128], index: 2, kind: output, shape index: {}]
  %s3 = sld [smem:[#allocation0]]
  $region26: #{densenet_forward.35} parent=0
    _
  %s5 = ssub.s32 1, %s3
  %s6 = scalar_select 0, %s5, %s3
  // Predicated region
  $region2: #{densenet_forward.35} parent=0 // pred_check
    _
  $region3: #{densenet_forward.35} parent=0 // pred_check_branch
    %8 = sbr.rel (0) target = $region5
  $region4: #{densenet_forward.35} parent=0 // pred_region
    _
  $region5: #{densenet_forward.35} parent=0 // pred_fallthru
    _
  // Predicated region
  $region6: #{densenet_forward.35} parent=0 // pred_check
    _
  $region7: #{densenet_forward.35} parent=0 // pred_check_branch
    %10 = sbr.rel (0) target = $region9
  $region8: #{densenet_forward.35} parent=0 // pred_region
    _
  $region9: #{densenet_forward.35} parent=0 // pred_fallthru
    _
  %p12 = scmp.eq.s32.totalorder 0, 0
  // Predicated region
  $region10: #{densenet_forward.35} parent=0 // pred_check
    %p13 = pneg %p12
  $region11: #{densenet_forward.35} parent=0 // pred_check_branch
    %15 = sbr.rel (%p13) target = $region13
  $region12: #{densenet_forward.35} parent=0 // pred_region
    %16 = vst [vmem:[#allocation2] sm:$0xff] 0.0
    %17 = vst [vmem:[#allocation2 + $0x8] sm:$0xff] 0.0
    %18 = vst [vmem:[#allocation2 + $0x10] sm:$0xff] 0.0
    %19 = vst [vmem:[#allocation2 + $0x18] sm:$0xff] 0.0
  $region13: #{densenet_forward.35} parent=0 // pred_fallthru
    _
  %v20 = vld [vmem:[%s0] sm:$0xff]
  %v21 = vld [vmem:[%s0 + $0x8] sm:$0xf]
  %v22 = vld [vmem:[%s0 + $0xc] sm:$0xff]
  %v23 = vld [vmem:[%s0 + $0x14] sm:$0xf]
  %v24 = vld [vmem:[%s0 + $0x18] sm:$0xff]
  %v25 = vld [vmem:[%s0 + $0x20] sm:$0xf]
  %v26 = vld [vmem:[%s0 + $0x24] sm:$0xff]
  %v27 = vld [vmem:[%s0 + $0x2c] sm:$0xf]
  %v28 = vld [vmem:[#allocation2] sm:$0xff]
  %v29 = vld [vmem:[#allocation2 + $0x8] sm:$0xff]
  %v30 = vld [vmem:[#allocation2 + $0x10] sm:$0xff]
  %v31 = vld [vmem:[#allocation2 + $0x18] sm:$0xff]
  %v32 = vld [vmem:[%s1] sm:$0xf]
  %v33 = vld [vmem:[%s1 + $0x4] sm:$0xf]
  %v34 = vld [vmem:[%s1 + $0x8] sm:$0xf]
  %v35 = vld [vmem:[%s1 + $0xc] sm:$0xf]
  %v36 = vld [vmem:[%s1 + $0x10] sm:$0xf]
  %v37 = vld [vmem:[%s1 + $0x14] sm:$0xf]
  %v38 = vld [vmem:[%s1 + $0x18] sm:$0xf]
  %v39 = vld [vmem:[%s1 + $0x1c] sm:$0xf]
  %v40 = vld [vmem:[%s1 + $0x20] sm:$0xf]
  %v41 = vld [vmem:[%s1 + $0x24] sm:$0xf]
  %v42 = vld [vmem:[%s1 + $0x28] sm:$0xf]
  %v43 = vld [vmem:[%s1 + $0x2c] sm:$0xf]
  %v44 = vld [vmem:[%s1 + $0x30] sm:$0xf]
  %v45 = vld [vmem:[%s1 + $0x34] sm:$0xf]
  %v46 = vld [vmem:[%s1 + $0x38] sm:$0xf]
  %v47 = vld [vmem:[%s1 + $0x3c] sm:$0xf]
  %v48 = vld [vmem:[%s1 + $0x40] sm:$0xf]
  %v49 = vld [vmem:[%s1 + $0x44] sm:$0xf]
  %v50 = vld [vmem:[%s1 + $0x48] sm:$0xf]
  %v51 = vld [vmem:[%s1 + $0x4c] sm:$0xf]
  %v52 = vld [vmem:[%s1 + $0x50] sm:$0xf]
  %v53 = vld [vmem:[%s1 + $0x54] sm:$0xf]
  %v54 = vld [vmem:[%s1 + $0x58] sm:$0xf]
  %v55 = vld [vmem:[%s1 + $0x5c] sm:$0xf]
  %v56 = vld [vmem:[%s1 + $0x60] sm:$0xf]
  %v57 = vld [vmem:[%s1 + $0x64] sm:$0xf]
  %v58 = vld [vmem:[%s1 + $0x68] sm:$0xf]
  %v59 = vld [vmem:[%s1 + $0x6c] sm:$0xf]
  %v60 = vld [vmem:[%s1 + $0x70] sm:$0xf]
  %v61 = vld [vmem:[%s1 + $0x74] sm:$0xf]
  %v62 = vld [vmem:[%s1 + $0x78] sm:$0xf]
  %v63 = vld [vmem:[%s1 + $0x7c] sm:$0xf]
  %v64 = vld [vmem:[%s1 + $0x80] sm:$0xf]
  %v65 = vld [vmem:[%s1 + $0x84] sm:$0xf]
  %v66 = vld [vmem:[%s1 + $0x88] sm:$0xf]
  %v67 = vld [vmem:[%s1 + $0x8c] sm:$0xf]
  %v68 = vld [vmem:[%s1 + $0x90] sm:$0xf]
  %v69 = vld [vmem:[%s1 + $0x94] sm:$0xf]
  %v70 = vld [vmem:[%s1 + $0x98] sm:$0xf]
  %v71 = vld [vmem:[%s1 + $0x9c] sm:$0xf]
  %v72 = vld [vmem:[%s1 + $0xa0] sm:$0xf]
  %v73 = vld [vmem:[%s1 + $0xa4] sm:$0xf]
  %v74 = vld [vmem:[%s1 + $0xa8] sm:$0xf]
  %v75 = vld [vmem:[%s1 + $0xac] sm:$0xf]
  %v76 = vld [vmem:[%s1 + $0xb0] sm:$0xf]
  %v77 = vld [vmem:[%s1 + $0xb4] sm:$0xf]
  %v78 = vld [vmem:[%s1 + $0xb8] sm:$0xf]
  %v79 = vld [vmem:[%s1 + $0xbc] sm:$0xf]
  %v88 = vunpack.c.l.b16 %v20
  %v89 = vunpack.c.h.b16 %v20
  %v90 = vunpack.c.l.b16 %v21
  %v91 = vunpack.c.l.b16 %v22
  %v92 = vunpack.c.h.b16 %v22
  %v93 = vunpack.c.l.b16 %v23
  %v94 = vunpack.c.l.b16 %v24
  %v95 = vunpack.c.h.b16 %v24
  %v96 = vunpack.c.l.b16 %v25
  %v97 = vunpack.c.l.b16 %v26
  %v98 = vunpack.c.h.b16 %v26
  %v99 = vunpack.c.l.b16 %v27
  %v100 = vpack.c.b16 %v91, %v88
  %v101 = vpack.c.b16 %v92, %v89
  %v102 = vpack.c.b16 %v93, %v90
  %v103 = vpack.c.b16 %v97, %v94
  %v104 = vpack.c.b16 %v98, %v95
  %v105 = vpack.c.b16 %v99, %v96
  %v160 = vunpack.c.l.b16 %v32
  %v161 = vunpack.c.l.b16 %v33
  %v162 = vunpack.c.l.b16 %v34
  %v163 = vunpack.c.l.b16 %v35
  %v164 = vunpack.c.l.b16 %v36
  %v165 = vunpack.c.l.b16 %v37
  %v166 = vunpack.c.l.b16 %v38
  %v167 = vunpack.c.l.b16 %v39
  %v168 = vunpack.c.l.b16 %v40
  %v169 = vunpack.c.l.b16 %v41
  %v170 = vunpack.c.l.b16 %v42
  %v171 = vunpack.c.l.b16 %v43
  %v172 = vunpack.c.l.b16 %v44
  %v173 = vunpack.c.l.b16 %v45
  %v174 = vunpack.c.l.b16 %v46
  %v175 = vunpack.c.l.b16 %v47
  %v176 = vunpack.c.l.b16 %v48
  %v177 = vunpack.c.l.b16 %v49
  %v178 = vunpack.c.l.b16 %v50
  %v179 = vunpack.c.l.b16 %v51
  %v180 = vunpack.c.l.b16 %v52
  %v181 = vunpack.c.l.b16 %v53
  %v182 = vunpack.c.l.b16 %v54
  %v183 = vunpack.c.l.b16 %v55
  %v184 = vunpack.c.l.b16 %v56
  %v185 = vunpack.c.l.b16 %v57
  %v186 = vunpack.c.l.b16 %v58
  %v187 = vunpack.c.l.b16 %v59
  %v188 = vunpack.c.l.b16 %v60
  %v189 = vunpack.c.l.b16 %v61
  %v190 = vunpack.c.l.b16 %v62
  %v191 = vunpack.c.l.b16 %v63
  %v192 = vunpack.c.l.b16 %v64
  %v193 = vunpack.c.l.b16 %v65
  %v194 = vunpack.c.l.b16 %v66
  %v195 = vunpack.c.l.b16 %v67
  %v196 = vunpack.c.l.b16 %v68
  %v197 = vunpack.c.l.b16 %v69
  %v198 = vunpack.c.l.b16 %v70
  %v199 = vunpack.c.l.b16 %v71
  %v200 = vunpack.c.l.b16 %v72
  %v201 = vunpack.c.l.b16 %v73
  %v202 = vunpack.c.l.b16 %v74
  %v203 = vunpack.c.l.b16 %v75
  %v204 = vunpack.c.l.b16 %v76
  %v205 = vunpack.c.l.b16 %v77
  %v206 = vunpack.c.l.b16 %v78
  %v207 = vunpack.c.l.b16 %v79
  %v208 = vpack.c.b16 %v161, %v160
  %v209 = vpack.c.b16 %v163, %v162
  %v210 = vpack.c.b16 %v165, %v164
  %v211 = vpack.c.b16 %v167, %v166
  %v212 = vpack.c.b16 %v169, %v168
  %v213 = vpack.c.b16 %v171, %v170
  %v214 = vpack.c.b16 %v173, %v172
  %v215 = vpack.c.b16 %v175, %v174
  %v216 = vpack.c.b16 %v177, %v176
  %v217 = vpack.c.b16 %v179, %v178
  %v218 = vpack.c.b16 %v181, %v180
  %v219 = vpack.c.b16 %v183, %v182
  %v220 = vpack.c.b16 %v185, %v184
  %v221 = vpack.c.b16 %v187, %v186
  %v222 = vpack.c.b16 %v189, %v188
  %v223 = vpack.c.b16 %v191, %v190
  %v224 = vpack.c.b16 %v193, %v192
  %v225 = vpack.c.b16 %v195, %v194
  %v226 = vpack.c.b16 %v197, %v196
  %v227 = vpack.c.b16 %v199, %v198
  %v228 = vpack.c.b16 %v201, %v200
  %v229 = vpack.c.b16 %v203, %v202
  %v230 = vpack.c.b16 %v205, %v204
  %v231 = vpack.c.b16 %v207, %v206
  %256 = vmatprep.subr.bf16.mxu0 0
  %257 = vmatpush1.bf16.msra.mxu0 %v208
  %258 = vmatprep.subr.bf16.mxu0 0
  %259 = vmatpush1.bf16.msra.mxu0 %v209
  %260 = vmatprep.subr.bf16.mxu0 0
  %261 = vmatpush1.bf16.msra.mxu0 %v210
  %262 = vmatprep.subr.bf16.mxu0 0
  %263 = vmatpush1.bf16.msra.mxu0 %v211
  %264 = vmatprep.subr.bf16.mxu0 0
  %265 = vmatpush1.bf16.msra.mxu0 %v212
  %266 = vmatprep.subr.bf16.mxu0 0
  %267 = vmatpush1.bf16.msra.mxu0 %v213
  %268 = vmatprep.subr.bf16.mxu0 0
  %269 = vmatpush1.bf16.msra.mxu0 %v214
  %270 = vmatprep.subr.bf16.mxu0 0
  %271 = vmatpush1.bf16.msra.mxu0 %v215
  %272 = vmatprep.subr.bf16.mxu0 0
  %273 = vmatpush1.bf16.msra.mxu0 %v216
  %274 = vmatprep.subr.bf16.mxu0 0
  %275 = vmatpush1.bf16.msra.mxu0 %v217
  %276 = vmatprep.subr.bf16.mxu0 0
  %277 = vmatpush1.bf16.msra.mxu0 %v218
  %278 = vmatprep.subr.bf16.mxu0 0
  %279 = vmatpush1.bf16.msra.mxu0 %v219
  %280 = vmatprep.subr.bf16.mxu0 0
  %281 = vmatpush1.bf16.msra.mxu0 %v220
  %282 = vmatprep.subr.bf16.mxu0 0
  %283 = vmatpush1.bf16.msra.mxu0 %v221
  %284 = vmatprep.subr.bf16.mxu0 0
  %285 = vmatpush1.bf16.msra.mxu0 %v222
  %286 = vmatprep.subr.bf16.mxu0 0
  %287 = vmatpush1.bf16.msra.mxu0 %v223
  %288 = vmatprep.mubr.bf16.mxu0 %v101
  %289 = vmatmul.mubr.bf16.gmra.mrb[0].mxu0 %v100
  %v290 = vpop.f32.mrb[0].mxu0
  %v291 = vadd.f32 0.0, %v290
  %v292 = vpop.f32.mrb[0].mxu0
  %v293 = vpop.f32.mrb[0].mxu0
  %v294 = vadd.f32 0.0, %v293
  %v295 = vpop.f32.mrb[0].mxu0
  %296 = vmatprep.mubr.bf16.mxu0 %v104
  %297 = vmatmul.mubr.bf16.gmra.mrb[0].mxu0 %v103
  %v298 = vpop.f32.mrb[0].mxu0
  %v299 = vadd.f32 0.0, %v298
  %v300 = vpop.f32.mrb[0].mxu0
  %v301 = vpop.f32.mrb[0].mxu0
  %v302 = vadd.f32 0.0, %v301
  %v303 = vpop.f32.mrb[0].mxu0
  %304 = vdwg.mxu0
  %305 = vmatprep.subr.bf16.mxu0 0
  %306 = vmatpush1.bf16.msra.mxu0 %v224
  %307 = vmatprep.subr.bf16.mxu0 0
  %308 = vmatpush1.bf16.msra.mxu0 %v225
  %309 = vmatprep.subr.bf16.mxu0 0
  %310 = vmatpush1.bf16.msra.mxu0 %v226
  %311 = vmatprep.subr.bf16.mxu0 0
  %312 = vmatpush1.bf16.msra.mxu0 %v227
  %313 = vmatprep.subr.bf16.mxu0 0
  %314 = vmatpush1.bf16.msra.mxu0 %v228
  %315 = vmatprep.subr.bf16.mxu0 0
  %316 = vmatpush1.bf16.msra.mxu0 %v229
  %317 = vmatprep.subr.bf16.mxu0 0
  %318 = vmatpush1.bf16.msra.mxu0 %v230
  %319 = vmatprep.subr.bf16.mxu0 0
  %320 = vmatpush1.bf16.msra.mxu0 %v231
  %321 = vmatprep.subr.bf16.mxu0 0
  %322 = vmatpush1.bf16.msra.mxu0 0
  %323 = vmatprep.subr.bf16.mxu0 0
  %324 = vmatpush1.bf16.msra.mxu0 0
  %325 = vmatprep.subr.bf16.mxu0 0
  %326 = vmatpush1.bf16.msra.mxu0 0
  %327 = vmatprep.subr.bf16.mxu0 0
  %328 = vmatpush1.bf16.msra.mxu0 0
  %329 = vmatprep.subr.bf16.mxu0 0
  %330 = vmatpush1.bf16.msra.mxu0 0
  %331 = vmatprep.subr.bf16.mxu0 0
  %332 = vmatpush1.bf16.msra.mxu0 0
  %333 = vmatprep.subr.bf16.mxu0 0
  %334 = vmatpush1.bf16.msra.mxu0 0
  %335 = vmatprep.subr.bf16.mxu0 0
  %336 = vmatpush1.bf16.msra.mxu0 0
  %337 = vmatprep.mubr.bf16.mxu0 0
  %338 = vmatmul.mubr.bf16.gmra.mrb[0].mxu0 %v102
  %v339 = vpop.f32.mrb[0].mxu0
  %v340 = vadd.f32 %v291, %v339
  %v341 = vpop.f32.mrb[0].mxu0
  %v342 = vpop.f32.mrb[0].mxu0
  %v343 = vadd.f32 %v294, %v342
  %v344 = vpop.f32.mrb[0].mxu0
  %345 = vmatprep.mubr.bf16.mxu0 0
  %346 = vmatmul.mubr.bf16.gmra.mrb[0].mxu0 %v105
  %v347 = vpop.f32.mrb[0].mxu0
  %v348 = vadd.f32 %v299, %v347
  %v349 = vpop.f32.mrb[0].mxu0
  %v350 = vpop.f32.mrb[0].mxu0
  %v351 = vadd.f32 %v302, %v350
  %v352 = vpop.f32.mrb[0].mxu0
  %353 = vdwg.mxu0
  %v354 = vadd.f32 %v28, %v340
  %v355 = vadd.f32 %v29, %v343
  %v356 = vadd.f32 %v30, %v348
  %v357 = vadd.f32 %v31, %v351
  %358 = vst [vmem:[#allocation2] sm:$0xff] %v354
  %359 = vst [vmem:[#allocation2 + $0x8] sm:$0xff] %v355
  %360 = vst [vmem:[#allocation2 + $0x10] sm:$0xff] %v356
  %361 = vst [vmem:[#allocation2 + $0x18] sm:$0xff] %v357
  // Predicated region
  $region14: #{densenet_forward.35} parent=0 // pred_check
    %p362 = pneg %p12
  $region15: #{densenet_forward.35} parent=0 // pred_check_branch
    %364 = sbr.rel (%p362) target = $region17
  $region16: #{densenet_forward.35} parent=0 // pred_region
    %v365 = vld [vmem:[#allocation2] sm:$0xff]
    %v366 = vld [vmem:[#allocation2 + $0x8] sm:$0xff]
    %v367 = vld [vmem:[#allocation2 + $0x10] sm:$0xff]
    %v368 = vld [vmem:[#allocation2 + $0x18] sm:$0xff]
    %v369 = vpack.c.bf16 %v366, %v365
    %v370 = vpack.c.bf16 %v368, %v367
    %v373 = vunpack.c.l.b16 %v369
    %v374 = vunpack.c.h.b16 %v369
    %v375 = vunpack.c.l.b16 %v370
    %v376 = vunpack.c.h.b16 %v370
    %v377 = vpack.c.b16 %v373, %v373
    %v378 = vpack.c.b16 %v374, %v374
    %v379 = vpack.c.b16 %v375, %v375
    %v380 = vpack.c.b16 %v376, %v376
    %385 = vst [vmem:[%s2] sm:$0xf] %v377
    %386 = vst [vmem:[%s2 + $0x4] sm:$0xf] %v378
    %387 = vst [vmem:[%s2 + $0x8] sm:$0xf] %v379
    %388 = vst [vmem:[%s2 + $0xc] sm:$0xf] %v380
  $region17: #{densenet_forward.35} parent=0 // pred_fallthru
    _
  // Predicated region
  $region18: #{densenet_forward.35} parent=0 // pred_check
    _
  $region19: #{densenet_forward.35} parent=0 // pred_check_branch
    %390 = sbr.rel (0) target = $region21
  $region20: #{densenet_forward.35} parent=0 // pred_region
    _
  $region21: #{densenet_forward.35} parent=0 // pred_fallthru
    _
  // Predicated region
  $region22: #{densenet_forward.35} parent=0 // pred_check
    _
  $region23: #{densenet_forward.35} parent=0 // pred_check_branch
    %392 = sbr.rel (0) target = $region25
  $region24: #{densenet_forward.35} parent=0 // pred_region
    _
  $region25: #{densenet_forward.35} parent=0 // pred_fallthru
    _

// kernel: densenet_forward.39
$region0: #{densenet_forward.39}
  #allocation0 [shape = 'u32[]', space=smem, size = 0x4, offset = 0x4, fixed_abs, tag = 'smem constant byte address 0x4 - core index']
  #allocation1 [shape = 'u32[144,128]{1,0:T(1,128)}', space=vmem, size = 0x12000, scoped, tag = 'internal scratch']
  %s0 = inlined_call_operand.vmem [shape: bf16[4,16,128], index: 0, kind: input, shape index: {}]
  %s1 = inlined_call_operand.vmem [shape: bf16[16,128], index: 1, kind: output, shape index: {}]
  %s2 = sld [smem:[#allocation0]]
  $region14: #{densenet_forward.39} parent=0
    _
  %s4 = ssub.s32 1, %s2
  %s5 = scalar_select 0, %s4, %s2
  // Predicated region
  $region2: #{densenet_forward.39} parent=0 // pred_check
    _
  $region3: #{densenet_forward.39} parent=0 // pred_check_branch
    %7 = sbr.rel (0) target = $region5
  $region4: #{densenet_forward.39} parent=0 // pred_region
    _
  $region5: #{densenet_forward.39} parent=0 // pred_fallthru
    _
  %v8 = vld [vmem:[%s0] sm:$0xf]
  %v9 = vld [vmem:[%s0 + $0x4] sm:$0xf]
  %v10 = vld [vmem:[%s0 + $0x8] sm:$0xf]
  %v11 = vld [vmem:[%s0 + $0xc] sm:$0xf]
  %v12 = vld [vmem:[%s0 + $0x10] sm:$0xf]
  %v13 = vld [vmem:[%s0 + $0x14] sm:$0xf]
  %v14 = vld [vmem:[%s0 + $0x18] sm:$0xf]
  %v15 = vld [vmem:[%s0 + $0x1c] sm:$0xf]
  %v16 = vunpack.c.l.bf16 %v8
  %v17 = vunpack.c.l.bf16 %v9
  %v18 = vunpack.c.l.bf16 %v10
  %v19 = vunpack.c.l.bf16 %v11
  %v20 = vunpack.c.l.bf16 %v12
  %v21 = vunpack.c.l.bf16 %v13
  %v22 = vunpack.c.l.bf16 %v14
  %v23 = vunpack.c.l.bf16 %v15
  %v24 = vadd.f32 %v16, %v18
  %v25 = vadd.f32 %v24, %v20
  %v26 = vadd.f32 %v25, %v22
  %v27 = vadd.f32 %v17, %v19
  %v28 = vadd.f32 %v27, %v21
  %v29 = vadd.f32 %v28, %v23
  %v30 = vrcp.pop 4.0
  %v31 = vmul.f32 %v26, %v30
  %v32 = vmul.f32 %v29, %v30
  %v33 = vpack.c.bf16 %v32, %v31
  %v35 = vunpack.c.l.b16 %v33
  %v36 = vunpack.c.h.b16 %v33
  %v37 = vpack.c.b16 %v35, %v35
  %v38 = vpack.c.b16 %v36, %v36
  %41 = vst [vmem:[%s1] sm:$0xf] %v37
  %42 = vst [vmem:[%s1 + $0x4] sm:$0xf] %v38
  // Predicated region
  $region6: #{densenet_forward.39} parent=0 // pred_check
    _
  $region7: #{densenet_forward.39} parent=0 // pred_check_branch
    %44 = sbr.rel (0) target = $region9
  $region8: #{densenet_forward.39} parent=0 // pred_region
    _
  $region9: #{densenet_forward.39} parent=0 // pred_fallthru
    _
  // Predicated region
  $region10: #{densenet_forward.39} parent=0 // pred_check
    _
  $region11: #{densenet_forward.39} parent=0 // pred_check_branch
    %46 = sbr.rel (0) target = $region13
  $region12: #{densenet_forward.39} parent=0 // pred_region
    _
  $region13: #{densenet_forward.39} parent=0 // pred_fallthru
    _

// kernel: densenet_forward.40
$region0: #{densenet_forward.40}
  #allocation0 [shape = 'u32[]', space=smem, size = 0x4, offset = 0x4, fixed_abs, tag = 'smem constant byte address 0x4 - core index']
  #allocation1 [shape = 'u32[144,128]{1,0:T(1,128)}', space=vmem, size = 0x12000, scoped, tag = 'internal scratch']
  #allocation2 [shape = 'f32[16,128]{1,0:T(8,128)}', space=vmem, size = 0x2000, scoped, tag = 'scratch operand']
  %s0 = inlined_call_operand.vmem [shape: bf16[16,128], index: 0, kind: input, shape index: {}]
  %s1 = inlined_call_operand.vmem [shape: bf16[128,128], index: 1, kind: input, shape index: {}]
  %s2 = inlined_call_operand.vmem [shape: f32[1,128], index: 2, kind: input, shape index: {}]
  %s3 = inlined_call_operand.vmem [shape: f32[1,128], index: 3, kind: input, shape index: {}]
  %s4 = inlined_call_operand.vmem [shape: f32[1,128], index: 4, kind: input, shape index: {}]
  %s5 = inlined_call_operand.vmem [shape: f32[1,128], index: 5, kind: input, shape index: {}]
  %s6 = inlined_call_operand.vmem [shape: bf16[16,128], index: 6, kind: output, shape index: {}]
  %s7 = sld [smem:[#allocation0]]
  $region42: #{densenet_forward.40} parent=0
    _
  %s9 = ssub.s32 1, %s7
  %s10 = scalar_select 0, %s9, %s7
  // Predicated region
  $region2: #{densenet_forward.40} parent=0 // pred_check
    _
  $region3: #{densenet_forward.40} parent=0 // pred_check_branch
    %12 = sbr.rel (0) target = $region5
  $region4: #{densenet_forward.40} parent=0 // pred_region
    _
  $region5: #{densenet_forward.40} parent=0 // pred_fallthru
    _
  // Predicated region
  $region6: #{densenet_forward.40} parent=0 // pred_check
    _
  $region7: #{densenet_forward.40} parent=0 // pred_check_branch
    %14 = sbr.rel (0) target = $region9
  $region8: #{densenet_forward.40} parent=0 // pred_region
    _
  $region9: #{densenet_forward.40} parent=0 // pred_fallthru
    _
  // Predicated region
  $region10: #{densenet_forward.40} parent=0 // pred_check
    _
  $region11: #{densenet_forward.40} parent=0 // pred_check_branch
    %16 = sbr.rel (0) target = $region13
  $region12: #{densenet_forward.40} parent=0 // pred_region
    _
  $region13: #{densenet_forward.40} parent=0 // pred_fallthru
    _
  // Predicated region
  $region14: #{densenet_forward.40} parent=0 // pred_check
    _
  $region15: #{densenet_forward.40} parent=0 // pred_check_branch
    %18 = sbr.rel (0) target = $region17
  $region16: #{densenet_forward.40} parent=0 // pred_region
    _
  $region17: #{densenet_forward.40} parent=0 // pred_fallthru
    _
  // Predicated region
  $region18: #{densenet_forward.40} parent=0 // pred_check
    _
  $region19: #{densenet_forward.40} parent=0 // pred_check_branch
    %20 = sbr.rel (0) target = $region21
  $region20: #{densenet_forward.40} parent=0 // pred_region
    _
  $region21: #{densenet_forward.40} parent=0 // pred_fallthru
    _
  // Predicated region
  $region22: #{densenet_forward.40} parent=0 // pred_check
    _
  $region23: #{densenet_forward.40} parent=0 // pred_check_branch
    %22 = sbr.rel (0) target = $region25
  $region24: #{densenet_forward.40} parent=0 // pred_region
    _
  $region25: #{densenet_forward.40} parent=0 // pred_fallthru
    _
  %p24 = scmp.eq.s32.totalorder 0, 0
  // Predicated region
  $region26: #{densenet_forward.40} parent=0 // pred_check
    %p25 = pneg %p24
  $region27: #{densenet_forward.40} parent=0 // pred_check_branch
    %27 = sbr.rel (%p25) target = $region29
  $region28: #{densenet_forward.40} parent=0 // pred_region
    %28 = vst [vmem:[#allocation2] sm:$0xff] 0.0
    %29 = vst [vmem:[#allocation2 + $0x8] sm:$0xff] 0.0
  $region29: #{densenet_forward.40} parent=0 // pred_fallthru
    _
  %v30 = vld [vmem:[%s0] sm:$0xf]
  %v31 = vld [vmem:[%s0 + $0x4] sm:$0xf]
  %v32 = vunpack.c.l.bf16 %v30
  %v33 = vunpack.c.l.bf16 %v31
  %v34 = vld [vmem:[%s2] sm:$0x1]
  %v36 = vlaneseq
  %v37 = vshrl.u32 %v36, 7
  %v38 = vsub.s32 0, %v37
  %v39 = vrot.slane %v34, %v38
  %v41 = vmul.f32 %v32, %v39
  %v42 = vmul.f32 %v33, %v39
  %v43 = vld [vmem:[%s3] sm:$0x1]
  %v45 = vlaneseq
  %v46 = vshrl.u32 %v45, 7
  %v47 = vsub.s32 0, %v46
  %v48 = vrot.slane %v43, %v47
  %v50 = vadd.f32 %v41, %v48
  %v51 = vadd.f32 %v42, %v48
  %v52 = vmax.f32 %v50, 0.0
  %v53 = vmax.f32 %v51, 0.0
  %v54 = vpack.c.bf16 %v53, %v52
  %v55 = vld [vmem:[#allocation2] sm:$0xff]
  %v56 = vld [vmem:[#allocation2 + $0x8] sm:$0xff]
  %v57 = vld [vmem:[%s1] sm:$0xf]
  %v58 = vld [vmem:[%s1 + $0x4] sm:$0xf]
  %v59 = vld [vmem:[%s1 + $0x8] sm:$0xf]
  %v60 = vld [vmem:[%s1 + $0xc] sm:$0xf]
  %v61 = vld [vmem:[%s1 + $0x10] sm:$0xf]
  %v62 = vld [vmem:[%s1 + $0x14] sm:$0xf]
  %v63 = vld [vmem:[%s1 + $0x18] sm:$0xf]
  %v64 = vld [vmem:[%s1 + $0x1c] sm:$0xf]
  %v65 = vld [vmem:[%s1 + $0x20] sm:$0xf]
  %v66 = vld [vmem:[%s1 + $0x24] sm:$0xf]
  %v67 = vld [vmem:[%s1 + $0x28] sm:$0xf]
  %v68 = vld [vmem:[%s1 + $0x2c] sm:$0xf]
  %v69 = vld [vmem:[%s1 + $0x30] sm:$0xf]
  %v70 = vld [vmem:[%s1 + $0x34] sm:$0xf]
  %v71 = vld [vmem:[%s1 + $0x38] sm:$0xf]
  %v72 = vld [vmem:[%s1 + $0x3c] sm:$0xf]
  %v89 = vunpack.c.l.b16 %v57
  %v90 = vunpack.c.l.b16 %v58
  %v91 = vunpack.c.l.b16 %v59
  %v92 = vunpack.c.l.b16 %v60
  %v93 = vunpack.c.l.b16 %v61
  %v94 = vunpack.c.l.b16 %v62
  %v95 = vunpack.c.l.b16 %v63
  %v96 = vunpack.c.l.b16 %v64
  %v97 = vunpack.c.l.b16 %v65
  %v98 = vunpack.c.l.b16 %v66
  %v99 = vunpack.c.l.b16 %v67
  %v100 = vunpack.c.l.b16 %v68
  %v101 = vunpack.c.l.b16 %v69
  %v102 = vunpack.c.l.b16 %v70
  %v103 = vunpack.c.l.b16 %v71
  %v104 = vunpack.c.l.b16 %v72
  %v105 = vpack.c.b16 %v90, %v89
  %v106 = vpack.c.b16 %v92, %v91
  %v107 = vpack.c.b16 %v94, %v93
  %v108 = vpack.c.b16 %v96, %v95
  %v109 = vpack.c.b16 %v98, %v97
  %v110 = vpack.c.b16 %v100, %v99
  %v111 = vpack.c.b16 %v102, %v101
  %v112 = vpack.c.b16 %v104, %v103
  %121 = vmatprep.subr.bf16.mxu0 0
  %122 = vmatpush1.bf16.msra.mxu0 %v105
  %123 = vmatprep.subr.bf16.mxu0 0
  %124 = vmatpush1.bf16.msra.mxu0 %v106
  %125 = vmatprep.subr.bf16.mxu0 0
  %126 = vmatpush1.bf16.msra.mxu0 %v107
  %127 = vmatprep.subr.bf16.mxu0 0
  %128 = vmatpush1.bf16.msra.mxu0 %v108
  %129 = vmatprep.subr.bf16.mxu0 0
  %130 = vmatpush1.bf16.msra.mxu0 %v109
  %131 = vmatprep.subr.bf16.mxu0 0
  %132 = vmatpush1.bf16.msra.mxu0 %v110
  %133 = vmatprep.subr.bf16.mxu0 0
  %134 = vmatpush1.bf16.msra.mxu0 %v111
  %135 = vmatprep.subr.bf16.mxu0 0
  %136 = vmatpush1.bf16.msra.mxu0 %v112
  %137 = vmatprep.subr.bf16.mxu0 0
  %138 = vmatpush1.bf16.msra.mxu0 0
  %139 = vmatprep.subr.bf16.mxu0 0
  %140 = vmatpush1.bf16.msra.mxu0 0
  %141 = vmatprep.subr.bf16.mxu0 0
  %142 = vmatpush1.bf16.msra.mxu0 0
  %143 = vmatprep.subr.bf16.mxu0 0
  %144 = vmatpush1.bf16.msra.mxu0 0
  %145 = vmatprep.subr.bf16.mxu0 0
  %146 = vmatpush1.bf16.msra.mxu0 0
  %147 = vmatprep.subr.bf16.mxu0 0
  %148 = vmatpush1.bf16.msra.mxu0 0
  %149 = vmatprep.subr.bf16.mxu0 0
  %150 = vmatpush1.bf16.msra.mxu0 0
  %151 = vmatprep.subr.bf16.mxu0 0
  %152 = vmatpush1.bf16.msra.mxu0 0
  %153 = vmatprep.mubr.bf16.mxu0 0
  %154 = vmatmul.mubr.bf16.gmra.mrb[0].mxu0 %v54
  %v155 = vpop.f32.mrb[0].mxu0
  %v156 = vadd.f32 0.0, %v155
  %v157 = vpop.f32.mrb[0].mxu0
  %v158 = vpop.f32.mrb[0].mxu0
  %v159 = vadd.f32 0.0, %v158
  %v160 = vpop.f32.mrb[0].mxu0
  %161 = vdwg.mxu0
  %v162 = vadd.f32 %v55, %v156
  %v163 = vadd.f32 %v56, %v159
  %164 = vst [vmem:[#allocation2] sm:$0xff] %v162
  %165 = vst [vmem:[#allocation2 + $0x8] sm:$0xff] %v163
  // Predicated region
  $region30: #{densenet_forward.40} parent=0 // pred_check
    %p166 = pneg %p24
  $region31: #{densenet_forward.40} parent=0 // pred_check_branch
    %168 = sbr.rel (%p166) target = $region33
  $region32: #{densenet_forward.40} parent=0 // pred_region
    %v169 = vld [vmem:[#allocation2] sm:$0xff]
    %v170 = vld [vmem:[#allocation2 + $0x8] sm:$0xff]
    %v171 = vld [vmem:[%s4] sm:$0x1]
    %v173 = vlaneseq
    %v174 = vshrl.u32 %v173, 7
    %v175 = vsub.s32 0, %v174
    %v176 = vrot.slane %v171, %v175
    %v178 = vmul.f32 %v169, %v176
    %v179 = vmul.f32 %v170, %v176
    %v180 = vld [vmem:[%s5] sm:$0x1]
    %v182 = vlaneseq
    %v183 = vshrl.u32 %v182, 7
    %v184 = vsub.s32 0, %v183
    %v185 = vrot.slane %v180, %v184
    %v187 = vadd.f32 %v178, %v185
    %v188 = vadd.f32 %v179, %v185
    %v189 = vmax.f32 %v187, 0.0
    %v190 = vmax.f32 %v188, 0.0
    %v191 = vpack.c.bf16 %v190, %v189
    %v193 = vunpack.c.l.b16 %v191
    %v194 = vunpack.c.h.b16 %v191
    %v195 = vpack.c.b16 %v193, %v193
    %v196 = vpack.c.b16 %v194, %v194
    %199 = vst [vmem:[%s6] sm:$0xf] %v195
    %200 = vst [vmem:[%s6 + $0x4] sm:$0xf] %v196
  $region33: #{densenet_forward.40} parent=0 // pred_fallthru
    _
  // Predicated region
  $region34: #{densenet_forward.40} parent=0 // pred_check
    _
  $region35: #{densenet_forward.40} parent=0 // pred_check_branch
    %202 = sbr.rel (0) target = $region37
  $region36: #{densenet_forward.40} parent=0 // pred_region
    _
  $region37: #{densenet_forward.40} parent=0 // pred_fallthru
    _
  // Predicated region
  $region38: #{densenet_forward.40} parent=0 // pred_check
    _
  $region39: #{densenet_forward.40} parent=0 // pred_check_branch
    %204 = sbr.rel (0) target = $region41
  $region40: #{densenet_forward.40} parent=0 // pred_region
    _
  $region41: #{densenet_forward.40} parent=0 // pred_fallthru
    _

// kernel: densenet_forward.41
$region0: #{densenet_forward.41}
  #allocation0 [shape = 'u32[]', space=smem, size = 0x4, offset = 0x4, fixed_abs, tag = 'smem constant byte address 0x4 - core index']
  #allocation1 [shape = 'u32[144,128]{1,0:T(1,128)}', space=vmem, size = 0x12000, scoped, tag = 'internal scratch']
  #allocation2 [shape = 'f32[16,128]{1,0:T(8,128)}', space=vmem, size = 0x2000, scoped, tag = 'scratch operand']
  %s0 = inlined_call_operand.vmem [shape: bf16[16,384], index: 0, kind: input, shape index: {}]
  %s1 = inlined_call_operand.vmem [shape: bf16[384,128], index: 1, kind: input, shape index: {}]
  %s2 = inlined_call_operand.vmem [shape: bf16[16,128], index: 2, kind: output, shape index: {}]
  %s3 = sld [smem:[#allocation0]]
  $region26: #{densenet_forward.41} parent=0
    _
  %s5 = ssub.s32 1, %s3
  %s6 = scalar_select 0, %s5, %s3
  // Predicated region
  $region2: #{densenet_forward.41} parent=0 // pred_check
    _
  $region3: #{densenet_forward.41} parent=0 // pred_check_branch
    %8 = sbr.rel (0) target = $region5
  $region4: #{densenet_forward.41} parent=0 // pred_region
    _
  $region5: #{densenet_forward.41} parent=0 // pred_fallthru
    _
  // Predicated region
  $region6: #{densenet_forward.41} parent=0 // pred_check
    _
  $region7: #{densenet_forward.41} parent=0 // pred_check_branch
    %10 = sbr.rel (0) target = $region9
  $region8: #{densenet_forward.41} parent=0 // pred_region
    _
  $region9: #{densenet_forward.41} parent=0 // pred_fallthru
    _
  %p12 = scmp.eq.s32.totalorder 0, 0
  // Predicated region
  $region10: #{densenet_forward.41} parent=0 // pred_check
    %p13 = pneg %p12
  $region11: #{densenet_forward.41} parent=0 // pred_check_branch
    %15 = sbr.rel (%p13) target = $region13
  $region12: #{densenet_forward.41} parent=0 // pred_region
    %16 = vst [vmem:[#allocation2] sm:$0xff] 0.0
    %17 = vst [vmem:[#allocation2 + $0x8] sm:$0xff] 0.0
  $region13: #{densenet_forward.41} parent=0 // pred_fallthru
    _
  %v18 = vld [vmem:[%s0] sm:$0xff]
  %v19 = vld [vmem:[%s0 + $0x8] sm:$0xf]
  %v20 = vld [vmem:[%s0 + $0xc] sm:$0xff]
  %v21 = vld [vmem:[%s0 + $0x14] sm:$0xf]
  %v22 = vld [vmem:[#allocation2] sm:$0xff]
  %v23 = vld [vmem:[#allocation2 + $0x8] sm:$0xff]
  %v24 = vld [vmem:[%s1] sm:$0xf]
  %v25 = vld [vmem:[%s1 + $0x4] sm:$0xf]
  %v26 = vld [vmem:[%s1 + $0x8] sm:$0xf]
  %v27 = vld [vmem:[%s1 + $0xc] sm:$0xf]
  %v28 = vld [vmem:[%s1 + $0x10] sm:$0xf]
  %v29 = vld [vmem:[%s1 + $0x14] sm:$0xf]
  %v30 = vld [vmem:[%s1 + $0x18] sm:$0xf]
  %v31 = vld [vmem:[%s1 + $0x1c] sm:$0xf]
  %v32 = vld [vmem:[%s1 + $0x20] sm:$0xf]
  %v33 = vld [vmem:[%s1 + $0x24] sm:$0xf]
  %v34 = vld [vmem:[%s1 + $0x28] sm:$0xf]
  %v35 = vld [vmem:[%s1 + $0x2c] sm:$0xf]
  %v36 = vld [vmem:[%s1 + $0x30] sm:$0xf]
  %v37 = vld [vmem:[%s1 + $0x34] sm:$0xf]
  %v38 = vld [vmem:[%s1 + $0x38] sm:$0xf]
  %v39 = vld [vmem:[%s1 + $0x3c] sm:$0xf]
  %v40 = vld [vmem:[%s1 + $0x40] sm:$0xf]
  %v41 = vld [vmem:[%s1 + $0x44] sm:$0xf]
  %v42 = vld [vmem:[%s1 + $0x48] sm:$0xf]
  %v43 = vld [vmem:[%s1 + $0x4c] sm:$0xf]
  %v44 = vld [vmem:[%s1 + $0x50] sm:$0xf]
  %v45 = vld [vmem:[%s1 + $0x54] sm:$0xf]
  %v46 = vld [vmem:[%s1 + $0x58] sm:$0xf]
  %v47 = vld [vmem:[%s1 + $0x5c] sm:$0xf]
  %v48 = vld [vmem:[%s1 + $0x60] sm:$0xf]
  %v49 = vld [vmem:[%s1 + $0x64] sm:$0xf]
  %v50 = vld [vmem:[%s1 + $0x68] sm:$0xf]
  %v51 = vld [vmem:[%s1 + $0x6c] sm:$0xf]
  %v52 = vld [vmem:[%s1 + $0x70] sm:$0xf]
  %v53 = vld [vmem:[%s1 + $0x74] sm:$0xf]
  %v54 = vld [vmem:[%s1 + $0x78] sm:$0xf]
  %v55 = vld [vmem:[%s1 + $0x7c] sm:$0xf]
  %v56 = vld [vmem:[%s1 + $0x80] sm:$0xf]
  %v57 = vld [vmem:[%s1 + $0x84] sm:$0xf]
  %v58 = vld [vmem:[%s1 + $0x88] sm:$0xf]
  %v59 = vld [vmem:[%s1 + $0x8c] sm:$0xf]
  %v60 = vld [vmem:[%s1 + $0x90] sm:$0xf]
  %v61 = vld [vmem:[%s1 + $0x94] sm:$0xf]
  %v62 = vld [vmem:[%s1 + $0x98] sm:$0xf]
  %v63 = vld [vmem:[%s1 + $0x9c] sm:$0xf]
  %v64 = vld [vmem:[%s1 + $0xa0] sm:$0xf]
  %v65 = vld [vmem:[%s1 + $0xa4] sm:$0xf]
  %v66 = vld [vmem:[%s1 + $0xa8] sm:$0xf]
  %v67 = vld [vmem:[%s1 + $0xac] sm:$0xf]
  %v68 = vld [vmem:[%s1 + $0xb0] sm:$0xf]
  %v69 = vld [vmem:[%s1 + $0xb4] sm:$0xf]
  %v70 = vld [vmem:[%s1 + $0xb8] sm:$0xf]
  %v71 = vld [vmem:[%s1 + $0xbc] sm:$0xf]
  %v76 = vunpack.c.l.b16 %v18
  %v77 = vunpack.c.h.b16 %v18
  %v78 = vunpack.c.l.b16 %v19
  %v79 = vunpack.c.l.b16 %v20
  %v80 = vunpack.c.h.b16 %v20
  %v81 = vunpack.c.l.b16 %v21
  %v82 = vpack.c.b16 %v79, %v76
  %v83 = vpack.c.b16 %v80, %v77
  %v84 = vpack.c.b16 %v81, %v78
  %v136 = vunpack.c.l.b16 %v24
  %v137 = vunpack.c.l.b16 %v25
  %v138 = vunpack.c.l.b16 %v26
  %v139 = vunpack.c.l.b16 %v27
  %v140 = vunpack.c.l.b16 %v28
  %v141 = vunpack.c.l.b16 %v29
  %v142 = vunpack.c.l.b16 %v30
  %v143 = vunpack.c.l.b16 %v31
  %v144 = vunpack.c.l.b16 %v32
  %v145 = vunpack.c.l.b16 %v33
  %v146 = vunpack.c.l.b16 %v34
  %v147 = vunpack.c.l.b16 %v35
  %v148 = vunpack.c.l.b16 %v36
  %v149 = vunpack.c.l.b16 %v37
  %v150 = vunpack.c.l.b16 %v38
  %v151 = vunpack.c.l.b16 %v39
  %v152 = vunpack.c.l.b16 %v40
  %v153 = vunpack.c.l.b16 %v41
  %v154 = vunpack.c.l.b16 %v42
  %v155 = vunpack.c.l.b16 %v43
  %v156 = vunpack.c.l.b16 %v44
  %v157 = vunpack.c.l.b16 %v45
  %v158 = vunpack.c.l.b16 %v46
  %v159 = vunpack.c.l.b16 %v47
  %v160 = vunpack.c.l.b16 %v48
  %v161 = vunpack.c.l.b16 %v49
  %v162 = vunpack.c.l.b16 %v50
  %v163 = vunpack.c.l.b16 %v51
  %v164 = vunpack.c.l.b16 %v52
  %v165 = vunpack.c.l.b16 %v53
  %v166 = vunpack.c.l.b16 %v54
  %v167 = vunpack.c.l.b16 %v55
  %v168 = vunpack.c.l.b16 %v56
  %v169 = vunpack.c.l.b16 %v57
  %v170 = vunpack.c.l.b16 %v58
  %v171 = vunpack.c.l.b16 %v59
  %v172 = vunpack.c.l.b16 %v60
  %v173 = vunpack.c.l.b16 %v61
  %v174 = vunpack.c.l.b16 %v62
  %v175 = vunpack.c.l.b16 %v63
  %v176 = vunpack.c.l.b16 %v64
  %v177 = vunpack.c.l.b16 %v65
  %v178 = vunpack.c.l.b16 %v66
  %v179 = vunpack.c.l.b16 %v67
  %v180 = vunpack.c.l.b16 %v68
  %v181 = vunpack.c.l.b16 %v69
  %v182 = vunpack.c.l.b16 %v70
  %v183 = vunpack.c.l.b16 %v71
  %v184 = vpack.c.b16 %v137, %v136
  %v185 = vpack.c.b16 %v139, %v138
  %v186 = vpack.c.b16 %v141, %v140
  %v187 = vpack.c.b16 %v143, %v142
  %v188 = vpack.c.b16 %v145, %v144
  %v189 = vpack.c.b16 %v147, %v146
  %v190 = vpack.c.b16 %v149, %v148
  %v191 = vpack.c.b16 %v151, %v150
  %v192 = vpack.c.b16 %v153, %v152
  %v193 = vpack.c.b16 %v155, %v154
  %v194 = vpack.c.b16 %v157, %v156
  %v195 = vpack.c.b16 %v159, %v158
  %v196 = vpack.c.b16 %v161, %v160
  %v197 = vpack.c.b16 %v163, %v162
  %v198 = vpack.c.b16 %v165, %v164
  %v199 = vpack.c.b16 %v167, %v166
  %v200 = vpack.c.b16 %v169, %v168
  %v201 = vpack.c.b16 %v171, %v170
  %v202 = vpack.c.b16 %v173, %v172
  %v203 = vpack.c.b16 %v175, %v174
  %v204 = vpack.c.b16 %v177, %v176
  %v205 = vpack.c.b16 %v179, %v178
  %v206 = vpack.c.b16 %v181, %v180
  %v207 = vpack.c.b16 %v183, %v182
  %232 = vmatprep.subr.bf16.mxu0 0
  %233 = vmatpush1.bf16.msra.mxu0 %v184
  %234 = vmatprep.subr.bf16.mxu0 0
  %235 = vmatpush1.bf16.msra.mxu0 %v185
  %236 = vmatprep.subr.bf16.mxu0 0
  %237 = vmatpush1.bf16.msra.mxu0 %v186
  %238 = vmatprep.subr.bf16.mxu0 0
  %239 = vmatpush1.bf16.msra.mxu0 %v187
  %240 = vmatprep.subr.bf16.mxu0 0
  %241 = vmatpush1.bf16.msra.mxu0 %v188
  %242 = vmatprep.subr.bf16.mxu0 0
  %243 = vmatpush1.bf16.msra.mxu0 %v189
  %244 = vmatprep.subr.bf16.mxu0 0
  %245 = vmatpush1.bf16.msra.mxu0 %v190
  %246 = vmatprep.subr.bf16.mxu0 0
  %247 = vmatpush1.bf16.msra.mxu0 %v191
  %248 = vmatprep.subr.bf16.mxu0 0
  %249 = vmatpush1.bf16.msra.mxu0 %v192
  %250 = vmatprep.subr.bf16.mxu0 0
  %251 = vmatpush1.bf16.msra.mxu0 %v193
  %252 = vmatprep.subr.bf16.mxu0 0
  %253 = vmatpush1.bf16.msra.mxu0 %v194
  %254 = vmatprep.subr.bf16.mxu0 0
  %255 = vmatpush1.bf16.msra.mxu0 %v195
  %256 = vmatprep.subr.bf16.mxu0 0
  %257 = vmatpush1.bf16.msra.mxu0 %v196
  %258 = vmatprep.subr.bf16.mxu0 0
  %259 = vmatpush1.bf16.msra.mxu0 %v197
  %260 = vmatprep.subr.bf16.mxu0 0
  %261 = vmatpush1.bf16.msra.mxu0 %v198
  %262 = vmatprep.subr.bf16.mxu0 0
  %263 = vmatpush1.bf16.msra.mxu0 %v199
  %264 = vmatprep.mubr.bf16.mxu0 %v83
  %265 = vmatmul.mubr.bf16.gmra.mrb[0].mxu0 %v82
  %v266 = vpop.f32.mrb[0].mxu0
  %v267 = vadd.f32 0.0, %v266
  %v268 = vpop.f32.mrb[0].mxu0
  %v269 = vpop.f32.mrb[0].mxu0
  %v270 = vadd.f32 0.0, %v269
  %v271 = vpop.f32.mrb[0].mxu0
  %272 = vdwg.mxu0
  %273 = vmatprep.subr.bf16.mxu0 0
  %274 = vmatpush1.bf16.msra.mxu0 %v200
  %275 = vmatprep.subr.bf16.mxu0 0
  %276 = vmatpush1.bf16.msra.mxu0 %v201
  %277 = vmatprep.subr.bf16.mxu0 0
  %278 = vmatpush1.bf16.msra.mxu0 %v202
  %279 = vmatprep.subr.bf16.mxu0 0
  %280 = vmatpush1.bf16.msra.mxu0 %v203
  %281 = vmatprep.subr.bf16.mxu0 0
  %282 = vmatpush1.bf16.msra.mxu0 %v204
  %283 = vmatprep.subr.bf16.mxu0 0
  %284 = vmatpush1.bf16.msra.mxu0 %v205
  %285 = vmatprep.subr.bf16.mxu0 0
  %286 = vmatpush1.bf16.msra.mxu0 %v206
  %287 = vmatprep.subr.bf16.mxu0 0
  %288 = vmatpush1.bf16.msra.mxu0 %v207
  %289 = vmatprep.subr.bf16.mxu0 0
  %290 = vmatpush1.bf16.msra.mxu0 0
  %291 = vmatprep.subr.bf16.mxu0 0
  %292 = vmatpush1.bf16.msra.mxu0 0
  %293 = vmatprep.subr.bf16.mxu0 0
  %294 = vmatpush1.bf16.msra.mxu0 0
  %295 = vmatprep.subr.bf16.mxu0 0
  %296 = vmatpush1.bf16.msra.mxu0 0
  %297 = vmatprep.subr.bf16.mxu0 0
  %298 = vmatpush1.bf16.msra.mxu0 0
  %299 = vmatprep.subr.bf16.mxu0 0
  %300 = vmatpush1.bf16.msra.mxu0 0
  %301 = vmatprep.subr.bf16.mxu0 0
  %302 = vmatpush1.bf16.msra.mxu0 0
  %303 = vmatprep.subr.bf16.mxu0 0
  %304 = vmatpush1.bf16.msra.mxu0 0
  %305 = vmatprep.mubr.bf16.mxu0 0
  %306 = vmatmul.mubr.bf16.gmra.mrb[0].mxu0 %v84
  %v307 = vpop.f32.mrb[0].mxu0
  %v308 = vadd.f32 %v267, %v307
  %v309 = vpop.f32.mrb[0].mxu0
  %v310 = vpop.f32.mrb[0].mxu0
  %v311 = vadd.f32 %v270, %v310
  %v312 = vpop.f32.mrb[0].mxu0
  %313 = vdwg.mxu0
  %v314 = vadd.f32 %v22, %v308
  %v315 = vadd.f32 %v23, %v311
  %316 = vst [vmem:[#allocation2] sm:$0xff] %v314
  %317 = vst [vmem:[#allocation2 + $0x8] sm:$0xff] %v315
  // Predicated region
  $region14: #{densenet_forward.41} parent=0 // pred_check
    %p318 = pneg %p12
  $region15: #{densenet_forward.41} parent=0 // pred_check_branch
    %320 = sbr.rel (%p318) target = $region17
  $region16: #{densenet_forward.41} parent=0 // pred_region
    %v321 = vld [vmem:[#allocation2] sm:$0xff]
    %v322 = vld [vmem:[#allocation2 + $0x8] sm:$0xff]
    %v323 = vpack.c.bf16 %v322, %v321
    %v325 = vunpack.c.l.b16 %v323
    %v326 = vunpack.c.h.b16 %v323
    %v327 = vpack.c.b16 %v325, %v325
    %v328 = vpack.c.b16 %v326, %v326
    %331 = vst [vmem:[%s2] sm:$0xf] %v327
    %332 = vst [vmem:[%s2 + $0x4] sm:$0xf] %v328
  $region17: #{densenet_forward.41} parent=0 // pred_fallthru
    _
  // Predicated region
  $region18: #{densenet_forward.41} parent=0 // pred_check
    _
  $region19: #{densenet_forward.41} parent=0 // pred_check_branch
    %334 = sbr.rel (0) target = $region21
  $region20: #{densenet_forward.41} parent=0 // pred_region
    _
  $region21: #{densenet_forward.41} parent=0 // pred_fallthru
    _
  // Predicated region
  $region22: #{densenet_forward.41} parent=0 // pred_check
    _
  $region23: #{densenet_forward.41} parent=0 // pred_check_branch
    %336 = sbr.rel (0) target = $region25
  $region24: #{densenet_forward.41} parent=0 // pred_region
    _
  $region25: #{densenet_forward.41} parent=0 // pred_fallthru
    _

// kernel: densenet_forward.44
$region0: #{densenet_forward.44}
  #allocation0 [shape = 'u32[]', space=smem, size = 0x4, offset = 0x4, fixed_abs, tag = 'smem constant byte address 0x4 - core index']
  #allocation1 [shape = 'u32[144,128]{1,0:T(1,128)}', space=vmem, size = 0x12000, scoped, tag = 'internal scratch']
  #allocation2 [shape = 'f32[16,128]{1,0:T(8,128)}', space=vmem, size = 0x2000, scoped, tag = 'scratch operand']
  %s0 = inlined_call_operand.vmem [shape: bf16[16,128], index: 0, kind: input, shape index: {}]
  %s1 = inlined_call_operand.vmem [shape: bf16[128,128], index: 1, kind: input, shape index: {}]
  %s2 = inlined_call_operand.vmem [shape: f32[1,128], index: 2, kind: input, shape index: {}]
  %s3 = inlined_call_operand.vmem [shape: f32[1,128], index: 3, kind: input, shape index: {}]
  %s4 = inlined_call_operand.vmem [shape: bf16[16,128], index: 4, kind: output, shape index: {}]
  %s5 = sld [smem:[#allocation0]]
  $region34: #{densenet_forward.44} parent=0
    _
  %s7 = ssub.s32 1, %s5
  %s8 = scalar_select 0, %s7, %s5
  // Predicated region
  $region2: #{densenet_forward.44} parent=0 // pred_check
    _
  $region3: #{densenet_forward.44} parent=0 // pred_check_branch
    %10 = sbr.rel (0) target = $region5
  $region4: #{densenet_forward.44} parent=0 // pred_region
    _
  $region5: #{densenet_forward.44} parent=0 // pred_fallthru
    _
  // Predicated region
  $region6: #{densenet_forward.44} parent=0 // pred_check
    _
  $region7: #{densenet_forward.44} parent=0 // pred_check_branch
    %12 = sbr.rel (0) target = $region9
  $region8: #{densenet_forward.44} parent=0 // pred_region
    _
  $region9: #{densenet_forward.44} parent=0 // pred_fallthru
    _
  // Predicated region
  $region10: #{densenet_forward.44} parent=0 // pred_check
    _
  $region11: #{densenet_forward.44} parent=0 // pred_check_branch
    %14 = sbr.rel (0) target = $region13
  $region12: #{densenet_forward.44} parent=0 // pred_region
    _
  $region13: #{densenet_forward.44} parent=0 // pred_fallthru
    _
  // Predicated region
  $region14: #{densenet_forward.44} parent=0 // pred_check
    _
  $region15: #{densenet_forward.44} parent=0 // pred_check_branch
    %16 = sbr.rel (0) target = $region17
  $region16: #{densenet_forward.44} parent=0 // pred_region
    _
  $region17: #{densenet_forward.44} parent=0 // pred_fallthru
    _
  %p18 = scmp.eq.s32.totalorder 0, 0
  // Predicated region
  $region18: #{densenet_forward.44} parent=0 // pred_check
    %p19 = pneg %p18
  $region19: #{densenet_forward.44} parent=0 // pred_check_branch
    %21 = sbr.rel (%p19) target = $region21
  $region20: #{densenet_forward.44} parent=0 // pred_region
    %22 = vst [vmem:[#allocation2] sm:$0xff] 0.0
    %23 = vst [vmem:[#allocation2 + $0x8] sm:$0xff] 0.0
  $region21: #{densenet_forward.44} parent=0 // pred_fallthru
    _
  %v24 = vld [vmem:[%s0] sm:$0xf]
  %v25 = vld [vmem:[%s0 + $0x4] sm:$0xf]
  %v26 = vunpack.c.l.bf16 %v24
  %v27 = vunpack.c.l.bf16 %v25
  %v28 = vld [vmem:[%s2] sm:$0x1]
  %v30 = vlaneseq
  %v31 = vshrl.u32 %v30, 7
  %v32 = vsub.s32 0, %v31
  %v33 = vrot.slane %v28, %v32
  %v35 = vmul.f32 %v26, %v33
  %v36 = vmul.f32 %v27, %v33
  %v37 = vld [vmem:[%s3] sm:$0x1]
  %v39 = vlaneseq
  %v40 = vshrl.u32 %v39, 7
  %v41 = vsub.s32 0, %v40
  %v42 = vrot.slane %v37, %v41
  %v44 = vadd.f32 %v35, %v42
  %v45 = vadd.f32 %v36, %v42
  %v46 = vmax.f32 %v44, 0.0
  %v47 = vmax.f32 %v45, 0.0
  %v48 = vpack.c.bf16 %v47, %v46
  %v49 = vld [vmem:[#allocation2] sm:$0xff]
  %v50 = vld [vmem:[#allocation2 + $0x8] sm:$0xff]
  %v51 = vld [vmem:[%s1] sm:$0xf]
  %v52 = vld [vmem:[%s1 + $0x4] sm:$0xf]
  %v53 = vld [vmem:[%s1 + $0x8] sm:$0xf]
  %v54 = vld [vmem:[%s1 + $0xc] sm:$0xf]
  %v55 = vld [vmem:[%s1 + $0x10] sm:$0xf]
  %v56 = vld [vmem:[%s1 + $0x14] sm:$0xf]
  %v57 = vld [vmem:[%s1 + $0x18] sm:$0xf]
  %v58 = vld [vmem:[%s1 + $0x1c] sm:$0xf]
  %v59 = vld [vmem:[%s1 + $0x20] sm:$0xf]
  %v60 = vld [vmem:[%s1 + $0x24] sm:$0xf]
  %v61 = vld [vmem:[%s1 + $0x28] sm:$0xf]
  %v62 = vld [vmem:[%s1 + $0x2c] sm:$0xf]
  %v63 = vld [vmem:[%s1 + $0x30] sm:$0xf]
  %v64 = vld [vmem:[%s1 + $0x34] sm:$0xf]
  %v65 = vld [vmem:[%s1 + $0x38] sm:$0xf]
  %v66 = vld [vmem:[%s1 + $0x3c] sm:$0xf]
  %v83 = vunpack.c.l.b16 %v51
  %v84 = vunpack.c.l.b16 %v52
  %v85 = vunpack.c.l.b16 %v53
  %v86 = vunpack.c.l.b16 %v54
  %v87 = vunpack.c.l.b16 %v55
  %v88 = vunpack.c.l.b16 %v56
  %v89 = vunpack.c.l.b16 %v57
  %v90 = vunpack.c.l.b16 %v58
  %v91 = vunpack.c.l.b16 %v59
  %v92 = vunpack.c.l.b16 %v60
  %v93 = vunpack.c.l.b16 %v61
  %v94 = vunpack.c.l.b16 %v62
  %v95 = vunpack.c.l.b16 %v63
  %v96 = vunpack.c.l.b16 %v64
  %v97 = vunpack.c.l.b16 %v65
  %v98 = vunpack.c.l.b16 %v66
  %v99 = vpack.c.b16 %v84, %v83
  %v100 = vpack.c.b16 %v86, %v85
  %v101 = vpack.c.b16 %v88, %v87
  %v102 = vpack.c.b16 %v90, %v89
  %v103 = vpack.c.b16 %v92, %v91
  %v104 = vpack.c.b16 %v94, %v93
  %v105 = vpack.c.b16 %v96, %v95
  %v106 = vpack.c.b16 %v98, %v97
  %115 = vmatprep.subr.bf16.mxu0 0
  %116 = vmatpush1.bf16.msra.mxu0 %v99
  %117 = vmatprep.subr.bf16.mxu0 0
  %118 = vmatpush1.bf16.msra.mxu0 %v100
  %119 = vmatprep.subr.bf16.mxu0 0
  %120 = vmatpush1.bf16.msra.mxu0 %v101
  %121 = vmatprep.subr.bf16.mxu0 0
  %122 = vmatpush1.bf16.msra.mxu0 %v102
  %123 = vmatprep.subr.bf16.mxu0 0
  %124 = vmatpush1.bf16.msra.mxu0 %v103
  %125 = vmatprep.subr.bf16.mxu0 0
  %126 = vmatpush1.bf16.msra.mxu0 %v104
  %127 = vmatprep.subr.bf16.mxu0 0
  %128 = vmatpush1.bf16.msra.mxu0 %v105
  %129 = vmatprep.subr.bf16.mxu0 0
  %130 = vmatpush1.bf16.msra.mxu0 %v106
  %131 = vmatprep.subr.bf16.mxu0 0
  %132 = vmatpush1.bf16.msra.mxu0 0
  %133 = vmatprep.subr.bf16.mxu0 0
  %134 = vmatpush1.bf16.msra.mxu0 0
  %135 = vmatprep.subr.bf16.mxu0 0
  %136 = vmatpush1.bf16.msra.mxu0 0
  %137 = vmatprep.subr.bf16.mxu0 0
  %138 = vmatpush1.bf16.msra.mxu0 0
  %139 = vmatprep.subr.bf16.mxu0 0
  %140 = vmatpush1.bf16.msra.mxu0 0
  %141 = vmatprep.subr.bf16.mxu0 0
  %142 = vmatpush1.bf16.msra.mxu0 0
  %143 = vmatprep.subr.bf16.mxu0 0
  %144 = vmatpush1.bf16.msra.mxu0 0
  %145 = vmatprep.subr.bf16.mxu0 0
  %146 = vmatpush1.bf16.msra.mxu0 0
  %147 = vmatprep.mubr.bf16.mxu0 0
  %148 = vmatmul.mubr.bf16.gmra.mrb[0].mxu0 %v48
  %v149 = vpop.f32.mrb[0].mxu0
  %v150 = vadd.f32 0.0, %v149
  %v151 = vpop.f32.mrb[0].mxu0
  %v152 = vpop.f32.mrb[0].mxu0
  %v153 = vadd.f32 0.0, %v152
  %v154 = vpop.f32.mrb[0].mxu0
  %155 = vdwg.mxu0
  %v156 = vadd.f32 %v49, %v150
  %v157 = vadd.f32 %v50, %v153
  %158 = vst [vmem:[#allocation2] sm:$0xff] %v156
  %159 = vst [vmem:[#allocation2 + $0x8] sm:$0xff] %v157
  // Predicated region
  $region22: #{densenet_forward.44} parent=0 // pred_check
    %p160 = pneg %p18
  $region23: #{densenet_forward.44} parent=0 // pred_check_branch
    %162 = sbr.rel (%p160) target = $region25
  $region24: #{densenet_forward.44} parent=0 // pred_region
    %v163 = vld [vmem:[#allocation2] sm:$0xff]
    %v164 = vld [vmem:[#allocation2 + $0x8] sm:$0xff]
    %v165 = vpack.c.bf16 %v164, %v163
    %v167 = vunpack.c.l.b16 %v165
    %v168 = vunpack.c.h.b16 %v165
    %v169 = vpack.c.b16 %v167, %v167
    %v170 = vpack.c.b16 %v168, %v168
    %173 = vst [vmem:[%s4] sm:$0xf] %v169
    %174 = vst [vmem:[%s4 + $0x4] sm:$0xf] %v170
  $region25: #{densenet_forward.44} parent=0 // pred_fallthru
    _
  // Predicated region
  $region26: #{densenet_forward.44} parent=0 // pred_check
    _
  $region27: #{densenet_forward.44} parent=0 // pred_check_branch
    %176 = sbr.rel (0) target = $region29
  $region28: #{densenet_forward.44} parent=0 // pred_region
    _
  $region29: #{densenet_forward.44} parent=0 // pred_fallthru
    _
  // Predicated region
  $region30: #{densenet_forward.44} parent=0 // pred_check
    _
  $region31: #{densenet_forward.44} parent=0 // pred_check_branch
    %178 = sbr.rel (0) target = $region33
  $region32: #{densenet_forward.44} parent=0 // pred_region
    _
  $region33: #{densenet_forward.44} parent=0 // pred_fallthru
    _

// kernel: densenet_forward.50
$region0: #{densenet_forward.50}
  #allocation0 [shape = 'u32[]', space=smem, size = 0x4, offset = 0x4, fixed_abs, tag = 'smem constant byte address 0x4 - core index']
  #allocation1 [shape = 'u32[144,128]{1,0:T(1,128)}', space=vmem, size = 0x12000, scoped, tag = 'internal scratch']
  %s0 = inlined_call_operand.vmem [shape: bf16[1,16,128], index: 0, kind: input, shape index: {}]
  %s1 = inlined_call_operand.vmem [shape: bf16[16,128], index: 1, kind: output, shape index: {}]
  %s2 = sld [smem:[#allocation0]]
  $region14: #{densenet_forward.50} parent=0
    _
  %s4 = ssub.s32 1, %s2
  %s5 = scalar_select 0, %s4, %s2
  // Predicated region
  $region2: #{densenet_forward.50} parent=0 // pred_check
    _
  $region3: #{densenet_forward.50} parent=0 // pred_check_branch
    %7 = sbr.rel (0) target = $region5
  $region4: #{densenet_forward.50} parent=0 // pred_region
    _
  $region5: #{densenet_forward.50} parent=0 // pred_fallthru
    _
  %v8 = vld [vmem:[%s0] sm:$0xf]
  %v9 = vld [vmem:[%s0 + $0x4] sm:$0xf]
  %v10 = vunpack.c.l.bf16 %v8
  %v11 = vunpack.c.l.bf16 %v9
  %v12 = vadd.f32 %v10, 0.0
  %v13 = vadd.f32 %v11, 0.0
  %v14 = vpack.c.bf16 %v13, %v12
  %v16 = vunpack.c.l.b16 %v14
  %v17 = vunpack.c.h.b16 %v14
  %v18 = vpack.c.b16 %v16, %v16
  %v19 = vpack.c.b16 %v17, %v17
  %22 = vst [vmem:[%s1] sm:$0xf] %v18
  %23 = vst [vmem:[%s1 + $0x4] sm:$0xf] %v19
  // Predicated region
  $region6: #{densenet_forward.50} parent=0 // pred_check
    _
  $region7: #{densenet_forward.50} parent=0 // pred_check_branch
    %25 = sbr.rel (0) target = $region9
  $region8: #{densenet_forward.50} parent=0 // pred_region
    _
  $region9: #{densenet_forward.50} parent=0 // pred_fallthru
    _
  // Predicated region
  $region10: #{densenet_forward.50} parent=0 // pred_check
    _
  $region11: #{densenet_forward.50} parent=0 // pred_check_branch
    %27 = sbr.rel (0) target = $region13
  $region12: #{densenet_forward.50} parent=0 // pred_region
    _
  $region13: #{densenet_forward.50} parent=0 // pred_fallthru
    _

// kernel: densenet_forward.51
$region0: #{densenet_forward.51}
  #allocation0 [shape = 'u32[]', space=smem, size = 0x4, offset = 0x4, fixed_abs, tag = 'smem constant byte address 0x4 - core index']
  #allocation1 [shape = 'u32[144,128]{1,0:T(1,128)}', space=vmem, size = 0x12000, scoped, tag = 'internal scratch']
  %s0 = inlined_call_operand.vmem [shape: bf16[16,128], index: 0, kind: input, shape index: {}]
  %s1 = inlined_call_operand.vmem [shape: f32[1,128], index: 1, kind: input, shape index: {}]
  %s2 = inlined_call_operand.vmem [shape: f32[1,128], index: 2, kind: input, shape index: {}]
  %s3 = inlined_call_operand.vmem [shape: bf16[128,1024], index: 3, kind: input, shape index: {}]
  %s4 = inlined_call_operand.vmem [shape: f32[1,1024], index: 4, kind: input, shape index: {}]
  %s5 = inlined_call_operand.vmem [shape: bf16[1024,128], index: 5, kind: input, shape index: {}]
  %s6 = inlined_call_operand.vmem [shape: f32[1,128], index: 6, kind: input, shape index: {}]
  %s7 = inlined_call_operand.vmem [shape: f32[16,128], index: 7, kind: output, shape index: {}]
  %s8 = sld [smem:[#allocation0]]
  $region38: #{densenet_forward.51} parent=0
    _
  %s10 = ssub.s32 1, %s8
  %s11 = scalar_select 0, %s10, %s8
  // Predicated region
  $region2: #{densenet_forward.51} parent=0 // pred_check
    _
  $region3: #{densenet_forward.51} parent=0 // pred_check_branch
    %13 = sbr.rel (0) target = $region5
  $region4: #{densenet_forward.51} parent=0 // pred_region
    _
  $region5: #{densenet_forward.51} parent=0 // pred_fallthru
    _
  // Predicated region
  $region6: #{densenet_forward.51} parent=0 // pred_check
    _
  $region7: #{densenet_forward.51} parent=0 // pred_check_branch
    %15 = sbr.rel (0) target = $region9
  $region8: #{densenet_forward.51} parent=0 // pred_region
    _
  $region9: #{densenet_forward.51} parent=0 // pred_fallthru
    _
  // Predicated region
  $region10: #{densenet_forward.51} parent=0 // pred_check
    _
  $region11: #{densenet_forward.51} parent=0 // pred_check_branch
    %17 = sbr.rel (0) target = $region13
  $region12: #{densenet_forward.51} parent=0 // pred_region
    _
  $region13: #{densenet_forward.51} parent=0 // pred_fallthru
    _
  // Predicated region
  $region14: #{densenet_forward.51} parent=0 // pred_check
    _
  $region15: #{densenet_forward.51} parent=0 // pred_check_branch
    %19 = sbr.rel (0) target = $region17
  $region16: #{densenet_forward.51} parent=0 // pred_region
    _
  $region17: #{densenet_forward.51} parent=0 // pred_fallthru
    _
  // Predicated region
  $region18: #{densenet_forward.51} parent=0 // pred_check
    _
  $region19: #{densenet_forward.51} parent=0 // pred_check_branch
    %21 = sbr.rel (0) target = $region21
  $region20: #{densenet_forward.51} parent=0 // pred_region
    _
  $region21: #{densenet_forward.51} parent=0 // pred_fallthru
    _
  // Predicated region
  $region22: #{densenet_forward.51} parent=0 // pred_check
    _
  $region23: #{densenet_forward.51} parent=0 // pred_check_branch
    %23 = sbr.rel (0) target = $region25
  $region24: #{densenet_forward.51} parent=0 // pred_region
    _
  $region25: #{densenet_forward.51} parent=0 // pred_fallthru
    _
  // Predicated region
  $region26: #{densenet_forward.51} parent=0 // pred_check
    _
  $region27: #{densenet_forward.51} parent=0 // pred_check_branch
    %25 = sbr.rel (0) target = $region29
  $region28: #{densenet_forward.51} parent=0 // pred_region
    _
  $region29: #{densenet_forward.51} parent=0 // pred_fallthru
    _
  %v27 = vld [vmem:[%s0] sm:$0xf]
  %v28 = vld [vmem:[%s0 + $0x4] sm:$0xf]
  %v29 = vunpack.c.l.bf16 %v27
  %v30 = vunpack.c.l.bf16 %v28
  %v31 = vld [vmem:[%s1] sm:$0x1]
  %v33 = vlaneseq
  %v34 = vshrl.u32 %v33, 7
  %v35 = vsub.s32 0, %v34
  %v36 = vrot.slane %v31, %v35
  %v38 = vmul.f32 %v29, %v36
  %v39 = vmul.f32 %v30, %v36
  %v40 = vld [vmem:[%s2] sm:$0x1]
  %v42 = vlaneseq
  %v43 = vshrl.u32 %v42, 7
  %v44 = vsub.s32 0, %v43
  %v45 = vrot.slane %v40, %v44
  %v47 = vadd.f32 %v38, %v45
  %v48 = vadd.f32 %v39, %v45
  %v49 = vpack.c.bf16 %v48, %v47
  %v50 = vld [vmem:[%s3] sm:$0xff]
  %v51 = vld [vmem:[%s3 + $0x8] sm:$0xff]
  %v52 = vld [vmem:[%s3 + $0x10] sm:$0xff]
  %v53 = vld [vmem:[%s3 + $0x18] sm:$0xff]
  %v54 = vld [vmem:[%s3 + $0x20] sm:$0xff]
  %v55 = vld [vmem:[%s3 + $0x28] sm:$0xff]
  %v56 = vld [vmem:[%s3 + $0x30] sm:$0xff]
  %v57 = vld [vmem:[%s3 + $0x38] sm:$0xff]
  %v58 = vld [vmem:[%s3 + $0x40] sm:$0xff]
  %v59 = vld [vmem:[%s3 + $0x48] sm:$0xff]
  %v60 = vld [vmem:[%s3 + $0x50] sm:$0xff]
  %v61 = vld [vmem:[%s3 + $0x58] sm:$0xff]
  %v62 = vld [vmem:[%s3 + $0x60] sm:$0xff]
  %v63 = vld [vmem:[%s3 + $0x68] sm:$0xff]
  %v64 = vld [vmem:[%s3 + $0x70] sm:$0xff]
  %v65 = vld [vmem:[%s3 + $0x78] sm:$0xff]
  %v66 = vld [vmem:[%s3 + $0x80] sm:$0xff]
  %v67 = vld [vmem:[%s3 + $0x88] sm:$0xff]
  %v68 = vld [vmem:[%s3 + $0x90] sm:$0xff]
  %v69 = vld [vmem:[%s3 + $0x98] sm:$0xff]
  %v70 = vld [vmem:[%s3 + $0xa0] sm:$0xff]
  %v71 = vld [vmem:[%s3 + $0xa8] sm:$0xff]
  %v72 = vld [vmem:[%s3 + $0xb0] sm:$0xff]
  %v73 = vld [vmem:[%s3 + $0xb8] sm:$0xff]
  %v74 = vld [vmem:[%s3 + $0xc0] sm:$0xff]
  %v75 = vld [vmem:[%s3 + $0xc8] sm:$0xff]
  %v76 = vld [vmem:[%s3 + $0xd0] sm:$0xff]
  %v77 = vld [vmem:[%s3 + $0xd8] sm:$0xff]
  %v78 = vld [vmem:[%s3 + $0xe0] sm:$0xff]
  %v79 = vld [vmem:[%s3 + $0xe8] sm:$0xff]
  %v80 = vld [vmem:[%s3 + $0xf0] sm:$0xff]
  %v81 = vld [vmem:[%s3 + $0xf8] sm:$0xff]
  %v82 = vld [vmem:[%s3 + $0x100] sm:$0xff]
  %v83 = vld [vmem:[%s3 + $0x108] sm:$0xff]
  %v84 = vld [vmem:[%s3 + $0x110] sm:$0xff]
  %v85 = vld [vmem:[%s3 + $0x118] sm:$0xff]
  %v86 = vld [vmem:[%s3 + $0x120] sm:$0xff]
  %v87 = vld [vmem:[%s3 + $0x128] sm:$0xff]
  %v88 = vld [vmem:[%s3 + $0x130] sm:$0xff]
  %v89 = vld [vmem:[%s3 + $0x138] sm:$0xff]
  %v90 = vld [vmem:[%s3 + $0x140] sm:$0xff]
  %v91 = vld [vmem:[%s3 + $0x148] sm:$0xff]
  %v92 = vld [vmem:[%s3 + $0x150] sm:$0xff]
  %v93 = vld [vmem:[%s3 + $0x158] sm:$0xff]
  %v94 = vld [vmem:[%s3 + $0x160] sm:$0xff]
  %v95 = vld [vmem:[%s3 + $0x168] sm:$0xff]
  %v96 = vld [vmem:[%s3 + $0x170] sm:$0xff]
  %v97 = vld [vmem:[%s3 + $0x178] sm:$0xff]
  %v98 = vld [vmem:[%s3 + $0x180] sm:$0xff]
  %v99 = vld [vmem:[%s3 + $0x188] sm:$0xff]
  %v100 = vld [vmem:[%s3 + $0x190] sm:$0xff]
  %v101 = vld [vmem:[%s3 + $0x198] sm:$0xff]
  %v102 = vld [vmem:[%s3 + $0x1a0] sm:$0xff]
  %v103 = vld [vmem:[%s3 + $0x1a8] sm:$0xff]
  %v104 = vld [vmem:[%s3 + $0x1b0] sm:$0xff]
  %v105 = vld [vmem:[%s3 + $0x1b8] sm:$0xff]
  %v106 = vld [vmem:[%s3 + $0x1c0] sm:$0xff]
  %v107 = vld [vmem:[%s3 + $0x1c8] sm:$0xff]
  %v108 = vld [vmem:[%s3 + $0x1d0] sm:$0xff]
  %v109 = vld [vmem:[%s3 + $0x1d8] sm:$0xff]
  %v110 = vld [vmem:[%s3 + $0x1e0] sm:$0xff]
  %v111 = vld [vmem:[%s3 + $0x1e8] sm:$0xff]
  %v112 = vld [vmem:[%s3 + $0x1f0] sm:$0xff]
  %v113 = vld [vmem:[%s3 + $0x1f8] sm:$0xff]
  %v114 = vld [vmem:[%s4] sm:$0xff]
  %v116 = vlaneseq
  %v117 = vshrl.u32 %v116, 7
  %v118 = vsub.s32 0, %v117
  %v119 = vrot.slane %v114, %v118
  %v120 = vlaneseq
  %v121 = vshrl.u32 %v120, 7
  %v122 = vsub.s32 1, %v121
  %v123 = vrot.slane %v114, %v122
  %v124 = vlaneseq
  %v125 = vshrl.u32 %v124, 7
  %v126 = vsub.s32 2, %v125
  %v127 = vrot.slane %v114, %v126
  %v128 = vlaneseq
  %v129 = vshrl.u32 %v128, 7
  %v130 = vsub.s32 3, %v129
  %v131 = vrot.slane %v114, %v130
  %v132 = vlaneseq
  %v133 = vshrl.u32 %v132, 7
  %v134 = vsub.s32 4, %v133
  %v135 = vrot.slane %v114, %v134
  %v136 = vlaneseq
  %v137 = vshrl.u32 %v136, 7
  %v138 = vsub.s32 5, %v137
  %v139 = vrot.slane %v114, %v138
  %v140 = vlaneseq
  %v141 = vshrl.u32 %v140, 7
  %v142 = vsub.s32 6, %v141
  %v143 = vrot.slane %v114, %v142
  %v144 = vlaneseq
  %v145 = vshrl.u32 %v144, 7
  %v146 = vsub.s32 7, %v145
  %v147 = vrot.slane %v114, %v146
  %v220 = vunpack.c.l.b16 %v50
  %v221 = vunpack.c.h.b16 %v50
  %v222 = vunpack.c.l.b16 %v51
  %v223 = vunpack.c.h.b16 %v51
  %v224 = vunpack.c.l.b16 %v52
  %v225 = vunpack.c.h.b16 %v52
  %v226 = vunpack.c.l.b16 %v53
  %v227 = vunpack.c.h.b16 %v53
  %v228 = vunpack.c.l.b16 %v54
  %v229 = vunpack.c.h.b16 %v54
  %v230 = vunpack.c.l.b16 %v55
  %v231 = vunpack.c.h.b16 %v55
  %v232 = vunpack.c.l.b16 %v56
  %v233 = vunpack.c.h.b16 %v56
  %v234 = vunpack.c.l.b16 %v57
  %v235 = vunpack.c.h.b16 %v57
  %v236 = vunpack.c.l.b16 %v58
  %v237 = vunpack.c.h.b16 %v58
  %v238 = vunpack.c.l.b16 %v59
  %v239 = vunpack.c.h.b16 %v59
  %v240 = vunpack.c.l.b16 %v60
  %v241 = vunpack.c.h.b16 %v60
  %v242 = vunpack.c.l.b16 %v61
  %v243 = vunpack.c.h.b16 %v61
  %v244 = vunpack.c.l.b16 %v62
  %v245 = vunpack.c.h.b16 %v62
  %v246 = vunpack.c.l.b16 %v63
  %v247 = vunpack.c.h.b16 %v63
  %v248 = vunpack.c.l.b16 %v64
  %v249 = vunpack.c.h.b16 %v64
  %v250 = vunpack.c.l.b16 %v65
  %v251 = vunpack.c.h.b16 %v65
  %v252 = vunpack.c.l.b16 %v66
  %v253 = vunpack.c.h.b16 %v66
  %v254 = vunpack.c.l.b16 %v67
  %v255 = vunpack.c.h.b16 %v67
  %v256 = vunpack.c.l.b16 %v68
  %v257 = vunpack.c.h.b16 %v68
  %v258 = vunpack.c.l.b16 %v69
  %v259 = vunpack.c.h.b16 %v69
  %v260 = vunpack.c.l.b16 %v70
  %v261 = vunpack.c.h.b16 %v70
  %v262 = vunpack.c.l.b16 %v71
  %v263 = vunpack.c.h.b16 %v71
  %v264 = vunpack.c.l.b16 %v72
  %v265 = vunpack.c.h.b16 %v72
  %v266 = vunpack.c.l.b16 %v73
  %v267 = vunpack.c.h.b16 %v73
  %v268 = vunpack.c.l.b16 %v74
  %v269 = vunpack.c.h.b16 %v74
  %v270 = vunpack.c.l.b16 %v75
  %v271 = vunpack.c.h.b16 %v75
  %v272 = vunpack.c.l.b16 %v76
  %v273 = vunpack.c.h.b16 %v76
  %v274 = vunpack.c.l.b16 %v77
  %v275 = vunpack.c.h.b16 %v77
  %v276 = vunpack.c.l.b16 %v78
  %v277 = vunpack.c.h.b16 %v78
  %v278 = vunpack.c.l.b16 %v79
  %v279 = vunpack.c.h.b16 %v79
  %v280 = vunpack.c.l.b16 %v80
  %v281 = vunpack.c.h.b16 %v80
  %v282 = vunpack.c.l.b16 %v81
  %v283 = vunpack.c.h.b16 %v81
  %v284 = vunpack.c.l.b16 %v82
  %v285 = vunpack.c.h.b16 %v82
  %v286 = vunpack.c.l.b16 %v83
  %v287 = vunpack.c.h.b16 %v83
  %v288 = vunpack.c.l.b16 %v84
  %v289 = vunpack.c.h.b16 %v84
  %v290 = vunpack.c.l.b16 %v85
  %v291 = vunpack.c.h.b16 %v85
  %v292 = vunpack.c.l.b16 %v86
  %v293 = vunpack.c.h.b16 %v86
  %v294 = vunpack.c.l.b16 %v87
  %v295 = vunpack.c.h.b16 %v87
  %v296 = vunpack.c.l.b16 %v88
  %v297 = vunpack.c.h.b16 %v88
  %v298 = vunpack.c.l.b16 %v89
  %v299 = vunpack.c.h.b16 %v89
  %v300 = vunpack.c.l.b16 %v90
  %v301 = vunpack.c.h.b16 %v90
  %v302 = vunpack.c.l.b16 %v91
  %v303 = vunpack.c.h.b16 %v91
  %v304 = vunpack.c.l.b16 %v92
  %v305 = vunpack.c.h.b16 %v92
  %v306 = vunpack.c.l.b16 %v93
  %v307 = vunpack.c.h.b16 %v93
  %v308 = vunpack.c.l.b16 %v94
  %v309 = vunpack.c.h.b16 %v94
  %v310 = vunpack.c.l.b16 %v95
  %v311 = vunpack.c.h.b16 %v95
  %v312 = vunpack.c.l.b16 %v96
  %v313 = vunpack.c.h.b16 %v96
  %v314 = vunpack.c.l.b16 %v97
  %v315 = vunpack.c.h.b16 %v97
  %v316 = vunpack.c.l.b16 %v98
  %v317 = vunpack.c.h.b16 %v98
  %v318 = vunpack.c.l.b16 %v99
  %v319 = vunpack.c.h.b16 %v99
  %v320 = vunpack.c.l.b16 %v100
  %v321 = vunpack.c.h.b16 %v100
  %v322 = vunpack.c.l.b16 %v101
  %v323 = vunpack.c.h.b16 %v101
  %v324 = vunpack.c.l.b16 %v102
  %v325 = vunpack.c.h.b16 %v102
  %v326 = vunpack.c.l.b16 %v103
  %v327 = vunpack.c.h.b16 %v103
  %v328 = vunpack.c.l.b16 %v104
  %v329 = vunpack.c.h.b16 %v104
  %v330 = vunpack.c.l.b16 %v105
  %v331 = vunpack.c.h.b16 %v105
  %v332 = vunpack.c.l.b16 %v106
  %v333 = vunpack.c.h.b16 %v106
  %v334 = vunpack.c.l.b16 %v107
  %v335 = vunpack.c.h.b16 %v107
  %v336 = vunpack.c.l.b16 %v108
  %v337 = vunpack.c.h.b16 %v108
  %v338 = vunpack.c.l.b16 %v109
  %v339 = vunpack.c.h.b16 %v109
  %v340 = vunpack.c.l.b16 %v110
  %v341 = vunpack.c.h.b16 %v110
  %v342 = vunpack.c.l.b16 %v111
  %v343 = vunpack.c.h.b16 %v111
  %v344 = vunpack.c.l.b16 %v112
  %v345 = vunpack.c.h.b16 %v112
  %v346 = vunpack.c.l.b16 %v113
  %v347 = vunpack.c.h.b16 %v113
  %v348 = vpack.c.b16 %v228, %v220
  %v349 = vpack.c.b16 %v229, %v221
  %v350 = vpack.c.b16 %v230, %v222
  %v351 = vpack.c.b16 %v231, %v223
  %v352 = vpack.c.b16 %v232, %v224
  %v353 = vpack.c.b16 %v233, %v225
  %v354 = vpack.c.b16 %v234, %v226
  %v355 = vpack.c.b16 %v235, %v227
  %v356 = vpack.c.b16 %v244, %v236
  %v357 = vpack.c.b16 %v245, %v237
  %v358 = vpack.c.b16 %v246, %v238
  %v359 = vpack.c.b16 %v247, %v239
  %v360 = vpack.c.b16 %v248, %v240
  %v361 = vpack.c.b16 %v249, %v241
  %v362 = vpack.c.b16 %v250, %v242
  %v363 = vpack.c.b16 %v251, %v243
  %v364 = vpack.c.b16 %v260, %v252
  %v365 = vpack.c.b16 %v261, %v253
  %v366 = vpack.c.b16 %v262, %v254
  %v367 = vpack.c.b16 %v263, %v255
  %v368 = vpack.c.b16 %v264, %v256
  %v369 = vpack.c.b16 %v265, %v257
  %v370 = vpack.c.b16 %v266, %v258
  %v371 = vpack.c.b16 %v267, %v259
  %v372 = vpack.c.b16 %v276, %v268
  %v373 = vpack.c.b16 %v277, %v269
  %v374 = vpack.c.b16 %v278, %v270
  %v375 = vpack.c.b16 %v279, %v271
  %v376 = vpack.c.b16 %v280, %v272
  %v377 = vpack.c.b16 %v281, %v273
  %v378 = vpack.c.b16 %v282, %v274
  %v379 = vpack.c.b16 %v283, %v275
  %v380 = vpack.c.b16 %v292, %v284
  %v381 = vpack.c.b16 %v293, %v285
  %v382 = vpack.c.b16 %v294, %v286
  %v383 = vpack.c.b16 %v295, %v287
  %v384 = vpack.c.b16 %v296, %v288
  %v385 = vpack.c.b16 %v297, %v289
  %v386 = vpack.c.b16 %v298, %v290
  %v387 = vpack.c.b16 %v299, %v291
  %v388 = vpack.c.b16 %v308, %v300
  %v389 = vpack.c.b16 %v309, %v301
  %v390 = vpack.c.b16 %v310, %v302
  %v391 = vpack.c.b16 %v311, %v303
  %v392 = vpack.c.b16 %v312, %v304
  %v393 = vpack.c.b16 %v313, %v305
  %v394 = vpack.c.b16 %v314, %v306
  %v395 = vpack.c.b16 %v315, %v307
  %v396 = vpack.c.b16 %v324, %v316
  %v397 = vpack.c.b16 %v325, %v317
  %v398 = vpack.c.b16 %v326, %v318
  %v399 = vpack.c.b16 %v327, %v319
  %v400 = vpack.c.b16 %v328, %v320
  %v401 = vpack.c.b16 %v329, %v321
  %v402 = vpack.c.b16 %v330, %v322
  %v403 = vpack.c.b16 %v331, %v323
  %v404 = vpack.c.b16 %v340, %v332
  %v405 = vpack.c.b16 %v341, %v333
  %v406 = vpack.c.b16 %v342, %v334
  %v407 = vpack.c.b16 %v343, %v335
  %v408 = vpack.c.b16 %v344, %v336
  %v409 = vpack.c.b16 %v345, %v337
  %v410 = vpack.c.b16 %v346, %v338
  %v411 = vpack.c.b16 %v347, %v339
  %476 = vmatprep.subr.bf16.mxu0 %v349
  %477 = vmatpush1.bf16.msra.mxu0 %v348
  %478 = vmatprep.subr.bf16.mxu0 %v357
  %479 = vmatpush1.bf16.msra.mxu0 %v356
  %480 = vmatprep.subr.bf16.mxu0 %v365
  %481 = vmatpush1.bf16.msra.mxu0 %v364
  %482 = vmatprep.subr.bf16.mxu0 %v373
  %483 = vmatpush1.bf16.msra.mxu0 %v372
  %484 = vmatprep.subr.bf16.mxu0 %v381
  %485 = vmatpush1.bf16.msra.mxu0 %v380
  %486 = vmatprep.subr.bf16.mxu0 %v389
  %487 = vmatpush1.bf16.msra.mxu0 %v388
  %488 = vmatprep.subr.bf16.mxu0 %v397
  %489 = vmatpush1.bf16.msra.mxu0 %v396
  %490 = vmatprep.subr.bf16.mxu0 %v405
  %491 = vmatpush1.bf16.msra.mxu0 %v404
  %492 = vmatprep.subr.bf16.mxu0 0
  %493 = vmatpush1.bf16.msra.mxu0 0
  %494 = vmatprep.subr.bf16.mxu0 0
  %495 = vmatpush1.bf16.msra.mxu0 0
  %496 = vmatprep.subr.bf16.mxu0 0
  %497 = vmatpush1.bf16.msra.mxu0 0
  %498 = vmatprep.subr.bf16.mxu0 0
  %499 = vmatpush1.bf16.msra.mxu0 0
  %500 = vmatprep.subr.bf16.mxu0 0
  %501 = vmatpush1.bf16.msra.mxu0 0
  %502 = vmatprep.subr.bf16.mxu0 0
  %503 = vmatpush1.bf16.msra.mxu0 0
  %504 = vmatprep.subr.bf16.mxu0 0
  %505 = vmatpush1.bf16.msra.mxu0 0
  %506 = vmatprep.subr.bf16.mxu0 0
  %507 = vmatpush1.bf16.msra.mxu0 0
  %508 = vmatprep.mubr.bf16.mxu0 0
  %509 = vmatmul.mubr.bf16.gmra.mrb[0].mxu0 %v49
  %v510 = vpop.f32.mrb[0].mxu0
  %v511 = vadd.f32 %v119, %v510
  %v512 = vpop.f32.mrb[0].mxu0
  %v513 = vadd.f32 %v123, %v512
  %v514 = vpop.f32.mrb[0].mxu0
  %v515 = vadd.f32 %v119, %v514
  %v516 = vpop.f32.mrb[0].mxu0
  %v517 = vadd.f32 %v123, %v516
  %518 = vdwg.mxu0
  %519 = vmatprep.subr.bf16.mxu0 %v351
  %520 = vmatpush1.bf16.msra.mxu0 %v350
  %521 = vmatprep.subr.bf16.mxu0 %v359
  %522 = vmatpush1.bf16.msra.mxu0 %v358
  %523 = vmatprep.subr.bf16.mxu0 %v367
  %524 = vmatpush1.bf16.msra.mxu0 %v366
  %525 = vmatprep.subr.bf16.mxu0 %v375
  %526 = vmatpush1.bf16.msra.mxu0 %v374
  %527 = vmatprep.subr.bf16.mxu0 %v383
  %528 = vmatpush1.bf16.msra.mxu0 %v382
  %529 = vmatprep.subr.bf16.mxu0 %v391
  %530 = vmatpush1.bf16.msra.mxu0 %v390
  %531 = vmatprep.subr.bf16.mxu0 %v399
  %532 = vmatpush1.bf16.msra.mxu0 %v398
  %533 = vmatprep.subr.bf16.mxu0 %v407
  %534 = vmatpush1.bf16.msra.mxu0 %v406
  %535 = vmatprep.subr.bf16.mxu0 0
  %536 = vmatpush1.bf16.msra.mxu0 0
  %537 = vmatprep.subr.bf16.mxu0 0
  %538 = vmatpush1.bf16.msra.mxu0 0
  %539 = vmatprep.subr.bf16.mxu0 0
  %540 = vmatpush1.bf16.msra.mxu0 0
  %541 = vmatprep.subr.bf16.mxu0 0
  %542 = vmatpush1.bf16.msra.mxu0 0
  %543 = vmatprep.subr.bf16.mxu0 0
  %544 = vmatpush1.bf16.msra.mxu0 0
  %545 = vmatprep.subr.bf16.mxu0 0
  %546 = vmatpush1.bf16.msra.mxu0 0
  %547 = vmatprep.subr.bf16.mxu0 0
  %548 = vmatpush1.bf16.msra.mxu0 0
  %549 = vmatprep.subr.bf16.mxu0 0
  %550 = vmatpush1.bf16.msra.mxu0 0
  %551 = vmatprep.mubr.bf16.mxu0 0
  %552 = vmatmul.mubr.bf16.gmra.mrb[0].mxu0 %v49
  %v553 = vpop.f32.mrb[0].mxu0
  %v554 = vadd.f32 %v127, %v553
  %v555 = vpop.f32.mrb[0].mxu0
  %v556 = vadd.f32 %v131, %v555
  %v557 = vpop.f32.mrb[0].mxu0
  %v558 = vadd.f32 %v127, %v557
  %v559 = vpop.f32.mrb[0].mxu0
  %v560 = vadd.f32 %v131, %v559
  %561 = vdwg.mxu0
  %562 = vmatprep.subr.bf16.mxu0 %v353
  %563 = vmatpush1.bf16.msra.mxu0 %v352
  %564 = vmatprep.subr.bf16.mxu0 %v361
  %565 = vmatpush1.bf16.msra.mxu0 %v360
  %566 = vmatprep.subr.bf16.mxu0 %v369
  %567 = vmatpush1.bf16.msra.mxu0 %v368
  %568 = vmatprep.subr.bf16.mxu0 %v377
  %569 = vmatpush1.bf16.msra.mxu0 %v376
  %570 = vmatprep.subr.bf16.mxu0 %v385
  %571 = vmatpush1.bf16.msra.mxu0 %v384
  %572 = vmatprep.subr.bf16.mxu0 %v393
  %573 = vmatpush1.bf16.msra.mxu0 %v392
  %574 = vmatprep.subr.bf16.mxu0 %v401
  %575 = vmatpush1.bf16.msra.mxu0 %v400
  %576 = vmatprep.subr.bf16.mxu0 %v409
  %577 = vmatpush1.bf16.msra.mxu0 %v408
  %578 = vmatprep.subr.bf16.mxu0 0
  %579 = vmatpush1.bf16.msra.mxu0 0
  %580 = vmatprep.subr.bf16.mxu0 0
  %581 = vmatpush1.bf16.msra.mxu0 0
  %582 = vmatprep.subr.bf16.mxu0 0
  %583 = vmatpush1.bf16.msra.mxu0 0
  %584 = vmatprep.subr.bf16.mxu0 0
  %585 = vmatpush1.bf16.msra.mxu0 0
  %586 = vmatprep.subr.bf16.mxu0 0
  %587 = vmatpush1.bf16.msra.mxu0 0
  %588 = vmatprep.subr.bf16.mxu0 0
  %589 = vmatpush1.bf16.msra.mxu0 0
  %590 = vmatprep.subr.bf16.mxu0 0
  %591 = vmatpush1.bf16.msra.mxu0 0
  %592 = vmatprep.subr.bf16.mxu0 0
  %593 = vmatpush1.bf16.msra.mxu0 0
  %594 = vmatprep.mubr.bf16.mxu0 0
  %595 = vmatmul.mubr.bf16.gmra.mrb[0].mxu0 %v49
  %v596 = vpop.f32.mrb[0].mxu0
  %v597 = vadd.f32 %v135, %v596
  %v598 = vpop.f32.mrb[0].mxu0
  %v599 = vadd.f32 %v139, %v598
  %v600 = vpop.f32.mrb[0].mxu0
  %v601 = vadd.f32 %v135, %v600
  %v602 = vpop.f32.mrb[0].mxu0
  %v603 = vadd.f32 %v139, %v602
  %604 = vdwg.mxu0
  %605 = vmatprep.subr.bf16.mxu0 %v355
  %606 = vmatpush1.bf16.msra.mxu0 %v354
  %607 = vmatprep.subr.bf16.mxu0 %v363
  %608 = vmatpush1.bf16.msra.mxu0 %v362
  %609 = vmatprep.subr.bf16.mxu0 %v371
  %610 = vmatpush1.bf16.msra.mxu0 %v370
  %611 = vmatprep.subr.bf16.mxu0 %v379
  %612 = vmatpush1.bf16.msra.mxu0 %v378
  %613 = vmatprep.subr.bf16.mxu0 %v387
  %614 = vmatpush1.bf16.msra.mxu0 %v386
  %615 = vmatprep.subr.bf16.mxu0 %v395
  %616 = vmatpush1.bf16.msra.mxu0 %v394
  %617 = vmatprep.subr.bf16.mxu0 %v403
  %618 = vmatpush1.bf16.msra.mxu0 %v402
  %619 = vmatprep.subr.bf16.mxu0 %v411
  %620 = vmatpush1.bf16.msra.mxu0 %v410
  %621 = vmatprep.subr.bf16.mxu0 0
  %622 = vmatpush1.bf16.msra.mxu0 0
  %623 = vmatprep.subr.bf16.mxu0 0
  %624 = vmatpush1.bf16.msra.mxu0 0
  %625 = vmatprep.subr.bf16.mxu0 0
  %626 = vmatpush1.bf16.msra.mxu0 0
  %627 = vmatprep.subr.bf16.mxu0 0
  %628 = vmatpush1.bf16.msra.mxu0 0
  %629 = vmatprep.subr.bf16.mxu0 0
  %630 = vmatpush1.bf16.msra.mxu0 0
  %631 = vmatprep.subr.bf16.mxu0 0
  %632 = vmatpush1.bf16.msra.mxu0 0
  %633 = vmatprep.subr.bf16.mxu0 0
  %634 = vmatpush1.bf16.msra.mxu0 0
  %635 = vmatprep.subr.bf16.mxu0 0
  %636 = vmatpush1.bf16.msra.mxu0 0
  %637 = vmatprep.mubr.bf16.mxu0 0
  %638 = vmatmul.mubr.bf16.gmra.mrb[0].mxu0 %v49
  %v639 = vpop.f32.mrb[0].mxu0
  %v640 = vadd.f32 %v143, %v639
  %v641 = vpop.f32.mrb[0].mxu0
  %v642 = vadd.f32 %v147, %v641
  %v643 = vpop.f32.mrb[0].mxu0
  %v644 = vadd.f32 %v143, %v643
  %v645 = vpop.f32.mrb[0].mxu0
  %v646 = vadd.f32 %v147, %v645
  %647 = vdwg.mxu0
  %vm648 = vcmp.gt.f32.partialorder %v511, 0.0
  %vm649 = vcmp.gt.f32.partialorder %v513, 0.0
  %vm650 = vcmp.gt.f32.partialorder %v554, 0.0
  %vm651 = vcmp.gt.f32.partialorder %v556, 0.0
  %vm652 = vcmp.gt.f32.partialorder %v597, 0.0
  %vm653 = vcmp.gt.f32.partialorder %v599, 0.0
  %vm654 = vcmp.gt.f32.partialorder %v640, 0.0
  %vm655 = vcmp.gt.f32.partialorder %v642, 0.0
  %vm656 = vcmp.gt.f32.partialorder %v515, 0.0
  %vm657 = vcmp.gt.f32.partialorder %v517, 0.0
  %vm658 = vcmp.gt.f32.partialorder %v558, 0.0
  %vm659 = vcmp.gt.f32.partialorder %v560, 0.0
  %vm660 = vcmp.gt.f32.partialorder %v601, 0.0
  %vm661 = vcmp.gt.f32.partialorder %v603, 0.0
  %vm662 = vcmp.gt.f32.partialorder %v644, 0.0
  %vm663 = vcmp.gt.f32.partialorder %v646, 0.0
  %v664 = vmul.f32 %v511, 0.01
  %v665 = vmul.f32 %v513, 0.01
  %v666 = vmul.f32 %v554, 0.01
  %v667 = vmul.f32 %v556, 0.01
  %v668 = vmul.f32 %v597, 0.01
  %v669 = vmul.f32 %v599, 0.01
  %v670 = vmul.f32 %v640, 0.01
  %v671 = vmul.f32 %v642, 0.01
  %v672 = vmul.f32 %v515, 0.01
  %v673 = vmul.f32 %v517, 0.01
  %v674 = vmul.f32 %v558, 0.01
  %v675 = vmul.f32 %v560, 0.01
  %v676 = vmul.f32 %v601, 0.01
  %v677 = vmul.f32 %v603, 0.01
  %v678 = vmul.f32 %v644, 0.01
  %v679 = vmul.f32 %v646, 0.01
  %v680 = vsel %vm648, %v511, %v664
  %v681 = vsel %vm649, %v513, %v665
  %v682 = vsel %vm650, %v554, %v666
  %v683 = vsel %vm651, %v556, %v667
  %v684 = vsel %vm652, %v597, %v668
  %v685 = vsel %vm653, %v599, %v669
  %v686 = vsel %vm654, %v640, %v670
  %v687 = vsel %vm655, %v642, %v671
  %v688 = vsel %vm656, %v515, %v672
  %v689 = vsel %vm657, %v517, %v673
  %v690 = vsel %vm658, %v558, %v674
  %v691 = vsel %vm659, %v560, %v675
  %v692 = vsel %vm660, %v601, %v676
  %v693 = vsel %vm661, %v603, %v677
  %v694 = vsel %vm662, %v644, %v678
  %v695 = vsel %vm663, %v646, %v679
  %v696 = vpack.c.bf16 %v688, %v680
  %v697 = vpack.c.bf16 %v689, %v681
  %v698 = vpack.c.bf16 %v690, %v682
  %v699 = vpack.c.bf16 %v691, %v683
  %v700 = vpack.c.bf16 %v692, %v684
  %v701 = vpack.c.bf16 %v693, %v685
  %v702 = vpack.c.bf16 %v694, %v686
  %v703 = vpack.c.bf16 %v695, %v687
  %v704 = vld [vmem:[%s5] sm:$0xf]
  %v705 = vld [vmem:[%s5 + $0x4] sm:$0xf]
  %v706 = vld [vmem:[%s5 + $0x8] sm:$0xf]
  %v707 = vld [vmem:[%s5 + $0xc] sm:$0xf]
  %v708 = vld [vmem:[%s5 + $0x10] sm:$0xf]
  %v709 = vld [vmem:[%s5 + $0x14] sm:$0xf]
  %v710 = vld [vmem:[%s5 + $0x18] sm:$0xf]
  %v711 = vld [vmem:[%s5 + $0x1c] sm:$0xf]
  %v712 = vld [vmem:[%s5 + $0x20] sm:$0xf]
  %v713 = vld [vmem:[%s5 + $0x24] sm:$0xf]
  %v714 = vld [vmem:[%s5 + $0x28] sm:$0xf]
  %v715 = vld [vmem:[%s5 + $0x2c] sm:$0xf]
  %v716 = vld [vmem:[%s5 + $0x30] sm:$0xf]
  %v717 = vld [vmem:[%s5 + $0x34] sm:$0xf]
  %v718 = vld [vmem:[%s5 + $0x38] sm:$0xf]
  %v719 = vld [vmem:[%s5 + $0x3c] sm:$0xf]
  %v720 = vld [vmem:[%s5 + $0x40] sm:$0xf]
  %v721 = vld [vmem:[%s5 + $0x44] sm:$0xf]
  %v722 = vld [vmem:[%s5 + $0x48] sm:$0xf]
  %v723 = vld [vmem:[%s5 + $0x4c] sm:$0xf]
  %v724 = vld [vmem:[%s5 + $0x50] sm:$0xf]
  %v725 = vld [vmem:[%s5 + $0x54] sm:$0xf]
  %v726 = vld [vmem:[%s5 + $0x58] sm:$0xf]
  %v727 = vld [vmem:[%s5 + $0x5c] sm:$0xf]
  %v728 = vld [vmem:[%s5 + $0x60] sm:$0xf]
  %v729 = vld [vmem:[%s5 + $0x64] sm:$0xf]
  %v730 = vld [vmem:[%s5 + $0x68] sm:$0xf]
  %v731 = vld [vmem:[%s5 + $0x6c] sm:$0xf]
  %v732 = vld [vmem:[%s5 + $0x70] sm:$0xf]
  %v733 = vld [vmem:[%s5 + $0x74] sm:$0xf]
  %v734 = vld [vmem:[%s5 + $0x78] sm:$0xf]
  %v735 = vld [vmem:[%s5 + $0x7c] sm:$0xf]
  %v736 = vld [vmem:[%s5 + $0x80] sm:$0xf]
  %v737 = vld [vmem:[%s5 + $0x84] sm:$0xf]
  %v738 = vld [vmem:[%s5 + $0x88] sm:$0xf]
  %v739 = vld [vmem:[%s5 + $0x8c] sm:$0xf]
  %v740 = vld [vmem:[%s5 + $0x90] sm:$0xf]
  %v741 = vld [vmem:[%s5 + $0x94] sm:$0xf]
  %v742 = vld [vmem:[%s5 + $0x98] sm:$0xf]
  %v743 = vld [vmem:[%s5 + $0x9c] sm:$0xf]
  %v744 = vld [vmem:[%s5 + $0xa0] sm:$0xf]
  %v745 = vld [vmem:[%s5 + $0xa4] sm:$0xf]
  %v746 = vld [vmem:[%s5 + $0xa8] sm:$0xf]
  %v747 = vld [vmem:[%s5 + $0xac] sm:$0xf]
  %v748 = vld [vmem:[%s5 + $0xb0] sm:$0xf]
  %v749 = vld [vmem:[%s5 + $0xb4] sm:$0xf]
  %v750 = vld [vmem:[%s5 + $0xb8] sm:$0xf]
  %v751 = vld [vmem:[%s5 + $0xbc] sm:$0xf]
  %v752 = vld [vmem:[%s5 + $0xc0] sm:$0xf]
  %v753 = vld [vmem:[%s5 + $0xc4] sm:$0xf]
  %v754 = vld [vmem:[%s5 + $0xc8] sm:$0xf]
  %v755 = vld [vmem:[%s5 + $0xcc] sm:$0xf]
  %v756 = vld [vmem:[%s5 + $0xd0] sm:$0xf]
  %v757 = vld [vmem:[%s5 + $0xd4] sm:$0xf]
  %v758 = vld [vmem:[%s5 + $0xd8] sm:$0xf]
  %v759 = vld [vmem:[%s5 + $0xdc] sm:$0xf]
  %v760 = vld [vmem:[%s5 + $0xe0] sm:$0xf]
  %v761 = vld [vmem:[%s5 + $0xe4] sm:$0xf]
  %v762 = vld [vmem:[%s5 + $0xe8] sm:$0xf]
  %v763 = vld [vmem:[%s5 + $0xec] sm:$0xf]
  %v764 = vld [vmem:[%s5 + $0xf0] sm:$0xf]
  %v765 = vld [vmem:[%s5 + $0xf4] sm:$0xf]
  %v766 = vld [vmem:[%s5 + $0xf8] sm:$0xf]
  %v767 = vld [vmem:[%s5 + $0xfc] sm:$0xf]
  %v768 = vld [vmem:[%s5 + $0x100] sm:$0xf]
  %v769 = vld [vmem:[%s5 + $0x104] sm:$0xf]
  %v770 = vld [vmem:[%s5 + $0x108] sm:$0xf]
  %v771 = vld [vmem:[%s5 + $0x10c] sm:$0xf]
  %v772 = vld [vmem:[%s5 + $0x110] sm:$0xf]
  %v773 = vld [vmem:[%s5 + $0x114] sm:$0xf]
  %v774 = vld [vmem:[%s5 + $0x118] sm:$0xf]
  %v775 = vld [vmem:[%s5 + $0x11c] sm:$0xf]
  %v776 = vld [vmem:[%s5 + $0x120] sm:$0xf]
  %v777 = vld [vmem:[%s5 + $0x124] sm:$0xf]
  %v778 = vld [vmem:[%s5 + $0x128] sm:$0xf]
  %v779 = vld [vmem:[%s5 + $0x12c] sm:$0xf]
  %v780 = vld [vmem:[%s5 + $0x130] sm:$0xf]
  %v781 = vld [vmem:[%s5 + $0x134] sm:$0xf]
  %v782 = vld [vmem:[%s5 + $0x138] sm:$0xf]
  %v783 = vld [vmem:[%s5 + $0x13c] sm:$0xf]
  %v784 = vld [vmem:[%s5 + $0x140] sm:$0xf]
  %v785 = vld [vmem:[%s5 + $0x144] sm:$0xf]
  %v786 = vld [vmem:[%s5 + $0x148] sm:$0xf]
  %v787 = vld [vmem:[%s5 + $0x14c] sm:$0xf]
  %v788 = vld [vmem:[%s5 + $0x150] sm:$0xf]
  %v789 = vld [vmem:[%s5 + $0x154] sm:$0xf]
  %v790 = vld [vmem:[%s5 + $0x158] sm:$0xf]
  %v791 = vld [vmem:[%s5 + $0x15c] sm:$0xf]
  %v792 = vld [vmem:[%s5 + $0x160] sm:$0xf]
  %v793 = vld [vmem:[%s5 + $0x164] sm:$0xf]
  %v794 = vld [vmem:[%s5 + $0x168] sm:$0xf]
  %v795 = vld [vmem:[%s5 + $0x16c] sm:$0xf]
  %v796 = vld [vmem:[%s5 + $0x170] sm:$0xf]
  %v797 = vld [vmem:[%s5 + $0x174] sm:$0xf]
  %v798 = vld [vmem:[%s5 + $0x178] sm:$0xf]
  %v799 = vld [vmem:[%s5 + $0x17c] sm:$0xf]
  %v800 = vld [vmem:[%s5 + $0x180] sm:$0xf]
  %v801 = vld [vmem:[%s5 + $0x184] sm:$0xf]
  %v802 = vld [vmem:[%s5 + $0x188] sm:$0xf]
  %v803 = vld [vmem:[%s5 + $0x18c] sm:$0xf]
  %v804 = vld [vmem:[%s5 + $0x190] sm:$0xf]
  %v805 = vld [vmem:[%s5 + $0x194] sm:$0xf]
  %v806 = vld [vmem:[%s5 + $0x198] sm:$0xf]
  %v807 = vld [vmem:[%s5 + $0x19c] sm:$0xf]
  %v808 = vld [vmem:[%s5 + $0x1a0] sm:$0xf]
  %v809 = vld [vmem:[%s5 + $0x1a4] sm:$0xf]
  %v810 = vld [vmem:[%s5 + $0x1a8] sm:$0xf]
  %v811 = vld [vmem:[%s5 + $0x1ac] sm:$0xf]
  %v812 = vld [vmem:[%s5 + $0x1b0] sm:$0xf]
  %v813 = vld [vmem:[%s5 + $0x1b4] sm:$0xf]
  %v814 = vld [vmem:[%s5 + $0x1b8] sm:$0xf]
  %v815 = vld [vmem:[%s5 + $0x1bc] sm:$0xf]
  %v816 = vld [vmem:[%s5 + $0x1c0] sm:$0xf]
  %v817 = vld [vmem:[%s5 + $0x1c4] sm:$0xf]
  %v818 = vld [vmem:[%s5 + $0x1c8] sm:$0xf]
  %v819 = vld [vmem:[%s5 + $0x1cc] sm:$0xf]
  %v820 = vld [vmem:[%s5 + $0x1d0] sm:$0xf]
  %v821 = vld [vmem:[%s5 + $0x1d4] sm:$0xf]
  %v822 = vld [vmem:[%s5 + $0x1d8] sm:$0xf]
  %v823 = vld [vmem:[%s5 + $0x1dc] sm:$0xf]
  %v824 = vld [vmem:[%s5 + $0x1e0] sm:$0xf]
  %v825 = vld [vmem:[%s5 + $0x1e4] sm:$0xf]
  %v826 = vld [vmem:[%s5 + $0x1e8] sm:$0xf]
  %v827 = vld [vmem:[%s5 + $0x1ec] sm:$0xf]
  %v828 = vld [vmem:[%s5 + $0x1f0] sm:$0xf]
  %v829 = vld [vmem:[%s5 + $0x1f4] sm:$0xf]
  %v830 = vld [vmem:[%s5 + $0x1f8] sm:$0xf]
  %v831 = vld [vmem:[%s5 + $0x1fc] sm:$0xf]
  %v832 = vld [vmem:[%s6] sm:$0x1]
  %v834 = vlaneseq
  %v835 = vshrl.u32 %v834, 7
  %v836 = vsub.s32 0, %v835
  %v837 = vrot.slane %v832, %v836
  %v967 = vunpack.c.l.b16 %v704
  %v968 = vunpack.c.l.b16 %v705
  %v969 = vunpack.c.l.b16 %v706
  %v970 = vunpack.c.l.b16 %v707
  %v971 = vunpack.c.l.b16 %v708
  %v972 = vunpack.c.l.b16 %v709
  %v973 = vunpack.c.l.b16 %v710
  %v974 = vunpack.c.l.b16 %v711
  %v975 = vunpack.c.l.b16 %v712
  %v976 = vunpack.c.l.b16 %v713
  %v977 = vunpack.c.l.b16 %v714
  %v978 = vunpack.c.l.b16 %v715
  %v979 = vunpack.c.l.b16 %v716
  %v980 = vunpack.c.l.b16 %v717
  %v981 = vunpack.c.l.b16 %v718
  %v982 = vunpack.c.l.b16 %v719
  %v983 = vunpack.c.l.b16 %v720
  %v984 = vunpack.c.l.b16 %v721
  %v985 = vunpack.c.l.b16 %v722
  %v986 = vunpack.c.l.b16 %v723
  %v987 = vunpack.c.l.b16 %v724
  %v988 = vunpack.c.l.b16 %v725
  %v989 = vunpack.c.l.b16 %v726
  %v990 = vunpack.c.l.b16 %v727
  %v991 = vunpack.c.l.b16 %v728
  %v992 = vunpack.c.l.b16 %v729
  %v993 = vunpack.c.l.b16 %v730
  %v994 = vunpack.c.l.b16 %v731
  %v995 = vunpack.c.l.b16 %v732
  %v996 = vunpack.c.l.b16 %v733
  %v997 = vunpack.c.l.b16 %v734
  %v998 = vunpack.c.l.b16 %v735
  %v999 = vunpack.c.l.b16 %v736
  %v1000 = vunpack.c.l.b16 %v737
  %v1001 = vunpack.c.l.b16 %v738
  %v1002 = vunpack.c.l.b16 %v739
  %v1003 = vunpack.c.l.b16 %v740
  %v1004 = vunpack.c.l.b16 %v741
  %v1005 = vunpack.c.l.b16 %v742
  %v1006 = vunpack.c.l.b16 %v743
  %v1007 = vunpack.c.l.b16 %v744
  %v1008 = vunpack.c.l.b16 %v745
  %v1009 = vunpack.c.l.b16 %v746
  %v1010 = vunpack.c.l.b16 %v747
  %v1011 = vunpack.c.l.b16 %v748
  %v1012 = vunpack.c.l.b16 %v749
  %v1013 = vunpack.c.l.b16 %v750
  %v1014 = vunpack.c.l.b16 %v751
  %v1015 = vunpack.c.l.b16 %v752
  %v1016 = vunpack.c.l.b16 %v753
  %v1017 = vunpack.c.l.b16 %v754
  %v1018 = vunpack.c.l.b16 %v755
  %v1019 = vunpack.c.l.b16 %v756
  %v1020 = vunpack.c.l.b16 %v757
  %v1021 = vunpack.c.l.b16 %v758
  %v1022 = vunpack.c.l.b16 %v759
  %v1023 = vunpack.c.l.b16 %v760
  %v1024 = vunpack.c.l.b16 %v761
  %v1025 = vunpack.c.l.b16 %v762
  %v1026 = vunpack.c.l.b16 %v763
  %v1027 = vunpack.c.l.b16 %v764
  %v1028 = vunpack.c.l.b16 %v765
  %v1029 = vunpack.c.l.b16 %v766
  %v1030 = vunpack.c.l.b16 %v767
  %v1031 = vunpack.c.l.b16 %v768
  %v1032 = vunpack.c.l.b16 %v769
  %v1033 = vunpack.c.l.b16 %v770
  %v1034 = vunpack.c.l.b16 %v771
  %v1035 = vunpack.c.l.b16 %v772
  %v1036 = vunpack.c.l.b16 %v773
  %v1037 = vunpack.c.l.b16 %v774
  %v1038 = vunpack.c.l.b16 %v775
  %v1039 = vunpack.c.l.b16 %v776
  %v1040 = vunpack.c.l.b16 %v777
  %v1041 = vunpack.c.l.b16 %v778
  %v1042 = vunpack.c.l.b16 %v779
  %v1043 = vunpack.c.l.b16 %v780
  %v1044 = vunpack.c.l.b16 %v781
  %v1045 = vunpack.c.l.b16 %v782
  %v1046 = vunpack.c.l.b16 %v783
  %v1047 = vunpack.c.l.b16 %v784
  %v1048 = vunpack.c.l.b16 %v785
  %v1049 = vunpack.c.l.b16 %v786
  %v1050 = vunpack.c.l.b16 %v787
  %v1051 = vunpack.c.l.b16 %v788
  %v1052 = vunpack.c.l.b16 %v789
  %v1053 = vunpack.c.l.b16 %v790
  %v1054 = vunpack.c.l.b16 %v791
  %v1055 = vunpack.c.l.b16 %v792
  %v1056 = vunpack.c.l.b16 %v793
  %v1057 = vunpack.c.l.b16 %v794
  %v1058 = vunpack.c.l.b16 %v795
  %v1059 = vunpack.c.l.b16 %v796
  %v1060 = vunpack.c.l.b16 %v797
  %v1061 = vunpack.c.l.b16 %v798
  %v1062 = vunpack.c.l.b16 %v799
  %v1063 = vunpack.c.l.b16 %v800
  %v1064 = vunpack.c.l.b16 %v801
  %v1065 = vunpack.c.l.b16 %v802
  %v1066 = vunpack.c.l.b16 %v803
  %v1067 = vunpack.c.l.b16 %v804
  %v1068 = vunpack.c.l.b16 %v805
  %v1069 = vunpack.c.l.b16 %v806
  %v1070 = vunpack.c.l.b16 %v807
  %v1071 = vunpack.c.l.b16 %v808
  %v1072 = vunpack.c.l.b16 %v809
  %v1073 = vunpack.c.l.b16 %v810
  %v1074 = vunpack.c.l.b16 %v811
  %v1075 = vunpack.c.l.b16 %v812
  %v1076 = vunpack.c.l.b16 %v813
  %v1077 = vunpack.c.l.b16 %v814
  %v1078 = vunpack.c.l.b16 %v815
  %v1079 = vunpack.c.l.b16 %v816
  %v1080 = vunpack.c.l.b16 %v817
  %v1081 = vunpack.c.l.b16 %v818
  %v1082 = vunpack.c.l.b16 %v819
  %v1083 = vunpack.c.l.b16 %v820
  %v1084 = vunpack.c.l.b16 %v821
  %v1085 = vunpack.c.l.b16 %v822
  %v1086 = vunpack.c.l.b16 %v823
  %v1087 = vunpack.c.l.b16 %v824
  %v1088 = vunpack.c.l.b16 %v825
  %v1089 = vunpack.c.l.b16 %v826
  %v1090 = vunpack.c.l.b16 %v827
  %v1091 = vunpack.c.l.b16 %v828
  %v1092 = vunpack.c.l.b16 %v829
  %v1093 = vunpack.c.l.b16 %v830
  %v1094 = vunpack.c.l.b16 %v831
  %v1095 = vpack.c.b16 %v968, %v967
  %v1096 = vpack.c.b16 %v970, %v969
  %v1097 = vpack.c.b16 %v972, %v971
  %v1098 = vpack.c.b16 %v974, %v973
  %v1099 = vpack.c.b16 %v976, %v975
  %v1100 = vpack.c.b16 %v978, %v977
  %v1101 = vpack.c.b16 %v980, %v979
  %v1102 = vpack.c.b16 %v982, %v981
  %v1103 = vpack.c.b16 %v984, %v983
  %v1104 = vpack.c.b16 %v986, %v985
  %v1105 = vpack.c.b16 %v988, %v987
  %v1106 = vpack.c.b16 %v990, %v989
  %v1107 = vpack.c.b16 %v992, %v991
  %v1108 = vpack.c.b16 %v994, %v993
  %v1109 = vpack.c.b16 %v996, %v995
  %v1110 = vpack.c.b16 %v998, %v997
  %v1111 = vpack.c.b16 %v1000, %v999
  %v1112 = vpack.c.b16 %v1002, %v1001
  %v1113 = vpack.c.b16 %v1004, %v1003
  %v1114 = vpack.c.b16 %v1006, %v1005
  %v1115 = vpack.c.b16 %v1008, %v1007
  %v1116 = vpack.c.b16 %v1010, %v1009
  %v1117 = vpack.c.b16 %v1012, %v1011
  %v1118 = vpack.c.b16 %v1014, %v1013
  %v1119 = vpack.c.b16 %v1016, %v1015
  %v1120 = vpack.c.b16 %v1018, %v1017
  %v1121 = vpack.c.b16 %v1020, %v1019
  %v1122 = vpack.c.b16 %v1022, %v1021
  %v1123 = vpack.c.b16 %v1024, %v1023
  %v1124 = vpack.c.b16 %v1026, %v1025
  %v1125 = vpack.c.b16 %v1028, %v1027
  %v1126 = vpack.c.b16 %v1030, %v1029
  %v1127 = vpack.c.b16 %v1032, %v1031
  %v1128 = vpack.c.b16 %v1034, %v1033
  %v1129 = vpack.c.b16 %v1036, %v1035
  %v1130 = vpack.c.b16 %v1038, %v1037
  %v1131 = vpack.c.b16 %v1040, %v1039
  %v1132 = vpack.c.b16 %v1042, %v1041
  %v1133 = vpack.c.b16 %v1044, %v1043
  %v1134 = vpack.c.b16 %v1046, %v1045
  %v1135 = vpack.c.b16 %v1048, %v1047
  %v1136 = vpack.c.b16 %v1050, %v1049
  %v1137 = vpack.c.b16 %v1052, %v1051
  %v1138 = vpack.c.b16 %v1054, %v1053
  %v1139 = vpack.c.b16 %v1056, %v1055
  %v1140 = vpack.c.b16 %v1058, %v1057
  %v1141 = vpack.c.b16 %v1060, %v1059
  %v1142 = vpack.c.b16 %v1062, %v1061
  %v1143 = vpack.c.b16 %v1064, %v1063
  %v1144 = vpack.c.b16 %v1066, %v1065
  %v1145 = vpack.c.b16 %v1068, %v1067
  %v1146 = vpack.c.b16 %v1070, %v1069
  %v1147 = vpack.c.b16 %v1072, %v1071
  %v1148 = vpack.c.b16 %v1074, %v1073
  %v1149 = vpack.c.b16 %v1076, %v1075
  %v1150 = vpack.c.b16 %v1078, %v1077
  %v1151 = vpack.c.b16 %v1080, %v1079
  %v1152 = vpack.c.b16 %v1082, %v1081
  %v1153 = vpack.c.b16 %v1084, %v1083
  %v1154 = vpack.c.b16 %v1086, %v1085
  %v1155 = vpack.c.b16 %v1088, %v1087
  %v1156 = vpack.c.b16 %v1090, %v1089
  %v1157 = vpack.c.b16 %v1092, %v1091
  %v1158 = vpack.c.b16 %v1094, %v1093
  %1223 = vmatprep.subr.bf16.mxu0 0
  %1224 = vmatpush1.bf16.msra.mxu0 %v1095
  %1225 = vmatprep.subr.bf16.mxu0 0
  %1226 = vmatpush1.bf16.msra.mxu0 %v1096
  %1227 = vmatprep.subr.bf16.mxu0 0
  %1228 = vmatpush1.bf16.msra.mxu0 %v1097
  %1229 = vmatprep.subr.bf16.mxu0 0
  %1230 = vmatpush1.bf16.msra.mxu0 %v1098
  %1231 = vmatprep.subr.bf16.mxu0 0
  %1232 = vmatpush1.bf16.msra.mxu0 %v1099
  %1233 = vmatprep.subr.bf16.mxu0 0
  %1234 = vmatpush1.bf16.msra.mxu0 %v1100
  %1235 = vmatprep.subr.bf16.mxu0 0
  %1236 = vmatpush1.bf16.msra.mxu0 %v1101
  %1237 = vmatprep.subr.bf16.mxu0 0
  %1238 = vmatpush1.bf16.msra.mxu0 %v1102
  %1239 = vmatprep.subr.bf16.mxu0 0
  %1240 = vmatpush1.bf16.msra.mxu0 %v1103
  %1241 = vmatprep.subr.bf16.mxu0 0
  %1242 = vmatpush1.bf16.msra.mxu0 %v1104
  %1243 = vmatprep.subr.bf16.mxu0 0
  %1244 = vmatpush1.bf16.msra.mxu0 %v1105
  %1245 = vmatprep.subr.bf16.mxu0 0
  %1246 = vmatpush1.bf16.msra.mxu0 %v1106
  %1247 = vmatprep.subr.bf16.mxu0 0
  %1248 = vmatpush1.bf16.msra.mxu0 %v1107
  %1249 = vmatprep.subr.bf16.mxu0 0
  %1250 = vmatpush1.bf16.msra.mxu0 %v1108
  %1251 = vmatprep.subr.bf16.mxu0 0
  %1252 = vmatpush1.bf16.msra.mxu0 %v1109
  %1253 = vmatprep.subr.bf16.mxu0 0
  %1254 = vmatpush1.bf16.msra.mxu0 %v1110
  %1255 = vmatprep.mubr.bf16.mxu0 %v697
  %1256 = vmatmul.mubr.bf16.gmra.mrb[0].mxu0 %v696
  %v1257 = vpop.f32.mrb[0].mxu0
  %v1258 = vadd.f32 %v837, %v1257
  %v1259 = vpop.f32.mrb[0].mxu0
  %v1260 = vpop.f32.mrb[0].mxu0
  %v1261 = vadd.f32 %v837, %v1260
  %v1262 = vpop.f32.mrb[0].mxu0
  %1263 = vdwg.mxu0
  %1264 = vmatprep.subr.bf16.mxu0 0
  %1265 = vmatpush1.bf16.msra.mxu0 %v1111
  %1266 = vmatprep.subr.bf16.mxu0 0
  %1267 = vmatpush1.bf16.msra.mxu0 %v1112
  %1268 = vmatprep.subr.bf16.mxu0 0
  %1269 = vmatpush1.bf16.msra.mxu0 %v1113
  %1270 = vmatprep.subr.bf16.mxu0 0
  %1271 = vmatpush1.bf16.msra.mxu0 %v1114
  %1272 = vmatprep.subr.bf16.mxu0 0
  %1273 = vmatpush1.bf16.msra.mxu0 %v1115
  %1274 = vmatprep.subr.bf16.mxu0 0
  %1275 = vmatpush1.bf16.msra.mxu0 %v1116
  %1276 = vmatprep.subr.bf16.mxu0 0
  %1277 = vmatpush1.bf16.msra.mxu0 %v1117
  %1278 = vmatprep.subr.bf16.mxu0 0
  %1279 = vmatpush1.bf16.msra.mxu0 %v1118
  %1280 = vmatprep.subr.bf16.mxu0 0
  %1281 = vmatpush1.bf16.msra.mxu0 %v1119
  %1282 = vmatprep.subr.bf16.mxu0 0
  %1283 = vmatpush1.bf16.msra.mxu0 %v1120
  %1284 = vmatprep.subr.bf16.mxu0 0
  %1285 = vmatpush1.bf16.msra.mxu0 %v1121
  %1286 = vmatprep.subr.bf16.mxu0 0
  %1287 = vmatpush1.bf16.msra.mxu0 %v1122
  %1288 = vmatprep.subr.bf16.mxu0 0
  %1289 = vmatpush1.bf16.msra.mxu0 %v1123
  %1290 = vmatprep.subr.bf16.mxu0 0
  %1291 = vmatpush1.bf16.msra.mxu0 %v1124
  %1292 = vmatprep.subr.bf16.mxu0 0
  %1293 = vmatpush1.bf16.msra.mxu0 %v1125
  %1294 = vmatprep.subr.bf16.mxu0 0
  %1295 = vmatpush1.bf16.msra.mxu0 %v1126
  %1296 = vmatprep.mubr.bf16.mxu0 %v699
  %1297 = vmatmul.mubr.bf16.gmra.mrb[0].mxu0 %v698
  %v1298 = vpop.f32.mrb[0].mxu0
  %v1299 = vadd.f32 %v1258, %v1298
  %v1300 = vpop.f32.mrb[0].mxu0
  %v1301 = vpop.f32.mrb[0].mxu0
  %v1302 = vadd.f32 %v1261, %v1301
  %v1303 = vpop.f32.mrb[0].mxu0
  %1304 = vdwg.mxu0
  %1305 = vmatprep.subr.bf16.mxu0 0
  %1306 = vmatpush1.bf16.msra.mxu0 %v1127
  %1307 = vmatprep.subr.bf16.mxu0 0
  %1308 = vmatpush1.bf16.msra.mxu0 %v1128
  %1309 = vmatprep.subr.bf16.mxu0 0
  %1310 = vmatpush1.bf16.msra.mxu0 %v1129
  %1311 = vmatprep.subr.bf16.mxu0 0
  %1312 = vmatpush1.bf16.msra.mxu0 %v1130
  %1313 = vmatprep.subr.bf16.mxu0 0
  %1314 = vmatpush1.bf16.msra.mxu0 %v1131
  %1315 = vmatprep.subr.bf16.mxu0 0
  %1316 = vmatpush1.bf16.msra.mxu0 %v1132
  %1317 = vmatprep.subr.bf16.mxu0 0
  %1318 = vmatpush1.bf16.msra.mxu0 %v1133
  %1319 = vmatprep.subr.bf16.mxu0 0
  %1320 = vmatpush1.bf16.msra.mxu0 %v1134
  %1321 = vmatprep.subr.bf16.mxu0 0
  %1322 = vmatpush1.bf16.msra.mxu0 %v1135
  %1323 = vmatprep.subr.bf16.mxu0 0
  %1324 = vmatpush1.bf16.msra.mxu0 %v1136
  %1325 = vmatprep.subr.bf16.mxu0 0
  %1326 = vmatpush1.bf16.msra.mxu0 %v1137
  %1327 = vmatprep.subr.bf16.mxu0 0
  %1328 = vmatpush1.bf16.msra.mxu0 %v1138
  %1329 = vmatprep.subr.bf16.mxu0 0
  %1330 = vmatpush1.bf16.msra.mxu0 %v1139
  %1331 = vmatprep.subr.bf16.mxu0 0
  %1332 = vmatpush1.bf16.msra.mxu0 %v1140
  %1333 = vmatprep.subr.bf16.mxu0 0
  %1334 = vmatpush1.bf16.msra.mxu0 %v1141
  %1335 = vmatprep.subr.bf16.mxu0 0
  %1336 = vmatpush1.bf16.msra.mxu0 %v1142
  %1337 = vmatprep.mubr.bf16.mxu0 %v701
  %1338 = vmatmul.mubr.bf16.gmra.mrb[0].mxu0 %v700
  %v1339 = vpop.f32.mrb[0].mxu0
  %v1340 = vadd.f32 %v1299, %v1339
  %v1341 = vpop.f32.mrb[0].mxu0
  %v1342 = vpop.f32.mrb[0].mxu0
  %v1343 = vadd.f32 %v1302, %v1342
  %v1344 = vpop.f32.mrb[0].mxu0
  %1345 = vdwg.mxu0
  %1346 = vmatprep.subr.bf16.mxu0 0
  %1347 = vmatpush1.bf16.msra.mxu0 %v1143
  %1348 = vmatprep.subr.bf16.mxu0 0
  %1349 = vmatpush1.bf16.msra.mxu0 %v1144
  %1350 = vmatprep.subr.bf16.mxu0 0
  %1351 = vmatpush1.bf16.msra.mxu0 %v1145
  %1352 = vmatprep.subr.bf16.mxu0 0
  %1353 = vmatpush1.bf16.msra.mxu0 %v1146
  %1354 = vmatprep.subr.bf16.mxu0 0
  %1355 = vmatpush1.bf16.msra.mxu0 %v1147
  %1356 = vmatprep.subr.bf16.mxu0 0
  %1357 = vmatpush1.bf16.msra.mxu0 %v1148
  %1358 = vmatprep.subr.bf16.mxu0 0
  %1359 = vmatpush1.bf16.msra.mxu0 %v1149
  %1360 = vmatprep.subr.bf16.mxu0 0
  %1361 = vmatpush1.bf16.msra.mxu0 %v1150
  %1362 = vmatprep.subr.bf16.mxu0 0
  %1363 = vmatpush1.bf16.msra.mxu0 %v1151
  %1364 = vmatprep.subr.bf16.mxu0 0
  %1365 = vmatpush1.bf16.msra.mxu0 %v1152
  %1366 = vmatprep.subr.bf16.mxu0 0
  %1367 = vmatpush1.bf16.msra.mxu0 %v1153
  %1368 = vmatprep.subr.bf16.mxu0 0
  %1369 = vmatpush1.bf16.msra.mxu0 %v1154
  %1370 = vmatprep.subr.bf16.mxu0 0
  %1371 = vmatpush1.bf16.msra.mxu0 %v1155
  %1372 = vmatprep.subr.bf16.mxu0 0
  %1373 = vmatpush1.bf16.msra.mxu0 %v1156
  %1374 = vmatprep.subr.bf16.mxu0 0
  %1375 = vmatpush1.bf16.msra.mxu0 %v1157
  %1376 = vmatprep.subr.bf16.mxu0 0
  %1377 = vmatpush1.bf16.msra.mxu0 %v1158
  %1378 = vmatprep.mubr.bf16.mxu0 %v703
  %1379 = vmatmul.mubr.bf16.gmra.mrb[0].mxu0 %v702
  %v1380 = vpop.f32.mrb[0].mxu0
  %v1381 = vadd.f32 %v1340, %v1380
  %v1382 = vpop.f32.mrb[0].mxu0
  %v1383 = vpop.f32.mrb[0].mxu0
  %v1384 = vadd.f32 %v1343, %v1383
  %v1385 = vpop.f32.mrb[0].mxu0
  %1386 = vdwg.mxu0
  %1387 = vst [vmem:[%s7] sm:$0xff] %v1381
  %1388 = vst [vmem:[%s7 + $0x8] sm:$0xff] %v1384
  // Predicated region
  $region30: #{densenet_forward.51} parent=0 // pred_check
    _
  $region31: #{densenet_forward.51} parent=0 // pred_check_branch
    %1390 = sbr.rel (0) target = $region33
  $region32: #{densenet_forward.51} parent=0 // pred_region
    _
  $region33: #{densenet_forward.51} parent=0 // pred_fallthru
    _
  // Predicated region
  $region34: #{densenet_forward.51} parent=0 // pred_check
    _
  $region35: #{densenet_forward.51} parent=0 // pred_check_branch
    %1392 = sbr.rel (0) target = $region37
  $region36: #{densenet_forward.51} parent=0 // pred_region
    _
  $region37: #{densenet_forward.51} parent=0 // pred_fallthru
    _

</llo_original>
